<compile_context>
chip_gen: v5e
topology: v5e:2x2
jax: 0.10.0
libtpu: 0.0.40
codegen_flags: <defaults>
</compile_context>

<pallas_src>
import math

import jax
import jax.numpy as jnp
from jax.experimental import pallas as pl
from jax.experimental.pallas import tpu as pltpu


def _round_up(x, m):
    return ((x + m - 1) // m) * m


def _vmem_limit(block_bytes):
    # Generous multiple of the (small) per-step footprint, well under the smallest
    # physical VMEM (64 MiB on v7x).
    return int(min(48 << 20, max(16 << 20, 4 * block_bytes)))


# ------------------ conv1: patch matmul + bias + ReLU + 2x2 maxpool ------------------

def _conv1_kernel(p_ref, w_ref, b_ref, o_ref):
    """p_ref: (4, tile, 27) bf16 patches grouped by 2x2 pool window;
    w_ref: (27, 64) bf16; b_ref: (1, 64) f32; o_ref: (tile, 64) f32."""
    w = w_ref[...]                         # hoisted: one load shared by all 4 taps
    m = jnp.dot(p_ref[0], w, preferred_element_type=jnp.float32)
    for t in range(1, 4):
        m = jnp.maximum(m, jnp.dot(p_ref[t], w, preferred_element_type=jnp.float32))
    # max over the pool window commutes with the shared bias add and ReLU.
    o_ref[...] = jnp.maximum(m + b_ref[...], 0.0).astype(o_ref.dtype)


def _pool_window_patches(x):
    """x: (N, H, W, C) -> (4, N*Hp*Wp, 9*C) 3x3 patches grouped by 2x2 pool window."""
    # TODO(synk): conv1's im2col stays as (cheap, 3-channel) host-side XLA glue; it
    # could be moved in-kernel like conv2/conv3 if it ever shows up in profiles.
    n, h, w, c = x.shape
    ho, wo = h - 2, w - 2
    hp, wp = ho // 2, wo // 2
    taps = [x[:, dy:dy + ho, dx:dx + wo, :] for dy in range(3) for dx in range(3)]
    p = jnp.stack(taps, axis=3)                      # (N, Ho, Wo, 9, C)
    p = p.reshape(n, ho, wo, 9 * c)
    p = p[:, :2 * hp, :2 * wp, :]                    # floor-mode pooling edge drop
    p = p.reshape(n, hp, 2, wp, 2, 9 * c)
    p = p.transpose(2, 4, 0, 1, 3, 5)                # (py, px, N, Hp, Wp, K)
    return p.reshape(4, n * hp * wp, 9 * c), (n, hp, wp)


def conv1_relu_pool(x, w, b, *, max_row_tile=512):
    """maxpool2x2(relu(conv3x3_valid(x))).  x: (N,H,W,3) bf16 -> (N,Hp,Wp,64) f32."""
    patches, (n, hp, wp) = _pool_window_patches(x)
    k = patches.shape[-1]                            # 27 -- no padding to 128
    cout = w.shape[-1]                               # 64 -- real channel count
    rows = patches.shape[1]
    # >=2 grid steps whenever possible (v7x megacore); rows multiple of 16 (bf16).
    tile = min(max_row_tile, max(16, _round_up(-(-rows // 2), 16)))
    prows = _round_up(rows, tile)
    if prows != rows:
        patches = jnp.pad(patches, ((0, 0), (0, prows - rows), (0, 0)))
    block_bytes = 2 * 4 * tile * k + 2 * k * cout + 4 * cout + 4 * tile * cout
    out = pl.pallas_call(
        _conv1_kernel,
        out_shape=jax.ShapeDtypeStruct((prows, cout), jnp.float32),
        grid_spec=pltpu.PrefetchScalarGridSpec(
            num_scalar_prefetch=0,
            grid=(prows // tile,),
            in_specs=[
                pl.BlockSpec((4, tile, k), lambda i: (0, i, 0)),
                pl.BlockSpec((k, cout), lambda i: (0, 0)),
                pl.BlockSpec((1, cout), lambda i: (0, 0)),
            ],
            out_specs=pl.BlockSpec((tile, cout), lambda i: (i, 0)),
        ),
        compiler_params=pltpu.CompilerParams(
            dimension_semantics=("parallel",),
            vmem_limit_bytes=_vmem_limit(block_bytes)),
    )(patches, w, b.reshape(1, cout))
    return out[:rows].reshape(n, hp, wp, cout)


# ---------------- fused conv2 -> conv3 -> fc1/fc2/fc3 (one kernel per image) ----------------

def _fused_kernel_factory(h1, c1, c2, c3, hid1, hid2, outp):
    h2 = h1 - 2            # conv2 output spatial (13)
    p2 = h2 // 2           # pooled (6)
    h3 = p2 - 2            # conv3 output spatial (4)
    p3 = h3 // 2           # pooled (2)

    def kernel(a1_ref, w2_ref, b2_ref, w3_ref, b3_ref,
               f1w_ref, f1b_ref, f2w_ref, f2b_ref, f3w_ref, f3b_ref,
               o_ref, a2_scr):
        # Hoisted weight/bias loads; weights stay VMEM-resident across grid steps.
        w2, b2 = w2_ref[...], b2_ref[...]
        w3, b3 = w3_ref[...], b3_ref[...]
        f1w, f1b = f1w_ref[...], f1b_ref[...]
        f2w, f2b = f2w_ref[...], f2b_ref[...]
        f3w, f3b = f3w_ref[...], f3b_ref[...]

        def row_patch(piece, y, wo):
            """In-VMEM im2col of one conv output row: (wo, 9*cin), (dy, dx, ci) order."""
            cols = [piece(y + dy, dx, wo) for dy in range(3) for dx in range(3)]
            return jnp.concatenate(cols, axis=-1).astype(jnp.bfloat16)

        def conv_row_pair(piece, j, wo, w_flat, b_row):
            """relu(bias + max over conv rows 2j, 2j+1) -> (wo, cout) f32 (height pool)."""
            r0 = jnp.dot(row_patch(piece, 2 * j, wo), w_flat,
                         preferred_element_type=jnp.float32)
            r1 = jnp.dot(row_patch(piece, 2 * j + 1, wo), w_flat,
                         preferred_element_type=jnp.float32)
            return jnp.maximum(jnp.maximum(r0, r1) + b_row, 0.0)

        a1_piece = lambda r, dx, wo: a1_ref[0, r, pl.ds(dx, wo), :]
        a2_piece = lambda r, dx, wo: a2_scr[r, pl.ds(dx, wo), :]

        # conv2 + ReLU + 2x2 pool -> a2_scr (p2, p2, c2); activations never leave VMEM.
        for j in range(p2):
            m = conv_row_pair(a1_piece, j, h2, w2, b2)
            for x in range(p2):   # width pool via unit slices (no strided access needed)
                a2_scr[j, pl.ds(x, 1), :] = jnp.maximum(m[2 * x:2 * x + 1, :],
                                                        m[2 * x + 1:2 * x + 2, :])

        # conv3 + ReLU + 2x2 pool, flattened directly into the fc1 input (HWC order).
        flat = []
        for j in range(p3):
            m = conv_row_pair(a2_piece, j, h3, w3, b3)
            for x in range(p3):
                flat.append(jnp.maximum(m[2 * x:2 * x + 1, :],
                                        m[2 * x + 1:2 * x + 2, :]))
        xf = jnp.concatenate(flat, axis=-1).astype(jnp.bfloat16)      # (1, p3*p3*c3)

        # fc1 -> ReLU -> fc2 -> ReLU -> fc3 (f32 accumulation, bf16 operands).
        h1a = jnp.maximum(
            jnp.dot(xf, f1w, preferred_element_type=jnp.float32) + f1b, 0.0)
        h2a = jnp.maximum(
            jnp.dot(h1a.astype(jnp.bfloat16), f2w,
                    preferred_element_type=jnp.float32) + f2b, 0.0)
        out = jnp.dot(h2a.astype(jnp.bfloat16), f3w,
                      preferred_element_type=jnp.float32) + f3b
        o_ref[0] = out

    return kernel, p2


def conv2_to_logits(a1, w2, b2, w3, b3, f1w, f1b, f2w, f2b, f3w, f3b):
    """Fused conv2+pool -> conv3+pool -> fc1 -> fc2 -> fc3, one grid step per image."""
    n, h1, _, c1 = a1.shape
    c2, c3 = w2.shape[1], w3.shape[1]
    hid1, hid2, outp = f1w.shape[1], f2w.shape[1], f3w.shape[1]
    kernel, p2 = _fused_kernel_factory(h1, c1, c2, c3, hid1, hid2, outp)
    weight_bytes = 2 * (w2.size + w3.size + f1w.size + f2w.size + f3w.size)
    block_bytes = (weight_bytes + 4 * h1 * h1 * c1 + 4 * p2 * p2 * c2
                   + 4 * (c2 + c3 + hid1 + hid2 + 2 * outp))
    out = pl.pallas_call(
        kernel,
        out_shape=jax.ShapeDtypeStruct((n, 1, outp), jnp.float32),
        grid_spec=pltpu.PrefetchScalarGridSpec(
            num_scalar_prefetch=0,
            grid=(n,),
            in_specs=[
                pl.BlockSpec((1, h1, h1, c1), lambda i: (i, 0, 0, 0)),
                pl.BlockSpec(w2.shape, lambda i: (0, 0)),
                pl.BlockSpec((1, c2), lambda i: (0, 0)),
                pl.BlockSpec(w3.shape, lambda i: (0, 0)),
                pl.BlockSpec((1, c3), lambda i: (0, 0)),
                pl.BlockSpec(f1w.shape, lambda i: (0, 0)),
                pl.BlockSpec((1, hid1), lambda i: (0, 0)),
                pl.BlockSpec(f2w.shape, lambda i: (0, 0)),
                pl.BlockSpec((1, hid2), lambda i: (0, 0)),
                pl.BlockSpec(f3w.shape, lambda i: (0, 0)),
                pl.BlockSpec((1, outp), lambda i: (0, 0)),
            ],
            out_specs=pl.BlockSpec((1, 1, outp), lambda i: (i, 0, 0)),
            scratch_shapes=[pltpu.VMEM((p2, p2, c2), jnp.float32)],
        ),
        compiler_params=pltpu.CompilerParams(
            dimension_semantics=("parallel",),
            vmem_limit_bytes=_vmem_limit(block_bytes)),
    )(a1, w2, b2.reshape(1, c2), w3, b3.reshape(1, c3),
      f1w, f1b.reshape(1, hid1), f2w, f2b.reshape(1, hid2),
      f3w, f3b.reshape(1, outp))
    return out.reshape(n, outp)


def cnn_forward(x_nchw, kp, *, num_classes=10):
    x = jnp.transpose(x_nchw, (0, 2, 3, 1)).astype(jnp.bfloat16)   # NCHW -> NHWC, bf16
    a1 = conv1_relu_pool(x, kp["c1w"], kp["c1b"])                  # (N, 15, 15, 64) f32
    out = conv2_to_logits(a1, kp["c2w"], kp["c2b"], kp["c3w"], kp["c3b"],
                          kp["f1w"], kp["f1b"], kp["f2w"], kp["f2b"],
                          kp["f3w"], kp["f3b"])                    # (N, 128)
    return out[:, :num_classes]                                    # drop fc3 lane padding


# --------------------------------- params ---------------------------------

def init_params(key, num_classes=10):
    """U(-1/sqrt(fan_in), 1/sqrt(fan_in)) init mimicking nn.Conv2d / nn.Linear.

    Conv weights are flattened to (3*3*Cin, Cout) in (dy, dx, ci) order; linear
    weights are (in_features, out_features).  fc1 consumes HWC-flattened conv3
    features (torch flattens CHW) -- a fixed input permutation of fc1, which is
    semantically equivalent since weights are initialized here.
    """
    ks = jax.random.split(key, 12)

    def u(k, shape, fan_in):
        bound = 1.0 / math.sqrt(fan_in)
        return jax.random.uniform(k, shape, jnp.float32, -bound, bound)

    return {
        "c1w": u(ks[0], (27, 64), 27),        "c1b": u(ks[1], (64,), 27),
        "c2w": u(ks[2], (576, 128), 576),     "c2b": u(ks[3], (128,), 576),
        "c3w": u(ks[4], (1152, 256), 1152),   "c3b": u(ks[5], (256,), 1152),
        "f1w": u(ks[6], (1024, 128), 1024),   "f1b": u(ks[7], (128,), 1024),
        "f2w": u(ks[8], (128, 256), 128),     "f2b": u(ks[9], (256,), 128),
        "f3w": u(ks[10], (256, num_classes), 256),
        "f3b": u(ks[11], (num_classes,), 256),
    }


def _pad_to(a, shape):
    return jnp.pad(a, [(0, s - d) for d, s in zip(a.shape, shape)])


def prepare_params_for_tpu(p, out_pad=128):
    """bf16 matmul operands (f32 accumulation in-kernel); fc3 padded to 128 lanes."""
    kp = {}
    for name in ("c1w", "c2w", "c3w", "f1w", "f2w"):
        kp[name] = p[name].astype(jnp.bfloat16)
    for name in ("c1b", "c2b", "c3b", "f1b", "f2b"):
        kp[name] = p[name].astype(jnp.float32)
    kp["f3w"] = _pad_to(p["f3w"], (p["f3w"].shape[0], out_pad)).astype(jnp.bfloat16)
    kp["f3b"] = _pad_to(p["f3b"], (out_pad,)).astype(jnp.float32)
    return kp


# --------------------------- pure-JAX reference ---------------------------

def cnn_ref(x_nchw, p):
    hi = jax.lax.Precision.HIGHEST
    x = jnp.transpose(x_nchw, (0, 2, 3, 1))

    def conv_block(x, w_flat, b):
        cin, cout = x.shape[-1], w_flat.shape[-1]
        w = w_flat.reshape(3, 3, cin, cout)
        y = jax.lax.conv_general_dilated(
            x, w, (1, 1), "VALID",
            dimension_numbers=("NHWC", "HWIO", "NHWC"), precision=hi)
        y = jnp.maximum(y + b, 0.0)
        return jax.lax.reduce_window(y, -jnp.inf, jax.lax.max,
                                     (1, 2, 2, 1), (1, 2, 2, 1), "VALID")

    x = conv_block(x, p["c1w"], p["c1b"])
    x = conv_block(x, p["c2w"], p["c2b"])
    x = conv_block(x, p["c3w"], p["c3b"])
    x = x.reshape(x.shape[0], -1)
    h = jnp.maximum(jnp.dot(x, p["f1w"], precision=hi) + p["f1b"], 0.0)
    h = jnp.maximum(jnp.dot(h, p["f2w"], precision=hi) + p["f2b"], 0.0)
    return jnp.dot(h, p["f3w"], precision=hi) + p["f3b"]


if __name__ == "__main__":
    num_classes = 10
    key = jax.random.PRNGKey(0)
    kx, kparam = jax.random.split(key)
    x = jax.random.normal(kx, (2, 3, 32, 32), jnp.float32)   # NCHW, CIFAR-sized

    params = init_params(kparam, num_classes)
    tpu_params = prepare_params_for_tpu(params)

    fwd = jax.jit(lambda xx, pp: cnn_forward(xx, pp, num_classes=num_classes))
    out = jax.block_until_ready(fwd(x, tpu_params))

    ref = cnn_ref(x, params)
    assert out.shape == (2, num_classes), (out.shape, ref.shape)
    max_err = float(jnp.max(jnp.abs(out - ref)))
    # bf16 matmul operands with f32 accumulation vs. an f32 reference -> 2e-2 tol.
    assert jnp.allclose(out, ref, atol=2e-2, rtol=2e-2), \
        f"mismatch vs reference (max abs err {max_err})"
    print("KERNEL_OK")
</pallas_src>

<mosaic_0001>
module attributes {stable_mosaic.version = 11 : i64} {
  func.func @_conv1_kernel(%arg0: i32, %arg1: memref<4x240x27xbf16, #tpu.memory_space<vmem>>, %arg2: memref<27x64xbf16, #tpu.memory_space<vmem>>, %arg3: memref<1x64xf32, #tpu.memory_space<vmem>>, %arg4: memref<240x64xf32, #tpu.memory_space<vmem>>) attributes {dimension_semantics = [#tpu.dimension_semantics<parallel>], iteration_bounds = array<i64: 2>, scalar_prefetch = 0 : i64, scratch_operands = 0 : i64, tpu.core_type = #tpu.core_type<tc>, window_params = [{transform_indices = @transform_0, window_bounds = array<i64: 4, 240, 27>}, {pipeline_mode = #tpu.pipeline_mode<synchronous>, transform_indices = @transform_1, window_bounds = array<i64: 27, 64>}, {pipeline_mode = #tpu.pipeline_mode<synchronous>, transform_indices = @transform_2, window_bounds = array<i64: 1, 64>}, {transform_indices = @transform_3, window_bounds = array<i64: 240, 64>}]} {
    %c0 = arith.constant 0 : index
    %c0_0 = arith.constant 0 : index
    %0 = vector.load %arg2[%c0, %c0_0] : memref<27x64xbf16, #tpu.memory_space<vmem>>, vector<27x64xbf16>
    %c0_1 = arith.constant 0 : index
    %c0_2 = arith.constant 0 : index
    %c0_3 = arith.constant 0 : index
    %1 = vector.load %arg1[%c0_1, %c0_2, %c0_3] : memref<4x240x27xbf16, #tpu.memory_space<vmem>>, vector<1x240x27xbf16>
    %2 = vector.shape_cast %1 : vector<1x240x27xbf16> to vector<240x27xbf16>
    %cst = arith.constant dense<0.000000e+00> : vector<240x64xf32>
    %3 = tpu.matmul %2, %0, %cst {dimension_numbers = #tpu.dot_dimension_numbers<[1], [0], [0], [1], [0, 0, 1, 1], [], []>} : vector<240x27xbf16>, vector<27x64xbf16>, vector<240x64xf32> -> vector<240x64xf32>
    %c1 = arith.constant 1 : index
    %c0_4 = arith.constant 0 : index
    %c0_5 = arith.constant 0 : index
    %4 = vector.load %arg1[%c1, %c0_4, %c0_5] : memref<4x240x27xbf16, #tpu.memory_space<vmem>>, vector<1x240x27xbf16>
    %5 = vector.shape_cast %4 : vector<1x240x27xbf16> to vector<240x27xbf16>
    %cst_6 = arith.constant dense<0.000000e+00> : vector<240x64xf32>
    %6 = tpu.matmul %5, %0, %cst_6 {dimension_numbers = #tpu.dot_dimension_numbers<[1], [0], [0], [1], [0, 0, 1, 1], [], []>} : vector<240x27xbf16>, vector<27x64xbf16>, vector<240x64xf32> -> vector<240x64xf32>
    %7 = arith.maximumf %3, %6 : vector<240x64xf32>
    %c2 = arith.constant 2 : index
    %c0_7 = arith.constant 0 : index
    %c0_8 = arith.constant 0 : index
    %8 = vector.load %arg1[%c2, %c0_7, %c0_8] : memref<4x240x27xbf16, #tpu.memory_space<vmem>>, vector<1x240x27xbf16>
    %9 = vector.shape_cast %8 : vector<1x240x27xbf16> to vector<240x27xbf16>
    %cst_9 = arith.constant dense<0.000000e+00> : vector<240x64xf32>
    %10 = tpu.matmul %9, %0, %cst_9 {dimension_numbers = #tpu.dot_dimension_numbers<[1], [0], [0], [1], [0, 0, 1, 1], [], []>} : vector<240x27xbf16>, vector<27x64xbf16>, vector<240x64xf32> -> vector<240x64xf32>
    %11 = arith.maximumf %7, %10 : vector<240x64xf32>
    %c3 = arith.constant 3 : index
    %c0_10 = arith.constant 0 : index
    %c0_11 = arith.constant 0 : index
    %12 = vector.load %arg1[%c3, %c0_10, %c0_11] : memref<4x240x27xbf16, #tpu.memory_space<vmem>>, vector<1x240x27xbf16>
    %13 = vector.shape_cast %12 : vector<1x240x27xbf16> to vector<240x27xbf16>
    %cst_12 = arith.constant dense<0.000000e+00> : vector<240x64xf32>
    %14 = tpu.matmul %13, %0, %cst_12 {dimension_numbers = #tpu.dot_dimension_numbers<[1], [0], [0], [1], [0, 0, 1, 1], [], []>} : vector<240x27xbf16>, vector<27x64xbf16>, vector<240x64xf32> -> vector<240x64xf32>
    %15 = arith.maximumf %11, %14 : vector<240x64xf32>
    %c0_13 = arith.constant 0 : index
    %c0_14 = arith.constant 0 : index
    %16 = vector.load %arg3[%c0_13, %c0_14] : memref<1x64xf32, #tpu.memory_space<vmem>>, vector<1x64xf32>
    %17 = vector.broadcast %16 : vector<1x64xf32> to vector<240x64xf32>
    %18 = arith.addf %15, %17 : vector<240x64xf32>
    %cst_15 = arith.constant 0.000000e+00 : f32
    %19 = vector.broadcast %cst_15 : f32 to vector<240x64xf32>
    %20 = arith.maximumf %18, %19 : vector<240x64xf32>
    %c0_16 = arith.constant 0 : index
    %c0_17 = arith.constant 0 : index
    %21 = vector.load %arg4[%c0_16, %c0_17] : memref<240x64xf32, #tpu.memory_space<vmem>>, vector<240x64xf32>
    tpu.vector_store %arg4[%c0_16, %c0_17], %20 {strides = array<i32>} : memref<240x64xf32, #tpu.memory_space<vmem>>, vector<240x64xf32>,
    return
  }
  func.func @transform_0(%arg0: i32) -> (i32, i32, i32) {
    %c0_i32 = arith.constant 0 : i32
    %c0_i32_0 = arith.constant 0 : i32
    %c0_i32_1 = arith.constant 0 : i32
    return %c0_i32, %arg0, %c0_i32_0 : i32, i32, i32
  }
  func.func @transform_1(%arg0: i32) -> (i32, i32) {
    %c0_i32 = arith.constant 0 : i32
    %c0_i32_0 = arith.constant 0 : i32
    %c0_i32_1 = arith.constant 0 : i32
    return %c0_i32, %c0_i32_0 : i32, i32
  }
  func.func @transform_2(%arg0: i32) -> (i32, i32) {
    %c0_i32 = arith.constant 0 : i32
    %c0_i32_0 = arith.constant 0 : i32
    %c0_i32_1 = arith.constant 0 : i32
    return %c0_i32, %c0_i32_0 : i32, i32
  }
  func.func @transform_3(%arg0: i32) -> (i32, i32) {
    %c0_i32 = arith.constant 0 : i32
    %c0_i32_0 = arith.constant 0 : i32
    return %arg0, %c0_i32 : i32, i32
  }
}

module attributes {stable_mosaic.version = 11 : i64} {
  func.func @kernel(%arg0: i32, %arg1: memref<1x15x15x64xf32, #tpu.memory_space<vmem>>, %arg2: memref<576x128xbf16, #tpu.memory_space<vmem>>, %arg3: memref<1x128xf32, #tpu.memory_space<vmem>>, %arg4: memref<1152x256xbf16, #tpu.memory_space<vmem>>, %arg5: memref<1x256xf32, #tpu.memory_space<vmem>>, %arg6: memref<1024x128xbf16, #tpu.memory_space<vmem>>, %arg7: memref<1x128xf32, #tpu.memory_space<vmem>>, %arg8: memref<128x256xbf16, #tpu.memory_space<vmem>>, %arg9: memref<1x256xf32, #tpu.memory_space<vmem>>, %arg10: memref<256x128xbf16, #tpu.memory_space<vmem>>, %arg11: memref<1x128xf32, #tpu.memory_space<vmem>>, %arg12: memref<1x1x128xf32, #tpu.memory_space<vmem>>, %arg13: memref<6x6x128xf32, #tpu.memory_space<vmem>>) attributes {dimension_semantics = [#tpu.dimension_semantics<parallel>], iteration_bounds = array<i64: 2>, scalar_prefetch = 0 : i64, scratch_operands = 1 : i64, tpu.core_type = #tpu.core_type<tc>, window_params = [{transform_indices = @transform_0, window_bounds = array<i64: 1, 15, 15, 64>}, {pipeline_mode = #tpu.pipeline_mode<synchronous>, transform_indices = @transform_1, window_bounds = array<i64: 576, 128>}, {pipeline_mode = #tpu.pipeline_mode<synchronous>, transform_indices = @transform_2, window_bounds = array<i64: 1, 128>}, {pipeline_mode = #tpu.pipeline_mode<synchronous>, transform_indices = @transform_3, window_bounds = array<i64: 1152, 256>}, {pipeline_mode = #tpu.pipeline_mode<synchronous>, transform_indices = @transform_4, window_bounds = array<i64: 1, 256>}, {pipeline_mode = #tpu.pipeline_mode<synchronous>, transform_indices = @transform_5, window_bounds = array<i64: 1024, 128>}, {pipeline_mode = #tpu.pipeline_mode<synchronous>, transform_indices = @transform_6, window_bounds = array<i64: 1, 128>}, {pipeline_mode = #tpu.pipeline_mode<synchronous>, transform_indices = @transform_7, window_bounds = array<i64: 128, 256>}, {pipeline_mode = #tpu.pipeline_mode<synchronous>, transform_indices = @transform_8, window_bounds = array<i64: 1, 256>}, {pipeline_mode = #tpu.pipeline_mode<synchronous>, transform_indices = @transform_9, window_bounds = array<i64: 256, 128>}, {pipeline_mode = #tpu.pipeline_mode<synchronous>, transform_indices = @transform_10, window_bounds = array<i64: 1, 128>}, {transform_indices = @transform_11, window_bounds = array<i64: 1, 1, 128>}]} {
    %c0 = arith.constant 0 : index
    %c0_0 = arith.constant 0 : index
    %0 = vector.load %arg2[%c0, %c0_0] : memref<576x128xbf16, #tpu.memory_space<vmem>>, vector<576x128xbf16>
    %c0_1 = arith.constant 0 : index
    %c0_2 = arith.constant 0 : index
    %1 = vector.load %arg3[%c0_1, %c0_2] : memref<1x128xf32, #tpu.memory_space<vmem>>, vector<1x128xf32>
    %c0_3 = arith.constant 0 : index
    %c0_4 = arith.constant 0 : index
    %2 = vector.load %arg4[%c0_3, %c0_4] : memref<1152x256xbf16, #tpu.memory_space<vmem>>, vector<1152x256xbf16>
    %c0_5 = arith.constant 0 : index
    %c0_6 = arith.constant 0 : index
    %3 = vector.load %arg5[%c0_5, %c0_6] : memref<1x256xf32, #tpu.memory_space<vmem>>, vector<1x256xf32>
    %c0_7 = arith.constant 0 : index
    %c0_8 = arith.constant 0 : index
    %4 = vector.load %arg6[%c0_7, %c0_8] : memref<1024x128xbf16, #tpu.memory_space<vmem>>, vector<1024x128xbf16>
    %c0_9 = arith.constant 0 : index
    %c0_10 = arith.constant 0 : index
    %5 = vector.load %arg7[%c0_9, %c0_10] : memref<1x128xf32, #tpu.memory_space<vmem>>, vector<1x128xf32>
    %c0_11 = arith.constant 0 : index
    %c0_12 = arith.constant 0 : index
    %6 = vector.load %arg8[%c0_11, %c0_12] : memref<128x256xbf16, #tpu.memory_space<vmem>>, vector<128x256xbf16>
    %c0_13 = arith.constant 0 : index
    %c0_14 = arith.constant 0 : index
    %7 = vector.load %arg9[%c0_13, %c0_14] : memref<1x256xf32, #tpu.memory_space<vmem>>, vector<1x256xf32>
    %c0_15 = arith.constant 0 : index
    %c0_16 = arith.constant 0 : index
    %8 = vector.load %arg10[%c0_15, %c0_16] : memref<256x128xbf16, #tpu.memory_space<vmem>>, vector<256x128xbf16>
    %c0_17 = arith.constant 0 : index
    %c0_18 = arith.constant 0 : index
    %9 = vector.load %arg11[%c0_17, %c0_18] : memref<1x128xf32, #tpu.memory_space<vmem>>, vector<1x128xf32>
    %c0_19 = arith.constant 0 : index
    %c0_20 = arith.constant 0 : index
    %c0_21 = arith.constant 0 : index
    %c0_22 = arith.constant 0 : index
    %10 = vector.load %arg1[%c0_19, %c0_20, %c0_21, %c0_22] : memref<1x15x15x64xf32, #tpu.memory_space<vmem>>, vector<1x1x13x64xf32>
    %11 = vector.shape_cast %10 : vector<1x1x13x64xf32> to vector<13x64xf32>
    %c0_23 = arith.constant 0 : index
    %c0_24 = arith.constant 0 : index
    %c1 = arith.constant 1 : index
    %c0_25 = arith.constant 0 : index
    %12 = vector.load %arg1[%c0_23, %c0_24, %c1, %c0_25] : memref<1x15x15x64xf32, #tpu.memory_space<vmem>>, vector<1x1x13x64xf32>
    %13 = vector.shape_cast %12 : vector<1x1x13x64xf32> to vector<13x64xf32>
    %c0_26 = arith.constant 0 : index
    %c0_27 = arith.constant 0 : index
    %c2 = arith.constant 2 : index
    %c0_28 = arith.constant 0 : index
    %14 = vector.load %arg1[%c0_26, %c0_27, %c2, %c0_28] : memref<1x15x15x64xf32, #tpu.memory_space<vmem>>, vector<1x1x13x64xf32>
    %15 = vector.shape_cast %14 : vector<1x1x13x64xf32> to vector<13x64xf32>
    %c0_29 = arith.constant 0 : index
    %c1_30 = arith.constant 1 : index
    %c0_31 = arith.constant 0 : index
    %c0_32 = arith.constant 0 : index
    %16 = vector.load %arg1[%c0_29, %c1_30, %c0_31, %c0_32] : memref<1x15x15x64xf32, #tpu.memory_space<vmem>>, vector<1x1x13x64xf32>
    %17 = vector.shape_cast %16 : vector<1x1x13x64xf32> to vector<13x64xf32>
    %c0_33 = arith.constant 0 : index
    %c1_34 = arith.constant 1 : index
    %c1_35 = arith.constant 1 : index
    %c0_36 = arith.constant 0 : index
    %18 = vector.load %arg1[%c0_33, %c1_34, %c1_35, %c0_36] : memref<1x15x15x64xf32, #tpu.memory_space<vmem>>, vector<1x1x13x64xf32>
    %19 = vector.shape_cast %18 : vector<1x1x13x64xf32> to vector<13x64xf32>
    %c0_37 = arith.constant 0 : index
    %c1_38 = arith.constant 1 : index
    %c2_39 = arith.constant 2 : index
    %c0_40 = arith.constant 0 : index
    %20 = vector.load %arg1[%c0_37, %c1_38, %c2_39, %c0_40] : memref<1x15x15x64xf32, #tpu.memory_space<vmem>>, vector<1x1x13x64xf32>
    %21 = vector.shape_cast %20 : vector<1x1x13x64xf32> to vector<13x64xf32>
    %c0_41 = arith.constant 0 : index
    %c2_42 = arith.constant 2 : index
    %c0_43 = arith.constant 0 : index
    %c0_44 = arith.constant 0 : index
    %22 = vector.load %arg1[%c0_41, %c2_42, %c0_43, %c0_44] : memref<1x15x15x64xf32, #tpu.memory_space<vmem>>, vector<1x1x13x64xf32>
    %23 = vector.shape_cast %22 : vector<1x1x13x64xf32> to vector<13x64xf32>
    %c0_45 = arith.constant 0 : index
    %c2_46 = arith.constant 2 : index
    %c1_47 = arith.constant 1 : index
    %c0_48 = arith.constant 0 : index
    %24 = vector.load %arg1[%c0_45, %c2_46, %c1_47, %c0_48] : memref<1x15x15x64xf32, #tpu.memory_space<vmem>>, vector<1x1x13x64xf32>
    %25 = vector.shape_cast %24 : vector<1x1x13x64xf32> to vector<13x64xf32>
    %c0_49 = arith.constant 0 : index
    %c2_50 = arith.constant 2 : index
    %c2_51 = arith.constant 2 : index
    %c0_52 = arith.constant 0 : index
    %26 = vector.load %arg1[%c0_49, %c2_50, %c2_51, %c0_52] : memref<1x15x15x64xf32, #tpu.memory_space<vmem>>, vector<1x1x13x64xf32>
    %27 = vector.shape_cast %26 : vector<1x1x13x64xf32> to vector<13x64xf32>
    %28 = tpu.concatenate %11, %13, %15, %17, %19, %21, %23, %25, %27 in 1 : vector<13x64xf32>, vector<13x64xf32>, vector<13x64xf32>, vector<13x64xf32>, vector<13x64xf32>, vector<13x64xf32>, vector<13x64xf32>, vector<13x64xf32>, vector<13x64xf32> -> vector<13x576xf32>
    %29 = arith.truncf %28 : vector<13x576xf32> to vector<13x576xbf16>
    %cst = arith.constant dense<0.000000e+00> : vector<13x128xf32>
    %30 = tpu.matmul %29, %0, %cst {dimension_numbers = #tpu.dot_dimension_numbers<[1], [0], [0], [1], [0, 0, 1, 1], [], []>} : vector<13x576xbf16>, vector<576x128xbf16>, vector<13x128xf32> -> vector<13x128xf32>
    %c0_53 = arith.constant 0 : index
    %c1_54 = arith.constant 1 : index
    %c0_55 = arith.constant 0 : index
    %c0_56 = arith.constant 0 : index
    %31 = vector.load %arg1[%c0_53, %c1_54, %c0_55, %c0_56] : memref<1x15x15x64xf32, #tpu.memory_space<vmem>>, vector<1x1x13x64xf32>
    %32 = vector.shape_cast %31 : vector<1x1x13x64xf32> to vector<13x64xf32>
    %c0_57 = arith.constant 0 : index
    %c1_58 = arith.constant 1 : index
    %c1_59 = arith.constant 1 : index
    %c0_60 = arith.constant 0 : index
    %33 = vector.load %arg1[%c0_57, %c1_58, %c1_59, %c0_60] : memref<1x15x15x64xf32, #tpu.memory_space<vmem>>, vector<1x1x13x64xf32>
    %34 = vector.shape_cast %33 : vector<1x1x13x64xf32> to vector<13x64xf32>
    %c0_61 = arith.constant 0 : index
    %c1_62 = arith.constant 1 : index
    %c2_63 = arith.constant 2 : index
    %c0_64 = arith.constant 0 : index
    %35 = vector.load %arg1[%c0_61, %c1_62, %c2_63, %c0_64] : memref<1x15x15x64xf32, #tpu.memory_space<vmem>>, vector<1x1x13x64xf32>
    %36 = vector.shape_cast %35 : vector<1x1x13x64xf32> to vector<13x64xf32>
    %c0_65 = arith.constant 0 : index
    %c2_66 = arith.constant 2 : index
    %c0_67 = arith.constant 0 : index
    %c0_68 = arith.constant 0 : index
    %37 = vector.load %arg1[%c0_65, %c2_66, %c0_67, %c0_68] : memref<1x15x15x64xf32, #tpu.memory_space<vmem>>, vector<1x1x13x64xf32>
    %38 = vector.shape_cast %37 : vector<1x1x13x64xf32> to vector<13x64xf32>
    %c0_69 = arith.constant 0 : index
    %c2_70 = arith.constant 2 : index
    %c1_71 = arith.constant 1 : index
    %c0_72 = arith.constant 0 : index
    %39 = vector.load %arg1[%c0_69, %c2_70, %c1_71, %c0_72] : memref<1x15x15x64xf32, #tpu.memory_space<vmem>>, vector<1x1x13x64xf32>
    %40 = vector.shape_cast %39 : vector<1x1x13x64xf32> to vector<13x64xf32>
    %c0_73 = arith.constant 0 : index
    %c2_74 = arith.constant 2 : index
    %c2_75 = arith.constant 2 : index
    %c0_76 = arith.constant 0 : index
    %41 = vector.load %arg1[%c0_73, %c2_74, %c2_75, %c0_76] : memref<1x15x15x64xf32, #tpu.memory_space<vmem>>, vector<1x1x13x64xf32>
    %42 = vector.shape_cast %41 : vector<1x1x13x64xf32> to vector<13x64xf32>
    %c0_77 = arith.constant 0 : index
    %c3 = arith.constant 3 : index
    %c0_78 = arith.constant 0 : index
    %c0_79 = arith.constant 0 : index
    %43 = vector.load %arg1[%c0_77, %c3, %c0_78, %c0_79] : memref<1x15x15x64xf32, #tpu.memory_space<vmem>>, vector<1x1x13x64xf32>
    %44 = vector.shape_cast %43 : vector<1x1x13x64xf32> to vector<13x64xf32>
    %c0_80 = arith.constant 0 : index
    %c3_81 = arith.constant 3 : index
    %c1_82 = arith.constant 1 : index
    %c0_83 = arith.constant 0 : index
    %45 = vector.load %arg1[%c0_80, %c3_81, %c1_82, %c0_83] : memref<1x15x15x64xf32, #tpu.memory_space<vmem>>, vector<1x1x13x64xf32>
    %46 = vector.shape_cast %45 : vector<1x1x13x64xf32> to vector<13x64xf32>
    %c0_84 = arith.constant 0 : index
    %c3_85 = arith.constant 3 : index
    %c2_86 = arith.constant 2 : index
    %c0_87 = arith.constant 0 : index
    %47 = vector.load %arg1[%c0_84, %c3_85, %c2_86, %c0_87] : memref<1x15x15x64xf32, #tpu.memory_space<vmem>>, vector<1x1x13x64xf32>
    %48 = vector.shape_cast %47 : vector<1x1x13x64xf32> to vector<13x64xf32>
    %49 = tpu.concatenate %32, %34, %36, %38, %40, %42, %44, %46, %48 in 1 : vector<13x64xf32>, vector<13x64xf32>, vector<13x64xf32>, vector<13x64xf32>, vector<13x64xf32>, vector<13x64xf32>, vector<13x64xf32>, vector<13x64xf32>, vector<13x64xf32> -> vector<13x576xf32>
    %50 = arith.truncf %49 : vector<13x576xf32> to vector<13x576xbf16>
    %cst_88 = arith.constant dense<0.000000e+00> : vector<13x128xf32>
    %51 = tpu.matmul %50, %0, %cst_88 {dimension_numbers = #tpu.dot_dimension_numbers<[1], [0], [0], [1], [0, 0, 1, 1], [], []>} : vector<13x576xbf16>, vector<576x128xbf16>, vector<13x128xf32> -> vector<13x128xf32>
    %52 = arith.maximumf %30, %51 : vector<13x128xf32>
    %53 = vector.broadcast %1 : vector<1x128xf32> to vector<13x128xf32>
    %54 = arith.addf %52, %53 : vector<13x128xf32>
    %cst_89 = arith.constant 0.000000e+00 : f32
    %55 = vector.broadcast %cst_89 : f32 to vector<13x128xf32>
    %56 = arith.maximumf %54, %55 : vector<13x128xf32>
    %57 = vector.extract_strided_slice %56 {offsets = [0, 0], sizes = [1, 128], strides = [1, 1]} : vector<13x128xf32> to vector<1x128xf32>
    %58 = vector.extract_strided_slice %56 {offsets = [1, 0], sizes = [1, 128], strides = [1, 1]} : vector<13x128xf32> to vector<1x128xf32>
    %59 = arith.maximumf %57, %58 : vector<1x128xf32>
    %c0_90 = arith.constant 0 : index
    %c0_91 = arith.constant 0 : index
    %c0_92 = arith.constant 0 : index
    %60 = vector.load %arg13[%c0_90, %c0_91, %c0_92] : memref<6x6x128xf32, #tpu.memory_space<vmem>>, vector<1x1x128xf32>
    %61 = vector.shape_cast %60 : vector<1x1x128xf32> to vector<1x128xf32>
    %62 = vector.shape_cast %59 : vector<1x128xf32> to vector<1x1x128xf32>
    tpu.vector_store %arg13[%c0_90, %c0_91, %c0_92], %62 {strides = array<i32>} : memref<6x6x128xf32, #tpu.memory_space<vmem>>, vector<1x1x128xf32>,
    %63 = vector.extract_strided_slice %56 {offsets = [2, 0], sizes = [1, 128], strides = [1, 1]} : vector<13x128xf32> to vector<1x128xf32>
    %64 = vector.extract_strided_slice %56 {offsets = [3, 0], sizes = [1, 128], strides = [1, 1]} : vector<13x128xf32> to vector<1x128xf32>
    %65 = arith.maximumf %63, %64 : vector<1x128xf32>
    %c0_93 = arith.constant 0 : index
    %c1_94 = arith.constant 1 : index
    %c0_95 = arith.constant 0 : index
    %66 = vector.load %arg13[%c0_93, %c1_94, %c0_95] : memref<6x6x128xf32, #tpu.memory_space<vmem>>, vector<1x1x128xf32>
    %67 = vector.shape_cast %66 : vector<1x1x128xf32> to vector<1x128xf32>
    %68 = vector.shape_cast %65 : vector<1x128xf32> to vector<1x1x128xf32>
    tpu.vector_store %arg13[%c0_93, %c1_94, %c0_95], %68 {strides = array<i32>} : memref<6x6x128xf32, #tpu.memory_space<vmem>>, vector<1x1x128xf32>,
    %69 = vector.extract_strided_slice %56 {offsets = [4, 0], sizes = [1, 128], strides = [1, 1]} : vector<13x128xf32> to vector<1x128xf32>
    %70 = vector.extract_strided_slice %56 {offsets = [5, 0], sizes = [1, 128], strides = [1, 1]} : vector<13x128xf32> to vector<1x128xf32>
    %71 = arith.maximumf %69, %70 : vector<1x128xf32>
    %c0_96 = arith.constant 0 : index
    %c2_97 = arith.constant 2 : index
    %c0_98 = arith.constant 0 : index
    %72 = vector.load %arg13[%c0_96, %c2_97, %c0_98] : memref<6x6x128xf32, #tpu.memory_space<vmem>>, vector<1x1x128xf32>
    %73 = vector.shape_cast %72 : vector<1x1x128xf32> to vector<1x128xf32>
    %74 = vector.shape_cast %71 : vector<1x128xf32> to vector<1x1x128xf32>
    tpu.vector_store %arg13[%c0_96, %c2_97, %c0_98], %74 {strides = array<i32>} : memref<6x6x128xf32, #tpu.memory_space<vmem>>, vector<1x1x128xf32>,
    %75 = vector.extract_strided_slice %56 {offsets = [6, 0], sizes = [1, 128], strides = [1, 1]} : vector<13x128xf32> to vector<1x128xf32>
    %76 = vector.extract_strided_slice %56 {offsets = [7, 0], sizes = [1, 128], strides = [1, 1]} : vector<13x128xf32> to vector<1x128xf32>
    %77 = arith.maximumf %75, %76 : vector<1x128xf32>
    %c0_99 = arith.constant 0 : index
    %c3_100 = arith.constant 3 : index
    %c0_101 = arith.constant 0 : index
    %78 = vector.load %arg13[%c0_99, %c3_100, %c0_101] : memref<6x6x128xf32, #tpu.memory_space<vmem>>, vector<1x1x128xf32>
    %79 = vector.shape_cast %78 : vector<1x1x128xf32> to vector<1x128xf32>
    %80 = vector.shape_cast %77 : vector<1x128xf32> to vector<1x1x128xf32>
    tpu.vector_store %arg13[%c0_99, %c3_100, %c0_101], %80 {strides = array<i32>} : memref<6x6x128xf32, #tpu.memory_space<vmem>>, vector<1x1x128xf32>,
    %81 = vector.extract_strided_slice %56 {offsets = [8, 0], sizes = [1, 128], strides = [1, 1]} : vector<13x128xf32> to vector<1x128xf32>
    %82 = vector.extract_strided_slice %56 {offsets = [9, 0], sizes = [1, 128], strides = [1, 1]} : vector<13x128xf32> to vector<1x128xf32>
    %83 = arith.maximumf %81, %82 : vector<1x128xf32>
    %c0_102 = arith.constant 0 : index
    %c4 = arith.constant 4 : index
    %c0_103 = arith.constant 0 : index
    %84 = vector.load %arg13[%c0_102, %c4, %c0_103] : memref<6x6x128xf32, #tpu.memory_space<vmem>>, vector<1x1x128xf32>
    %85 = vector.shape_cast %84 : vector<1x1x128xf32> to vector<1x128xf32>
    %86 = vector.shape_cast %83 : vector<1x128xf32> to vector<1x1x128xf32>
    tpu.vector_store %arg13[%c0_102, %c4, %c0_103], %86 {strides = array<i32>} : memref<6x6x128xf32, #tpu.memory_space<vmem>>, vector<1x1x128xf32>,
    %87 = vector.extract_strided_slice %56 {offsets = [10, 0], sizes = [1, 128], strides = [1, 1]} : vector<13x128xf32> to vector<1x128xf32>
    %88 = vector.extract_strided_slice %56 {offsets = [11, 0], sizes = [1, 128], strides = [1, 1]} : vector<13x128xf32> to vector<1x128xf32>
    %89 = arith.maximumf %87, %88 : vector<1x128xf32>
    %c0_104 = arith.constant 0 : index
    %c5 = arith.constant 5 : index
    %c0_105 = arith.constant 0 : index
    %90 = vector.load %arg13[%c0_104, %c5, %c0_105] : memref<6x6x128xf32, #tpu.memory_space<vmem>>, vector<1x1x128xf32>
    %91 = vector.shape_cast %90 : vector<1x1x128xf32> to vector<1x128xf32>
    %92 = vector.shape_cast %89 : vector<1x128xf32> to vector<1x1x128xf32>
    tpu.vector_store %arg13[%c0_104, %c5, %c0_105], %92 {strides = array<i32>} : memref<6x6x128xf32, #tpu.memory_space<vmem>>, vector<1x1x128xf32>,
    %c0_106 = arith.constant 0 : index
    %c2_107 = arith.constant 2 : index
    %c0_108 = arith.constant 0 : index
    %c0_109 = arith.constant 0 : index
    %93 = vector.load %arg1[%c0_106, %c2_107, %c0_108, %c0_109] : memref<1x15x15x64xf32, #tpu.memory_space<vmem>>, vector<1x1x13x64xf32>
    %94 = vector.shape_cast %93 : vector<1x1x13x64xf32> to vector<13x64xf32>
    %c0_110 = arith.constant 0 : index
    %c2_111 = arith.constant 2 : index
    %c1_112 = arith.constant 1 : index
    %c0_113 = arith.constant 0 : index
    %95 = vector.load %arg1[%c0_110, %c2_111, %c1_112, %c0_113] : memref<1x15x15x64xf32, #tpu.memory_space<vmem>>, vector<1x1x13x64xf32>
    %96 = vector.shape_cast %95 : vector<1x1x13x64xf32> to vector<13x64xf32>
    %c0_114 = arith.constant 0 : index
    %c2_115 = arith.constant 2 : index
    %c2_116 = arith.constant 2 : index
    %c0_117 = arith.constant 0 : index
    %97 = vector.load %arg1[%c0_114, %c2_115, %c2_116, %c0_117] : memref<1x15x15x64xf32, #tpu.memory_space<vmem>>, vector<1x1x13x64xf32>
    %98 = vector.shape_cast %97 : vector<1x1x13x64xf32> to vector<13x64xf32>
    %c0_118 = arith.constant 0 : index
    %c3_119 = arith.constant 3 : index
    %c0_120 = arith.constant 0 : index
    %c0_121 = arith.constant 0 : index
    %99 = vector.load %arg1[%c0_118, %c3_119, %c0_120, %c0_121] : memref<1x15x15x64xf32, #tpu.memory_space<vmem>>, vector<1x1x13x64xf32>
    %100 = vector.shape_cast %99 : vector<1x1x13x64xf32> to vector<13x64xf32>
    %c0_122 = arith.constant 0 : index
    %c3_123 = arith.constant 3 : index
    %c1_124 = arith.constant 1 : index
    %c0_125 = arith.constant 0 : index
    %101 = vector.load %arg1[%c0_122, %c3_123, %c1_124, %c0_125] : memref<1x15x15x64xf32, #tpu.memory_space<vmem>>, vector<1x1x13x64xf32>
    %102 = vector.shape_cast %101 : vector<1x1x13x64xf32> to vector<13x64xf32>
    %c0_126 = arith.constant 0 : index
    %c3_127 = arith.constant 3 : index
    %c2_128 = arith.constant 2 : index
    %c0_129 = arith.constant 0 : index
    %103 = vector.load %arg1[%c0_126, %c3_127, %c2_128, %c0_129] : memref<1x15x15x64xf32, #tpu.memory_space<vmem>>, vector<1x1x13x64xf32>
    %104 = vector.shape_cast %103 : vector<1x1x13x64xf32> to vector<13x64xf32>
    %c0_130 = arith.constant 0 : index
    %c4_131 = arith.constant 4 : index
    %c0_132 = arith.constant 0 : index
    %c0_133 = arith.constant 0 : index
    %105 = vector.load %arg1[%c0_130, %c4_131, %c0_132, %c0_133] : memref<1x15x15x64xf32, #tpu.memory_space<vmem>>, vector<1x1x13x64xf32>
    %106 = vector.shape_cast %105 : vector<1x1x13x64xf32> to vector<13x64xf32>
    %c0_134 = arith.constant 0 : index
    %c4_135 = arith.constant 4 : index
    %c1_136 = arith.constant 1 : index
    %c0_137 = arith.constant 0 : index
    %107 = vector.load %arg1[%c0_134, %c4_135, %c1_136, %c0_137] : memref<1x15x15x64xf32, #tpu.memory_space<vmem>>, vector<1x1x13x64xf32>
    %108 = vector.shape_cast %107 : vector<1x1x13x64xf32> to vector<13x64xf32>
    %c0_138 = arith.constant 0 : index
    %c4_139 = arith.constant 4 : index
    %c2_140 = arith.constant 2 : index
    %c0_141 = arith.constant 0 : index
    %109 = vector.load %arg1[%c0_138, %c4_139, %c2_140, %c0_141] : memref<1x15x15x64xf32, #tpu.memory_space<vmem>>, vector<1x1x13x64xf32>
    %110 = vector.shape_cast %109 : vector<1x1x13x64xf32> to vector<13x64xf32>
    %111 = tpu.concatenate %94, %96, %98, %100, %102, %104, %106, %108, %110 in 1 : vector<13x64xf32>, vector<13x64xf32>, vector<13x64xf32>, vector<13x64xf32>, vector<13x64xf32>, vector<13x64xf32>, vector<13x64xf32>, vector<13x64xf32>, vector<13x64xf32> -> vector<13x576xf32>
    %112 = arith.truncf %111 : vector<13x576xf32> to vector<13x576xbf16>
    %cst_142 = arith.constant dense<0.000000e+00> : vector<13x128xf32>
    %113 = tpu.matmul %112, %0, %cst_142 {dimension_numbers = #tpu.dot_dimension_numbers<[1], [0], [0], [1], [0, 0, 1, 1], [], []>} : vector<13x576xbf16>, vector<576x128xbf16>, vector<13x128xf32> -> vector<13x128xf32>
    %c0_143 = arith.constant 0 : index
    %c3_144 = arith.constant 3 : index
    %c0_145 = arith.constant 0 : index
    %c0_146 = arith.constant 0 : index
    %114 = vector.load %arg1[%c0_143, %c3_144, %c0_145, %c0_146] : memref<1x15x15x64xf32, #tpu.memory_space<vmem>>, vector<1x1x13x64xf32>
    %115 = vector.shape_cast %114 : vector<1x1x13x64xf32> to vector<13x64xf32>
    %c0_147 = arith.constant 0 : index
    %c3_148 = arith.constant 3 : index
    %c1_149 = arith.constant 1 : index
    %c0_150 = arith.constant 0 : index
    %116 = vector.load %arg1[%c0_147, %c3_148, %c1_149, %c0_150] : memref<1x15x15x64xf32, #tpu.memory_space<vmem>>, vector<1x1x13x64xf32>
    %117 = vector.shape_cast %116 : vector<1x1x13x64xf32> to vector<13x64xf32>
    %c0_151 = arith.constant 0 : index
    %c3_152 = arith.constant 3 : index
    %c2_153 = arith.constant 2 : index
    %c0_154 = arith.constant 0 : index
    %118 = vector.load %arg1[%c0_151, %c3_152, %c2_153, %c0_154] : memref<1x15x15x64xf32, #tpu.memory_space<vmem>>, vector<1x1x13x64xf32>
    %119 = vector.shape_cast %118 : vector<1x1x13x64xf32> to vector<13x64xf32>
    %c0_155 = arith.constant 0 : index
    %c4_156 = arith.constant 4 : index
    %c0_157 = arith.constant 0 : index
    %c0_158 = arith.constant 0 : index
    %120 = vector.load %arg1[%c0_155, %c4_156, %c0_157, %c0_158] : memref<1x15x15x64xf32, #tpu.memory_space<vmem>>, vector<1x1x13x64xf32>
    %121 = vector.shape_cast %120 : vector<1x1x13x64xf32> to vector<13x64xf32>
    %c0_159 = arith.constant 0 : index
    %c4_160 = arith.constant 4 : index
    %c1_161 = arith.constant 1 : index
    %c0_162 = arith.constant 0 : index
    %122 = vector.load %arg1[%c0_159, %c4_160, %c1_161, %c0_162] : memref<1x15x15x64xf32, #tpu.memory_space<vmem>>, vector<1x1x13x64xf32>
    %123 = vector.shape_cast %122 : vector<1x1x13x64xf32> to vector<13x64xf32>
    %c0_163 = arith.constant 0 : index
    %c4_164 = arith.constant 4 : index
    %c2_165 = arith.constant 2 : index
    %c0_166 = arith.constant 0 : index
    %124 = vector.load %arg1[%c0_163, %c4_164, %c2_165, %c0_166] : memref<1x15x15x64xf32, #tpu.memory_space<vmem>>, vector<1x1x13x64xf32>
    %125 = vector.shape_cast %124 : vector<1x1x13x64xf32> to vector<13x64xf32>
    %c0_167 = arith.constant 0 : index
    %c5_168 = arith.constant 5 : index
    %c0_169 = arith.constant 0 : index
    %c0_170 = arith.constant 0 : index
    %126 = vector.load %arg1[%c0_167, %c5_168, %c0_169, %c0_170] : memref<1x15x15x64xf32, #tpu.memory_space<vmem>>, vector<1x1x13x64xf32>
    %127 = vector.shape_cast %126 : vector<1x1x13x64xf32> to vector<13x64xf32>
    %c0_171 = arith.constant 0 : index
    %c5_172 = arith.constant 5 : index
    %c1_173 = arith.constant 1 : index
    %c0_174 = arith.constant 0 : index
    %128 = vector.load %arg1[%c0_171, %c5_172, %c1_173, %c0_174] : memref<1x15x15x64xf32, #tpu.memory_space<vmem>>, vector<1x1x13x64xf32>
    %129 = vector.shape_cast %128 : vector<1x1x13x64xf32> to vector<13x64xf32>
    %c0_175 = arith.constant 0 : index
    %c5_176 = arith.constant 5 : index
    %c2_177 = arith.constant 2 : index
    %c0_178 = arith.constant 0 : index
    %130 = vector.load %arg1[%c0_175, %c5_176, %c2_177, %c0_178] : memref<1x15x15x64xf32, #tpu.memory_space<vmem>>, vector<1x1x13x64xf32>
    %131 = vector.shape_cast %130 : vector<1x1x13x64xf32> to vector<13x64xf32>
    %132 = tpu.concatenate %115, %117, %119, %121, %123, %125, %127, %129, %131 in 1 : vector<13x64xf32>, vector<13x64xf32>, vector<13x64xf32>, vector<13x64xf32>, vector<13x64xf32>, vector<13x64xf32>, vector<13x64xf32>, vector<13x64xf32>, vector<13x64xf32> -> vector<13x576xf32>
    %133 = arith.truncf %132 : vector<13x576xf32> to vector<13x576xbf16>
    %cst_179 = arith.constant dense<0.000000e+00> : vector<13x128xf32>
    %134 = tpu.matmul %133, %0, %cst_179 {dimension_numbers = #tpu.dot_dimension_numbers<[1], [0], [0], [1], [0, 0, 1, 1], [], []>} : vector<13x576xbf16>, vector<576x128xbf16>, vector<13x128xf32> -> vector<13x128xf32>
    %135 = arith.maximumf %113, %134 : vector<13x128xf32>
    %136 = vector.broadcast %1 : vector<1x128xf32> to vector<13x128xf32>
    %137 = arith.addf %135, %136 : vector<13x128xf32>
    %cst_180 = arith.constant 0.000000e+00 : f32
    %138 = vector.broadcast %cst_180 : f32 to vector<13x128xf32>
    %139 = arith.maximumf %137, %138 : vector<13x128xf32>
    %140 = vector.extract_strided_slice %139 {offsets = [0, 0], sizes = [1, 128], strides = [1, 1]} : vector<13x128xf32> to vector<1x128xf32>
    %141 = vector.extract_strided_slice %139 {offsets = [1, 0], sizes = [1, 128], strides = [1, 1]} : vector<13x128xf32> to vector<1x128xf32>
    %142 = arith.maximumf %140, %141 : vector<1x128xf32>
    %c1_181 = arith.constant 1 : index
    %c0_182 = arith.constant 0 : index
    %c0_183 = arith.constant 0 : index
    %143 = vector.load %arg13[%c1_181, %c0_182, %c0_183] : memref<6x6x128xf32, #tpu.memory_space<vmem>>, vector<1x1x128xf32>
    %144 = vector.shape_cast %143 : vector<1x1x128xf32> to vector<1x128xf32>
    %145 = vector.shape_cast %142 : vector<1x128xf32> to vector<1x1x128xf32>
    tpu.vector_store %arg13[%c1_181, %c0_182, %c0_183], %145 {strides = array<i32>} : memref<6x6x128xf32, #tpu.memory_space<vmem>>, vector<1x1x128xf32>,
    %146 = vector.extract_strided_slice %139 {offsets = [2, 0], sizes = [1, 128], strides = [1, 1]} : vector<13x128xf32> to vector<1x128xf32>
    %147 = vector.extract_strided_slice %139 {offsets = [3, 0], sizes = [1, 128], strides = [1, 1]} : vector<13x128xf32> to vector<1x128xf32>
    %148 = arith.maximumf %146, %147 : vector<1x128xf32>
    %c1_184 = arith.constant 1 : index
    %c1_185 = arith.constant 1 : index
    %c0_186 = arith.constant 0 : index
    %149 = vector.load %arg13[%c1_184, %c1_185, %c0_186] : memref<6x6x128xf32, #tpu.memory_space<vmem>>, vector<1x1x128xf32>
    %150 = vector.shape_cast %149 : vector<1x1x128xf32> to vector<1x128xf32>
    %151 = vector.shape_cast %148 : vector<1x128xf32> to vector<1x1x128xf32>
    tpu.vector_store %arg13[%c1_184, %c1_185, %c0_186], %151 {strides = array<i32>} : memref<6x6x128xf32, #tpu.memory_space<vmem>>, vector<1x1x128xf32>,
    %152 = vector.extract_strided_slice %139 {offsets = [4, 0], sizes = [1, 128], strides = [1, 1]} : vector<13x128xf32> to vector<1x128xf32>
    %153 = vector.extract_strided_slice %139 {offsets = [5, 0], sizes = [1, 128], strides = [1, 1]} : vector<13x128xf32> to vector<1x128xf32>
    %154 = arith.maximumf %152, %153 : vector<1x128xf32>
    %c1_187 = arith.constant 1 : index
    %c2_188 = arith.constant 2 : index
    %c0_189 = arith.constant 0 : index
    %155 = vector.load %arg13[%c1_187, %c2_188, %c0_189] : memref<6x6x128xf32, #tpu.memory_space<vmem>>, vector<1x1x128xf32>
    %156 = vector.shape_cast %155 : vector<1x1x128xf32> to vector<1x128xf32>
    %157 = vector.shape_cast %154 : vector<1x128xf32> to vector<1x1x128xf32>
    tpu.vector_store %arg13[%c1_187, %c2_188, %c0_189], %157 {strides = array<i32>} : memref<6x6x128xf32, #tpu.memory_space<vmem>>, vector<1x1x128xf32>,
    %158 = vector.extract_strided_slice %139 {offsets = [6, 0], sizes = [1, 128], strides = [1, 1]} : vector<13x128xf32> to vector<1x128xf32>
    %159 = vector.extract_strided_slice %139 {offsets = [7, 0], sizes = [1, 128], strides = [1, 1]} : vector<13x128xf32> to vector<1x128xf32>
    %160 = arith.maximumf %158, %159 : vector<1x128xf32>
    %c1_190 = arith.constant 1 : index
    %c3_191 = arith.constant 3 : index
    %c0_192 = arith.constant 0 : index
    %161 = vector.load %arg13[%c1_190, %c3_191, %c0_192] : memref<6x6x128xf32, #tpu.memory_space<vmem>>, vector<1x1x128xf32>
    %162 = vector.shape_cast %161 : vector<1x1x128xf32> to vector<1x128xf32>
    %163 = vector.shape_cast %160 : vector<1x128xf32> to vector<1x1x128xf32>
    tpu.vector_store %arg13[%c1_190, %c3_191, %c0_192], %163 {strides = array<i32>} : memref<6x6x128xf32, #tpu.memory_space<vmem>>, vector<1x1x128xf32>,
    %164 = vector.extract_strided_slice %139 {offsets = [8, 0], sizes = [1, 128], strides = [1, 1]} : vector<13x128xf32> to vector<1x128xf32>
    %165 = vector.extract_strided_slice %139 {offsets = [9, 0], sizes = [1, 128], strides = [1, 1]} : vector<13x128xf32> to vector<1x128xf32>
    %166 = arith.maximumf %164, %165 : vector<1x128xf32>
    %c1_193 = arith.constant 1 : index
    %c4_194 = arith.constant 4 : index
    %c0_195 = arith.constant 0 : index
    %167 = vector.load %arg13[%c1_193, %c4_194, %c0_195] : memref<6x6x128xf32, #tpu.memory_space<vmem>>, vector<1x1x128xf32>
    %168 = vector.shape_cast %167 : vector<1x1x128xf32> to vector<1x128xf32>
    %169 = vector.shape_cast %166 : vector<1x128xf32> to vector<1x1x128xf32>
    tpu.vector_store %arg13[%c1_193, %c4_194, %c0_195], %169 {strides = array<i32>} : memref<6x6x128xf32, #tpu.memory_space<vmem>>, vector<1x1x128xf32>,
    %170 = vector.extract_strided_slice %139 {offsets = [10, 0], sizes = [1, 128], strides = [1, 1]} : vector<13x128xf32> to vector<1x128xf32>
    %171 = vector.extract_strided_slice %139 {offsets = [11, 0], sizes = [1, 128], strides = [1, 1]} : vector<13x128xf32> to vector<1x128xf32>
    %172 = arith.maximumf %170, %171 : vector<1x128xf32>
    %c1_196 = arith.constant 1 : index
    %c5_197 = arith.constant 5 : index
    %c0_198 = arith.constant 0 : index
    %173 = vector.load %arg13[%c1_196, %c5_197, %c0_198] : memref<6x6x128xf32, #tpu.memory_space<vmem>>, vector<1x1x128xf32>
    %174 = vector.shape_cast %173 : vector<1x1x128xf32> to vector<1x128xf32>
    %175 = vector.shape_cast %172 : vector<1x128xf32> to vector<1x1x128xf32>
    tpu.vector_store %arg13[%c1_196, %c5_197, %c0_198], %175 {strides = array<i32>} : memref<6x6x128xf32, #tpu.memory_space<vmem>>, vector<1x1x128xf32>,
    %c0_199 = arith.constant 0 : index
    %c4_200 = arith.constant 4 : index
    %c0_201 = arith.constant 0 : index
    %c0_202 = arith.constant 0 : index
    %176 = vector.load %arg1[%c0_199, %c4_200, %c0_201, %c0_202] : memref<1x15x15x64xf32, #tpu.memory_space<vmem>>, vector<1x1x13x64xf32>
    %177 = vector.shape_cast %176 : vector<1x1x13x64xf32> to vector<13x64xf32>
    %c0_203 = arith.constant 0 : index
    %c4_204 = arith.constant 4 : index
    %c1_205 = arith.constant 1 : index
    %c0_206 = arith.constant 0 : index
    %178 = vector.load %arg1[%c0_203, %c4_204, %c1_205, %c0_206] : memref<1x15x15x64xf32, #tpu.memory_space<vmem>>, vector<1x1x13x64xf32>
    %179 = vector.shape_cast %178 : vector<1x1x13x64xf32> to vector<13x64xf32>
    %c0_207 = arith.constant 0 : index
    %c4_208 = arith.constant 4 : index
    %c2_209 = arith.constant 2 : index
    %c0_210 = arith.constant 0 : index
    %180 = vector.load %arg1[%c0_207, %c4_208, %c2_209, %c0_210] : memref<1x15x15x64xf32, #tpu.memory_space<vmem>>, vector<1x1x13x64xf32>
    %181 = vector.shape_cast %180 : vector<1x1x13x64xf32> to vector<13x64xf32>
    %c0_211 = arith.constant 0 : index
    %c5_212 = arith.constant 5 : index
    %c0_213 = arith.constant 0 : index
    %c0_214 = arith.constant 0 : index
    %182 = vector.load %arg1[%c0_211, %c5_212, %c0_213, %c0_214] : memref<1x15x15x64xf32, #tpu.memory_space<vmem>>, vector<1x1x13x64xf32>
    %183 = vector.shape_cast %182 : vector<1x1x13x64xf32> to vector<13x64xf32>
    %c0_215 = arith.constant 0 : index
    %c5_216 = arith.constant 5 : index
    %c1_217 = arith.constant 1 : index
    %c0_218 = arith.constant 0 : index
    %184 = vector.load %arg1[%c0_215, %c5_216, %c1_217, %c0_218] : memref<1x15x15x64xf32, #tpu.memory_space<vmem>>, vector<1x1x13x64xf32>
    %185 = vector.shape_cast %184 : vector<1x1x13x64xf32> to vector<13x64xf32>
    %c0_219 = arith.constant 0 : index
    %c5_220 = arith.constant 5 : index
    %c2_221 = arith.constant 2 : index
    %c0_222 = arith.constant 0 : index
    %186 = vector.load %arg1[%c0_219, %c5_220, %c2_221, %c0_222] : memref<1x15x15x64xf32, #tpu.memory_space<vmem>>, vector<1x1x13x64xf32>
    %187 = vector.shape_cast %186 : vector<1x1x13x64xf32> to vector<13x64xf32>
    %c0_223 = arith.constant 0 : index
    %c6 = arith.constant 6 : index
    %c0_224 = arith.constant 0 : index
    %c0_225 = arith.constant 0 : index
    %188 = vector.load %arg1[%c0_223, %c6, %c0_224, %c0_225] : memref<1x15x15x64xf32, #tpu.memory_space<vmem>>, vector<1x1x13x64xf32>
    %189 = vector.shape_cast %188 : vector<1x1x13x64xf32> to vector<13x64xf32>
    %c0_226 = arith.constant 0 : index
    %c6_227 = arith.constant 6 : index
    %c1_228 = arith.constant 1 : index
    %c0_229 = arith.constant 0 : index
    %190 = vector.load %arg1[%c0_226, %c6_227, %c1_228, %c0_229] : memref<1x15x15x64xf32, #tpu.memory_space<vmem>>, vector<1x1x13x64xf32>
    %191 = vector.shape_cast %190 : vector<1x1x13x64xf32> to vector<13x64xf32>
    %c0_230 = arith.constant 0 : index
    %c6_231 = arith.constant 6 : index
    %c2_232 = arith.constant 2 : index
    %c0_233 = arith.constant 0 : index
    %192 = vector.load %arg1[%c0_230, %c6_231, %c2_232, %c0_233] : memref<1x15x15x64xf32, #tpu.memory_space<vmem>>, vector<1x1x13x64xf32>
    %193 = vector.shape_cast %192 : vector<1x1x13x64xf32> to vector<13x64xf32>
    %194 = tpu.concatenate %177, %179, %181, %183, %185, %187, %189, %191, %193 in 1 : vector<13x64xf32>, vector<13x64xf32>, vector<13x64xf32>, vector<13x64xf32>, vector<13x64xf32>, vector<13x64xf32>, vector<13x64xf32>, vector<13x64xf32>, vector<13x64xf32> -> vector<13x576xf32>
    %195 = arith.truncf %194 : vector<13x576xf32> to vector<13x576xbf16>
    %cst_234 = arith.constant dense<0.000000e+00> : vector<13x128xf32>
    %196 = tpu.matmul %195, %0, %cst_234 {dimension_numbers = #tpu.dot_dimension_numbers<[1], [0], [0], [1], [0, 0, 1, 1], [], []>} : vector<13x576xbf16>, vector<576x128xbf16>, vector<13x128xf32> -> vector<13x128xf32>
    %c0_235 = arith.constant 0 : index
    %c5_236 = arith.constant 5 : index
    %c0_237 = arith.constant 0 : index
    %c0_238 = arith.constant 0 : index
    %197 = vector.load %arg1[%c0_235, %c5_236, %c0_237, %c0_238] : memref<1x15x15x64xf32, #tpu.memory_space<vmem>>, vector<1x1x13x64xf32>
    %198 = vector.shape_cast %197 : vector<1x1x13x64xf32> to vector<13x64xf32>
    %c0_239 = arith.constant 0 : index
    %c5_240 = arith.constant 5 : index
    %c1_241 = arith.constant 1 : index
    %c0_242 = arith.constant 0 : index
    %199 = vector.load %arg1[%c0_239, %c5_240, %c1_241, %c0_242] : memref<1x15x15x64xf32, #tpu.memory_space<vmem>>, vector<1x1x13x64xf32>
    %200 = vector.shape_cast %199 : vector<1x1x13x64xf32> to vector<13x64xf32>
    %c0_243 = arith.constant 0 : index
    %c5_244 = arith.constant 5 : index
    %c2_245 = arith.constant 2 : index
    %c0_246 = arith.constant 0 : index
    %201 = vector.load %arg1[%c0_243, %c5_244, %c2_245, %c0_246] : memref<1x15x15x64xf32, #tpu.memory_space<vmem>>, vector<1x1x13x64xf32>
    %202 = vector.shape_cast %201 : vector<1x1x13x64xf32> to vector<13x64xf32>
    %c0_247 = arith.constant 0 : index
    %c6_248 = arith.constant 6 : index
    %c0_249 = arith.constant 0 : index
    %c0_250 = arith.constant 0 : index
    %203 = vector.load %arg1[%c0_247, %c6_248, %c0_249, %c0_250] : memref<1x15x15x64xf32, #tpu.memory_space<vmem>>, vector<1x1x13x64xf32>
    %204 = vector.shape_cast %203 : vector<1x1x13x64xf32> to vector<13x64xf32>
    %c0_251 = arith.constant 0 : index
    %c6_252 = arith.constant 6 : index
    %c1_253 = arith.constant 1 : index
    %c0_254 = arith.constant 0 : index
    %205 = vector.load %arg1[%c0_251, %c6_252, %c1_253, %c0_254] : memref<1x15x15x64xf32, #tpu.memory_space<vmem>>, vector<1x1x13x64xf32>
    %206 = vector.shape_cast %205 : vector<1x1x13x64xf32> to vector<13x64xf32>
    %c0_255 = arith.constant 0 : index
    %c6_256 = arith.constant 6 : index
    %c2_257 = arith.constant 2 : index
    %c0_258 = arith.constant 0 : index
    %207 = vector.load %arg1[%c0_255, %c6_256, %c2_257, %c0_258] : memref<1x15x15x64xf32, #tpu.memory_space<vmem>>, vector<1x1x13x64xf32>
    %208 = vector.shape_cast %207 : vector<1x1x13x64xf32> to vector<13x64xf32>
    %c0_259 = arith.constant 0 : index
    %c7 = arith.constant 7 : index
    %c0_260 = arith.constant 0 : index
    %c0_261 = arith.constant 0 : index
    %209 = vector.load %arg1[%c0_259, %c7, %c0_260, %c0_261] : memref<1x15x15x64xf32, #tpu.memory_space<vmem>>, vector<1x1x13x64xf32>
    %210 = vector.shape_cast %209 : vector<1x1x13x64xf32> to vector<13x64xf32>
    %c0_262 = arith.constant 0 : index
    %c7_263 = arith.constant 7 : index
    %c1_264 = arith.constant 1 : index
    %c0_265 = arith.constant 0 : index
    %211 = vector.load %arg1[%c0_262, %c7_263, %c1_264, %c0_265] : memref<1x15x15x64xf32, #tpu.memory_space<vmem>>, vector<1x1x13x64xf32>
    %212 = vector.shape_cast %211 : vector<1x1x13x64xf32> to vector<13x64xf32>
    %c0_266 = arith.constant 0 : index
    %c7_267 = arith.constant 7 : index
    %c2_268 = arith.constant 2 : index
    %c0_269 = arith.constant 0 : index
    %213 = vector.load %arg1[%c0_266, %c7_267, %c2_268, %c0_269] : memref<1x15x15x64xf32, #tpu.memory_space<vmem>>, vector<1x1x13x64xf32>
    %214 = vector.shape_cast %213 : vector<1x1x13x64xf32> to vector<13x64xf32>
    %215 = tpu.concatenate %198, %200, %202, %204, %206, %208, %210, %212, %214 in 1 : vector<13x64xf32>, vector<13x64xf32>, vector<13x64xf32>, vector<13x64xf32>, vector<13x64xf32>, vector<13x64xf32>, vector<13x64xf32>, vector<13x64xf32>, vector<13x64xf32> -> vector<13x576xf32>
    %216 = arith.truncf %215 : vector<13x576xf32> to vector<13x576xbf16>
    %cst_270 = arith.constant dense<0.000000e+00> : vector<13x128xf32>
    %217 = tpu.matmul %216, %0, %cst_270 {dimension_numbers = #tpu.dot_dimension_numbers<[1], [0], [0], [1], [0, 0, 1, 1], [], []>} : vector<13x576xbf16>, vector<576x128xbf16>, vector<13x128xf32> -> vector<13x128xf32>
    %218 = arith.maximumf %196, %217 : vector<13x128xf32>
    %219 = vector.broadcast %1 : vector<1x128xf32> to vector<13x128xf32>
    %220 = arith.addf %218, %219 : vector<13x128xf32>
    %cst_271 = arith.constant 0.000000e+00 : f32
    %221 = vector.broadcast %cst_271 : f32 to vector<13x128xf32>
    %222 = arith.maximumf %220, %221 : vector<13x128xf32>
    %223 = vector.extract_strided_slice %222 {offsets = [0, 0], sizes = [1, 128], strides = [1, 1]} : vector<13x128xf32> to vector<1x128xf32>
    %224 = vector.extract_strided_slice %222 {offsets = [1, 0], sizes = [1, 128], strides = [1, 1]} : vector<13x128xf32> to vector<1x128xf32>
    %225 = arith.maximumf %223, %224 : vector<1x128xf32>
    %c2_272 = arith.constant 2 : index
    %c0_273 = arith.constant 0 : index
    %c0_274 = arith.constant 0 : index
    %226 = vector.load %arg13[%c2_272, %c0_273, %c0_274] : memref<6x6x128xf32, #tpu.memory_space<vmem>>, vector<1x1x128xf32>
    %227 = vector.shape_cast %226 : vector<1x1x128xf32> to vector<1x128xf32>
    %228 = vector.shape_cast %225 : vector<1x128xf32> to vector<1x1x128xf32>
    tpu.vector_store %arg13[%c2_272, %c0_273, %c0_274], %228 {strides = array<i32>} : memref<6x6x128xf32, #tpu.memory_space<vmem>>, vector<1x1x128xf32>,
    %229 = vector.extract_strided_slice %222 {offsets = [2, 0], sizes = [1, 128], strides = [1, 1]} : vector<13x128xf32> to vector<1x128xf32>
    %230 = vector.extract_strided_slice %222 {offsets = [3, 0], sizes = [1, 128], strides = [1, 1]} : vector<13x128xf32> to vector<1x128xf32>
    %231 = arith.maximumf %229, %230 : vector<1x128xf32>
    %c2_275 = arith.constant 2 : index
    %c1_276 = arith.constant 1 : index
    %c0_277 = arith.constant 0 : index
    %232 = vector.load %arg13[%c2_275, %c1_276, %c0_277] : memref<6x6x128xf32, #tpu.memory_space<vmem>>, vector<1x1x128xf32>
    %233 = vector.shape_cast %232 : vector<1x1x128xf32> to vector<1x128xf32>
    %234 = vector.shape_cast %231 : vector<1x128xf32> to vector<1x1x128xf32>
    tpu.vector_store %arg13[%c2_275, %c1_276, %c0_277], %234 {strides = array<i32>} : memref<6x6x128xf32, #tpu.memory_space<vmem>>, vector<1x1x128xf32>,
    %235 = vector.extract_strided_slice %222 {offsets = [4, 0], sizes = [1, 128], strides = [1, 1]} : vector<13x128xf32> to vector<1x128xf32>
    %236 = vector.extract_strided_slice %222 {offsets = [5, 0], sizes = [1, 128], strides = [1, 1]} : vector<13x128xf32> to vector<1x128xf32>
    %237 = arith.maximumf %235, %236 : vector<1x128xf32>
    %c2_278 = arith.constant 2 : index
    %c2_279 = arith.constant 2 : index
    %c0_280 = arith.constant 0 : index
    %238 = vector.load %arg13[%c2_278, %c2_279, %c0_280] : memref<6x6x128xf32, #tpu.memory_space<vmem>>, vector<1x1x128xf32>
    %239 = vector.shape_cast %238 : vector<1x1x128xf32> to vector<1x128xf32>
    %240 = vector.shape_cast %237 : vector<1x128xf32> to vector<1x1x128xf32>
    tpu.vector_store %arg13[%c2_278, %c2_279, %c0_280], %240 {strides = array<i32>} : memref<6x6x128xf32, #tpu.memory_space<vmem>>, vector<1x1x128xf32>,
    %241 = vector.extract_strided_slice %222 {offsets = [6, 0], sizes = [1, 128], strides = [1, 1]} : vector<13x128xf32> to vector<1x128xf32>
    %242 = vector.extract_strided_slice %222 {offsets = [7, 0], sizes = [1, 128], strides = [1, 1]} : vector<13x128xf32> to vector<1x128xf32>
    %243 = arith.maximumf %241, %242 : vector<1x128xf32>
    %c2_281 = arith.constant 2 : index
    %c3_282 = arith.constant 3 : index
    %c0_283 = arith.constant 0 : index
    %244 = vector.load %arg13[%c2_281, %c3_282, %c0_283] : memref<6x6x128xf32, #tpu.memory_space<vmem>>, vector<1x1x128xf32>
    %245 = vector.shape_cast %244 : vector<1x1x128xf32> to vector<1x128xf32>
    %246 = vector.shape_cast %243 : vector<1x128xf32> to vector<1x1x128xf32>
    tpu.vector_store %arg13[%c2_281, %c3_282, %c0_283], %246 {strides = array<i32>} : memref<6x6x128xf32, #tpu.memory_space<vmem>>, vector<1x1x128xf32>,
    %247 = vector.extract_strided_slice %222 {offsets = [8, 0], sizes = [1, 128], strides = [1, 1]} : vector<13x128xf32> to vector<1x128xf32>
    %248 = vector.extract_strided_slice %222 {offsets = [9, 0], sizes = [1, 128], strides = [1, 1]} : vector<13x128xf32> to vector<1x128xf32>
    %249 = arith.maximumf %247, %248 : vector<1x128xf32>
    %c2_284 = arith.constant 2 : index
    %c4_285 = arith.constant 4 : index
    %c0_286 = arith.constant 0 : index
    %250 = vector.load %arg13[%c2_284, %c4_285, %c0_286] : memref<6x6x128xf32, #tpu.memory_space<vmem>>, vector<1x1x128xf32>
    %251 = vector.shape_cast %250 : vector<1x1x128xf32> to vector<1x128xf32>
    %252 = vector.shape_cast %249 : vector<1x128xf32> to vector<1x1x128xf32>
    tpu.vector_store %arg13[%c2_284, %c4_285, %c0_286], %252 {strides = array<i32>} : memref<6x6x128xf32, #tpu.memory_space<vmem>>, vector<1x1x128xf32>,
    %253 = vector.extract_strided_slice %222 {offsets = [10, 0], sizes = [1, 128], strides = [1, 1]} : vector<13x128xf32> to vector<1x128xf32>
    %254 = vector.extract_strided_slice %222 {offsets = [11, 0], sizes = [1, 128], strides = [1, 1]} : vector<13x128xf32> to vector<1x128xf32>
    %255 = arith.maximumf %253, %254 : vector<1x128xf32>
    %c2_287 = arith.constant 2 : index
    %c5_288 = arith.constant 5 : index
    %c0_289 = arith.constant 0 : index
    %256 = vector.load %arg13[%c2_287, %c5_288, %c0_289] : memref<6x6x128xf32, #tpu.memory_space<vmem>>, vector<1x1x128xf32>
    %257 = vector.shape_cast %256 : vector<1x1x128xf32> to vector<1x128xf32>
    %258 = vector.shape_cast %255 : vector<1x128xf32> to vector<1x1x128xf32>
    tpu.vector_store %arg13[%c2_287, %c5_288, %c0_289], %258 {strides = array<i32>} : memref<6x6x128xf32, #tpu.memory_space<vmem>>, vector<1x1x128xf32>,
    %c0_290 = arith.constant 0 : index
    %c6_291 = arith.constant 6 : index
    %c0_292 = arith.constant 0 : index
    %c0_293 = arith.constant 0 : index
    %259 = vector.load %arg1[%c0_290, %c6_291, %c0_292, %c0_293] : memref<1x15x15x64xf32, #tpu.memory_space<vmem>>, vector<1x1x13x64xf32>
    %260 = vector.shape_cast %259 : vector<1x1x13x64xf32> to vector<13x64xf32>
    %c0_294 = arith.constant 0 : index
    %c6_295 = arith.constant 6 : index
    %c1_296 = arith.constant 1 : index
    %c0_297 = arith.constant 0 : index
    %261 = vector.load %arg1[%c0_294, %c6_295, %c1_296, %c0_297] : memref<1x15x15x64xf32, #tpu.memory_space<vmem>>, vector<1x1x13x64xf32>
    %262 = vector.shape_cast %261 : vector<1x1x13x64xf32> to vector<13x64xf32>
    %c0_298 = arith.constant 0 : index
    %c6_299 = arith.constant 6 : index
    %c2_300 = arith.constant 2 : index
    %c0_301 = arith.constant 0 : index
    %263 = vector.load %arg1[%c0_298, %c6_299, %c2_300, %c0_301] : memref<1x15x15x64xf32, #tpu.memory_space<vmem>>, vector<1x1x13x64xf32>
    %264 = vector.shape_cast %263 : vector<1x1x13x64xf32> to vector<13x64xf32>
    %c0_302 = arith.constant 0 : index
    %c7_303 = arith.constant 7 : index
    %c0_304 = arith.constant 0 : index
    %c0_305 = arith.constant 0 : index
    %265 = vector.load %arg1[%c0_302, %c7_303, %c0_304, %c0_305] : memref<1x15x15x64xf32, #tpu.memory_space<vmem>>, vector<1x1x13x64xf32>
    %266 = vector.shape_cast %265 : vector<1x1x13x64xf32> to vector<13x64xf32>
    %c0_306 = arith.constant 0 : index
    %c7_307 = arith.constant 7 : index
    %c1_308 = arith.constant 1 : index
    %c0_309 = arith.constant 0 : index
    %267 = vector.load %arg1[%c0_306, %c7_307, %c1_308, %c0_309] : memref<1x15x15x64xf32, #tpu.memory_space<vmem>>, vector<1x1x13x64xf32>
    %268 = vector.shape_cast %267 : vector<1x1x13x64xf32> to vector<13x64xf32>
    %c0_310 = arith.constant 0 : index
    %c7_311 = arith.constant 7 : index
    %c2_312 = arith.constant 2 : index
    %c0_313 = arith.constant 0 : index
    %269 = vector.load %arg1[%c0_310, %c7_311, %c2_312, %c0_313] : memref<1x15x15x64xf32, #tpu.memory_space<vmem>>, vector<1x1x13x64xf32>
    %270 = vector.shape_cast %269 : vector<1x1x13x64xf32> to vector<13x64xf32>
    %c0_314 = arith.constant 0 : index
    %c8 = arith.constant 8 : index
    %c0_315 = arith.constant 0 : index
    %c0_316 = arith.constant 0 : index
    %271 = vector.load %arg1[%c0_314, %c8, %c0_315, %c0_316] : memref<1x15x15x64xf32, #tpu.memory_space<vmem>>, vector<1x1x13x64xf32>
    %272 = vector.shape_cast %271 : vector<1x1x13x64xf32> to vector<13x64xf32>
    %c0_317 = arith.constant 0 : index
    %c8_318 = arith.constant 8 : index
    %c1_319 = arith.constant 1 : index
    %c0_320 = arith.constant 0 : index
    %273 = vector.load %arg1[%c0_317, %c8_318, %c1_319, %c0_320] : memref<1x15x15x64xf32, #tpu.memory_space<vmem>>, vector<1x1x13x64xf32>
    %274 = vector.shape_cast %273 : vector<1x1x13x64xf32> to vector<13x64xf32>
    %c0_321 = arith.constant 0 : index
    %c8_322 = arith.constant 8 : index
    %c2_323 = arith.constant 2 : index
    %c0_324 = arith.constant 0 : index
    %275 = vector.load %arg1[%c0_321, %c8_322, %c2_323, %c0_324] : memref<1x15x15x64xf32, #tpu.memory_space<vmem>>, vector<1x1x13x64xf32>
    %276 = vector.shape_cast %275 : vector<1x1x13x64xf32> to vector<13x64xf32>
    %277 = tpu.concatenate %260, %262, %264, %266, %268, %270, %272, %274, %276 in 1 : vector<13x64xf32>, vector<13x64xf32>, vector<13x64xf32>, vector<13x64xf32>, vector<13x64xf32>, vector<13x64xf32>, vector<13x64xf32>, vector<13x64xf32>, vector<13x64xf32> -> vector<13x576xf32>
    %278 = arith.truncf %277 : vector<13x576xf32> to vector<13x576xbf16>
    %cst_325 = arith.constant dense<0.000000e+00> : vector<13x128xf32>
    %279 = tpu.matmul %278, %0, %cst_325 {dimension_numbers = #tpu.dot_dimension_numbers<[1], [0], [0], [1], [0, 0, 1, 1], [], []>} : vector<13x576xbf16>, vector<576x128xbf16>, vector<13x128xf32> -> vector<13x128xf32>
    %c0_326 = arith.constant 0 : index
    %c7_327 = arith.constant 7 : index
    %c0_328 = arith.constant 0 : index
    %c0_329 = arith.constant 0 : index
    %280 = vector.load %arg1[%c0_326, %c7_327, %c0_328, %c0_329] : memref<1x15x15x64xf32, #tpu.memory_space<vmem>>, vector<1x1x13x64xf32>
    %281 = vector.shape_cast %280 : vector<1x1x13x64xf32> to vector<13x64xf32>
    %c0_330 = arith.constant 0 : index
    %c7_331 = arith.constant 7 : index
    %c1_332 = arith.constant 1 : index
    %c0_333 = arith.constant 0 : index
    %282 = vector.load %arg1[%c0_330, %c7_331, %c1_332, %c0_333] : memref<1x15x15x64xf32, #tpu.memory_space<vmem>>, vector<1x1x13x64xf32>
    %283 = vector.shape_cast %282 : vector<1x1x13x64xf32> to vector<13x64xf32>
    %c0_334 = arith.constant 0 : index
    %c7_335 = arith.constant 7 : index
    %c2_336 = arith.constant 2 : index
    %c0_337 = arith.constant 0 : index
    %284 = vector.load %arg1[%c0_334, %c7_335, %c2_336, %c0_337] : memref<1x15x15x64xf32, #tpu.memory_space<vmem>>, vector<1x1x13x64xf32>
    %285 = vector.shape_cast %284 : vector<1x1x13x64xf32> to vector<13x64xf32>
    %c0_338 = arith.constant 0 : index
    %c8_339 = arith.constant 8 : index
    %c0_340 = arith.constant 0 : index
    %c0_341 = arith.constant 0 : index
    %286 = vector.load %arg1[%c0_338, %c8_339, %c0_340, %c0_341] : memref<1x15x15x64xf32, #tpu.memory_space<vmem>>, vector<1x1x13x64xf32>
    %287 = vector.shape_cast %286 : vector<1x1x13x64xf32> to vector<13x64xf32>
    %c0_342 = arith.constant 0 : index
    %c8_343 = arith.constant 8 : index
    %c1_344 = arith.constant 1 : index
    %c0_345 = arith.constant 0 : index
    %288 = vector.load %arg1[%c0_342, %c8_343, %c1_344, %c0_345] : memref<1x15x15x64xf32, #tpu.memory_space<vmem>>, vector<1x1x13x64xf32>
    %289 = vector.shape_cast %288 : vector<1x1x13x64xf32> to vector<13x64xf32>
    %c0_346 = arith.constant 0 : index
    %c8_347 = arith.constant 8 : index
    %c2_348 = arith.constant 2 : index
    %c0_349 = arith.constant 0 : index
    %290 = vector.load %arg1[%c0_346, %c8_347, %c2_348, %c0_349] : memref<1x15x15x64xf32, #tpu.memory_space<vmem>>, vector<1x1x13x64xf32>
    %291 = vector.shape_cast %290 : vector<1x1x13x64xf32> to vector<13x64xf32>
    %c0_350 = arith.constant 0 : index
    %c9 = arith.constant 9 : index
    %c0_351 = arith.constant 0 : index
    %c0_352 = arith.constant 0 : index
    %292 = vector.load %arg1[%c0_350, %c9, %c0_351, %c0_352] : memref<1x15x15x64xf32, #tpu.memory_space<vmem>>, vector<1x1x13x64xf32>
    %293 = vector.shape_cast %292 : vector<1x1x13x64xf32> to vector<13x64xf32>
    %c0_353 = arith.constant 0 : index
    %c9_354 = arith.constant 9 : index
    %c1_355 = arith.constant 1 : index
    %c0_356 = arith.constant 0 : index
    %294 = vector.load %arg1[%c0_353, %c9_354, %c1_355, %c0_356] : memref<1x15x15x64xf32, #tpu.memory_space<vmem>>, vector<1x1x13x64xf32>
    %295 = vector.shape_cast %294 : vector<1x1x13x64xf32> to vector<13x64xf32>
    %c0_357 = arith.constant 0 : index
    %c9_358 = arith.constant 9 : index
    %c2_359 = arith.constant 2 : index
    %c0_360 = arith.constant 0 : index
    %296 = vector.load %arg1[%c0_357, %c9_358, %c2_359, %c0_360] : memref<1x15x15x64xf32, #tpu.memory_space<vmem>>, vector<1x1x13x64xf32>
    %297 = vector.shape_cast %296 : vector<1x1x13x64xf32> to vector<13x64xf32>
    %298 = tpu.concatenate %281, %283, %285, %287, %289, %291, %293, %295, %297 in 1 : vector<13x64xf32>, vector<13x64xf32>, vector<13x64xf32>, vector<13x64xf32>, vector<13x64xf32>, vector<13x64xf32>, vector<13x64xf32>, vector<13x64xf32>, vector<13x64xf32> -> vector<13x576xf32>
    %299 = arith.truncf %298 : vector<13x576xf32> to vector<13x576xbf16>
    %cst_361 = arith.constant dense<0.000000e+00> : vector<13x128xf32>
    %300 = tpu.matmul %299, %0, %cst_361 {dimension_numbers = #tpu.dot_dimension_numbers<[1], [0], [0], [1], [0, 0, 1, 1], [], []>} : vector<13x576xbf16>, vector<576x128xbf16>, vector<13x128xf32> -> vector<13x128xf32>
    %301 = arith.maximumf %279, %300 : vector<13x128xf32>
    %302 = vector.broadcast %1 : vector<1x128xf32> to vector<13x128xf32>
    %303 = arith.addf %301, %302 : vector<13x128xf32>
    %cst_362 = arith.constant 0.000000e+00 : f32
    %304 = vector.broadcast %cst_362 : f32 to vector<13x128xf32>
    %305 = arith.maximumf %303, %304 : vector<13x128xf32>
    %306 = vector.extract_strided_slice %305 {offsets = [0, 0], sizes = [1, 128], strides = [1, 1]} : vector<13x128xf32> to vector<1x128xf32>
    %307 = vector.extract_strided_slice %305 {offsets = [1, 0], sizes = [1, 128], strides = [1, 1]} : vector<13x128xf32> to vector<1x128xf32>
    %308 = arith.maximumf %306, %307 : vector<1x128xf32>
    %c3_363 = arith.constant 3 : index
    %c0_364 = arith.constant 0 : index
    %c0_365 = arith.constant 0 : index
    %309 = vector.load %arg13[%c3_363, %c0_364, %c0_365] : memref<6x6x128xf32, #tpu.memory_space<vmem>>, vector<1x1x128xf32>
    %310 = vector.shape_cast %309 : vector<1x1x128xf32> to vector<1x128xf32>
    %311 = vector.shape_cast %308 : vector<1x128xf32> to vector<1x1x128xf32>
    tpu.vector_store %arg13[%c3_363, %c0_364, %c0_365], %311 {strides = array<i32>} : memref<6x6x128xf32, #tpu.memory_space<vmem>>, vector<1x1x128xf32>,
    %312 = vector.extract_strided_slice %305 {offsets = [2, 0], sizes = [1, 128], strides = [1, 1]} : vector<13x128xf32> to vector<1x128xf32>
    %313 = vector.extract_strided_slice %305 {offsets = [3, 0], sizes = [1, 128], strides = [1, 1]} : vector<13x128xf32> to vector<1x128xf32>
    %314 = arith.maximumf %312, %313 : vector<1x128xf32>
    %c3_366 = arith.constant 3 : index
    %c1_367 = arith.constant 1 : index
    %c0_368 = arith.constant 0 : index
    %315 = vector.load %arg13[%c3_366, %c1_367, %c0_368] : memref<6x6x128xf32, #tpu.memory_space<vmem>>, vector<1x1x128xf32>
    %316 = vector.shape_cast %315 : vector<1x1x128xf32> to vector<1x128xf32>
    %317 = vector.shape_cast %314 : vector<1x128xf32> to vector<1x1x128xf32>
    tpu.vector_store %arg13[%c3_366, %c1_367, %c0_368], %317 {strides = array<i32>} : memref<6x6x128xf32, #tpu.memory_space<vmem>>, vector<1x1x128xf32>,
    %318 = vector.extract_strided_slice %305 {offsets = [4, 0], sizes = [1, 128], strides = [1, 1]} : vector<13x128xf32> to vector<1x128xf32>
    %319 = vector.extract_strided_slice %305 {offsets = [5, 0], sizes = [1, 128], strides = [1, 1]} : vector<13x128xf32> to vector<1x128xf32>
    %320 = arith.maximumf %318, %319 : vector<1x128xf32>
    %c3_369 = arith.constant 3 : index
    %c2_370 = arith.constant 2 : index
    %c0_371 = arith.constant 0 : index
    %321 = vector.load %arg13[%c3_369, %c2_370, %c0_371] : memref<6x6x128xf32, #tpu.memory_space<vmem>>, vector<1x1x128xf32>
    %322 = vector.shape_cast %321 : vector<1x1x128xf32> to vector<1x128xf32>
    %323 = vector.shape_cast %320 : vector<1x128xf32> to vector<1x1x128xf32>
    tpu.vector_store %arg13[%c3_369, %c2_370, %c0_371], %323 {strides = array<i32>} : memref<6x6x128xf32, #tpu.memory_space<vmem>>, vector<1x1x128xf32>,
    %324 = vector.extract_strided_slice %305 {offsets = [6, 0], sizes = [1, 128], strides = [1, 1]} : vector<13x128xf32> to vector<1x128xf32>
    %325 = vector.extract_strided_slice %305 {offsets = [7, 0], sizes = [1, 128], strides = [1, 1]} : vector<13x128xf32> to vector<1x128xf32>
    %326 = arith.maximumf %324, %325 : vector<1x128xf32>
    %c3_372 = arith.constant 3 : index
    %c3_373 = arith.constant 3 : index
    %c0_374 = arith.constant 0 : index
    %327 = vector.load %arg13[%c3_372, %c3_373, %c0_374] : memref<6x6x128xf32, #tpu.memory_space<vmem>>, vector<1x1x128xf32>
    %328 = vector.shape_cast %327 : vector<1x1x128xf32> to vector<1x128xf32>
    %329 = vector.shape_cast %326 : vector<1x128xf32> to vector<1x1x128xf32>
    tpu.vector_store %arg13[%c3_372, %c3_373, %c0_374], %329 {strides = array<i32>} : memref<6x6x128xf32, #tpu.memory_space<vmem>>, vector<1x1x128xf32>,
    %330 = vector.extract_strided_slice %305 {offsets = [8, 0], sizes = [1, 128], strides = [1, 1]} : vector<13x128xf32> to vector<1x128xf32>
    %331 = vector.extract_strided_slice %305 {offsets = [9, 0], sizes = [1, 128], strides = [1, 1]} : vector<13x128xf32> to vector<1x128xf32>
    %332 = arith.maximumf %330, %331 : vector<1x128xf32>
    %c3_375 = arith.constant 3 : index
    %c4_376 = arith.constant 4 : index
    %c0_377 = arith.constant 0 : index
    %333 = vector.load %arg13[%c3_375, %c4_376, %c0_377] : memref<6x6x128xf32, #tpu.memory_space<vmem>>, vector<1x1x128xf32>
    %334 = vector.shape_cast %333 : vector<1x1x128xf32> to vector<1x128xf32>
    %335 = vector.shape_cast %332 : vector<1x128xf32> to vector<1x1x128xf32>
    tpu.vector_store %arg13[%c3_375, %c4_376, %c0_377], %335 {strides = array<i32>} : memref<6x6x128xf32, #tpu.memory_space<vmem>>, vector<1x1x128xf32>,
    %336 = vector.extract_strided_slice %305 {offsets = [10, 0], sizes = [1, 128], strides = [1, 1]} : vector<13x128xf32> to vector<1x128xf32>
    %337 = vector.extract_strided_slice %305 {offsets = [11, 0], sizes = [1, 128], strides = [1, 1]} : vector<13x128xf32> to vector<1x128xf32>
    %338 = arith.maximumf %336, %337 : vector<1x128xf32>
    %c3_378 = arith.constant 3 : index
    %c5_379 = arith.constant 5 : index
    %c0_380 = arith.constant 0 : index
    %339 = vector.load %arg13[%c3_378, %c5_379, %c0_380] : memref<6x6x128xf32, #tpu.memory_space<vmem>>, vector<1x1x128xf32>
    %340 = vector.shape_cast %339 : vector<1x1x128xf32> to vector<1x128xf32>
    %341 = vector.shape_cast %338 : vector<1x128xf32> to vector<1x1x128xf32>
    tpu.vector_store %arg13[%c3_378, %c5_379, %c0_380], %341 {strides = array<i32>} : memref<6x6x128xf32, #tpu.memory_space<vmem>>, vector<1x1x128xf32>,
    %c0_381 = arith.constant 0 : index
    %c8_382 = arith.constant 8 : index
    %c0_383 = arith.constant 0 : index
    %c0_384 = arith.constant 0 : index
    %342 = vector.load %arg1[%c0_381, %c8_382, %c0_383, %c0_384] : memref<1x15x15x64xf32, #tpu.memory_space<vmem>>, vector<1x1x13x64xf32>
    %343 = vector.shape_cast %342 : vector<1x1x13x64xf32> to vector<13x64xf32>
    %c0_385 = arith.constant 0 : index
    %c8_386 = arith.constant 8 : index
    %c1_387 = arith.constant 1 : index
    %c0_388 = arith.constant 0 : index
    %344 = vector.load %arg1[%c0_385, %c8_386, %c1_387, %c0_388] : memref<1x15x15x64xf32, #tpu.memory_space<vmem>>, vector<1x1x13x64xf32>
    %345 = vector.shape_cast %344 : vector<1x1x13x64xf32> to vector<13x64xf32>
    %c0_389 = arith.constant 0 : index
    %c8_390 = arith.constant 8 : index
    %c2_391 = arith.constant 2 : index
    %c0_392 = arith.constant 0 : index
    %346 = vector.load %arg1[%c0_389, %c8_390, %c2_391, %c0_392] : memref<1x15x15x64xf32, #tpu.memory_space<vmem>>, vector<1x1x13x64xf32>
    %347 = vector.shape_cast %346 : vector<1x1x13x64xf32> to vector<13x64xf32>
    %c0_393 = arith.constant 0 : index
    %c9_394 = arith.constant 9 : index
    %c0_395 = arith.constant 0 : index
    %c0_396 = arith.constant 0 : index
    %348 = vector.load %arg1[%c0_393, %c9_394, %c0_395, %c0_396] : memref<1x15x15x64xf32, #tpu.memory_space<vmem>>, vector<1x1x13x64xf32>
    %349 = vector.shape_cast %348 : vector<1x1x13x64xf32> to vector<13x64xf32>
    %c0_397 = arith.constant 0 : index
    %c9_398 = arith.constant 9 : index
    %c1_399 = arith.constant 1 : index
    %c0_400 = arith.constant 0 : index
    %350 = vector.load %arg1[%c0_397, %c9_398, %c1_399, %c0_400] : memref<1x15x15x64xf32, #tpu.memory_space<vmem>>, vector<1x1x13x64xf32>
    %351 = vector.shape_cast %350 : vector<1x1x13x64xf32> to vector<13x64xf32>
    %c0_401 = arith.constant 0 : index
    %c9_402 = arith.constant 9 : index
    %c2_403 = arith.constant 2 : index
    %c0_404 = arith.constant 0 : index
    %352 = vector.load %arg1[%c0_401, %c9_402, %c2_403, %c0_404] : memref<1x15x15x64xf32, #tpu.memory_space<vmem>>, vector<1x1x13x64xf32>
    %353 = vector.shape_cast %352 : vector<1x1x13x64xf32> to vector<13x64xf32>
    %c0_405 = arith.constant 0 : index
    %c10 = arith.constant 10 : index
    %c0_406 = arith.constant 0 : index
    %c0_407 = arith.constant 0 : index
    %354 = vector.load %arg1[%c0_405, %c10, %c0_406, %c0_407] : memref<1x15x15x64xf32, #tpu.memory_space<vmem>>, vector<1x1x13x64xf32>
    %355 = vector.shape_cast %354 : vector<1x1x13x64xf32> to vector<13x64xf32>
    %c0_408 = arith.constant 0 : index
    %c10_409 = arith.constant 10 : index
    %c1_410 = arith.constant 1 : index
    %c0_411 = arith.constant 0 : index
    %356 = vector.load %arg1[%c0_408, %c10_409, %c1_410, %c0_411] : memref<1x15x15x64xf32, #tpu.memory_space<vmem>>, vector<1x1x13x64xf32>
    %357 = vector.shape_cast %356 : vector<1x1x13x64xf32> to vector<13x64xf32>
    %c0_412 = arith.constant 0 : index
    %c10_413 = arith.constant 10 : index
    %c2_414 = arith.constant 2 : index
    %c0_415 = arith.constant 0 : index
    %358 = vector.load %arg1[%c0_412, %c10_413, %c2_414, %c0_415] : memref<1x15x15x64xf32, #tpu.memory_space<vmem>>, vector<1x1x13x64xf32>
    %359 = vector.shape_cast %358 : vector<1x1x13x64xf32> to vector<13x64xf32>
    %360 = tpu.concatenate %343, %345, %347, %349, %351, %353, %355, %357, %359 in 1 : vector<13x64xf32>, vector<13x64xf32>, vector<13x64xf32>, vector<13x64xf32>, vector<13x64xf32>, vector<13x64xf32>, vector<13x64xf32>, vector<13x64xf32>, vector<13x64xf32> -> vector<13x576xf32>
    %361 = arith.truncf %360 : vector<13x576xf32> to vector<13x576xbf16>
    %cst_416 = arith.constant dense<0.000000e+00> : vector<13x128xf32>
    %362 = tpu.matmul %361, %0, %cst_416 {dimension_numbers = #tpu.dot_dimension_numbers<[1], [0], [0], [1], [0, 0, 1, 1], [], []>} : vector<13x576xbf16>, vector<576x128xbf16>, vector<13x128xf32> -> vector<13x128xf32>
    %c0_417 = arith.constant 0 : index
    %c9_418 = arith.constant 9 : index
    %c0_419 = arith.constant 0 : index
    %c0_420 = arith.constant 0 : index
    %363 = vector.load %arg1[%c0_417, %c9_418, %c0_419, %c0_420] : memref<1x15x15x64xf32, #tpu.memory_space<vmem>>, vector<1x1x13x64xf32>
    %364 = vector.shape_cast %363 : vector<1x1x13x64xf32> to vector<13x64xf32>
    %c0_421 = arith.constant 0 : index
    %c9_422 = arith.constant 9 : index
    %c1_423 = arith.constant 1 : index
    %c0_424 = arith.constant 0 : index
    %365 = vector.load %arg1[%c0_421, %c9_422, %c1_423, %c0_424] : memref<1x15x15x64xf32, #tpu.memory_space<vmem>>, vector<1x1x13x64xf32>
    %366 = vector.shape_cast %365 : vector<1x1x13x64xf32> to vector<13x64xf32>
    %c0_425 = arith.constant 0 : index
    %c9_426 = arith.constant 9 : index
    %c2_427 = arith.constant 2 : index
    %c0_428 = arith.constant 0 : index
    %367 = vector.load %arg1[%c0_425, %c9_426, %c2_427, %c0_428] : memref<1x15x15x64xf32, #tpu.memory_space<vmem>>, vector<1x1x13x64xf32>
    %368 = vector.shape_cast %367 : vector<1x1x13x64xf32> to vector<13x64xf32>
    %c0_429 = arith.constant 0 : index
    %c10_430 = arith.constant 10 : index
    %c0_431 = arith.constant 0 : index
    %c0_432 = arith.constant 0 : index
    %369 = vector.load %arg1[%c0_429, %c10_430, %c0_431, %c0_432] : memref<1x15x15x64xf32, #tpu.memory_space<vmem>>, vector<1x1x13x64xf32>
    %370 = vector.shape_cast %369 : vector<1x1x13x64xf32> to vector<13x64xf32>
    %c0_433 = arith.constant 0 : index
    %c10_434 = arith.constant 10 : index
    %c1_435 = arith.constant 1 : index
    %c0_436 = arith.constant 0 : index
    %371 = vector.load %arg1[%c0_433, %c10_434, %c1_435, %c0_436] : memref<1x15x15x64xf32, #tpu.memory_space<vmem>>, vector<1x1x13x64xf32>
    %372 = vector.shape_cast %371 : vector<1x1x13x64xf32> to vector<13x64xf32>
    %c0_437 = arith.constant 0 : index
    %c10_438 = arith.constant 10 : index
    %c2_439 = arith.constant 2 : index
    %c0_440 = arith.constant 0 : index
    %373 = vector.load %arg1[%c0_437, %c10_438, %c2_439, %c0_440] : memref<1x15x15x64xf32, #tpu.memory_space<vmem>>, vector<1x1x13x64xf32>
    %374 = vector.shape_cast %373 : vector<1x1x13x64xf32> to vector<13x64xf32>
    %c0_441 = arith.constant 0 : index
    %c11 = arith.constant 11 : index
    %c0_442 = arith.constant 0 : index
    %c0_443 = arith.constant 0 : index
    %375 = vector.load %arg1[%c0_441, %c11, %c0_442, %c0_443] : memref<1x15x15x64xf32, #tpu.memory_space<vmem>>, vector<1x1x13x64xf32>
    %376 = vector.shape_cast %375 : vector<1x1x13x64xf32> to vector<13x64xf32>
    %c0_444 = arith.constant 0 : index
    %c11_445 = arith.constant 11 : index
    %c1_446 = arith.constant 1 : index
    %c0_447 = arith.constant 0 : index
    %377 = vector.load %arg1[%c0_444, %c11_445, %c1_446, %c0_447] : memref<1x15x15x64xf32, #tpu.memory_space<vmem>>, vector<1x1x13x64xf32>
    %378 = vector.shape_cast %377 : vector<1x1x13x64xf32> to vector<13x64xf32>
    %c0_448 = arith.constant 0 : index
    %c11_449 = arith.constant 11 : index
    %c2_450 = arith.constant 2 : index
    %c0_451 = arith.constant 0 : index
    %379 = vector.load %arg1[%c0_448, %c11_449, %c2_450, %c0_451] : memref<1x15x15x64xf32, #tpu.memory_space<vmem>>, vector<1x1x13x64xf32>
    %380 = vector.shape_cast %379 : vector<1x1x13x64xf32> to vector<13x64xf32>
    %381 = tpu.concatenate %364, %366, %368, %370, %372, %374, %376, %378, %380 in 1 : vector<13x64xf32>, vector<13x64xf32>, vector<13x64xf32>, vector<13x64xf32>, vector<13x64xf32>, vector<13x64xf32>, vector<13x64xf32>, vector<13x64xf32>, vector<13x64xf32> -> vector<13x576xf32>
    %382 = arith.truncf %381 : vector<13x576xf32> to vector<13x576xbf16>
    %cst_452 = arith.constant dense<0.000000e+00> : vector<13x128xf32>
    %383 = tpu.matmul %382, %0, %cst_452 {dimension_numbers = #tpu.dot_dimension_numbers<[1], [0], [0], [1], [0, 0, 1, 1], [], []>} : vector<13x576xbf16>, vector<576x128xbf16>, vector<13x128xf32> -> vector<13x128xf32>
    %384 = arith.maximumf %362, %383 : vector<13x128xf32>
    %385 = vector.broadcast %1 : vector<1x128xf32> to vector<13x128xf32>
    %386 = arith.addf %384, %385 : vector<13x128xf32>
    %cst_453 = arith.constant 0.000000e+00 : f32
    %387 = vector.broadcast %cst_453 : f32 to vector<13x128xf32>
    %388 = arith.maximumf %386, %387 : vector<13x128xf32>
    %389 = vector.extract_strided_slice %388 {offsets = [0, 0], sizes = [1, 128], strides = [1, 1]} : vector<13x128xf32> to vector<1x128xf32>
    %390 = vector.extract_strided_slice %388 {offsets = [1, 0], sizes = [1, 128], strides = [1, 1]} : vector<13x128xf32> to vector<1x128xf32>
    %391 = arith.maximumf %389, %390 : vector<1x128xf32>
    %c4_454 = arith.constant 4 : index
    %c0_455 = arith.constant 0 : index
    %c0_456 = arith.constant 0 : index
    %392 = vector.load %arg13[%c4_454, %c0_455, %c0_456] : memref<6x6x128xf32, #tpu.memory_space<vmem>>, vector<1x1x128xf32>
    %393 = vector.shape_cast %392 : vector<1x1x128xf32> to vector<1x128xf32>
    %394 = vector.shape_cast %391 : vector<1x128xf32> to vector<1x1x128xf32>
    tpu.vector_store %arg13[%c4_454, %c0_455, %c0_456], %394 {strides = array<i32>} : memref<6x6x128xf32, #tpu.memory_space<vmem>>, vector<1x1x128xf32>,
    %395 = vector.extract_strided_slice %388 {offsets = [2, 0], sizes = [1, 128], strides = [1, 1]} : vector<13x128xf32> to vector<1x128xf32>
    %396 = vector.extract_strided_slice %388 {offsets = [3, 0], sizes = [1, 128], strides = [1, 1]} : vector<13x128xf32> to vector<1x128xf32>
    %397 = arith.maximumf %395, %396 : vector<1x128xf32>
    %c4_457 = arith.constant 4 : index
    %c1_458 = arith.constant 1 : index
    %c0_459 = arith.constant 0 : index
    %398 = vector.load %arg13[%c4_457, %c1_458, %c0_459] : memref<6x6x128xf32, #tpu.memory_space<vmem>>, vector<1x1x128xf32>
    %399 = vector.shape_cast %398 : vector<1x1x128xf32> to vector<1x128xf32>
    %400 = vector.shape_cast %397 : vector<1x128xf32> to vector<1x1x128xf32>
    tpu.vector_store %arg13[%c4_457, %c1_458, %c0_459], %400 {strides = array<i32>} : memref<6x6x128xf32, #tpu.memory_space<vmem>>, vector<1x1x128xf32>,
    %401 = vector.extract_strided_slice %388 {offsets = [4, 0], sizes = [1, 128], strides = [1, 1]} : vector<13x128xf32> to vector<1x128xf32>
    %402 = vector.extract_strided_slice %388 {offsets = [5, 0], sizes = [1, 128], strides = [1, 1]} : vector<13x128xf32> to vector<1x128xf32>
    %403 = arith.maximumf %401, %402 : vector<1x128xf32>
    %c4_460 = arith.constant 4 : index
    %c2_461 = arith.constant 2 : index
    %c0_462 = arith.constant 0 : index
    %404 = vector.load %arg13[%c4_460, %c2_461, %c0_462] : memref<6x6x128xf32, #tpu.memory_space<vmem>>, vector<1x1x128xf32>
    %405 = vector.shape_cast %404 : vector<1x1x128xf32> to vector<1x128xf32>
    %406 = vector.shape_cast %403 : vector<1x128xf32> to vector<1x1x128xf32>
    tpu.vector_store %arg13[%c4_460, %c2_461, %c0_462], %406 {strides = array<i32>} : memref<6x6x128xf32, #tpu.memory_space<vmem>>, vector<1x1x128xf32>,
    %407 = vector.extract_strided_slice %388 {offsets = [6, 0], sizes = [1, 128], strides = [1, 1]} : vector<13x128xf32> to vector<1x128xf32>
    %408 = vector.extract_strided_slice %388 {offsets = [7, 0], sizes = [1, 128], strides = [1, 1]} : vector<13x128xf32> to vector<1x128xf32>
    %409 = arith.maximumf %407, %408 : vector<1x128xf32>
    %c4_463 = arith.constant 4 : index
    %c3_464 = arith.constant 3 : index
    %c0_465 = arith.constant 0 : index
    %410 = vector.load %arg13[%c4_463, %c3_464, %c0_465] : memref<6x6x128xf32, #tpu.memory_space<vmem>>, vector<1x1x128xf32>
    %411 = vector.shape_cast %410 : vector<1x1x128xf32> to vector<1x128xf32>
    %412 = vector.shape_cast %409 : vector<1x128xf32> to vector<1x1x128xf32>
    tpu.vector_store %arg13[%c4_463, %c3_464, %c0_465], %412 {strides = array<i32>} : memref<6x6x128xf32, #tpu.memory_space<vmem>>, vector<1x1x128xf32>,
    %413 = vector.extract_strided_slice %388 {offsets = [8, 0], sizes = [1, 128], strides = [1, 1]} : vector<13x128xf32> to vector<1x128xf32>
    %414 = vector.extract_strided_slice %388 {offsets = [9, 0], sizes = [1, 128], strides = [1, 1]} : vector<13x128xf32> to vector<1x128xf32>
    %415 = arith.maximumf %413, %414 : vector<1x128xf32>
    %c4_466 = arith.constant 4 : index
    %c4_467 = arith.constant 4 : index
    %c0_468 = arith.constant 0 : index
    %416 = vector.load %arg13[%c4_466, %c4_467, %c0_468] : memref<6x6x128xf32, #tpu.memory_space<vmem>>, vector<1x1x128xf32>
    %417 = vector.shape_cast %416 : vector<1x1x128xf32> to vector<1x128xf32>
    %418 = vector.shape_cast %415 : vector<1x128xf32> to vector<1x1x128xf32>
    tpu.vector_store %arg13[%c4_466, %c4_467, %c0_468], %418 {strides = array<i32>} : memref<6x6x128xf32, #tpu.memory_space<vmem>>, vector<1x1x128xf32>,
    %419 = vector.extract_strided_slice %388 {offsets = [10, 0], sizes = [1, 128], strides = [1, 1]} : vector<13x128xf32> to vector<1x128xf32>
    %420 = vector.extract_strided_slice %388 {offsets = [11, 0], sizes = [1, 128], strides = [1, 1]} : vector<13x128xf32> to vector<1x128xf32>
    %421 = arith.maximumf %419, %420 : vector<1x128xf32>
    %c4_469 = arith.constant 4 : index
    %c5_470 = arith.constant 5 : index
    %c0_471 = arith.constant 0 : index
    %422 = vector.load %arg13[%c4_469, %c5_470, %c0_471] : memref<6x6x128xf32, #tpu.memory_space<vmem>>, vector<1x1x128xf32>
    %423 = vector.shape_cast %422 : vector<1x1x128xf32> to vector<1x128xf32>
    %424 = vector.shape_cast %421 : vector<1x128xf32> to vector<1x1x128xf32>
    tpu.vector_store %arg13[%c4_469, %c5_470, %c0_471], %424 {strides = array<i32>} : memref<6x6x128xf32, #tpu.memory_space<vmem>>, vector<1x1x128xf32>,
    %c0_472 = arith.constant 0 : index
    %c10_473 = arith.constant 10 : index
    %c0_474 = arith.constant 0 : index
    %c0_475 = arith.constant 0 : index
    %425 = vector.load %arg1[%c0_472, %c10_473, %c0_474, %c0_475] : memref<1x15x15x64xf32, #tpu.memory_space<vmem>>, vector<1x1x13x64xf32>
    %426 = vector.shape_cast %425 : vector<1x1x13x64xf32> to vector<13x64xf32>
    %c0_476 = arith.constant 0 : index
    %c10_477 = arith.constant 10 : index
    %c1_478 = arith.constant 1 : index
    %c0_479 = arith.constant 0 : index
    %427 = vector.load %arg1[%c0_476, %c10_477, %c1_478, %c0_479] : memref<1x15x15x64xf32, #tpu.memory_space<vmem>>, vector<1x1x13x64xf32>
    %428 = vector.shape_cast %427 : vector<1x1x13x64xf32> to vector<13x64xf32>
    %c0_480 = arith.constant 0 : index
    %c10_481 = arith.constant 10 : index
    %c2_482 = arith.constant 2 : index
    %c0_483 = arith.constant 0 : index
    %429 = vector.load %arg1[%c0_480, %c10_481, %c2_482, %c0_483] : memref<1x15x15x64xf32, #tpu.memory_space<vmem>>, vector<1x1x13x64xf32>
    %430 = vector.shape_cast %429 : vector<1x1x13x64xf32> to vector<13x64xf32>
    %c0_484 = arith.constant 0 : index
    %c11_485 = arith.constant 11 : index
    %c0_486 = arith.constant 0 : index
    %c0_487 = arith.constant 0 : index
    %431 = vector.load %arg1[%c0_484, %c11_485, %c0_486, %c0_487] : memref<1x15x15x64xf32, #tpu.memory_space<vmem>>, vector<1x1x13x64xf32>
    %432 = vector.shape_cast %431 : vector<1x1x13x64xf32> to vector<13x64xf32>
    %c0_488 = arith.constant 0 : index
    %c11_489 = arith.constant 11 : index
    %c1_490 = arith.constant 1 : index
    %c0_491 = arith.constant 0 : index
    %433 = vector.load %arg1[%c0_488, %c11_489, %c1_490, %c0_491] : memref<1x15x15x64xf32, #tpu.memory_space<vmem>>, vector<1x1x13x64xf32>
    %434 = vector.shape_cast %433 : vector<1x1x13x64xf32> to vector<13x64xf32>
    %c0_492 = arith.constant 0 : index
    %c11_493 = arith.constant 11 : index
    %c2_494 = arith.constant 2 : index
    %c0_495 = arith.constant 0 : index
    %435 = vector.load %arg1[%c0_492, %c11_493, %c2_494, %c0_495] : memref<1x15x15x64xf32, #tpu.memory_space<vmem>>, vector<1x1x13x64xf32>
    %436 = vector.shape_cast %435 : vector<1x1x13x64xf32> to vector<13x64xf32>
    %c0_496 = arith.constant 0 : index
    %c12 = arith.constant 12 : index
    %c0_497 = arith.constant 0 : index
    %c0_498 = arith.constant 0 : index
    %437 = vector.load %arg1[%c0_496, %c12, %c0_497, %c0_498] : memref<1x15x15x64xf32, #tpu.memory_space<vmem>>, vector<1x1x13x64xf32>
    %438 = vector.shape_cast %437 : vector<1x1x13x64xf32> to vector<13x64xf32>
    %c0_499 = arith.constant 0 : index
    %c12_500 = arith.constant 12 : index
    %c1_501 = arith.constant 1 : index
    %c0_502 = arith.constant 0 : index
    %439 = vector.load %arg1[%c0_499, %c12_500, %c1_501, %c0_502] : memref<1x15x15x64xf32, #tpu.memory_space<vmem>>, vector<1x1x13x64xf32>
    %440 = vector.shape_cast %439 : vector<1x1x13x64xf32> to vector<13x64xf32>
    %c0_503 = arith.constant 0 : index
    %c12_504 = arith.constant 12 : index
    %c2_505 = arith.constant 2 : index
    %c0_506 = arith.constant 0 : index
    %441 = vector.load %arg1[%c0_503, %c12_504, %c2_505, %c0_506] : memref<1x15x15x64xf32, #tpu.memory_space<vmem>>, vector<1x1x13x64xf32>
    %442 = vector.shape_cast %441 : vector<1x1x13x64xf32> to vector<13x64xf32>
    %443 = tpu.concatenate %426, %428, %430, %432, %434, %436, %438, %440, %442 in 1 : vector<13x64xf32>, vector<13x64xf32>, vector<13x64xf32>, vector<13x64xf32>, vector<13x64xf32>, vector<13x64xf32>, vector<13x64xf32>, vector<13x64xf32>, vector<13x64xf32> -> vector<13x576xf32>
    %444 = arith.truncf %443 : vector<13x576xf32> to vector<13x576xbf16>
    %cst_507 = arith.constant dense<0.000000e+00> : vector<13x128xf32>
    %445 = tpu.matmul %444, %0, %cst_507 {dimension_numbers = #tpu.dot_dimension_numbers<[1], [0], [0], [1], [0, 0, 1, 1], [], []>} : vector<13x576xbf16>, vector<576x128xbf16>, vector<13x128xf32> -> vector<13x128xf32>
    %c0_508 = arith.constant 0 : index
    %c11_509 = arith.constant 11 : index
    %c0_510 = arith.constant 0 : index
    %c0_511 = arith.constant 0 : index
    %446 = vector.load %arg1[%c0_508, %c11_509, %c0_510, %c0_511] : memref<1x15x15x64xf32, #tpu.memory_space<vmem>>, vector<1x1x13x64xf32>
    %447 = vector.shape_cast %446 : vector<1x1x13x64xf32> to vector<13x64xf32>
    %c0_512 = arith.constant 0 : index
    %c11_513 = arith.constant 11 : index
    %c1_514 = arith.constant 1 : index
    %c0_515 = arith.constant 0 : index
    %448 = vector.load %arg1[%c0_512, %c11_513, %c1_514, %c0_515] : memref<1x15x15x64xf32, #tpu.memory_space<vmem>>, vector<1x1x13x64xf32>
    %449 = vector.shape_cast %448 : vector<1x1x13x64xf32> to vector<13x64xf32>
    %c0_516 = arith.constant 0 : index
    %c11_517 = arith.constant 11 : index
    %c2_518 = arith.constant 2 : index
    %c0_519 = arith.constant 0 : index
    %450 = vector.load %arg1[%c0_516, %c11_517, %c2_518, %c0_519] : memref<1x15x15x64xf32, #tpu.memory_space<vmem>>, vector<1x1x13x64xf32>
    %451 = vector.shape_cast %450 : vector<1x1x13x64xf32> to vector<13x64xf32>
    %c0_520 = arith.constant 0 : index
    %c12_521 = arith.constant 12 : index
    %c0_522 = arith.constant 0 : index
    %c0_523 = arith.constant 0 : index
    %452 = vector.load %arg1[%c0_520, %c12_521, %c0_522, %c0_523] : memref<1x15x15x64xf32, #tpu.memory_space<vmem>>, vector<1x1x13x64xf32>
    %453 = vector.shape_cast %452 : vector<1x1x13x64xf32> to vector<13x64xf32>
    %c0_524 = arith.constant 0 : index
    %c12_525 = arith.constant 12 : index
    %c1_526 = arith.constant 1 : index
    %c0_527 = arith.constant 0 : index
    %454 = vector.load %arg1[%c0_524, %c12_525, %c1_526, %c0_527] : memref<1x15x15x64xf32, #tpu.memory_space<vmem>>, vector<1x1x13x64xf32>
    %455 = vector.shape_cast %454 : vector<1x1x13x64xf32> to vector<13x64xf32>
    %c0_528 = arith.constant 0 : index
    %c12_529 = arith.constant 12 : index
    %c2_530 = arith.constant 2 : index
    %c0_531 = arith.constant 0 : index
    %456 = vector.load %arg1[%c0_528, %c12_529, %c2_530, %c0_531] : memref<1x15x15x64xf32, #tpu.memory_space<vmem>>, vector<1x1x13x64xf32>
    %457 = vector.shape_cast %456 : vector<1x1x13x64xf32> to vector<13x64xf32>
    %c0_532 = arith.constant 0 : index
    %c13 = arith.constant 13 : index
    %c0_533 = arith.constant 0 : index
    %c0_534 = arith.constant 0 : index
    %458 = vector.load %arg1[%c0_532, %c13, %c0_533, %c0_534] : memref<1x15x15x64xf32, #tpu.memory_space<vmem>>, vector<1x1x13x64xf32>
    %459 = vector.shape_cast %458 : vector<1x1x13x64xf32> to vector<13x64xf32>
    %c0_535 = arith.constant 0 : index
    %c13_536 = arith.constant 13 : index
    %c1_537 = arith.constant 1 : index
    %c0_538 = arith.constant 0 : index
    %460 = vector.load %arg1[%c0_535, %c13_536, %c1_537, %c0_538] : memref<1x15x15x64xf32, #tpu.memory_space<vmem>>, vector<1x1x13x64xf32>
    %461 = vector.shape_cast %460 : vector<1x1x13x64xf32> to vector<13x64xf32>
    %c0_539 = arith.constant 0 : index
    %c13_540 = arith.constant 13 : index
    %c2_541 = arith.constant 2 : index
    %c0_542 = arith.constant 0 : index
    %462 = vector.load %arg1[%c0_539, %c13_540, %c2_541, %c0_542] : memref<1x15x15x64xf32, #tpu.memory_space<vmem>>, vector<1x1x13x64xf32>
    %463 = vector.shape_cast %462 : vector<1x1x13x64xf32> to vector<13x64xf32>
    %464 = tpu.concatenate %447, %449, %451, %453, %455, %457, %459, %461, %463 in 1 : vector<13x64xf32>, vector<13x64xf32>, vector<13x64xf32>, vector<13x64xf32>, vector<13x64xf32>, vector<13x64xf32>, vector<13x64xf32>, vector<13x64xf32>, vector<13x64xf32> -> vector<13x576xf32>
    %465 = arith.truncf %464 : vector<13x576xf32> to vector<13x576xbf16>
    %cst_543 = arith.constant dense<0.000000e+00> : vector<13x128xf32>
    %466 = tpu.matmul %465, %0, %cst_543 {dimension_numbers = #tpu.dot_dimension_numbers<[1], [0], [0], [1], [0, 0, 1, 1], [], []>} : vector<13x576xbf16>, vector<576x128xbf16>, vector<13x128xf32> -> vector<13x128xf32>
    %467 = arith.maximumf %445, %466 : vector<13x128xf32>
    %468 = vector.broadcast %1 : vector<1x128xf32> to vector<13x128xf32>
    %469 = arith.addf %467, %468 : vector<13x128xf32>
    %cst_544 = arith.constant 0.000000e+00 : f32
    %470 = vector.broadcast %cst_544 : f32 to vector<13x128xf32>
    %471 = arith.maximumf %469, %470 : vector<13x128xf32>
    %472 = vector.extract_strided_slice %471 {offsets = [0, 0], sizes = [1, 128], strides = [1, 1]} : vector<13x128xf32> to vector<1x128xf32>
    %473 = vector.extract_strided_slice %471 {offsets = [1, 0], sizes = [1, 128], strides = [1, 1]} : vector<13x128xf32> to vector<1x128xf32>
    %474 = arith.maximumf %472, %473 : vector<1x128xf32>
    %c5_545 = arith.constant 5 : index
    %c0_546 = arith.constant 0 : index
    %c0_547 = arith.constant 0 : index
    %475 = vector.load %arg13[%c5_545, %c0_546, %c0_547] : memref<6x6x128xf32, #tpu.memory_space<vmem>>, vector<1x1x128xf32>
    %476 = vector.shape_cast %475 : vector<1x1x128xf32> to vector<1x128xf32>
    %477 = vector.shape_cast %474 : vector<1x128xf32> to vector<1x1x128xf32>
    tpu.vector_store %arg13[%c5_545, %c0_546, %c0_547], %477 {strides = array<i32>} : memref<6x6x128xf32, #tpu.memory_space<vmem>>, vector<1x1x128xf32>,
    %478 = vector.extract_strided_slice %471 {offsets = [2, 0], sizes = [1, 128], strides = [1, 1]} : vector<13x128xf32> to vector<1x128xf32>
    %479 = vector.extract_strided_slice %471 {offsets = [3, 0], sizes = [1, 128], strides = [1, 1]} : vector<13x128xf32> to vector<1x128xf32>
    %480 = arith.maximumf %478, %479 : vector<1x128xf32>
    %c5_548 = arith.constant 5 : index
    %c1_549 = arith.constant 1 : index
    %c0_550 = arith.constant 0 : index
    %481 = vector.load %arg13[%c5_548, %c1_549, %c0_550] : memref<6x6x128xf32, #tpu.memory_space<vmem>>, vector<1x1x128xf32>
    %482 = vector.shape_cast %481 : vector<1x1x128xf32> to vector<1x128xf32>
    %483 = vector.shape_cast %480 : vector<1x128xf32> to vector<1x1x128xf32>
    tpu.vector_store %arg13[%c5_548, %c1_549, %c0_550], %483 {strides = array<i32>} : memref<6x6x128xf32, #tpu.memory_space<vmem>>, vector<1x1x128xf32>,
    %484 = vector.extract_strided_slice %471 {offsets = [4, 0], sizes = [1, 128], strides = [1, 1]} : vector<13x128xf32> to vector<1x128xf32>
    %485 = vector.extract_strided_slice %471 {offsets = [5, 0], sizes = [1, 128], strides = [1, 1]} : vector<13x128xf32> to vector<1x128xf32>
    %486 = arith.maximumf %484, %485 : vector<1x128xf32>
    %c5_551 = arith.constant 5 : index
    %c2_552 = arith.constant 2 : index
    %c0_553 = arith.constant 0 : index
    %487 = vector.load %arg13[%c5_551, %c2_552, %c0_553] : memref<6x6x128xf32, #tpu.memory_space<vmem>>, vector<1x1x128xf32>
    %488 = vector.shape_cast %487 : vector<1x1x128xf32> to vector<1x128xf32>
    %489 = vector.shape_cast %486 : vector<1x128xf32> to vector<1x1x128xf32>
    tpu.vector_store %arg13[%c5_551, %c2_552, %c0_553], %489 {strides = array<i32>} : memref<6x6x128xf32, #tpu.memory_space<vmem>>, vector<1x1x128xf32>,
    %490 = vector.extract_strided_slice %471 {offsets = [6, 0], sizes = [1, 128], strides = [1, 1]} : vector<13x128xf32> to vector<1x128xf32>
    %491 = vector.extract_strided_slice %471 {offsets = [7, 0], sizes = [1, 128], strides = [1, 1]} : vector<13x128xf32> to vector<1x128xf32>
    %492 = arith.maximumf %490, %491 : vector<1x128xf32>
    %c5_554 = arith.constant 5 : index
    %c3_555 = arith.constant 3 : index
    %c0_556 = arith.constant 0 : index
    %493 = vector.load %arg13[%c5_554, %c3_555, %c0_556] : memref<6x6x128xf32, #tpu.memory_space<vmem>>, vector<1x1x128xf32>
    %494 = vector.shape_cast %493 : vector<1x1x128xf32> to vector<1x128xf32>
    %495 = vector.shape_cast %492 : vector<1x128xf32> to vector<1x1x128xf32>
    tpu.vector_store %arg13[%c5_554, %c3_555, %c0_556], %495 {strides = array<i32>} : memref<6x6x128xf32, #tpu.memory_space<vmem>>, vector<1x1x128xf32>,
    %496 = vector.extract_strided_slice %471 {offsets = [8, 0], sizes = [1, 128], strides = [1, 1]} : vector<13x128xf32> to vector<1x128xf32>
    %497 = vector.extract_strided_slice %471 {offsets = [9, 0], sizes = [1, 128], strides = [1, 1]} : vector<13x128xf32> to vector<1x128xf32>
    %498 = arith.maximumf %496, %497 : vector<1x128xf32>
    %c5_557 = arith.constant 5 : index
    %c4_558 = arith.constant 4 : index
    %c0_559 = arith.constant 0 : index
    %499 = vector.load %arg13[%c5_557, %c4_558, %c0_559] : memref<6x6x128xf32, #tpu.memory_space<vmem>>, vector<1x1x128xf32>
    %500 = vector.shape_cast %499 : vector<1x1x128xf32> to vector<1x128xf32>
    %501 = vector.shape_cast %498 : vector<1x128xf32> to vector<1x1x128xf32>
    tpu.vector_store %arg13[%c5_557, %c4_558, %c0_559], %501 {strides = array<i32>} : memref<6x6x128xf32, #tpu.memory_space<vmem>>, vector<1x1x128xf32>,
    %502 = vector.extract_strided_slice %471 {offsets = [10, 0], sizes = [1, 128], strides = [1, 1]} : vector<13x128xf32> to vector<1x128xf32>
    %503 = vector.extract_strided_slice %471 {offsets = [11, 0], sizes = [1, 128], strides = [1, 1]} : vector<13x128xf32> to vector<1x128xf32>
    %504 = arith.maximumf %502, %503 : vector<1x128xf32>
    %c5_560 = arith.constant 5 : index
    %c5_561 = arith.constant 5 : index
    %c0_562 = arith.constant 0 : index
    %505 = vector.load %arg13[%c5_560, %c5_561, %c0_562] : memref<6x6x128xf32, #tpu.memory_space<vmem>>, vector<1x1x128xf32>
    %506 = vector.shape_cast %505 : vector<1x1x128xf32> to vector<1x128xf32>
    %507 = vector.shape_cast %504 : vector<1x128xf32> to vector<1x1x128xf32>
    tpu.vector_store %arg13[%c5_560, %c5_561, %c0_562], %507 {strides = array<i32>} : memref<6x6x128xf32, #tpu.memory_space<vmem>>, vector<1x1x128xf32>,
    %c0_563 = arith.constant 0 : index
    %c0_564 = arith.constant 0 : index
    %c0_565 = arith.constant 0 : index
    %508 = vector.load %arg13[%c0_563, %c0_564, %c0_565] : memref<6x6x128xf32, #tpu.memory_space<vmem>>, vector<1x4x128xf32>
    %509 = vector.shape_cast %508 : vector<1x4x128xf32> to vector<4x128xf32>
    %c0_566 = arith.constant 0 : index
    %c1_567 = arith.constant 1 : index
    %c0_568 = arith.constant 0 : index
    %510 = vector.load %arg13[%c0_566, %c1_567, %c0_568] : memref<6x6x128xf32, #tpu.memory_space<vmem>>, vector<1x4x128xf32>
    %511 = vector.shape_cast %510 : vector<1x4x128xf32> to vector<4x128xf32>
    %c0_569 = arith.constant 0 : index
    %c2_570 = arith.constant 2 : index
    %c0_571 = arith.constant 0 : index
    %512 = vector.load %arg13[%c0_569, %c2_570, %c0_571] : memref<6x6x128xf32, #tpu.memory_space<vmem>>, vector<1x4x128xf32>
    %513 = vector.shape_cast %512 : vector<1x4x128xf32> to vector<4x128xf32>
    %c1_572 = arith.constant 1 : index
    %c0_573 = arith.constant 0 : index
    %c0_574 = arith.constant 0 : index
    %514 = vector.load %arg13[%c1_572, %c0_573, %c0_574] : memref<6x6x128xf32, #tpu.memory_space<vmem>>, vector<1x4x128xf32>
    %515 = vector.shape_cast %514 : vector<1x4x128xf32> to vector<4x128xf32>
    %c1_575 = arith.constant 1 : index
    %c1_576 = arith.constant 1 : index
    %c0_577 = arith.constant 0 : index
    %516 = vector.load %arg13[%c1_575, %c1_576, %c0_577] : memref<6x6x128xf32, #tpu.memory_space<vmem>>, vector<1x4x128xf32>
    %517 = vector.shape_cast %516 : vector<1x4x128xf32> to vector<4x128xf32>
    %c1_578 = arith.constant 1 : index
    %c2_579 = arith.constant 2 : index
    %c0_580 = arith.constant 0 : index
    %518 = vector.load %arg13[%c1_578, %c2_579, %c0_580] : memref<6x6x128xf32, #tpu.memory_space<vmem>>, vector<1x4x128xf32>
    %519 = vector.shape_cast %518 : vector<1x4x128xf32> to vector<4x128xf32>
    %c2_581 = arith.constant 2 : index
    %c0_582 = arith.constant 0 : index
    %c0_583 = arith.constant 0 : index
    %520 = vector.load %arg13[%c2_581, %c0_582, %c0_583] : memref<6x6x128xf32, #tpu.memory_space<vmem>>, vector<1x4x128xf32>
    %521 = vector.shape_cast %520 : vector<1x4x128xf32> to vector<4x128xf32>
    %c2_584 = arith.constant 2 : index
    %c1_585 = arith.constant 1 : index
    %c0_586 = arith.constant 0 : index
    %522 = vector.load %arg13[%c2_584, %c1_585, %c0_586] : memref<6x6x128xf32, #tpu.memory_space<vmem>>, vector<1x4x128xf32>
    %523 = vector.shape_cast %522 : vector<1x4x128xf32> to vector<4x128xf32>
    %c2_587 = arith.constant 2 : index
    %c2_588 = arith.constant 2 : index
    %c0_589 = arith.constant 0 : index
    %524 = vector.load %arg13[%c2_587, %c2_588, %c0_589] : memref<6x6x128xf32, #tpu.memory_space<vmem>>, vector<1x4x128xf32>
    %525 = vector.shape_cast %524 : vector<1x4x128xf32> to vector<4x128xf32>
    %526 = tpu.concatenate %509, %511, %513, %515, %517, %519, %521, %523, %525 in 1 : vector<4x128xf32>, vector<4x128xf32>, vector<4x128xf32>, vector<4x128xf32>, vector<4x128xf32>, vector<4x128xf32>, vector<4x128xf32>, vector<4x128xf32>, vector<4x128xf32> -> vector<4x1152xf32>
    %527 = arith.truncf %526 : vector<4x1152xf32> to vector<4x1152xbf16>
    %cst_590 = arith.constant dense<0.000000e+00> : vector<4x256xf32>
    %528 = tpu.matmul %527, %2, %cst_590 {dimension_numbers = #tpu.dot_dimension_numbers<[1], [0], [0], [1], [0, 0, 1, 1], [], []>} : vector<4x1152xbf16>, vector<1152x256xbf16>, vector<4x256xf32> -> vector<4x256xf32>
    %c1_591 = arith.constant 1 : index
    %c0_592 = arith.constant 0 : index
    %c0_593 = arith.constant 0 : index
    %529 = vector.load %arg13[%c1_591, %c0_592, %c0_593] : memref<6x6x128xf32, #tpu.memory_space<vmem>>, vector<1x4x128xf32>
    %530 = vector.shape_cast %529 : vector<1x4x128xf32> to vector<4x128xf32>
    %c1_594 = arith.constant 1 : index
    %c1_595 = arith.constant 1 : index
    %c0_596 = arith.constant 0 : index
    %531 = vector.load %arg13[%c1_594, %c1_595, %c0_596] : memref<6x6x128xf32, #tpu.memory_space<vmem>>, vector<1x4x128xf32>
    %532 = vector.shape_cast %531 : vector<1x4x128xf32> to vector<4x128xf32>
    %c1_597 = arith.constant 1 : index
    %c2_598 = arith.constant 2 : index
    %c0_599 = arith.constant 0 : index
    %533 = vector.load %arg13[%c1_597, %c2_598, %c0_599] : memref<6x6x128xf32, #tpu.memory_space<vmem>>, vector<1x4x128xf32>
    %534 = vector.shape_cast %533 : vector<1x4x128xf32> to vector<4x128xf32>
    %c2_600 = arith.constant 2 : index
    %c0_601 = arith.constant 0 : index
    %c0_602 = arith.constant 0 : index
    %535 = vector.load %arg13[%c2_600, %c0_601, %c0_602] : memref<6x6x128xf32, #tpu.memory_space<vmem>>, vector<1x4x128xf32>
    %536 = vector.shape_cast %535 : vector<1x4x128xf32> to vector<4x128xf32>
    %c2_603 = arith.constant 2 : index
    %c1_604 = arith.constant 1 : index
    %c0_605 = arith.constant 0 : index
    %537 = vector.load %arg13[%c2_603, %c1_604, %c0_605] : memref<6x6x128xf32, #tpu.memory_space<vmem>>, vector<1x4x128xf32>
    %538 = vector.shape_cast %537 : vector<1x4x128xf32> to vector<4x128xf32>
    %c2_606 = arith.constant 2 : index
    %c2_607 = arith.constant 2 : index
    %c0_608 = arith.constant 0 : index
    %539 = vector.load %arg13[%c2_606, %c2_607, %c0_608] : memref<6x6x128xf32, #tpu.memory_space<vmem>>, vector<1x4x128xf32>
    %540 = vector.shape_cast %539 : vector<1x4x128xf32> to vector<4x128xf32>
    %c3_609 = arith.constant 3 : index
    %c0_610 = arith.constant 0 : index
    %c0_611 = arith.constant 0 : index
    %541 = vector.load %arg13[%c3_609, %c0_610, %c0_611] : memref<6x6x128xf32, #tpu.memory_space<vmem>>, vector<1x4x128xf32>
    %542 = vector.shape_cast %541 : vector<1x4x128xf32> to vector<4x128xf32>
    %c3_612 = arith.constant 3 : index
    %c1_613 = arith.constant 1 : index
    %c0_614 = arith.constant 0 : index
    %543 = vector.load %arg13[%c3_612, %c1_613, %c0_614] : memref<6x6x128xf32, #tpu.memory_space<vmem>>, vector<1x4x128xf32>
    %544 = vector.shape_cast %543 : vector<1x4x128xf32> to vector<4x128xf32>
    %c3_615 = arith.constant 3 : index
    %c2_616 = arith.constant 2 : index
    %c0_617 = arith.constant 0 : index
    %545 = vector.load %arg13[%c3_615, %c2_616, %c0_617] : memref<6x6x128xf32, #tpu.memory_space<vmem>>, vector<1x4x128xf32>
    %546 = vector.shape_cast %545 : vector<1x4x128xf32> to vector<4x128xf32>
    %547 = tpu.concatenate %530, %532, %534, %536, %538, %540, %542, %544, %546 in 1 : vector<4x128xf32>, vector<4x128xf32>, vector<4x128xf32>, vector<4x128xf32>, vector<4x128xf32>, vector<4x128xf32>, vector<4x128xf32>, vector<4x128xf32>, vector<4x128xf32> -> vector<4x1152xf32>
    %548 = arith.truncf %547 : vector<4x1152xf32> to vector<4x1152xbf16>
    %cst_618 = arith.constant dense<0.000000e+00> : vector<4x256xf32>
    %549 = tpu.matmul %548, %2, %cst_618 {dimension_numbers = #tpu.dot_dimension_numbers<[1], [0], [0], [1], [0, 0, 1, 1], [], []>} : vector<4x1152xbf16>, vector<1152x256xbf16>, vector<4x256xf32> -> vector<4x256xf32>
    %550 = arith.maximumf %528, %549 : vector<4x256xf32>
    %551 = vector.broadcast %3 : vector<1x256xf32> to vector<4x256xf32>
    %552 = arith.addf %550, %551 : vector<4x256xf32>
    %cst_619 = arith.constant 0.000000e+00 : f32
    %553 = vector.broadcast %cst_619 : f32 to vector<4x256xf32>
    %554 = arith.maximumf %552, %553 : vector<4x256xf32>
    %555 = vector.extract_strided_slice %554 {offsets = [0, 0], sizes = [1, 256], strides = [1, 1]} : vector<4x256xf32> to vector<1x256xf32>
    %556 = vector.extract_strided_slice %554 {offsets = [1, 0], sizes = [1, 256], strides = [1, 1]} : vector<4x256xf32> to vector<1x256xf32>
    %557 = arith.maximumf %555, %556 : vector<1x256xf32>
    %558 = vector.extract_strided_slice %554 {offsets = [2, 0], sizes = [1, 256], strides = [1, 1]} : vector<4x256xf32> to vector<1x256xf32>
    %559 = vector.extract_strided_slice %554 {offsets = [3, 0], sizes = [1, 256], strides = [1, 1]} : vector<4x256xf32> to vector<1x256xf32>
    %560 = arith.maximumf %558, %559 : vector<1x256xf32>
    %c2_620 = arith.constant 2 : index
    %c0_621 = arith.constant 0 : index
    %c0_622 = arith.constant 0 : index
    %561 = vector.load %arg13[%c2_620, %c0_621, %c0_622] : memref<6x6x128xf32, #tpu.memory_space<vmem>>, vector<1x4x128xf32>
    %562 = vector.shape_cast %561 : vector<1x4x128xf32> to vector<4x128xf32>
    %c2_623 = arith.constant 2 : index
    %c1_624 = arith.constant 1 : index
    %c0_625 = arith.constant 0 : index
    %563 = vector.load %arg13[%c2_623, %c1_624, %c0_625] : memref<6x6x128xf32, #tpu.memory_space<vmem>>, vector<1x4x128xf32>
    %564 = vector.shape_cast %563 : vector<1x4x128xf32> to vector<4x128xf32>
    %c2_626 = arith.constant 2 : index
    %c2_627 = arith.constant 2 : index
    %c0_628 = arith.constant 0 : index
    %565 = vector.load %arg13[%c2_626, %c2_627, %c0_628] : memref<6x6x128xf32, #tpu.memory_space<vmem>>, vector<1x4x128xf32>
    %566 = vector.shape_cast %565 : vector<1x4x128xf32> to vector<4x128xf32>
    %c3_629 = arith.constant 3 : index
    %c0_630 = arith.constant 0 : index
    %c0_631 = arith.constant 0 : index
    %567 = vector.load %arg13[%c3_629, %c0_630, %c0_631] : memref<6x6x128xf32, #tpu.memory_space<vmem>>, vector<1x4x128xf32>
    %568 = vector.shape_cast %567 : vector<1x4x128xf32> to vector<4x128xf32>
    %c3_632 = arith.constant 3 : index
    %c1_633 = arith.constant 1 : index
    %c0_634 = arith.constant 0 : index
    %569 = vector.load %arg13[%c3_632, %c1_633, %c0_634] : memref<6x6x128xf32, #tpu.memory_space<vmem>>, vector<1x4x128xf32>
    %570 = vector.shape_cast %569 : vector<1x4x128xf32> to vector<4x128xf32>
    %c3_635 = arith.constant 3 : index
    %c2_636 = arith.constant 2 : index
    %c0_637 = arith.constant 0 : index
    %571 = vector.load %arg13[%c3_635, %c2_636, %c0_637] : memref<6x6x128xf32, #tpu.memory_space<vmem>>, vector<1x4x128xf32>
    %572 = vector.shape_cast %571 : vector<1x4x128xf32> to vector<4x128xf32>
    %c4_638 = arith.constant 4 : index
    %c0_639 = arith.constant 0 : index
    %c0_640 = arith.constant 0 : index
    %573 = vector.load %arg13[%c4_638, %c0_639, %c0_640] : memref<6x6x128xf32, #tpu.memory_space<vmem>>, vector<1x4x128xf32>
    %574 = vector.shape_cast %573 : vector<1x4x128xf32> to vector<4x128xf32>
    %c4_641 = arith.constant 4 : index
    %c1_642 = arith.constant 1 : index
    %c0_643 = arith.constant 0 : index
    %575 = vector.load %arg13[%c4_641, %c1_642, %c0_643] : memref<6x6x128xf32, #tpu.memory_space<vmem>>, vector<1x4x128xf32>
    %576 = vector.shape_cast %575 : vector<1x4x128xf32> to vector<4x128xf32>
    %c4_644 = arith.constant 4 : index
    %c2_645 = arith.constant 2 : index
    %c0_646 = arith.constant 0 : index
    %577 = vector.load %arg13[%c4_644, %c2_645, %c0_646] : memref<6x6x128xf32, #tpu.memory_space<vmem>>, vector<1x4x128xf32>
    %578 = vector.shape_cast %577 : vector<1x4x128xf32> to vector<4x128xf32>
    %579 = tpu.concatenate %562, %564, %566, %568, %570, %572, %574, %576, %578 in 1 : vector<4x128xf32>, vector<4x128xf32>, vector<4x128xf32>, vector<4x128xf32>, vector<4x128xf32>, vector<4x128xf32>, vector<4x128xf32>, vector<4x128xf32>, vector<4x128xf32> -> vector<4x1152xf32>
    %580 = arith.truncf %579 : vector<4x1152xf32> to vector<4x1152xbf16>
    %cst_647 = arith.constant dense<0.000000e+00> : vector<4x256xf32>
    %581 = tpu.matmul %580, %2, %cst_647 {dimension_numbers = #tpu.dot_dimension_numbers<[1], [0], [0], [1], [0, 0, 1, 1], [], []>} : vector<4x1152xbf16>, vector<1152x256xbf16>, vector<4x256xf32> -> vector<4x256xf32>
    %c3_648 = arith.constant 3 : index
    %c0_649 = arith.constant 0 : index
    %c0_650 = arith.constant 0 : index
    %582 = vector.load %arg13[%c3_648, %c0_649, %c0_650] : memref<6x6x128xf32, #tpu.memory_space<vmem>>, vector<1x4x128xf32>
    %583 = vector.shape_cast %582 : vector<1x4x128xf32> to vector<4x128xf32>
    %c3_651 = arith.constant 3 : index
    %c1_652 = arith.constant 1 : index
    %c0_653 = arith.constant 0 : index
    %584 = vector.load %arg13[%c3_651, %c1_652, %c0_653] : memref<6x6x128xf32, #tpu.memory_space<vmem>>, vector<1x4x128xf32>
    %585 = vector.shape_cast %584 : vector<1x4x128xf32> to vector<4x128xf32>
    %c3_654 = arith.constant 3 : index
    %c2_655 = arith.constant 2 : index
    %c0_656 = arith.constant 0 : index
    %586 = vector.load %arg13[%c3_654, %c2_655, %c0_656] : memref<6x6x128xf32, #tpu.memory_space<vmem>>, vector<1x4x128xf32>
    %587 = vector.shape_cast %586 : vector<1x4x128xf32> to vector<4x128xf32>
    %c4_657 = arith.constant 4 : index
    %c0_658 = arith.constant 0 : index
    %c0_659 = arith.constant 0 : index
    %588 = vector.load %arg13[%c4_657, %c0_658, %c0_659] : memref<6x6x128xf32, #tpu.memory_space<vmem>>, vector<1x4x128xf32>
    %589 = vector.shape_cast %588 : vector<1x4x128xf32> to vector<4x128xf32>
    %c4_660 = arith.constant 4 : index
    %c1_661 = arith.constant 1 : index
    %c0_662 = arith.constant 0 : index
    %590 = vector.load %arg13[%c4_660, %c1_661, %c0_662] : memref<6x6x128xf32, #tpu.memory_space<vmem>>, vector<1x4x128xf32>
    %591 = vector.shape_cast %590 : vector<1x4x128xf32> to vector<4x128xf32>
    %c4_663 = arith.constant 4 : index
    %c2_664 = arith.constant 2 : index
    %c0_665 = arith.constant 0 : index
    %592 = vector.load %arg13[%c4_663, %c2_664, %c0_665] : memref<6x6x128xf32, #tpu.memory_space<vmem>>, vector<1x4x128xf32>
    %593 = vector.shape_cast %592 : vector<1x4x128xf32> to vector<4x128xf32>
    %c5_666 = arith.constant 5 : index
    %c0_667 = arith.constant 0 : index
    %c0_668 = arith.constant 0 : index
    %594 = vector.load %arg13[%c5_666, %c0_667, %c0_668] : memref<6x6x128xf32, #tpu.memory_space<vmem>>, vector<1x4x128xf32>
    %595 = vector.shape_cast %594 : vector<1x4x128xf32> to vector<4x128xf32>
    %c5_669 = arith.constant 5 : index
    %c1_670 = arith.constant 1 : index
    %c0_671 = arith.constant 0 : index
    %596 = vector.load %arg13[%c5_669, %c1_670, %c0_671] : memref<6x6x128xf32, #tpu.memory_space<vmem>>, vector<1x4x128xf32>
    %597 = vector.shape_cast %596 : vector<1x4x128xf32> to vector<4x128xf32>
    %c5_672 = arith.constant 5 : index
    %c2_673 = arith.constant 2 : index
    %c0_674 = arith.constant 0 : index
    %598 = vector.load %arg13[%c5_672, %c2_673, %c0_674] : memref<6x6x128xf32, #tpu.memory_space<vmem>>, vector<1x4x128xf32>
    %599 = vector.shape_cast %598 : vector<1x4x128xf32> to vector<4x128xf32>
    %600 = tpu.concatenate %583, %585, %587, %589, %591, %593, %595, %597, %599 in 1 : vector<4x128xf32>, vector<4x128xf32>, vector<4x128xf32>, vector<4x128xf32>, vector<4x128xf32>, vector<4x128xf32>, vector<4x128xf32>, vector<4x128xf32>, vector<4x128xf32> -> vector<4x1152xf32>
    %601 = arith.truncf %600 : vector<4x1152xf32> to vector<4x1152xbf16>
    %cst_675 = arith.constant dense<0.000000e+00> : vector<4x256xf32>
    %602 = tpu.matmul %601, %2, %cst_675 {dimension_numbers = #tpu.dot_dimension_numbers<[1], [0], [0], [1], [0, 0, 1, 1], [], []>} : vector<4x1152xbf16>, vector<1152x256xbf16>, vector<4x256xf32> -> vector<4x256xf32>
    %603 = arith.maximumf %581, %602 : vector<4x256xf32>
    %604 = vector.broadcast %3 : vector<1x256xf32> to vector<4x256xf32>
    %605 = arith.addf %603, %604 : vector<4x256xf32>
    %cst_676 = arith.constant 0.000000e+00 : f32
    %606 = vector.broadcast %cst_676 : f32 to vector<4x256xf32>
    %607 = arith.maximumf %605, %606 : vector<4x256xf32>
    %608 = vector.extract_strided_slice %607 {offsets = [0, 0], sizes = [1, 256], strides = [1, 1]} : vector<4x256xf32> to vector<1x256xf32>
    %609 = vector.extract_strided_slice %607 {offsets = [1, 0], sizes = [1, 256], strides = [1, 1]} : vector<4x256xf32> to vector<1x256xf32>
    %610 = arith.maximumf %608, %609 : vector<1x256xf32>
    %611 = vector.extract_strided_slice %607 {offsets = [2, 0], sizes = [1, 256], strides = [1, 1]} : vector<4x256xf32> to vector<1x256xf32>
    %612 = vector.extract_strided_slice %607 {offsets = [3, 0], sizes = [1, 256], strides = [1, 1]} : vector<4x256xf32> to vector<1x256xf32>
    %613 = arith.maximumf %611, %612 : vector<1x256xf32>
    %614 = tpu.concatenate %557, %560, %610, %613 in 1 : vector<1x256xf32>, vector<1x256xf32>, vector<1x256xf32>, vector<1x256xf32> -> vector<1x1024xf32>
    %615 = arith.truncf %614 : vector<1x1024xf32> to vector<1x1024xbf16>
    %cst_677 = arith.constant dense<0.000000e+00> : vector<1x128xf32>
    %616 = tpu.matmul %615, %4, %cst_677 {dimension_numbers = #tpu.dot_dimension_numbers<[1], [0], [0], [1], [0, 0, 1, 1], [], []>} : vector<1x1024xbf16>, vector<1024x128xbf16>, vector<1x128xf32> -> vector<1x128xf32>
    %617 = arith.addf %616, %5 : vector<1x128xf32>
    %cst_678 = arith.constant 0.000000e+00 : f32
    %618 = vector.broadcast %cst_678 : f32 to vector<1x128xf32>
    %619 = arith.maximumf %617, %618 : vector<1x128xf32>
    %620 = arith.truncf %619 : vector<1x128xf32> to vector<1x128xbf16>
    %cst_679 = arith.constant dense<0.000000e+00> : vector<1x256xf32>
    %621 = tpu.matmul %620, %6, %cst_679 {dimension_numbers = #tpu.dot_dimension_numbers<[1], [0], [0], [1], [0, 0, 1, 1], [], []>} : vector<1x128xbf16>, vector<128x256xbf16>, vector<1x256xf32> -> vector<1x256xf32>
    %622 = arith.addf %621, %7 : vector<1x256xf32>
    %cst_680 = arith.constant 0.000000e+00 : f32
    %623 = vector.broadcast %cst_680 : f32 to vector<1x256xf32>
    %624 = arith.maximumf %622, %623 : vector<1x256xf32>
    %625 = arith.truncf %624 : vector<1x256xf32> to vector<1x256xbf16>
    %cst_681 = arith.constant dense<0.000000e+00> : vector<1x128xf32>
    %626 = tpu.matmul %625, %8, %cst_681 {dimension_numbers = #tpu.dot_dimension_numbers<[1], [0], [0], [1], [0, 0, 1, 1], [], []>} : vector<1x256xbf16>, vector<256x128xbf16>, vector<1x128xf32> -> vector<1x128xf32>
    %627 = arith.addf %626, %9 : vector<1x128xf32>
    %c0_682 = arith.constant 0 : index
    %c0_683 = arith.constant 0 : index
    %c0_684 = arith.constant 0 : index
    %628 = vector.load %arg12[%c0_682, %c0_683, %c0_684] : memref<1x1x128xf32, #tpu.memory_space<vmem>>, vector<1x1x128xf32>
    %629 = vector.shape_cast %628 : vector<1x1x128xf32> to vector<1x128xf32>
    %630 = vector.shape_cast %627 : vector<1x128xf32> to vector<1x1x128xf32>
    tpu.vector_store %arg12[%c0_682, %c0_683, %c0_684], %630 {strides = array<i32>} : memref<1x1x128xf32, #tpu.memory_space<vmem>>, vector<1x1x128xf32>,
    return
  }
  func.func @transform_0(%arg0: i32) -> (i32, i32, i32, i32) {
    %c0_i32 = arith.constant 0 : i32
    %c0_i32_0 = arith.constant 0 : i32
    %c0_i32_1 = arith.constant 0 : i32
    %c0_i32_2 = arith.constant 0 : i32
    return %arg0, %c0_i32, %c0_i32_0, %c0_i32_1 : i32, i32, i32, i32
  }
  func.func @transform_1(%arg0: i32) -> (i32, i32) {
    %c0_i32 = arith.constant 0 : i32
    %c0_i32_0 = arith.constant 0 : i32
    %c0_i32_1 = arith.constant 0 : i32
    return %c0_i32, %c0_i32_0 : i32, i32
  }
  func.func @transform_2(%arg0: i32) -> (i32, i32) {
    %c0_i32 = arith.constant 0 : i32
    %c0_i32_0 = arith.constant 0 : i32
    %c0_i32_1 = arith.constant 0 : i32
    return %c0_i32, %c0_i32_0 : i32, i32
  }
  func.func @transform_3(%arg0: i32) -> (i32, i32) {
    %c0_i32 = arith.constant 0 : i32
    %c0_i32_0 = arith.constant 0 : i32
    %c0_i32_1 = arith.constant 0 : i32
    return %c0_i32, %c0_i32_0 : i32, i32
  }
  func.func @transform_4(%arg0: i32) -> (i32, i32) {
    %c0_i32 = arith.constant 0 : i32
    %c0_i32_0 = arith.constant 0 : i32
    %c0_i32_1 = arith.constant 0 : i32
    return %c0_i32, %c0_i32_0 : i32, i32
  }
  func.func @transform_5(%arg0: i32) -> (i32, i32) {
    %c0_i32 = arith.constant 0 : i32
    %c0_i32_0 = arith.constant 0 : i32
    %c0_i32_1 = arith.constant 0 : i32
    return %c0_i32, %c0_i32_0 : i32, i32
  }
  func.func @transform_6(%arg0: i32) -> (i32, i32) {
    %c0_i32 = arith.constant 0 : i32
    %c0_i32_0 = arith.constant 0 : i32
    %c0_i32_1 = arith.constant 0 : i32
    return %c0_i32, %c0_i32_0 : i32, i32
  }
  func.func @transform_7(%arg0: i32) -> (i32, i32) {
    %c0_i32 = arith.constant 0 : i32
    %c0_i32_0 = arith.constant 0 : i32
    %c0_i32_1 = arith.constant 0 : i32
    return %c0_i32, %c0_i32_0 : i32, i32
  }
  func.func @transform_8(%arg0: i32) -> (i32, i32) {
    %c0_i32 = arith.constant 0 : i32
    %c0_i32_0 = arith.constant 0 : i32
    %c0_i32_1 = arith.constant 0 : i32
    return %c0_i32, %c0_i32_0 : i32, i32
  }
  func.func @transform_9(%arg0: i32) -> (i32, i32) {
    %c0_i32 = arith.constant 0 : i32
    %c0_i32_0 = arith.constant 0 : i32
    %c0_i32_1 = arith.constant 0 : i32
    return %c0_i32, %c0_i32_0 : i32, i32
  }
  func.func @transform_10(%arg0: i32) -> (i32, i32) {
    %c0_i32 = arith.constant 0 : i32
    %c0_i32_0 = arith.constant 0 : i32
    %c0_i32_1 = arith.constant 0 : i32
    return %c0_i32, %c0_i32_0 : i32, i32
  }
  func.func @transform_11(%arg0: i32) -> (i32, i32, i32) {
    %c0_i32 = arith.constant 0 : i32
    %c0_i32_0 = arith.constant 0 : i32
    %c0_i32_1 = arith.constant 0 : i32
    return %arg0, %c0_i32, %c0_i32_0 : i32, i32, i32
  }
}

</mosaic_0001>

<llo_original>
// kernel: _lambda_.2
$region0: #{_lambda_.2}
  #allocation0 [shape = 'u32[]', space=smem, size = 0x4, offset = 0x4, fixed_abs, tag = 'smem constant byte address 0x4 - core index']
  #allocation1 [shape = 'u32[72,128]{1,0:T(1,128)}', space=vmem, size = 0x9000, scoped, tag = 'internal scratch']
  %s0 = inlined_call_operand.vmem [shape: bf16[4,480,27], index: 0, kind: input, shape index: {}]
  %s1 = inlined_call_operand.vmem [shape: bf16[27,64], index: 1, kind: input, shape index: {}]
  %s2 = inlined_call_operand.vmem [shape: f32[1,64], index: 2, kind: input, shape index: {}]
  %s3 = inlined_call_operand.vmem [shape: f32[480,64], index: 3, kind: output, shape index: {}]
  %s4 = sld [smem:[#allocation0]]
  $region86: #{_lambda_.2} parent=0
    _
  %s6 = ssub.s32 1, %s4
  %s7 = scalar_select 0, %s6, %s4
  $region1: #{_lambda_.2} parent=0
    #allocation2 [shape = 'u8[491520]{0}', space=vmem, size = 0x78000, scoped, tag = 'input window, operand 0']
    loop: start=0, step=1, limit=4
    $region2: #{_lambda_.2} parent=1 // loop_pre_header
      _
    $region3: #{_lambda_.2} parent=1 // loop_header
      %s9 = sphi 0, %s13
      %p10 = scmp.ge.s32.totalorder %s9, 4
      %s19 = sphi 0, %s21
      %s22 = sphi 0, %s19
      %s23 = sphi 0, %s22
      %s39 = sphi 0, %s23
      %s43 = sphi 0, %s43
      %s45 = sphi 0, %s43
      %s46 = sphi 0, %s45
      %s60 = sphi 0, %s46
      %s64 = sphi 0, %s64
      %s66 = sphi 0, %s64
      %s67 = sphi 0, %s66
      %s81 = sphi 0, %s67
      %s87 = sphi 0, %s89
      %s90 = sphi 0, %s87
      %s91 = sphi 0, %s90
      %s107 = sphi 0, %s91
    $region4: #{_lambda_.2} parent=1 // loop_header_branch
      %12 = sbr.rel (%p10) target = $region8
    $region5: #{_lambda_.2} parent=1 // loop_body
      %s14 = ssub.s32 %s9, 1
      %s15 = ssub.s32 %s9, 2
      %s16 = sadd.s32 %s9, 1
      %s17 = ssub.s32 %s9, %s16
      %p18 = scmp.eq.s32.totalorder %s17, 0
      %s20 = sadd.s32 %s19, 1
      %s21 = scalar_select %p18, %s19, %s20
      %p24 = pneg %p18
      %p25 = scmp.eq.s32.totalorder %s9, 1
      %p26 = por %p24, %p25
      %p27 = scmp.ne.s32.totalorder %s19, %s22
      %p28 = scmp.eq.s32.totalorder %s9, 0
      %p29 = por %p27, %p28
      %p30 = scmp.ne.s32.totalorder %s19, %s22
      %p31 = scmp.eq.s32.totalorder %s14, 1
      %p32 = por %p30, %p31
      %p33 = scmp.ne.s32.totalorder %s22, %s23
      %p34 = scmp.eq.s32.totalorder %s14, 0
      %p35 = por %p33, %p34
      %p36 = scmp.ne.s32.totalorder %s22, %s23
      %p37 = scmp.eq.s32.totalorder %s15, 1
      %p38 = por %p36, %p37
      %p40 = scmp.ne.s32.totalorder %s23, %s39
      %p41 = scmp.eq.s32.totalorder %s15, 0
      %p42 = por %p40, %p41
      %s44 = sadd.s32 %s43, 1
      %p47 = scmp.eq.s32.totalorder %s9, 1
      %p48 = scmp.ne.s32.totalorder %s43, %s45
      %p49 = scmp.eq.s32.totalorder %s9, 0
      %p50 = por %p48, %p49
      %p51 = scmp.ne.s32.totalorder %s43, %s45
      %p52 = scmp.eq.s32.totalorder %s14, 1
      %p53 = por %p51, %p52
      %p54 = scmp.ne.s32.totalorder %s45, %s46
      %p55 = scmp.eq.s32.totalorder %s14, 0
      %p56 = por %p54, %p55
      %p57 = scmp.ne.s32.totalorder %s45, %s46
      %p58 = scmp.eq.s32.totalorder %s15, 1
      %p59 = por %p57, %p58
      %p61 = scmp.ne.s32.totalorder %s46, %s60
      %p62 = scmp.eq.s32.totalorder %s15, 0
      %p63 = por %p61, %p62
      %s65 = sadd.s32 %s64, 1
      %p68 = scmp.eq.s32.totalorder %s9, 1
      %p69 = scmp.ne.s32.totalorder %s64, %s66
      %p70 = scmp.eq.s32.totalorder %s9, 0
      %p71 = por %p69, %p70
      %p72 = scmp.ne.s32.totalorder %s64, %s66
      %p73 = scmp.eq.s32.totalorder %s14, 1
      %p74 = por %p72, %p73
      %p75 = scmp.ne.s32.totalorder %s66, %s67
      %p76 = scmp.eq.s32.totalorder %s14, 0
      %p77 = por %p75, %p76
      %p78 = scmp.ne.s32.totalorder %s66, %s67
      %p79 = scmp.eq.s32.totalorder %s15, 1
      %p80 = por %p78, %p79
      %p82 = scmp.ne.s32.totalorder %s67, %s81
      %p83 = scmp.eq.s32.totalorder %s15, 0
      %p84 = por %p82, %p83
      %s85 = ssub.s32 %s9, %s16
      %p86 = scmp.eq.s32.totalorder %s85, 0
      %s88 = sadd.s32 %s87, 1
      %s89 = scalar_select %p86, %s87, %s88
      %p92 = pneg %p86
      %p93 = scmp.eq.s32.totalorder %s9, 1
      %p94 = por %p92, %p93
      %p95 = scmp.ne.s32.totalorder %s87, %s90
      %p96 = scmp.eq.s32.totalorder %s9, 0
      %p97 = por %p95, %p96
      %p98 = scmp.ne.s32.totalorder %s87, %s90
      %p99 = scmp.eq.s32.totalorder %s14, 1
      %p100 = por %p98, %p99
      %p101 = scmp.ne.s32.totalorder %s90, %s91
      %p102 = scmp.eq.s32.totalorder %s14, 0
      %p103 = por %p101, %p102
      %p104 = scmp.ne.s32.totalorder %s90, %s91
      %p105 = scmp.eq.s32.totalorder %s15, 1
      %p106 = por %p104, %p105
      %p108 = scmp.ne.s32.totalorder %s91, %s107
      %p109 = scmp.eq.s32.totalorder %s15, 0
      %p110 = por %p108, %p109
      %p111 = scmp.le.s32.totalorder 1, %s9
      %p112 = scmp.lt.s32.totalorder %s9, 3
      %p113 = pnand %p111, %p112
      %p114 = pneg %p113
      // Predicated region
      $region9: #{_lambda_.2} parent=5 // pred_check
        _
      $region10: #{_lambda_.2} parent=5 // pred_check_branch
        %116 = sbr.rel (%p113) target = $region12
      $region11: #{_lambda_.2} parent=5 // pred_region
        %s117 = ssub.s32 %s9, 1
        // Predicated region
        $region13: #{_lambda_.2} parent=11 // pred_check
          %p118 = pneg %p56
        $region14: #{_lambda_.2} parent=11 // pred_check_branch
          %120 = sbr.rel (%p118) target = $region16
        $region15: #{_lambda_.2} parent=11 // pred_region
          _
        $region16: #{_lambda_.2} parent=11 // pred_fallthru
          _
        // Predicated region
        $region17: #{_lambda_.2} parent=11 // pred_check
          %p121 = pneg %p77
        $region18: #{_lambda_.2} parent=11 // pred_check_branch
          %123 = sbr.rel (%p121) target = $region20
        $region19: #{_lambda_.2} parent=11 // pred_region
          _
        $region20: #{_lambda_.2} parent=11 // pred_fallthru
          _
      $region12: #{_lambda_.2} parent=5 // pred_fallthru
        _
      %p124 = scmp.lt.s32.totalorder %s9, 2
      // Predicated region
      $region21: #{_lambda_.2} parent=5 // pred_check
        %p125 = pneg %p124
      $region22: #{_lambda_.2} parent=5 // pred_check_branch
        %127 = sbr.rel (%p125) target = $region24
      $region23: #{_lambda_.2} parent=5 // pred_region
        // Predicated region
        $region25: #{_lambda_.2} parent=23 // pred_check
          %p128 = pneg %p29
        $region26: #{_lambda_.2} parent=23 // pred_check_branch
          %130 = sbr.rel (%p128) target = $region28
        $region27: #{_lambda_.2} parent=23 // pred_region
          %s131 = sand.u32 %s19, 1
          %s132 = sand.u32 %s19, 1
          %s133 = smul.addr %s132, 480
          %s134 = scalar_lea.vmem [#allocation2], %s133
          %s135 = smul.u32 30, %s9
          %s136 = smul.addr %s135, 4
          %s137 = scalar_lea.vmem %s0, %s136
          // Predicated region
          $region29: #{_lambda_.2} parent=27 // pred_check
            _
          $region30: #{_lambda_.2} parent=27 // pred_check_branch
            %139 = sbr.rel (0) target = $region32
          $region31: #{_lambda_.2} parent=27 // pred_region
            // Predicated region
            $region33: #{_lambda_.2} parent=31 // pred_check
              _
            $region34: #{_lambda_.2} parent=31 // pred_check_branch
              %141 = sbr.rel target = $region36
            $region35: #{_lambda_.2} parent=31 // pred_region
              // Predicated region
              $region48: #{_lambda_.2} parent=35 // pred_check
                _
              $region49: #{_lambda_.2} parent=35 // pred_check_branch
                %395 = sbr.rel (0) target = $region51
              $region50: #{_lambda_.2} parent=35 // pred_region
                loop: start=0, step=1, limit=1
                $region52: #{_lambda_.2} parent=50 // loop_pre_header
                  _
                $region53: #{_lambda_.2} parent=50 // loop_header
                  %s397 = sphi 0, %s401
                  %p398 = scmp.ge.s32.totalorder %s397, 1
                  %s402 = sphi %s137, %s137
                  %s403 = sphi %s134, %s134
                $region54: #{_lambda_.2} parent=50 // loop_header_branch
                  %400 = sbr.rel (%p398) target = $region58
                $region55: #{_lambda_.2} parent=50 // loop_body
                  _
                $region56: #{_lambda_.2} parent=50 // loop_footer
                  %s401 = sadd.s32 1, %s397
                $region57: #{_lambda_.2} parent=50 // loop_footer_branch
                  %396 = sbr.rel target = $region53
                $region58: #{_lambda_.2} parent=50 // loop_exit
                  _
                %s405 = ssub.s32 16, 1
                loop: start=0, step=1, limit=1
                $region59: #{_lambda_.2} parent=50 // loop_pre_header
                  _
                $region60: #{_lambda_.2} parent=50 // loop_header
                  %s407 = sphi 0, %s411
                  %p408 = scmp.ge.s32.totalorder %s407, 1
                  %s412 = sphi %s137, %s137
                  %s413 = sphi %s134, %s134
                $region61: #{_lambda_.2} parent=50 // loop_header_branch
                  %410 = sbr.rel (%p408) target = $region65
                $region62: #{_lambda_.2} parent=50 // loop_body
                  %v414 = vld [vmem:[%s412] sm:%s405]
                  %415 = vst [vmem:[%s413] sm:%s405] %v414
                  %v416 = vld [vmem:[%s412 + $0x4] sm:%s405]
                  %417 = vst [vmem:[%s413 + $0x4] sm:%s405] %v416
                  %v418 = vld [vmem:[%s412 + $0x8] sm:%s405]
                  %419 = vst [vmem:[%s413 + $0x8] sm:%s405] %v418
                  %v420 = vld [vmem:[%s412 + $0xc] sm:%s405]
                  %421 = vst [vmem:[%s413 + $0xc] sm:%s405] %v420
                  %v422 = vld [vmem:[%s412 + $0x10] sm:%s405]
                  %423 = vst [vmem:[%s413 + $0x10] sm:%s405] %v422
                  %v424 = vld [vmem:[%s412 + $0x14] sm:%s405]
                  %425 = vst [vmem:[%s413 + $0x14] sm:%s405] %v424
                  %v426 = vld [vmem:[%s412 + $0x18] sm:%s405]
                  %427 = vst [vmem:[%s413 + $0x18] sm:%s405] %v426
                  %v428 = vld [vmem:[%s412 + $0x1c] sm:%s405]
                  %429 = vst [vmem:[%s413 + $0x1c] sm:%s405] %v428
                  %v430 = vld [vmem:[%s412 + $0x20] sm:%s405]
                  %431 = vst [vmem:[%s413 + $0x20] sm:%s405] %v430
                  %v432 = vld [vmem:[%s412 + $0x24] sm:%s405]
                  %433 = vst [vmem:[%s413 + $0x24] sm:%s405] %v432
                  %v434 = vld [vmem:[%s412 + $0x28] sm:%s405]
                  %435 = vst [vmem:[%s413 + $0x28] sm:%s405] %v434
                  %v436 = vld [vmem:[%s412 + $0x2c] sm:%s405]
                  %437 = vst [vmem:[%s413 + $0x2c] sm:%s405] %v436
                  %v438 = vld [vmem:[%s412 + $0x30] sm:%s405]
                  %439 = vst [vmem:[%s413 + $0x30] sm:%s405] %v438
                  %v440 = vld [vmem:[%s412 + $0x34] sm:%s405]
                  %441 = vst [vmem:[%s413 + $0x34] sm:%s405] %v440
                  %v442 = vld [vmem:[%s412 + $0x38] sm:%s405]
                  %443 = vst [vmem:[%s413 + $0x38] sm:%s405] %v442
                  %v444 = vld [vmem:[%s412 + $0x3c] sm:%s405]
                  %445 = vst [vmem:[%s413 + $0x3c] sm:%s405] %v444
                  %v446 = vld [vmem:[%s412 + $0x40] sm:%s405]
                  %447 = vst [vmem:[%s413 + $0x40] sm:%s405] %v446
                  %v448 = vld [vmem:[%s412 + $0x44] sm:%s405]
                  %449 = vst [vmem:[%s413 + $0x44] sm:%s405] %v448
                  %v450 = vld [vmem:[%s412 + $0x48] sm:%s405]
                  %451 = vst [vmem:[%s413 + $0x48] sm:%s405] %v450
                  %v452 = vld [vmem:[%s412 + $0x4c] sm:%s405]
                  %453 = vst [vmem:[%s413 + $0x4c] sm:%s405] %v452
                  %v454 = vld [vmem:[%s412 + $0x50] sm:%s405]
                  %455 = vst [vmem:[%s413 + $0x50] sm:%s405] %v454
                  %v456 = vld [vmem:[%s412 + $0x54] sm:%s405]
                  %457 = vst [vmem:[%s413 + $0x54] sm:%s405] %v456
                  %v458 = vld [vmem:[%s412 + $0x58] sm:%s405]
                  %459 = vst [vmem:[%s413 + $0x58] sm:%s405] %v458
                  %v460 = vld [vmem:[%s412 + $0x5c] sm:%s405]
                  %461 = vst [vmem:[%s413 + $0x5c] sm:%s405] %v460
                  %v462 = vld [vmem:[%s412 + $0x60] sm:%s405]
                  %463 = vst [vmem:[%s413 + $0x60] sm:%s405] %v462
                  %v464 = vld [vmem:[%s412 + $0x64] sm:%s405]
                  %465 = vst [vmem:[%s413 + $0x64] sm:%s405] %v464
                  %v466 = vld [vmem:[%s412 + $0x68] sm:%s405]
                  %467 = vst [vmem:[%s413 + $0x68] sm:%s405] %v466
                  %v468 = vld [vmem:[%s412 + $0x6c] sm:%s405]
                  %469 = vst [vmem:[%s413 + $0x6c] sm:%s405] %v468
                  %v470 = vld [vmem:[%s412 + $0x70] sm:%s405]
                  %471 = vst [vmem:[%s413 + $0x70] sm:%s405] %v470
                  %v472 = vld [vmem:[%s412 + $0x74] sm:%s405]
                  %473 = vst [vmem:[%s413 + $0x74] sm:%s405] %v472
                  %v474 = vld [vmem:[%s412 + $0xf0] sm:%s405]
                  %475 = vst [vmem:[%s413 + $0x78] sm:%s405] %v474
                  %v476 = vld [vmem:[%s412 + $0xf4] sm:%s405]
                  %477 = vst [vmem:[%s413 + $0x7c] sm:%s405] %v476
                  %v478 = vld [vmem:[%s412 + $0xf8] sm:%s405]
                  %479 = vst [vmem:[%s413 + $0x80] sm:%s405] %v478
                  %v480 = vld [vmem:[%s412 + $0xfc] sm:%s405]
                  %481 = vst [vmem:[%s413 + $0x84] sm:%s405] %v480
                  %v482 = vld [vmem:[%s412 + $0x100] sm:%s405]
                  %483 = vst [vmem:[%s413 + $0x88] sm:%s405] %v482
                  %v484 = vld [vmem:[%s412 + $0x104] sm:%s405]
                  %485 = vst [vmem:[%s413 + $0x8c] sm:%s405] %v484
                  %v486 = vld [vmem:[%s412 + $0x108] sm:%s405]
                  %487 = vst [vmem:[%s413 + $0x90] sm:%s405] %v486
                  %v488 = vld [vmem:[%s412 + $0x10c] sm:%s405]
                  %489 = vst [vmem:[%s413 + $0x94] sm:%s405] %v488
                  %v490 = vld [vmem:[%s412 + $0x110] sm:%s405]
                  %491 = vst [vmem:[%s413 + $0x98] sm:%s405] %v490
                  %v492 = vld [vmem:[%s412 + $0x114] sm:%s405]
                  %493 = vst [vmem:[%s413 + $0x9c] sm:%s405] %v492
                  %v494 = vld [vmem:[%s412 + $0x118] sm:%s405]
                  %495 = vst [vmem:[%s413 + $0xa0] sm:%s405] %v494
                  %v496 = vld [vmem:[%s412 + $0x11c] sm:%s405]
                  %497 = vst [vmem:[%s413 + $0xa4] sm:%s405] %v496
                  %v498 = vld [vmem:[%s412 + $0x120] sm:%s405]
                  %499 = vst [vmem:[%s413 + $0xa8] sm:%s405] %v498
                  %v500 = vld [vmem:[%s412 + $0x124] sm:%s405]
                  %501 = vst [vmem:[%s413 + $0xac] sm:%s405] %v500
                  %v502 = vld [vmem:[%s412 + $0x128] sm:%s405]
                  %503 = vst [vmem:[%s413 + $0xb0] sm:%s405] %v502
                  %v504 = vld [vmem:[%s412 + $0x12c] sm:%s405]
                  %505 = vst [vmem:[%s413 + $0xb4] sm:%s405] %v504
                  %v506 = vld [vmem:[%s412 + $0x130] sm:%s405]
                  %507 = vst [vmem:[%s413 + $0xb8] sm:%s405] %v506
                  %v508 = vld [vmem:[%s412 + $0x134] sm:%s405]
                  %509 = vst [vmem:[%s413 + $0xbc] sm:%s405] %v508
                  %v510 = vld [vmem:[%s412 + $0x138] sm:%s405]
                  %511 = vst [vmem:[%s413 + $0xc0] sm:%s405] %v510
                  %v512 = vld [vmem:[%s412 + $0x13c] sm:%s405]
                  %513 = vst [vmem:[%s413 + $0xc4] sm:%s405] %v512
                  %v514 = vld [vmem:[%s412 + $0x140] sm:%s405]
                  %515 = vst [vmem:[%s413 + $0xc8] sm:%s405] %v514
                  %v516 = vld [vmem:[%s412 + $0x144] sm:%s405]
                  %517 = vst [vmem:[%s413 + $0xcc] sm:%s405] %v516
                  %v518 = vld [vmem:[%s412 + $0x148] sm:%s405]
                  %519 = vst [vmem:[%s413 + $0xd0] sm:%s405] %v518
                  %v520 = vld [vmem:[%s412 + $0x14c] sm:%s405]
                  %521 = vst [vmem:[%s413 + $0xd4] sm:%s405] %v520
                  %v522 = vld [vmem:[%s412 + $0x150] sm:%s405]
                  %523 = vst [vmem:[%s413 + $0xd8] sm:%s405] %v522
                  %v524 = vld [vmem:[%s412 + $0x154] sm:%s405]
                  %525 = vst [vmem:[%s413 + $0xdc] sm:%s405] %v524
                  %v526 = vld [vmem:[%s412 + $0x158] sm:%s405]
                  %527 = vst [vmem:[%s413 + $0xe0] sm:%s405] %v526
                  %v528 = vld [vmem:[%s412 + $0x15c] sm:%s405]
                  %529 = vst [vmem:[%s413 + $0xe4] sm:%s405] %v528
                  %v530 = vld [vmem:[%s412 + $0x160] sm:%s405]
                  %531 = vst [vmem:[%s413 + $0xe8] sm:%s405] %v530
                  %v532 = vld [vmem:[%s412 + $0x164] sm:%s405]
                  %533 = vst [vmem:[%s413 + $0xec] sm:%s405] %v532
                  %v534 = vld [vmem:[%s412 + $0x1e0] sm:%s405]
                  %535 = vst [vmem:[%s413 + $0xf0] sm:%s405] %v534
                  %v536 = vld [vmem:[%s412 + $0x1e4] sm:%s405]
                  %537 = vst [vmem:[%s413 + $0xf4] sm:%s405] %v536
                  %v538 = vld [vmem:[%s412 + $0x1e8] sm:%s405]
                  %539 = vst [vmem:[%s413 + $0xf8] sm:%s405] %v538
                  %v540 = vld [vmem:[%s412 + $0x1ec] sm:%s405]
                  %541 = vst [vmem:[%s413 + $0xfc] sm:%s405] %v540
                  %v542 = vld [vmem:[%s412 + $0x1f0] sm:%s405]
                  %543 = vst [vmem:[%s413 + $0x100] sm:%s405] %v542
                  %v544 = vld [vmem:[%s412 + $0x1f4] sm:%s405]
                  %545 = vst [vmem:[%s413 + $0x104] sm:%s405] %v544
                  %v546 = vld [vmem:[%s412 + $0x1f8] sm:%s405]
                  %547 = vst [vmem:[%s413 + $0x108] sm:%s405] %v546
                  %v548 = vld [vmem:[%s412 + $0x1fc] sm:%s405]
                  %549 = vst [vmem:[%s413 + $0x10c] sm:%s405] %v548
                  %v550 = vld [vmem:[%s412 + $0x200] sm:%s405]
                  %551 = vst [vmem:[%s413 + $0x110] sm:%s405] %v550
                  %v552 = vld [vmem:[%s412 + $0x204] sm:%s405]
                  %553 = vst [vmem:[%s413 + $0x114] sm:%s405] %v552
                  %v554 = vld [vmem:[%s412 + $0x208] sm:%s405]
                  %555 = vst [vmem:[%s413 + $0x118] sm:%s405] %v554
                  %v556 = vld [vmem:[%s412 + $0x20c] sm:%s405]
                  %557 = vst [vmem:[%s413 + $0x11c] sm:%s405] %v556
                  %v558 = vld [vmem:[%s412 + $0x210] sm:%s405]
                  %559 = vst [vmem:[%s413 + $0x120] sm:%s405] %v558
                  %v560 = vld [vmem:[%s412 + $0x214] sm:%s405]
                  %561 = vst [vmem:[%s413 + $0x124] sm:%s405] %v560
                  %v562 = vld [vmem:[%s412 + $0x218] sm:%s405]
                  %563 = vst [vmem:[%s413 + $0x128] sm:%s405] %v562
                  %v564 = vld [vmem:[%s412 + $0x21c] sm:%s405]
                  %565 = vst [vmem:[%s413 + $0x12c] sm:%s405] %v564
                  %v566 = vld [vmem:[%s412 + $0x220] sm:%s405]
                  %567 = vst [vmem:[%s413 + $0x130] sm:%s405] %v566
                  %v568 = vld [vmem:[%s412 + $0x224] sm:%s405]
                  %569 = vst [vmem:[%s413 + $0x134] sm:%s405] %v568
                  %v570 = vld [vmem:[%s412 + $0x228] sm:%s405]
                  %571 = vst [vmem:[%s413 + $0x138] sm:%s405] %v570
                  %v572 = vld [vmem:[%s412 + $0x22c] sm:%s405]
                  %573 = vst [vmem:[%s413 + $0x13c] sm:%s405] %v572
                  %v574 = vld [vmem:[%s412 + $0x230] sm:%s405]
                  %575 = vst [vmem:[%s413 + $0x140] sm:%s405] %v574
                  %v576 = vld [vmem:[%s412 + $0x234] sm:%s405]
                  %577 = vst [vmem:[%s413 + $0x144] sm:%s405] %v576
                  %v578 = vld [vmem:[%s412 + $0x238] sm:%s405]
                  %579 = vst [vmem:[%s413 + $0x148] sm:%s405] %v578
                  %v580 = vld [vmem:[%s412 + $0x23c] sm:%s405]
                  %581 = vst [vmem:[%s413 + $0x14c] sm:%s405] %v580
                  %v582 = vld [vmem:[%s412 + $0x240] sm:%s405]
                  %583 = vst [vmem:[%s413 + $0x150] sm:%s405] %v582
                  %v584 = vld [vmem:[%s412 + $0x244] sm:%s405]
                  %585 = vst [vmem:[%s413 + $0x154] sm:%s405] %v584
                  %v586 = vld [vmem:[%s412 + $0x248] sm:%s405]
                  %587 = vst [vmem:[%s413 + $0x158] sm:%s405] %v586
                  %v588 = vld [vmem:[%s412 + $0x24c] sm:%s405]
                  %589 = vst [vmem:[%s413 + $0x15c] sm:%s405] %v588
                  %v590 = vld [vmem:[%s412 + $0x250] sm:%s405]
                  %591 = vst [vmem:[%s413 + $0x160] sm:%s405] %v590
                  %v592 = vld [vmem:[%s412 + $0x254] sm:%s405]
                  %593 = vst [vmem:[%s413 + $0x164] sm:%s405] %v592
                  %v594 = vld [vmem:[%s412 + $0x2d0] sm:%s405]
                  %595 = vst [vmem:[%s413 + $0x168] sm:%s405] %v594
                  %v596 = vld [vmem:[%s412 + $0x2d4] sm:%s405]
                  %597 = vst [vmem:[%s413 + $0x16c] sm:%s405] %v596
                  %v598 = vld [vmem:[%s412 + $0x2d8] sm:%s405]
                  %599 = vst [vmem:[%s413 + $0x170] sm:%s405] %v598
                  %v600 = vld [vmem:[%s412 + $0x2dc] sm:%s405]
                  %601 = vst [vmem:[%s413 + $0x174] sm:%s405] %v600
                  %v602 = vld [vmem:[%s412 + $0x2e0] sm:%s405]
                  %603 = vst [vmem:[%s413 + $0x178] sm:%s405] %v602
                  %v604 = vld [vmem:[%s412 + $0x2e4] sm:%s405]
                  %605 = vst [vmem:[%s413 + $0x17c] sm:%s405] %v604
                  %v606 = vld [vmem:[%s412 + $0x2e8] sm:%s405]
                  %607 = vst [vmem:[%s413 + $0x180] sm:%s405] %v606
                  %v608 = vld [vmem:[%s412 + $0x2ec] sm:%s405]
                  %609 = vst [vmem:[%s413 + $0x184] sm:%s405] %v608
                  %v610 = vld [vmem:[%s412 + $0x2f0] sm:%s405]
                  %611 = vst [vmem:[%s413 + $0x188] sm:%s405] %v610
                  %v612 = vld [vmem:[%s412 + $0x2f4] sm:%s405]
                  %613 = vst [vmem:[%s413 + $0x18c] sm:%s405] %v612
                  %v614 = vld [vmem:[%s412 + $0x2f8] sm:%s405]
                  %615 = vst [vmem:[%s413 + $0x190] sm:%s405] %v614
                  %v616 = vld [vmem:[%s412 + $0x2fc] sm:%s405]
                  %617 = vst [vmem:[%s413 + $0x194] sm:%s405] %v616
                  %v618 = vld [vmem:[%s412 + $0x300] sm:%s405]
                  %619 = vst [vmem:[%s413 + $0x198] sm:%s405] %v618
                  %v620 = vld [vmem:[%s412 + $0x304] sm:%s405]
                  %621 = vst [vmem:[%s413 + $0x19c] sm:%s405] %v620
                  %v622 = vld [vmem:[%s412 + $0x308] sm:%s405]
                  %623 = vst [vmem:[%s413 + $0x1a0] sm:%s405] %v622
                  %v624 = vld [vmem:[%s412 + $0x30c] sm:%s405]
                  %625 = vst [vmem:[%s413 + $0x1a4] sm:%s405] %v624
                  %v626 = vld [vmem:[%s412 + $0x310] sm:%s405]
                  %627 = vst [vmem:[%s413 + $0x1a8] sm:%s405] %v626
                  %v628 = vld [vmem:[%s412 + $0x314] sm:%s405]
                  %629 = vst [vmem:[%s413 + $0x1ac] sm:%s405] %v628
                  %v630 = vld [vmem:[%s412 + $0x318] sm:%s405]
                  %631 = vst [vmem:[%s413 + $0x1b0] sm:%s405] %v630
                  %v632 = vld [vmem:[%s412 + $0x31c] sm:%s405]
                  %633 = vst [vmem:[%s413 + $0x1b4] sm:%s405] %v632
                  %v634 = vld [vmem:[%s412 + $0x320] sm:%s405]
                  %635 = vst [vmem:[%s413 + $0x1b8] sm:%s405] %v634
                  %v636 = vld [vmem:[%s412 + $0x324] sm:%s405]
                  %637 = vst [vmem:[%s413 + $0x1bc] sm:%s405] %v636
                  %v638 = vld [vmem:[%s412 + $0x328] sm:%s405]
                  %639 = vst [vmem:[%s413 + $0x1c0] sm:%s405] %v638
                  %v640 = vld [vmem:[%s412 + $0x32c] sm:%s405]
                  %641 = vst [vmem:[%s413 + $0x1c4] sm:%s405] %v640
                  %v642 = vld [vmem:[%s412 + $0x330] sm:%s405]
                  %643 = vst [vmem:[%s413 + $0x1c8] sm:%s405] %v642
                  %v644 = vld [vmem:[%s412 + $0x334] sm:%s405]
                  %645 = vst [vmem:[%s413 + $0x1cc] sm:%s405] %v644
                  %v646 = vld [vmem:[%s412 + $0x338] sm:%s405]
                  %647 = vst [vmem:[%s413 + $0x1d0] sm:%s405] %v646
                  %v648 = vld [vmem:[%s412 + $0x33c] sm:%s405]
                  %649 = vst [vmem:[%s413 + $0x1d4] sm:%s405] %v648
                  %v650 = vld [vmem:[%s412 + $0x340] sm:%s405]
                  %651 = vst [vmem:[%s413 + $0x1d8] sm:%s405] %v650
                  %v652 = vld [vmem:[%s412 + $0x344] sm:%s405]
                  %653 = vst [vmem:[%s413 + $0x1dc] sm:%s405] %v652
                $region63: #{_lambda_.2} parent=50 // loop_footer
                  %s411 = sadd.s32 1, %s407
                $region64: #{_lambda_.2} parent=50 // loop_footer_branch
                  %406 = sbr.rel target = $region60
                $region65: #{_lambda_.2} parent=50 // loop_exit
                  _
              $region51: #{_lambda_.2} parent=35 // pred_fallthru
                _
            $region36: #{_lambda_.2} parent=31 // pred_fallthru
              _
            // Predicated region
            $region37: #{_lambda_.2} parent=31 // pred_check
              _
            $region38: #{_lambda_.2} parent=31 // pred_check_branch
              %143 = sbr.rel (0) target = $region40
            $region39: #{_lambda_.2} parent=31 // pred_region
              %s145 = ssub.s32 16, 1
              loop: start=0, step=1, limit=1
              $region41: #{_lambda_.2} parent=39 // loop_pre_header
                _
              $region42: #{_lambda_.2} parent=39 // loop_header
                %s147 = sphi 0, %s151
                %p148 = scmp.ge.s32.totalorder %s147, 1
                %s152 = sphi %s137, %s137
                %s153 = sphi %s134, %s134
              $region43: #{_lambda_.2} parent=39 // loop_header_branch
                %150 = sbr.rel (%p148) target = $region47
              $region44: #{_lambda_.2} parent=39 // loop_body
                %v154 = vld [vmem:[%s152] sm:%s145]
                %155 = vst [vmem:[%s153] sm:%s145] %v154
                %v156 = vld [vmem:[%s152 + $0x4] sm:%s145]
                %157 = vst [vmem:[%s153 + $0x4] sm:%s145] %v156
                %v158 = vld [vmem:[%s152 + $0x8] sm:%s145]
                %159 = vst [vmem:[%s153 + $0x8] sm:%s145] %v158
                %v160 = vld [vmem:[%s152 + $0xc] sm:%s145]
                %161 = vst [vmem:[%s153 + $0xc] sm:%s145] %v160
                %v162 = vld [vmem:[%s152 + $0x10] sm:%s145]
                %163 = vst [vmem:[%s153 + $0x10] sm:%s145] %v162
                %v164 = vld [vmem:[%s152 + $0x14] sm:%s145]
                %165 = vst [vmem:[%s153 + $0x14] sm:%s145] %v164
                %v166 = vld [vmem:[%s152 + $0x18] sm:%s145]
                %167 = vst [vmem:[%s153 + $0x18] sm:%s145] %v166
                %v168 = vld [vmem:[%s152 + $0x1c] sm:%s145]
                %169 = vst [vmem:[%s153 + $0x1c] sm:%s145] %v168
                %v170 = vld [vmem:[%s152 + $0x20] sm:%s145]
                %171 = vst [vmem:[%s153 + $0x20] sm:%s145] %v170
                %v172 = vld [vmem:[%s152 + $0x24] sm:%s145]
                %173 = vst [vmem:[%s153 + $0x24] sm:%s145] %v172
                %v174 = vld [vmem:[%s152 + $0x28] sm:%s145]
                %175 = vst [vmem:[%s153 + $0x28] sm:%s145] %v174
                %v176 = vld [vmem:[%s152 + $0x2c] sm:%s145]
                %177 = vst [vmem:[%s153 + $0x2c] sm:%s145] %v176
                %v178 = vld [vmem:[%s152 + $0x30] sm:%s145]
                %179 = vst [vmem:[%s153 + $0x30] sm:%s145] %v178
                %v180 = vld [vmem:[%s152 + $0x34] sm:%s145]
                %181 = vst [vmem:[%s153 + $0x34] sm:%s145] %v180
                %v182 = vld [vmem:[%s152 + $0x38] sm:%s145]
                %183 = vst [vmem:[%s153 + $0x38] sm:%s145] %v182
                %v184 = vld [vmem:[%s152 + $0x3c] sm:%s145]
                %185 = vst [vmem:[%s153 + $0x3c] sm:%s145] %v184
                %v186 = vld [vmem:[%s152 + $0x40] sm:%s145]
                %187 = vst [vmem:[%s153 + $0x40] sm:%s145] %v186
                %v188 = vld [vmem:[%s152 + $0x44] sm:%s145]
                %189 = vst [vmem:[%s153 + $0x44] sm:%s145] %v188
                %v190 = vld [vmem:[%s152 + $0x48] sm:%s145]
                %191 = vst [vmem:[%s153 + $0x48] sm:%s145] %v190
                %v192 = vld [vmem:[%s152 + $0x4c] sm:%s145]
                %193 = vst [vmem:[%s153 + $0x4c] sm:%s145] %v192
                %v194 = vld [vmem:[%s152 + $0x50] sm:%s145]
                %195 = vst [vmem:[%s153 + $0x50] sm:%s145] %v194
                %v196 = vld [vmem:[%s152 + $0x54] sm:%s145]
                %197 = vst [vmem:[%s153 + $0x54] sm:%s145] %v196
                %v198 = vld [vmem:[%s152 + $0x58] sm:%s145]
                %199 = vst [vmem:[%s153 + $0x58] sm:%s145] %v198
                %v200 = vld [vmem:[%s152 + $0x5c] sm:%s145]
                %201 = vst [vmem:[%s153 + $0x5c] sm:%s145] %v200
                %v202 = vld [vmem:[%s152 + $0x60] sm:%s145]
                %203 = vst [vmem:[%s153 + $0x60] sm:%s145] %v202
                %v204 = vld [vmem:[%s152 + $0x64] sm:%s145]
                %205 = vst [vmem:[%s153 + $0x64] sm:%s145] %v204
                %v206 = vld [vmem:[%s152 + $0x68] sm:%s145]
                %207 = vst [vmem:[%s153 + $0x68] sm:%s145] %v206
                %v208 = vld [vmem:[%s152 + $0x6c] sm:%s145]
                %209 = vst [vmem:[%s153 + $0x6c] sm:%s145] %v208
                %v210 = vld [vmem:[%s152 + $0x70] sm:%s145]
                %211 = vst [vmem:[%s153 + $0x70] sm:%s145] %v210
                %v212 = vld [vmem:[%s152 + $0x74] sm:%s145]
                %213 = vst [vmem:[%s153 + $0x74] sm:%s145] %v212
                %v214 = vld [vmem:[%s152 + $0xf0] sm:%s145]
                %215 = vst [vmem:[%s153 + $0x78] sm:%s145] %v214
                %v216 = vld [vmem:[%s152 + $0xf4] sm:%s145]
                %217 = vst [vmem:[%s153 + $0x7c] sm:%s145] %v216
                %v218 = vld [vmem:[%s152 + $0xf8] sm:%s145]
                %219 = vst [vmem:[%s153 + $0x80] sm:%s145] %v218
                %v220 = vld [vmem:[%s152 + $0xfc] sm:%s145]
                %221 = vst [vmem:[%s153 + $0x84] sm:%s145] %v220
                %v222 = vld [vmem:[%s152 + $0x100] sm:%s145]
                %223 = vst [vmem:[%s153 + $0x88] sm:%s145] %v222
                %v224 = vld [vmem:[%s152 + $0x104] sm:%s145]
                %225 = vst [vmem:[%s153 + $0x8c] sm:%s145] %v224
                %v226 = vld [vmem:[%s152 + $0x108] sm:%s145]
                %227 = vst [vmem:[%s153 + $0x90] sm:%s145] %v226
                %v228 = vld [vmem:[%s152 + $0x10c] sm:%s145]
                %229 = vst [vmem:[%s153 + $0x94] sm:%s145] %v228
                %v230 = vld [vmem:[%s152 + $0x110] sm:%s145]
                %231 = vst [vmem:[%s153 + $0x98] sm:%s145] %v230
                %v232 = vld [vmem:[%s152 + $0x114] sm:%s145]
                %233 = vst [vmem:[%s153 + $0x9c] sm:%s145] %v232
                %v234 = vld [vmem:[%s152 + $0x118] sm:%s145]
                %235 = vst [vmem:[%s153 + $0xa0] sm:%s145] %v234
                %v236 = vld [vmem:[%s152 + $0x11c] sm:%s145]
                %237 = vst [vmem:[%s153 + $0xa4] sm:%s145] %v236
                %v238 = vld [vmem:[%s152 + $0x120] sm:%s145]
                %239 = vst [vmem:[%s153 + $0xa8] sm:%s145] %v238
                %v240 = vld [vmem:[%s152 + $0x124] sm:%s145]
                %241 = vst [vmem:[%s153 + $0xac] sm:%s145] %v240
                %v242 = vld [vmem:[%s152 + $0x128] sm:%s145]
                %243 = vst [vmem:[%s153 + $0xb0] sm:%s145] %v242
                %v244 = vld [vmem:[%s152 + $0x12c] sm:%s145]
                %245 = vst [vmem:[%s153 + $0xb4] sm:%s145] %v244
                %v246 = vld [vmem:[%s152 + $0x130] sm:%s145]
                %247 = vst [vmem:[%s153 + $0xb8] sm:%s145] %v246
                %v248 = vld [vmem:[%s152 + $0x134] sm:%s145]
                %249 = vst [vmem:[%s153 + $0xbc] sm:%s145] %v248
                %v250 = vld [vmem:[%s152 + $0x138] sm:%s145]
                %251 = vst [vmem:[%s153 + $0xc0] sm:%s145] %v250
                %v252 = vld [vmem:[%s152 + $0x13c] sm:%s145]
                %253 = vst [vmem:[%s153 + $0xc4] sm:%s145] %v252
                %v254 = vld [vmem:[%s152 + $0x140] sm:%s145]
                %255 = vst [vmem:[%s153 + $0xc8] sm:%s145] %v254
                %v256 = vld [vmem:[%s152 + $0x144] sm:%s145]
                %257 = vst [vmem:[%s153 + $0xcc] sm:%s145] %v256
                %v258 = vld [vmem:[%s152 + $0x148] sm:%s145]
                %259 = vst [vmem:[%s153 + $0xd0] sm:%s145] %v258
                %v260 = vld [vmem:[%s152 + $0x14c] sm:%s145]
                %261 = vst [vmem:[%s153 + $0xd4] sm:%s145] %v260
                %v262 = vld [vmem:[%s152 + $0x150] sm:%s145]
                %263 = vst [vmem:[%s153 + $0xd8] sm:%s145] %v262
                %v264 = vld [vmem:[%s152 + $0x154] sm:%s145]
                %265 = vst [vmem:[%s153 + $0xdc] sm:%s145] %v264
                %v266 = vld [vmem:[%s152 + $0x158] sm:%s145]
                %267 = vst [vmem:[%s153 + $0xe0] sm:%s145] %v266
                %v268 = vld [vmem:[%s152 + $0x15c] sm:%s145]
                %269 = vst [vmem:[%s153 + $0xe4] sm:%s145] %v268
                %v270 = vld [vmem:[%s152 + $0x160] sm:%s145]
                %271 = vst [vmem:[%s153 + $0xe8] sm:%s145] %v270
                %v272 = vld [vmem:[%s152 + $0x164] sm:%s145]
                %273 = vst [vmem:[%s153 + $0xec] sm:%s145] %v272
                %v274 = vld [vmem:[%s152 + $0x1e0] sm:%s145]
                %275 = vst [vmem:[%s153 + $0xf0] sm:%s145] %v274
                %v276 = vld [vmem:[%s152 + $0x1e4] sm:%s145]
                %277 = vst [vmem:[%s153 + $0xf4] sm:%s145] %v276
                %v278 = vld [vmem:[%s152 + $0x1e8] sm:%s145]
                %279 = vst [vmem:[%s153 + $0xf8] sm:%s145] %v278
                %v280 = vld [vmem:[%s152 + $0x1ec] sm:%s145]
                %281 = vst [vmem:[%s153 + $0xfc] sm:%s145] %v280
                %v282 = vld [vmem:[%s152 + $0x1f0] sm:%s145]
                %283 = vst [vmem:[%s153 + $0x100] sm:%s145] %v282
                %v284 = vld [vmem:[%s152 + $0x1f4] sm:%s145]
                %285 = vst [vmem:[%s153 + $0x104] sm:%s145] %v284
                %v286 = vld [vmem:[%s152 + $0x1f8] sm:%s145]
                %287 = vst [vmem:[%s153 + $0x108] sm:%s145] %v286
                %v288 = vld [vmem:[%s152 + $0x1fc] sm:%s145]
                %289 = vst [vmem:[%s153 + $0x10c] sm:%s145] %v288
                %v290 = vld [vmem:[%s152 + $0x200] sm:%s145]
                %291 = vst [vmem:[%s153 + $0x110] sm:%s145] %v290
                %v292 = vld [vmem:[%s152 + $0x204] sm:%s145]
                %293 = vst [vmem:[%s153 + $0x114] sm:%s145] %v292
                %v294 = vld [vmem:[%s152 + $0x208] sm:%s145]
                %295 = vst [vmem:[%s153 + $0x118] sm:%s145] %v294
                %v296 = vld [vmem:[%s152 + $0x20c] sm:%s145]
                %297 = vst [vmem:[%s153 + $0x11c] sm:%s145] %v296
                %v298 = vld [vmem:[%s152 + $0x210] sm:%s145]
                %299 = vst [vmem:[%s153 + $0x120] sm:%s145] %v298
                %v300 = vld [vmem:[%s152 + $0x214] sm:%s145]
                %301 = vst [vmem:[%s153 + $0x124] sm:%s145] %v300
                %v302 = vld [vmem:[%s152 + $0x218] sm:%s145]
                %303 = vst [vmem:[%s153 + $0x128] sm:%s145] %v302
                %v304 = vld [vmem:[%s152 + $0x21c] sm:%s145]
                %305 = vst [vmem:[%s153 + $0x12c] sm:%s145] %v304
                %v306 = vld [vmem:[%s152 + $0x220] sm:%s145]
                %307 = vst [vmem:[%s153 + $0x130] sm:%s145] %v306
                %v308 = vld [vmem:[%s152 + $0x224] sm:%s145]
                %309 = vst [vmem:[%s153 + $0x134] sm:%s145] %v308
                %v310 = vld [vmem:[%s152 + $0x228] sm:%s145]
                %311 = vst [vmem:[%s153 + $0x138] sm:%s145] %v310
                %v312 = vld [vmem:[%s152 + $0x22c] sm:%s145]
                %313 = vst [vmem:[%s153 + $0x13c] sm:%s145] %v312
                %v314 = vld [vmem:[%s152 + $0x230] sm:%s145]
                %315 = vst [vmem:[%s153 + $0x140] sm:%s145] %v314
                %v316 = vld [vmem:[%s152 + $0x234] sm:%s145]
                %317 = vst [vmem:[%s153 + $0x144] sm:%s145] %v316
                %v318 = vld [vmem:[%s152 + $0x238] sm:%s145]
                %319 = vst [vmem:[%s153 + $0x148] sm:%s145] %v318
                %v320 = vld [vmem:[%s152 + $0x23c] sm:%s145]
                %321 = vst [vmem:[%s153 + $0x14c] sm:%s145] %v320
                %v322 = vld [vmem:[%s152 + $0x240] sm:%s145]
                %323 = vst [vmem:[%s153 + $0x150] sm:%s145] %v322
                %v324 = vld [vmem:[%s152 + $0x244] sm:%s145]
                %325 = vst [vmem:[%s153 + $0x154] sm:%s145] %v324
                %v326 = vld [vmem:[%s152 + $0x248] sm:%s145]
                %327 = vst [vmem:[%s153 + $0x158] sm:%s145] %v326
                %v328 = vld [vmem:[%s152 + $0x24c] sm:%s145]
                %329 = vst [vmem:[%s153 + $0x15c] sm:%s145] %v328
                %v330 = vld [vmem:[%s152 + $0x250] sm:%s145]
                %331 = vst [vmem:[%s153 + $0x160] sm:%s145] %v330
                %v332 = vld [vmem:[%s152 + $0x254] sm:%s145]
                %333 = vst [vmem:[%s153 + $0x164] sm:%s145] %v332
                %v334 = vld [vmem:[%s152 + $0x2d0] sm:%s145]
                %335 = vst [vmem:[%s153 + $0x168] sm:%s145] %v334
                %v336 = vld [vmem:[%s152 + $0x2d4] sm:%s145]
                %337 = vst [vmem:[%s153 + $0x16c] sm:%s145] %v336
                %v338 = vld [vmem:[%s152 + $0x2d8] sm:%s145]
                %339 = vst [vmem:[%s153 + $0x170] sm:%s145] %v338
                %v340 = vld [vmem:[%s152 + $0x2dc] sm:%s145]
                %341 = vst [vmem:[%s153 + $0x174] sm:%s145] %v340
                %v342 = vld [vmem:[%s152 + $0x2e0] sm:%s145]
                %343 = vst [vmem:[%s153 + $0x178] sm:%s145] %v342
                %v344 = vld [vmem:[%s152 + $0x2e4] sm:%s145]
                %345 = vst [vmem:[%s153 + $0x17c] sm:%s145] %v344
                %v346 = vld [vmem:[%s152 + $0x2e8] sm:%s145]
                %347 = vst [vmem:[%s153 + $0x180] sm:%s145] %v346
                %v348 = vld [vmem:[%s152 + $0x2ec] sm:%s145]
                %349 = vst [vmem:[%s153 + $0x184] sm:%s145] %v348
                %v350 = vld [vmem:[%s152 + $0x2f0] sm:%s145]
                %351 = vst [vmem:[%s153 + $0x188] sm:%s145] %v350
                %v352 = vld [vmem:[%s152 + $0x2f4] sm:%s145]
                %353 = vst [vmem:[%s153 + $0x18c] sm:%s145] %v352
                %v354 = vld [vmem:[%s152 + $0x2f8] sm:%s145]
                %355 = vst [vmem:[%s153 + $0x190] sm:%s145] %v354
                %v356 = vld [vmem:[%s152 + $0x2fc] sm:%s145]
                %357 = vst [vmem:[%s153 + $0x194] sm:%s145] %v356
                %v358 = vld [vmem:[%s152 + $0x300] sm:%s145]
                %359 = vst [vmem:[%s153 + $0x198] sm:%s145] %v358
                %v360 = vld [vmem:[%s152 + $0x304] sm:%s145]
                %361 = vst [vmem:[%s153 + $0x19c] sm:%s145] %v360
                %v362 = vld [vmem:[%s152 + $0x308] sm:%s145]
                %363 = vst [vmem:[%s153 + $0x1a0] sm:%s145] %v362
                %v364 = vld [vmem:[%s152 + $0x30c] sm:%s145]
                %365 = vst [vmem:[%s153 + $0x1a4] sm:%s145] %v364
                %v366 = vld [vmem:[%s152 + $0x310] sm:%s145]
                %367 = vst [vmem:[%s153 + $0x1a8] sm:%s145] %v366
                %v368 = vld [vmem:[%s152 + $0x314] sm:%s145]
                %369 = vst [vmem:[%s153 + $0x1ac] sm:%s145] %v368
                %v370 = vld [vmem:[%s152 + $0x318] sm:%s145]
                %371 = vst [vmem:[%s153 + $0x1b0] sm:%s145] %v370
                %v372 = vld [vmem:[%s152 + $0x31c] sm:%s145]
                %373 = vst [vmem:[%s153 + $0x1b4] sm:%s145] %v372
                %v374 = vld [vmem:[%s152 + $0x320] sm:%s145]
                %375 = vst [vmem:[%s153 + $0x1b8] sm:%s145] %v374
                %v376 = vld [vmem:[%s152 + $0x324] sm:%s145]
                %377 = vst [vmem:[%s153 + $0x1bc] sm:%s145] %v376
                %v378 = vld [vmem:[%s152 + $0x328] sm:%s145]
                %379 = vst [vmem:[%s153 + $0x1c0] sm:%s145] %v378
                %v380 = vld [vmem:[%s152 + $0x32c] sm:%s145]
                %381 = vst [vmem:[%s153 + $0x1c4] sm:%s145] %v380
                %v382 = vld [vmem:[%s152 + $0x330] sm:%s145]
                %383 = vst [vmem:[%s153 + $0x1c8] sm:%s145] %v382
                %v384 = vld [vmem:[%s152 + $0x334] sm:%s145]
                %385 = vst [vmem:[%s153 + $0x1cc] sm:%s145] %v384
                %v386 = vld [vmem:[%s152 + $0x338] sm:%s145]
                %387 = vst [vmem:[%s153 + $0x1d0] sm:%s145] %v386
                %v388 = vld [vmem:[%s152 + $0x33c] sm:%s145]
                %389 = vst [vmem:[%s153 + $0x1d4] sm:%s145] %v388
                %v390 = vld [vmem:[%s152 + $0x340] sm:%s145]
                %391 = vst [vmem:[%s153 + $0x1d8] sm:%s145] %v390
                %v392 = vld [vmem:[%s152 + $0x344] sm:%s145]
                %393 = vst [vmem:[%s153 + $0x1dc] sm:%s145] %v392
              $region45: #{_lambda_.2} parent=39 // loop_footer
                %s151 = sadd.s32 1, %s147
              $region46: #{_lambda_.2} parent=39 // loop_footer_branch
                %146 = sbr.rel target = $region42
              $region47: #{_lambda_.2} parent=39 // loop_exit
                _
            $region40: #{_lambda_.2} parent=31 // pred_fallthru
              _
          $region32: #{_lambda_.2} parent=27 // pred_fallthru
            _
          %654 = vnop
        $region28: #{_lambda_.2} parent=23 // pred_fallthru
          _
      $region24: #{_lambda_.2} parent=5 // pred_fallthru
        _
      %p655 = scmp.le.s32.totalorder 1, %s9
      %p656 = scmp.lt.s32.totalorder %s9, 3
      %p657 = pnand %p655, %p656
      %p658 = pneg %p657
      // Predicated region
      $region66: #{_lambda_.2} parent=5 // pred_check
        _
      $region67: #{_lambda_.2} parent=5 // pred_check_branch
        %660 = sbr.rel (%p657) target = $region69
      $region68: #{_lambda_.2} parent=5 // pred_region
        %s661 = ssub.s32 %s9, 1
        %s662 = sand.u32 %s22, 1
        %s663 = sand.u32 %s22, 1
        %s664 = smul.addr %s663, 480
        %s665 = scalar_lea.vmem [#allocation2], %s664
        // Predicated region
        $region70: #{_lambda_.2} parent=68 // pred_check
          %p666 = pneg %p35
        $region71: #{_lambda_.2} parent=68 // pred_check_branch
          %668 = sbr.rel (%p666) target = $region73
        $region72: #{_lambda_.2} parent=68 // pred_region
          _
        $region73: #{_lambda_.2} parent=68 // pred_fallthru
          _
        %s669 = sand.u32 %s22, 1
        %s670 = sand.u32 %s22, 1
        %s671 = smul.addr %s670, 480
        %s672 = scalar_lea.vmem [#allocation2], %s671
        %p673 = pneg %p35
        %p674 = pneg %p32
        %p675 = pneg %p56
        %p676 = pneg %p53
        %p677 = pneg %p77
        %p678 = pneg %p74
        %p679 = pneg %p103
        %p680 = pneg %p100
        %s681 = smul.u32 30, %s14
        %p682 = scmp.lt.s32.totalorder %s681, 59
        %s683 = scalar_select %p682, %s681, 59
        %s684 = smul.addr %s683, 8
        %s685 = scalar_lea.vmem %s3, %s684
        %s686 = smul.u32 30, %s14
        %s687 = smul.u32 30, %s14
        %p688 = scmp.lt.s32.totalorder %s687, 59
        %s689 = scalar_select %p688, %s687, 59
        %s690 = smul.addr %s689, 8
        %s691 = scalar_lea.vmem %s3, %s690
        %s692 = smul.u32 30, %s14
        %v694 = vld [vmem:[%s1] sm:$0xf]
        %v695 = vld [vmem:[%s1 + $0x4] sm:$0xf]
        %v696 = vld [vmem:[%s1 + $0x8] sm:$0xf]
        %v697 = vld [vmem:[%s1 + $0xc] sm:$0x3]
        %v698 = vld [vmem:[%s665] sm:$0xf]
        %v699 = vld [vmem:[%s665 + $0x4] sm:$0xf]
        %v700 = vld [vmem:[%s665 + $0x8] sm:$0xf]
        %v701 = vld [vmem:[%s665 + $0xc] sm:$0xf]
        %v702 = vld [vmem:[%s665 + $0x10] sm:$0xf]
        %v703 = vld [vmem:[%s665 + $0x14] sm:$0xf]
        %v704 = vld [vmem:[%s665 + $0x18] sm:$0xf]
        %v705 = vld [vmem:[%s665 + $0x1c] sm:$0xf]
        %v706 = vld [vmem:[%s665 + $0x20] sm:$0xf]
        %v707 = vld [vmem:[%s665 + $0x24] sm:$0xf]
        %v708 = vld [vmem:[%s665 + $0x28] sm:$0xf]
        %v709 = vld [vmem:[%s665 + $0x2c] sm:$0xf]
        %v710 = vld [vmem:[%s665 + $0x30] sm:$0xf]
        %v711 = vld [vmem:[%s665 + $0x34] sm:$0xf]
        %v712 = vld [vmem:[%s665 + $0x38] sm:$0xf]
        %v713 = vld [vmem:[%s665 + $0x3c] sm:$0xf]
        %v714 = vld [vmem:[%s665 + $0x40] sm:$0xf]
        %v715 = vld [vmem:[%s665 + $0x44] sm:$0xf]
        %v716 = vld [vmem:[%s665 + $0x48] sm:$0xf]
        %v717 = vld [vmem:[%s665 + $0x4c] sm:$0xf]
        %v718 = vld [vmem:[%s665 + $0x50] sm:$0xf]
        %v719 = vld [vmem:[%s665 + $0x54] sm:$0xf]
        %v720 = vld [vmem:[%s665 + $0x58] sm:$0xf]
        %v721 = vld [vmem:[%s665 + $0x5c] sm:$0xf]
        %v722 = vld [vmem:[%s665 + $0x60] sm:$0xf]
        %v723 = vld [vmem:[%s665 + $0x64] sm:$0xf]
        %v724 = vld [vmem:[%s665 + $0x68] sm:$0xf]
        %v725 = vld [vmem:[%s665 + $0x6c] sm:$0xf]
        %v726 = vld [vmem:[%s665 + $0x70] sm:$0xf]
        %v727 = vld [vmem:[%s665 + $0x74] sm:$0xf]
        %v758 = vunpack.c.l.b16 %v698
        %v759 = vunpack.c.l.b16 %v699
        %v760 = vunpack.c.l.b16 %v700
        %v761 = vunpack.c.l.b16 %v701
        %v762 = vunpack.c.l.b16 %v702
        %v763 = vunpack.c.l.b16 %v703
        %v764 = vunpack.c.l.b16 %v704
        %v765 = vunpack.c.l.b16 %v705
        %v766 = vunpack.c.l.b16 %v706
        %v767 = vunpack.c.l.b16 %v707
        %v768 = vunpack.c.l.b16 %v708
        %v769 = vunpack.c.l.b16 %v709
        %v770 = vunpack.c.l.b16 %v710
        %v771 = vunpack.c.l.b16 %v711
        %v772 = vunpack.c.l.b16 %v712
        %v773 = vunpack.c.l.b16 %v713
        %v774 = vunpack.c.l.b16 %v714
        %v775 = vunpack.c.l.b16 %v715
        %v776 = vunpack.c.l.b16 %v716
        %v777 = vunpack.c.l.b16 %v717
        %v778 = vunpack.c.l.b16 %v718
        %v779 = vunpack.c.l.b16 %v719
        %v780 = vunpack.c.l.b16 %v720
        %v781 = vunpack.c.l.b16 %v721
        %v782 = vunpack.c.l.b16 %v722
        %v783 = vunpack.c.l.b16 %v723
        %v784 = vunpack.c.l.b16 %v724
        %v785 = vunpack.c.l.b16 %v725
        %v786 = vunpack.c.l.b16 %v726
        %v787 = vunpack.c.l.b16 %v727
        %v788 = vpack.c.b16 %v759, %v758
        %v789 = vpack.c.b16 %v761, %v760
        %v790 = vpack.c.b16 %v763, %v762
        %v791 = vpack.c.b16 %v765, %v764
        %v792 = vpack.c.b16 %v767, %v766
        %v793 = vpack.c.b16 %v769, %v768
        %v794 = vpack.c.b16 %v771, %v770
        %v795 = vpack.c.b16 %v773, %v772
        %v796 = vpack.c.b16 %v775, %v774
        %v797 = vpack.c.b16 %v777, %v776
        %v798 = vpack.c.b16 %v779, %v778
        %v799 = vpack.c.b16 %v781, %v780
        %v800 = vpack.c.b16 %v783, %v782
        %v801 = vpack.c.b16 %v785, %v784
        %v802 = vpack.c.b16 %v787, %v786
        %v807 = vunpack.c.l.b16 %v694
        %v808 = vunpack.c.l.b16 %v695
        %v809 = vunpack.c.l.b16 %v696
        %v810 = vunpack.c.l.b16 %v697
        %v811 = vpack.c.b16 %v808, %v807
        %v812 = vpack.c.b16 %v810, %v809
        %vm814 = vcmask 220160
        %v816 = vsel %vm814, %v788, 0
        %v819 = vsel %vm814, %v789, 0
        %v822 = vsel %vm814, %v790, 0
        %v825 = vsel %vm814, %v791, 0
        %v828 = vsel %vm814, %v792, 0
        %v831 = vsel %vm814, %v793, 0
        %v834 = vsel %vm814, %v794, 0
        %v837 = vsel %vm814, %v795, 0
        %v840 = vsel %vm814, %v796, 0
        %v843 = vsel %vm814, %v797, 0
        %v846 = vsel %vm814, %v798, 0
        %v849 = vsel %vm814, %v799, 0
        %v852 = vsel %vm814, %v800, 0
        %v855 = vsel %vm814, %v801, 0
        %v858 = vsel %vm814, %v802, 0
        %vm860 = vcmask 1044480
        %vm861 = vcmask 1045504
        %v862 = vsel %vm860, 4294967295, 65535
        %v863 = vsel %vm861, %v862, 0
        %v865 = vand.u32 %v812, %v863
        %867 = vmatpush.bf16.msra.mxu0 0
        %868 = vmatpush.bf16.msra.mxu0 0
        %869 = vmatpush.bf16.msra.mxu0 0
        %870 = vmatpush.bf16.msra.mxu0 0
        %871 = vmatpush.bf16.msra.mxu0 0
        %872 = vmatpush.bf16.msra.mxu0 0
        %873 = vmatpush.bf16.msra.mxu0 %v865
        %874 = vmatpush.bf16.msra.mxu0 %v811
        %875 = vmatmul.bf16.gmra.mxu0 %v816
        %v876 = vpop.f32.mrf.mxu0
        %v877 = vadd.f32 0.0, %v876
        %v878 = vpop.f32.mrf.mxu0
        %v879 = vadd.f32 0.0, %v878
        %880 = vmatmul.bf16.gmra.mxu0 %v819
        %v881 = vpop.f32.mrf.mxu0
        %v882 = vadd.f32 0.0, %v881
        %v883 = vpop.f32.mrf.mxu0
        %v884 = vadd.f32 0.0, %v883
        %885 = vmatmul.bf16.gmra.mxu0 %v822
        %v886 = vpop.f32.mrf.mxu0
        %v887 = vadd.f32 0.0, %v886
        %v888 = vpop.f32.mrf.mxu0
        %v889 = vadd.f32 0.0, %v888
        %890 = vmatmul.bf16.gmra.mxu0 %v825
        %v891 = vpop.f32.mrf.mxu0
        %v892 = vadd.f32 0.0, %v891
        %v893 = vpop.f32.mrf.mxu0
        %v894 = vadd.f32 0.0, %v893
        %895 = vmatmul.bf16.gmra.mxu0 %v828
        %v896 = vpop.f32.mrf.mxu0
        %v897 = vadd.f32 0.0, %v896
        %v898 = vpop.f32.mrf.mxu0
        %v899 = vadd.f32 0.0, %v898
        %900 = vmatmul.bf16.gmra.mxu0 %v831
        %v901 = vpop.f32.mrf.mxu0
        %v902 = vadd.f32 0.0, %v901
        %v903 = vpop.f32.mrf.mxu0
        %v904 = vadd.f32 0.0, %v903
        %905 = vmatmul.bf16.gmra.mxu0 %v834
        %v906 = vpop.f32.mrf.mxu0
        %v907 = vadd.f32 0.0, %v906
        %v908 = vpop.f32.mrf.mxu0
        %v909 = vadd.f32 0.0, %v908
        %910 = vmatmul.bf16.gmra.mxu0 %v837
        %v911 = vpop.f32.mrf.mxu0
        %v912 = vadd.f32 0.0, %v911
        %v913 = vpop.f32.mrf.mxu0
        %v914 = vadd.f32 0.0, %v913
        %915 = vmatmul.bf16.gmra.mxu0 %v840
        %v916 = vpop.f32.mrf.mxu0
        %v917 = vadd.f32 0.0, %v916
        %v918 = vpop.f32.mrf.mxu0
        %v919 = vadd.f32 0.0, %v918
        %920 = vmatmul.bf16.gmra.mxu0 %v843
        %v921 = vpop.f32.mrf.mxu0
        %v922 = vadd.f32 0.0, %v921
        %v923 = vpop.f32.mrf.mxu0
        %v924 = vadd.f32 0.0, %v923
        %925 = vmatmul.bf16.gmra.mxu0 %v846
        %v926 = vpop.f32.mrf.mxu0
        %v927 = vadd.f32 0.0, %v926
        %v928 = vpop.f32.mrf.mxu0
        %v929 = vadd.f32 0.0, %v928
        %930 = vmatmul.bf16.gmra.mxu0 %v849
        %v931 = vpop.f32.mrf.mxu0
        %v932 = vadd.f32 0.0, %v931
        %v933 = vpop.f32.mrf.mxu0
        %v934 = vadd.f32 0.0, %v933
        %935 = vmatmul.bf16.gmra.mxu0 %v852
        %v936 = vpop.f32.mrf.mxu0
        %v937 = vadd.f32 0.0, %v936
        %v938 = vpop.f32.mrf.mxu0
        %v939 = vadd.f32 0.0, %v938
        %940 = vmatmul.bf16.gmra.mxu0 %v855
        %v941 = vpop.f32.mrf.mxu0
        %v942 = vadd.f32 0.0, %v941
        %v943 = vpop.f32.mrf.mxu0
        %v944 = vadd.f32 0.0, %v943
        %945 = vmatmul.bf16.gmra.mxu0 %v858
        %v946 = vpop.f32.mrf.mxu0
        %v947 = vadd.f32 0.0, %v946
        %v948 = vpop.f32.mrf.mxu0
        %v949 = vadd.f32 0.0, %v948
        %950 = vdwg.mxu0
        %s951 = scalar_lea.vmem %s665, 120 [#allocation2]
        %v952 = vld [vmem:[%s951] sm:$0xf]
        %v953 = vld [vmem:[%s951 + $0x4] sm:$0xf]
        %v954 = vld [vmem:[%s951 + $0x8] sm:$0xf]
        %v955 = vld [vmem:[%s951 + $0xc] sm:$0xf]
        %v956 = vld [vmem:[%s951 + $0x10] sm:$0xf]
        %v957 = vld [vmem:[%s951 + $0x14] sm:$0xf]
        %v958 = vld [vmem:[%s951 + $0x18] sm:$0xf]
        %v959 = vld [vmem:[%s951 + $0x1c] sm:$0xf]
        %v960 = vld [vmem:[%s951 + $0x20] sm:$0xf]
        %v961 = vld [vmem:[%s951 + $0x24] sm:$0xf]
        %v962 = vld [vmem:[%s951 + $0x28] sm:$0xf]
        %v963 = vld [vmem:[%s951 + $0x2c] sm:$0xf]
        %v964 = vld [vmem:[%s951 + $0x30] sm:$0xf]
        %v965 = vld [vmem:[%s951 + $0x34] sm:$0xf]
        %v966 = vld [vmem:[%s951 + $0x38] sm:$0xf]
        %v967 = vld [vmem:[%s951 + $0x3c] sm:$0xf]
        %v968 = vld [vmem:[%s951 + $0x40] sm:$0xf]
        %v969 = vld [vmem:[%s951 + $0x44] sm:$0xf]
        %v970 = vld [vmem:[%s951 + $0x48] sm:$0xf]
        %v971 = vld [vmem:[%s951 + $0x4c] sm:$0xf]
        %v972 = vld [vmem:[%s951 + $0x50] sm:$0xf]
        %v973 = vld [vmem:[%s951 + $0x54] sm:$0xf]
        %v974 = vld [vmem:[%s951 + $0x58] sm:$0xf]
        %v975 = vld [vmem:[%s951 + $0x5c] sm:$0xf]
        %v976 = vld [vmem:[%s951 + $0x60] sm:$0xf]
        %v977 = vld [vmem:[%s951 + $0x64] sm:$0xf]
        %v978 = vld [vmem:[%s951 + $0x68] sm:$0xf]
        %v979 = vld [vmem:[%s951 + $0x6c] sm:$0xf]
        %v980 = vld [vmem:[%s951 + $0x70] sm:$0xf]
        %v981 = vld [vmem:[%s951 + $0x74] sm:$0xf]
        %v1012 = vunpack.c.l.b16 %v952
        %v1013 = vunpack.c.l.b16 %v953
        %v1014 = vunpack.c.l.b16 %v954
        %v1015 = vunpack.c.l.b16 %v955
        %v1016 = vunpack.c.l.b16 %v956
        %v1017 = vunpack.c.l.b16 %v957
        %v1018 = vunpack.c.l.b16 %v958
        %v1019 = vunpack.c.l.b16 %v959
        %v1020 = vunpack.c.l.b16 %v960
        %v1021 = vunpack.c.l.b16 %v961
        %v1022 = vunpack.c.l.b16 %v962
        %v1023 = vunpack.c.l.b16 %v963
        %v1024 = vunpack.c.l.b16 %v964
        %v1025 = vunpack.c.l.b16 %v965
        %v1026 = vunpack.c.l.b16 %v966
        %v1027 = vunpack.c.l.b16 %v967
        %v1028 = vunpack.c.l.b16 %v968
        %v1029 = vunpack.c.l.b16 %v969
        %v1030 = vunpack.c.l.b16 %v970
        %v1031 = vunpack.c.l.b16 %v971
        %v1032 = vunpack.c.l.b16 %v972
        %v1033 = vunpack.c.l.b16 %v973
        %v1034 = vunpack.c.l.b16 %v974
        %v1035 = vunpack.c.l.b16 %v975
        %v1036 = vunpack.c.l.b16 %v976
        %v1037 = vunpack.c.l.b16 %v977
        %v1038 = vunpack.c.l.b16 %v978
        %v1039 = vunpack.c.l.b16 %v979
        %v1040 = vunpack.c.l.b16 %v980
        %v1041 = vunpack.c.l.b16 %v981
        %v1042 = vpack.c.b16 %v1013, %v1012
        %v1043 = vpack.c.b16 %v1015, %v1014
        %v1044 = vpack.c.b16 %v1017, %v1016
        %v1045 = vpack.c.b16 %v1019, %v1018
        %v1046 = vpack.c.b16 %v1021, %v1020
        %v1047 = vpack.c.b16 %v1023, %v1022
        %v1048 = vpack.c.b16 %v1025, %v1024
        %v1049 = vpack.c.b16 %v1027, %v1026
        %v1050 = vpack.c.b16 %v1029, %v1028
        %v1051 = vpack.c.b16 %v1031, %v1030
        %v1052 = vpack.c.b16 %v1033, %v1032
        %v1053 = vpack.c.b16 %v1035, %v1034
        %v1054 = vpack.c.b16 %v1037, %v1036
        %v1055 = vpack.c.b16 %v1039, %v1038
        %v1056 = vpack.c.b16 %v1041, %v1040
        %v1058 = vsel %vm814, %v1042, 0
        %v1061 = vsel %vm814, %v1043, 0
        %v1064 = vsel %vm814, %v1044, 0
        %v1067 = vsel %vm814, %v1045, 0
        %v1070 = vsel %vm814, %v1046, 0
        %v1073 = vsel %vm814, %v1047, 0
        %v1076 = vsel %vm814, %v1048, 0
        %v1079 = vsel %vm814, %v1049, 0
        %v1082 = vsel %vm814, %v1050, 0
        %v1085 = vsel %vm814, %v1051, 0
        %v1088 = vsel %vm814, %v1052, 0
        %v1091 = vsel %vm814, %v1053, 0
        %v1094 = vsel %vm814, %v1054, 0
        %v1097 = vsel %vm814, %v1055, 0
        %v1100 = vsel %vm814, %v1056, 0
        %1102 = vmatpush.bf16.msra.mxu0 0
        %1103 = vmatpush.bf16.msra.mxu0 0
        %1104 = vmatpush.bf16.msra.mxu0 0
        %1105 = vmatpush.bf16.msra.mxu0 0
        %1106 = vmatpush.bf16.msra.mxu0 0
        %1107 = vmatpush.bf16.msra.mxu0 0
        %1108 = vmatpush.bf16.msra.mxu0 %v865
        %1109 = vmatpush.bf16.msra.mxu0 %v811
        %1110 = vmatmul.bf16.gmra.mxu0 %v1058
        %v1111 = vpop.f32.mrf.mxu0
        %v1112 = vadd.f32 0.0, %v1111
        %v1113 = vpop.f32.mrf.mxu0
        %v1114 = vadd.f32 0.0, %v1113
        %1115 = vmatmul.bf16.gmra.mxu0 %v1061
        %v1116 = vpop.f32.mrf.mxu0
        %v1117 = vadd.f32 0.0, %v1116
        %v1118 = vpop.f32.mrf.mxu0
        %v1119 = vadd.f32 0.0, %v1118
        %1120 = vmatmul.bf16.gmra.mxu0 %v1064
        %v1121 = vpop.f32.mrf.mxu0
        %v1122 = vadd.f32 0.0, %v1121
        %v1123 = vpop.f32.mrf.mxu0
        %v1124 = vadd.f32 0.0, %v1123
        %1125 = vmatmul.bf16.gmra.mxu0 %v1067
        %v1126 = vpop.f32.mrf.mxu0
        %v1127 = vadd.f32 0.0, %v1126
        %v1128 = vpop.f32.mrf.mxu0
        %v1129 = vadd.f32 0.0, %v1128
        %1130 = vmatmul.bf16.gmra.mxu0 %v1070
        %v1131 = vpop.f32.mrf.mxu0
        %v1132 = vadd.f32 0.0, %v1131
        %v1133 = vpop.f32.mrf.mxu0
        %v1134 = vadd.f32 0.0, %v1133
        %1135 = vmatmul.bf16.gmra.mxu0 %v1073
        %v1136 = vpop.f32.mrf.mxu0
        %v1137 = vadd.f32 0.0, %v1136
        %v1138 = vpop.f32.mrf.mxu0
        %v1139 = vadd.f32 0.0, %v1138
        %1140 = vmatmul.bf16.gmra.mxu0 %v1076
        %v1141 = vpop.f32.mrf.mxu0
        %v1142 = vadd.f32 0.0, %v1141
        %v1143 = vpop.f32.mrf.mxu0
        %v1144 = vadd.f32 0.0, %v1143
        %1145 = vmatmul.bf16.gmra.mxu0 %v1079
        %v1146 = vpop.f32.mrf.mxu0
        %v1147 = vadd.f32 0.0, %v1146
        %v1148 = vpop.f32.mrf.mxu0
        %v1149 = vadd.f32 0.0, %v1148
        %1150 = vmatmul.bf16.gmra.mxu0 %v1082
        %v1151 = vpop.f32.mrf.mxu0
        %v1152 = vadd.f32 0.0, %v1151
        %v1153 = vpop.f32.mrf.mxu0
        %v1154 = vadd.f32 0.0, %v1153
        %1155 = vmatmul.bf16.gmra.mxu0 %v1085
        %v1156 = vpop.f32.mrf.mxu0
        %v1157 = vadd.f32 0.0, %v1156
        %v1158 = vpop.f32.mrf.mxu0
        %v1159 = vadd.f32 0.0, %v1158
        %1160 = vmatmul.bf16.gmra.mxu0 %v1088
        %v1161 = vpop.f32.mrf.mxu0
        %v1162 = vadd.f32 0.0, %v1161
        %v1163 = vpop.f32.mrf.mxu0
        %v1164 = vadd.f32 0.0, %v1163
        %1165 = vmatmul.bf16.gmra.mxu0 %v1091
        %v1166 = vpop.f32.mrf.mxu0
        %v1167 = vadd.f32 0.0, %v1166
        %v1168 = vpop.f32.mrf.mxu0
        %v1169 = vadd.f32 0.0, %v1168
        %1170 = vmatmul.bf16.gmra.mxu0 %v1094
        %v1171 = vpop.f32.mrf.mxu0
        %v1172 = vadd.f32 0.0, %v1171
        %v1173 = vpop.f32.mrf.mxu0
        %v1174 = vadd.f32 0.0, %v1173
        %1175 = vmatmul.bf16.gmra.mxu0 %v1097
        %v1176 = vpop.f32.mrf.mxu0
        %v1177 = vadd.f32 0.0, %v1176
        %v1178 = vpop.f32.mrf.mxu0
        %v1179 = vadd.f32 0.0, %v1178
        %1180 = vmatmul.bf16.gmra.mxu0 %v1100
        %v1181 = vpop.f32.mrf.mxu0
        %v1182 = vadd.f32 0.0, %v1181
        %v1183 = vpop.f32.mrf.mxu0
        %v1184 = vadd.f32 0.0, %v1183
        %1185 = vdwg.mxu0
        %v1186 = vmax.f32 %v877, %v1112
        %v1187 = vmax.f32 %v879, %v1114
        %v1188 = vmax.f32 %v882, %v1117
        %v1189 = vmax.f32 %v884, %v1119
        %v1190 = vmax.f32 %v887, %v1122
        %v1191 = vmax.f32 %v889, %v1124
        %v1192 = vmax.f32 %v892, %v1127
        %v1193 = vmax.f32 %v894, %v1129
        %v1194 = vmax.f32 %v897, %v1132
        %v1195 = vmax.f32 %v899, %v1134
        %v1196 = vmax.f32 %v902, %v1137
        %v1197 = vmax.f32 %v904, %v1139
        %v1198 = vmax.f32 %v907, %v1142
        %v1199 = vmax.f32 %v909, %v1144
        %v1200 = vmax.f32 %v912, %v1147
        %v1201 = vmax.f32 %v914, %v1149
        %v1202 = vmax.f32 %v917, %v1152
        %v1203 = vmax.f32 %v919, %v1154
        %v1204 = vmax.f32 %v922, %v1157
        %v1205 = vmax.f32 %v924, %v1159
        %v1206 = vmax.f32 %v927, %v1162
        %v1207 = vmax.f32 %v929, %v1164
        %v1208 = vmax.f32 %v932, %v1167
        %v1209 = vmax.f32 %v934, %v1169
        %v1210 = vmax.f32 %v937, %v1172
        %v1211 = vmax.f32 %v939, %v1174
        %v1212 = vmax.f32 %v942, %v1177
        %v1213 = vmax.f32 %v944, %v1179
        %v1214 = vmax.f32 %v947, %v1182
        %v1215 = vmax.f32 %v949, %v1184
        %s1216 = scalar_lea.vmem %s665, 240 [#allocation2]
        %v1217 = vld [vmem:[%s1216] sm:$0xf]
        %v1218 = vld [vmem:[%s1216 + $0x4] sm:$0xf]
        %v1219 = vld [vmem:[%s1216 + $0x8] sm:$0xf]
        %v1220 = vld [vmem:[%s1216 + $0xc] sm:$0xf]
        %v1221 = vld [vmem:[%s1216 + $0x10] sm:$0xf]
        %v1222 = vld [vmem:[%s1216 + $0x14] sm:$0xf]
        %v1223 = vld [vmem:[%s1216 + $0x18] sm:$0xf]
        %v1224 = vld [vmem:[%s1216 + $0x1c] sm:$0xf]
        %v1225 = vld [vmem:[%s1216 + $0x20] sm:$0xf]
        %v1226 = vld [vmem:[%s1216 + $0x24] sm:$0xf]
        %v1227 = vld [vmem:[%s1216 + $0x28] sm:$0xf]
        %v1228 = vld [vmem:[%s1216 + $0x2c] sm:$0xf]
        %v1229 = vld [vmem:[%s1216 + $0x30] sm:$0xf]
        %v1230 = vld [vmem:[%s1216 + $0x34] sm:$0xf]
        %v1231 = vld [vmem:[%s1216 + $0x38] sm:$0xf]
        %v1232 = vld [vmem:[%s1216 + $0x3c] sm:$0xf]
        %v1233 = vld [vmem:[%s1216 + $0x40] sm:$0xf]
        %v1234 = vld [vmem:[%s1216 + $0x44] sm:$0xf]
        %v1235 = vld [vmem:[%s1216 + $0x48] sm:$0xf]
        %v1236 = vld [vmem:[%s1216 + $0x4c] sm:$0xf]
        %v1237 = vld [vmem:[%s1216 + $0x50] sm:$0xf]
        %v1238 = vld [vmem:[%s1216 + $0x54] sm:$0xf]
        %v1239 = vld [vmem:[%s1216 + $0x58] sm:$0xf]
        %v1240 = vld [vmem:[%s1216 + $0x5c] sm:$0xf]
        %v1241 = vld [vmem:[%s1216 + $0x60] sm:$0xf]
        %v1242 = vld [vmem:[%s1216 + $0x64] sm:$0xf]
        %v1243 = vld [vmem:[%s1216 + $0x68] sm:$0xf]
        %v1244 = vld [vmem:[%s1216 + $0x6c] sm:$0xf]
        %v1245 = vld [vmem:[%s1216 + $0x70] sm:$0xf]
        %v1246 = vld [vmem:[%s1216 + $0x74] sm:$0xf]
        %v1277 = vunpack.c.l.b16 %v1217
        %v1278 = vunpack.c.l.b16 %v1218
        %v1279 = vunpack.c.l.b16 %v1219
        %v1280 = vunpack.c.l.b16 %v1220
        %v1281 = vunpack.c.l.b16 %v1221
        %v1282 = vunpack.c.l.b16 %v1222
        %v1283 = vunpack.c.l.b16 %v1223
        %v1284 = vunpack.c.l.b16 %v1224
        %v1285 = vunpack.c.l.b16 %v1225
        %v1286 = vunpack.c.l.b16 %v1226
        %v1287 = vunpack.c.l.b16 %v1227
        %v1288 = vunpack.c.l.b16 %v1228
        %v1289 = vunpack.c.l.b16 %v1229
        %v1290 = vunpack.c.l.b16 %v1230
        %v1291 = vunpack.c.l.b16 %v1231
        %v1292 = vunpack.c.l.b16 %v1232
        %v1293 = vunpack.c.l.b16 %v1233
        %v1294 = vunpack.c.l.b16 %v1234
        %v1295 = vunpack.c.l.b16 %v1235
        %v1296 = vunpack.c.l.b16 %v1236
        %v1297 = vunpack.c.l.b16 %v1237
        %v1298 = vunpack.c.l.b16 %v1238
        %v1299 = vunpack.c.l.b16 %v1239
        %v1300 = vunpack.c.l.b16 %v1240
        %v1301 = vunpack.c.l.b16 %v1241
        %v1302 = vunpack.c.l.b16 %v1242
        %v1303 = vunpack.c.l.b16 %v1243
        %v1304 = vunpack.c.l.b16 %v1244
        %v1305 = vunpack.c.l.b16 %v1245
        %v1306 = vunpack.c.l.b16 %v1246
        %v1307 = vpack.c.b16 %v1278, %v1277
        %v1308 = vpack.c.b16 %v1280, %v1279
        %v1309 = vpack.c.b16 %v1282, %v1281
        %v1310 = vpack.c.b16 %v1284, %v1283
        %v1311 = vpack.c.b16 %v1286, %v1285
        %v1312 = vpack.c.b16 %v1288, %v1287
        %v1313 = vpack.c.b16 %v1290, %v1289
        %v1314 = vpack.c.b16 %v1292, %v1291
        %v1315 = vpack.c.b16 %v1294, %v1293
        %v1316 = vpack.c.b16 %v1296, %v1295
        %v1317 = vpack.c.b16 %v1298, %v1297
        %v1318 = vpack.c.b16 %v1300, %v1299
        %v1319 = vpack.c.b16 %v1302, %v1301
        %v1320 = vpack.c.b16 %v1304, %v1303
        %v1321 = vpack.c.b16 %v1306, %v1305
        %v1323 = vsel %vm814, %v1307, 0
        %v1326 = vsel %vm814, %v1308, 0
        %v1329 = vsel %vm814, %v1309, 0
        %v1332 = vsel %vm814, %v1310, 0
        %v1335 = vsel %vm814, %v1311, 0
        %v1338 = vsel %vm814, %v1312, 0
        %v1341 = vsel %vm814, %v1313, 0
        %v1344 = vsel %vm814, %v1314, 0
        %v1347 = vsel %vm814, %v1315, 0
        %v1350 = vsel %vm814, %v1316, 0
        %v1353 = vsel %vm814, %v1317, 0
        %v1356 = vsel %vm814, %v1318, 0
        %v1359 = vsel %vm814, %v1319, 0
        %v1362 = vsel %vm814, %v1320, 0
        %v1365 = vsel %vm814, %v1321, 0
        %1367 = vmatpush.bf16.msra.mxu0 0
        %1368 = vmatpush.bf16.msra.mxu0 0
        %1369 = vmatpush.bf16.msra.mxu0 0
        %1370 = vmatpush.bf16.msra.mxu0 0
        %1371 = vmatpush.bf16.msra.mxu0 0
        %1372 = vmatpush.bf16.msra.mxu0 0
        %1373 = vmatpush.bf16.msra.mxu0 %v865
        %1374 = vmatpush.bf16.msra.mxu0 %v811
        %1375 = vmatmul.bf16.gmra.mxu0 %v1323
        %v1376 = vpop.f32.mrf.mxu0
        %v1377 = vadd.f32 0.0, %v1376
        %v1378 = vpop.f32.mrf.mxu0
        %v1379 = vadd.f32 0.0, %v1378
        %1380 = vmatmul.bf16.gmra.mxu0 %v1326
        %v1381 = vpop.f32.mrf.mxu0
        %v1382 = vadd.f32 0.0, %v1381
        %v1383 = vpop.f32.mrf.mxu0
        %v1384 = vadd.f32 0.0, %v1383
        %1385 = vmatmul.bf16.gmra.mxu0 %v1329
        %v1386 = vpop.f32.mrf.mxu0
        %v1387 = vadd.f32 0.0, %v1386
        %v1388 = vpop.f32.mrf.mxu0
        %v1389 = vadd.f32 0.0, %v1388
        %1390 = vmatmul.bf16.gmra.mxu0 %v1332
        %v1391 = vpop.f32.mrf.mxu0
        %v1392 = vadd.f32 0.0, %v1391
        %v1393 = vpop.f32.mrf.mxu0
        %v1394 = vadd.f32 0.0, %v1393
        %1395 = vmatmul.bf16.gmra.mxu0 %v1335
        %v1396 = vpop.f32.mrf.mxu0
        %v1397 = vadd.f32 0.0, %v1396
        %v1398 = vpop.f32.mrf.mxu0
        %v1399 = vadd.f32 0.0, %v1398
        %1400 = vmatmul.bf16.gmra.mxu0 %v1338
        %v1401 = vpop.f32.mrf.mxu0
        %v1402 = vadd.f32 0.0, %v1401
        %v1403 = vpop.f32.mrf.mxu0
        %v1404 = vadd.f32 0.0, %v1403
        %1405 = vmatmul.bf16.gmra.mxu0 %v1341
        %v1406 = vpop.f32.mrf.mxu0
        %v1407 = vadd.f32 0.0, %v1406
        %v1408 = vpop.f32.mrf.mxu0
        %v1409 = vadd.f32 0.0, %v1408
        %1410 = vmatmul.bf16.gmra.mxu0 %v1344
        %v1411 = vpop.f32.mrf.mxu0
        %v1412 = vadd.f32 0.0, %v1411
        %v1413 = vpop.f32.mrf.mxu0
        %v1414 = vadd.f32 0.0, %v1413
        %1415 = vmatmul.bf16.gmra.mxu0 %v1347
        %v1416 = vpop.f32.mrf.mxu0
        %v1417 = vadd.f32 0.0, %v1416
        %v1418 = vpop.f32.mrf.mxu0
        %v1419 = vadd.f32 0.0, %v1418
        %1420 = vmatmul.bf16.gmra.mxu0 %v1350
        %v1421 = vpop.f32.mrf.mxu0
        %v1422 = vadd.f32 0.0, %v1421
        %v1423 = vpop.f32.mrf.mxu0
        %v1424 = vadd.f32 0.0, %v1423
        %1425 = vmatmul.bf16.gmra.mxu0 %v1353
        %v1426 = vpop.f32.mrf.mxu0
        %v1427 = vadd.f32 0.0, %v1426
        %v1428 = vpop.f32.mrf.mxu0
        %v1429 = vadd.f32 0.0, %v1428
        %1430 = vmatmul.bf16.gmra.mxu0 %v1356
        %v1431 = vpop.f32.mrf.mxu0
        %v1432 = vadd.f32 0.0, %v1431
        %v1433 = vpop.f32.mrf.mxu0
        %v1434 = vadd.f32 0.0, %v1433
        %1435 = vmatmul.bf16.gmra.mxu0 %v1359
        %v1436 = vpop.f32.mrf.mxu0
        %v1437 = vadd.f32 0.0, %v1436
        %v1438 = vpop.f32.mrf.mxu0
        %v1439 = vadd.f32 0.0, %v1438
        %1440 = vmatmul.bf16.gmra.mxu0 %v1362
        %v1441 = vpop.f32.mrf.mxu0
        %v1442 = vadd.f32 0.0, %v1441
        %v1443 = vpop.f32.mrf.mxu0
        %v1444 = vadd.f32 0.0, %v1443
        %1445 = vmatmul.bf16.gmra.mxu0 %v1365
        %v1446 = vpop.f32.mrf.mxu0
        %v1447 = vadd.f32 0.0, %v1446
        %v1448 = vpop.f32.mrf.mxu0
        %v1449 = vadd.f32 0.0, %v1448
        %1450 = vdwg.mxu0
        %v1451 = vmax.f32 %v1186, %v1377
        %v1452 = vmax.f32 %v1187, %v1379
        %v1453 = vmax.f32 %v1188, %v1382
        %v1454 = vmax.f32 %v1189, %v1384
        %v1455 = vmax.f32 %v1190, %v1387
        %v1456 = vmax.f32 %v1191, %v1389
        %v1457 = vmax.f32 %v1192, %v1392
        %v1458 = vmax.f32 %v1193, %v1394
        %v1459 = vmax.f32 %v1194, %v1397
        %v1460 = vmax.f32 %v1195, %v1399
        %v1461 = vmax.f32 %v1196, %v1402
        %v1462 = vmax.f32 %v1197, %v1404
        %v1463 = vmax.f32 %v1198, %v1407
        %v1464 = vmax.f32 %v1199, %v1409
        %v1465 = vmax.f32 %v1200, %v1412
        %v1466 = vmax.f32 %v1201, %v1414
        %v1467 = vmax.f32 %v1202, %v1417
        %v1468 = vmax.f32 %v1203, %v1419
        %v1469 = vmax.f32 %v1204, %v1422
        %v1470 = vmax.f32 %v1205, %v1424
        %v1471 = vmax.f32 %v1206, %v1427
        %v1472 = vmax.f32 %v1207, %v1429
        %v1473 = vmax.f32 %v1208, %v1432
        %v1474 = vmax.f32 %v1209, %v1434
        %v1475 = vmax.f32 %v1210, %v1437
        %v1476 = vmax.f32 %v1211, %v1439
        %v1477 = vmax.f32 %v1212, %v1442
        %v1478 = vmax.f32 %v1213, %v1444
        %v1479 = vmax.f32 %v1214, %v1447
        %v1480 = vmax.f32 %v1215, %v1449
        %s1481 = scalar_lea.vmem %s665, 360 [#allocation2]
        %v1482 = vld [vmem:[%s1481] sm:$0xf]
        %v1483 = vld [vmem:[%s1481 + $0x4] sm:$0xf]
        %v1484 = vld [vmem:[%s1481 + $0x8] sm:$0xf]
        %v1485 = vld [vmem:[%s1481 + $0xc] sm:$0xf]
        %v1486 = vld [vmem:[%s1481 + $0x10] sm:$0xf]
        %v1487 = vld [vmem:[%s1481 + $0x14] sm:$0xf]
        %v1488 = vld [vmem:[%s1481 + $0x18] sm:$0xf]
        %v1489 = vld [vmem:[%s1481 + $0x1c] sm:$0xf]
        %v1490 = vld [vmem:[%s1481 + $0x20] sm:$0xf]
        %v1491 = vld [vmem:[%s1481 + $0x24] sm:$0xf]
        %v1492 = vld [vmem:[%s1481 + $0x28] sm:$0xf]
        %v1493 = vld [vmem:[%s1481 + $0x2c] sm:$0xf]
        %v1494 = vld [vmem:[%s1481 + $0x30] sm:$0xf]
        %v1495 = vld [vmem:[%s1481 + $0x34] sm:$0xf]
        %v1496 = vld [vmem:[%s1481 + $0x38] sm:$0xf]
        %v1497 = vld [vmem:[%s1481 + $0x3c] sm:$0xf]
        %v1498 = vld [vmem:[%s1481 + $0x40] sm:$0xf]
        %v1499 = vld [vmem:[%s1481 + $0x44] sm:$0xf]
        %v1500 = vld [vmem:[%s1481 + $0x48] sm:$0xf]
        %v1501 = vld [vmem:[%s1481 + $0x4c] sm:$0xf]
        %v1502 = vld [vmem:[%s1481 + $0x50] sm:$0xf]
        %v1503 = vld [vmem:[%s1481 + $0x54] sm:$0xf]
        %v1504 = vld [vmem:[%s1481 + $0x58] sm:$0xf]
        %v1505 = vld [vmem:[%s1481 + $0x5c] sm:$0xf]
        %v1506 = vld [vmem:[%s1481 + $0x60] sm:$0xf]
        %v1507 = vld [vmem:[%s1481 + $0x64] sm:$0xf]
        %v1508 = vld [vmem:[%s1481 + $0x68] sm:$0xf]
        %v1509 = vld [vmem:[%s1481 + $0x6c] sm:$0xf]
        %v1510 = vld [vmem:[%s1481 + $0x70] sm:$0xf]
        %v1511 = vld [vmem:[%s1481 + $0x74] sm:$0xf]
        %v1542 = vunpack.c.l.b16 %v1482
        %v1543 = vunpack.c.l.b16 %v1483
        %v1544 = vunpack.c.l.b16 %v1484
        %v1545 = vunpack.c.l.b16 %v1485
        %v1546 = vunpack.c.l.b16 %v1486
        %v1547 = vunpack.c.l.b16 %v1487
        %v1548 = vunpack.c.l.b16 %v1488
        %v1549 = vunpack.c.l.b16 %v1489
        %v1550 = vunpack.c.l.b16 %v1490
        %v1551 = vunpack.c.l.b16 %v1491
        %v1552 = vunpack.c.l.b16 %v1492
        %v1553 = vunpack.c.l.b16 %v1493
        %v1554 = vunpack.c.l.b16 %v1494
        %v1555 = vunpack.c.l.b16 %v1495
        %v1556 = vunpack.c.l.b16 %v1496
        %v1557 = vunpack.c.l.b16 %v1497
        %v1558 = vunpack.c.l.b16 %v1498
        %v1559 = vunpack.c.l.b16 %v1499
        %v1560 = vunpack.c.l.b16 %v1500
        %v1561 = vunpack.c.l.b16 %v1501
        %v1562 = vunpack.c.l.b16 %v1502
        %v1563 = vunpack.c.l.b16 %v1503
        %v1564 = vunpack.c.l.b16 %v1504
        %v1565 = vunpack.c.l.b16 %v1505
        %v1566 = vunpack.c.l.b16 %v1506
        %v1567 = vunpack.c.l.b16 %v1507
        %v1568 = vunpack.c.l.b16 %v1508
        %v1569 = vunpack.c.l.b16 %v1509
        %v1570 = vunpack.c.l.b16 %v1510
        %v1571 = vunpack.c.l.b16 %v1511
        %v1572 = vpack.c.b16 %v1543, %v1542
        %v1573 = vpack.c.b16 %v1545, %v1544
        %v1574 = vpack.c.b16 %v1547, %v1546
        %v1575 = vpack.c.b16 %v1549, %v1548
        %v1576 = vpack.c.b16 %v1551, %v1550
        %v1577 = vpack.c.b16 %v1553, %v1552
        %v1578 = vpack.c.b16 %v1555, %v1554
        %v1579 = vpack.c.b16 %v1557, %v1556
        %v1580 = vpack.c.b16 %v1559, %v1558
        %v1581 = vpack.c.b16 %v1561, %v1560
        %v1582 = vpack.c.b16 %v1563, %v1562
        %v1583 = vpack.c.b16 %v1565, %v1564
        %v1584 = vpack.c.b16 %v1567, %v1566
        %v1585 = vpack.c.b16 %v1569, %v1568
        %v1586 = vpack.c.b16 %v1571, %v1570
        %v1588 = vsel %vm814, %v1572, 0
        %v1591 = vsel %vm814, %v1573, 0
        %v1594 = vsel %vm814, %v1574, 0
        %v1597 = vsel %vm814, %v1575, 0
        %v1600 = vsel %vm814, %v1576, 0
        %v1603 = vsel %vm814, %v1577, 0
        %v1606 = vsel %vm814, %v1578, 0
        %v1609 = vsel %vm814, %v1579, 0
        %v1612 = vsel %vm814, %v1580, 0
        %v1615 = vsel %vm814, %v1581, 0
        %v1618 = vsel %vm814, %v1582, 0
        %v1621 = vsel %vm814, %v1583, 0
        %v1624 = vsel %vm814, %v1584, 0
        %v1627 = vsel %vm814, %v1585, 0
        %v1630 = vsel %vm814, %v1586, 0
        %1632 = vmatpush.bf16.msra.mxu0 0
        %1633 = vmatpush.bf16.msra.mxu0 0
        %1634 = vmatpush.bf16.msra.mxu0 0
        %1635 = vmatpush.bf16.msra.mxu0 0
        %1636 = vmatpush.bf16.msra.mxu0 0
        %1637 = vmatpush.bf16.msra.mxu0 0
        %1638 = vmatpush.bf16.msra.mxu0 %v865
        %1639 = vmatpush.bf16.msra.mxu0 %v811
        %1640 = vmatmul.bf16.gmra.mxu0 %v1588
        %v1641 = vpop.f32.mrf.mxu0
        %v1642 = vadd.f32 0.0, %v1641
        %v1643 = vpop.f32.mrf.mxu0
        %v1644 = vadd.f32 0.0, %v1643
        %1645 = vmatmul.bf16.gmra.mxu0 %v1591
        %v1646 = vpop.f32.mrf.mxu0
        %v1647 = vadd.f32 0.0, %v1646
        %v1648 = vpop.f32.mrf.mxu0
        %v1649 = vadd.f32 0.0, %v1648
        %1650 = vmatmul.bf16.gmra.mxu0 %v1594
        %v1651 = vpop.f32.mrf.mxu0
        %v1652 = vadd.f32 0.0, %v1651
        %v1653 = vpop.f32.mrf.mxu0
        %v1654 = vadd.f32 0.0, %v1653
        %1655 = vmatmul.bf16.gmra.mxu0 %v1597
        %v1656 = vpop.f32.mrf.mxu0
        %v1657 = vadd.f32 0.0, %v1656
        %v1658 = vpop.f32.mrf.mxu0
        %v1659 = vadd.f32 0.0, %v1658
        %1660 = vmatmul.bf16.gmra.mxu0 %v1600
        %v1661 = vpop.f32.mrf.mxu0
        %v1662 = vadd.f32 0.0, %v1661
        %v1663 = vpop.f32.mrf.mxu0
        %v1664 = vadd.f32 0.0, %v1663
        %1665 = vmatmul.bf16.gmra.mxu0 %v1603
        %v1666 = vpop.f32.mrf.mxu0
        %v1667 = vadd.f32 0.0, %v1666
        %v1668 = vpop.f32.mrf.mxu0
        %v1669 = vadd.f32 0.0, %v1668
        %1670 = vmatmul.bf16.gmra.mxu0 %v1606
        %v1671 = vpop.f32.mrf.mxu0
        %v1672 = vadd.f32 0.0, %v1671
        %v1673 = vpop.f32.mrf.mxu0
        %v1674 = vadd.f32 0.0, %v1673
        %1675 = vmatmul.bf16.gmra.mxu0 %v1609
        %v1676 = vpop.f32.mrf.mxu0
        %v1677 = vadd.f32 0.0, %v1676
        %v1678 = vpop.f32.mrf.mxu0
        %v1679 = vadd.f32 0.0, %v1678
        %1680 = vmatmul.bf16.gmra.mxu0 %v1612
        %v1681 = vpop.f32.mrf.mxu0
        %v1682 = vadd.f32 0.0, %v1681
        %v1683 = vpop.f32.mrf.mxu0
        %v1684 = vadd.f32 0.0, %v1683
        %1685 = vmatmul.bf16.gmra.mxu0 %v1615
        %v1686 = vpop.f32.mrf.mxu0
        %v1687 = vadd.f32 0.0, %v1686
        %v1688 = vpop.f32.mrf.mxu0
        %v1689 = vadd.f32 0.0, %v1688
        %1690 = vmatmul.bf16.gmra.mxu0 %v1618
        %v1691 = vpop.f32.mrf.mxu0
        %v1692 = vadd.f32 0.0, %v1691
        %v1693 = vpop.f32.mrf.mxu0
        %v1694 = vadd.f32 0.0, %v1693
        %1695 = vmatmul.bf16.gmra.mxu0 %v1621
        %v1696 = vpop.f32.mrf.mxu0
        %v1697 = vadd.f32 0.0, %v1696
        %v1698 = vpop.f32.mrf.mxu0
        %v1699 = vadd.f32 0.0, %v1698
        %1700 = vmatmul.bf16.gmra.mxu0 %v1624
        %v1701 = vpop.f32.mrf.mxu0
        %v1702 = vadd.f32 0.0, %v1701
        %v1703 = vpop.f32.mrf.mxu0
        %v1704 = vadd.f32 0.0, %v1703
        %1705 = vmatmul.bf16.gmra.mxu0 %v1627
        %v1706 = vpop.f32.mrf.mxu0
        %v1707 = vadd.f32 0.0, %v1706
        %v1708 = vpop.f32.mrf.mxu0
        %v1709 = vadd.f32 0.0, %v1708
        %1710 = vmatmul.bf16.gmra.mxu0 %v1630
        %v1711 = vpop.f32.mrf.mxu0
        %v1712 = vadd.f32 0.0, %v1711
        %v1713 = vpop.f32.mrf.mxu0
        %v1714 = vadd.f32 0.0, %v1713
        %1715 = vdwg.mxu0
        %v1716 = vmax.f32 %v1451, %v1642
        %v1717 = vmax.f32 %v1452, %v1644
        %v1718 = vmax.f32 %v1453, %v1647
        %v1719 = vmax.f32 %v1454, %v1649
        %v1720 = vmax.f32 %v1455, %v1652
        %v1721 = vmax.f32 %v1456, %v1654
        %v1722 = vmax.f32 %v1457, %v1657
        %v1723 = vmax.f32 %v1458, %v1659
        %v1724 = vmax.f32 %v1459, %v1662
        %v1725 = vmax.f32 %v1460, %v1664
        %v1726 = vmax.f32 %v1461, %v1667
        %v1727 = vmax.f32 %v1462, %v1669
        %v1728 = vmax.f32 %v1463, %v1672
        %v1729 = vmax.f32 %v1464, %v1674
        %v1730 = vmax.f32 %v1465, %v1677
        %v1731 = vmax.f32 %v1466, %v1679
        %v1732 = vmax.f32 %v1467, %v1682
        %v1733 = vmax.f32 %v1468, %v1684
        %v1734 = vmax.f32 %v1469, %v1687
        %v1735 = vmax.f32 %v1470, %v1689
        %v1736 = vmax.f32 %v1471, %v1692
        %v1737 = vmax.f32 %v1472, %v1694
        %v1738 = vmax.f32 %v1473, %v1697
        %v1739 = vmax.f32 %v1474, %v1699
        %v1740 = vmax.f32 %v1475, %v1702
        %v1741 = vmax.f32 %v1476, %v1704
        %v1742 = vmax.f32 %v1477, %v1707
        %v1743 = vmax.f32 %v1478, %v1709
        %v1744 = vmax.f32 %v1479, %v1712
        %v1745 = vmax.f32 %v1480, %v1714
        %v1746 = vld [vmem:[%s2] sm:$0x1]
        %v1748 = vperm.slane %v1746, 0
        %v1750 = vadd.f32 %v1716, %v1748
        %v1751 = vadd.f32 %v1717, %v1748
        %v1752 = vadd.f32 %v1718, %v1748
        %v1753 = vadd.f32 %v1719, %v1748
        %v1754 = vadd.f32 %v1720, %v1748
        %v1755 = vadd.f32 %v1721, %v1748
        %v1756 = vadd.f32 %v1722, %v1748
        %v1757 = vadd.f32 %v1723, %v1748
        %v1758 = vadd.f32 %v1724, %v1748
        %v1759 = vadd.f32 %v1725, %v1748
        %v1760 = vadd.f32 %v1726, %v1748
        %v1761 = vadd.f32 %v1727, %v1748
        %v1762 = vadd.f32 %v1728, %v1748
        %v1763 = vadd.f32 %v1729, %v1748
        %v1764 = vadd.f32 %v1730, %v1748
        %v1765 = vadd.f32 %v1731, %v1748
        %v1766 = vadd.f32 %v1732, %v1748
        %v1767 = vadd.f32 %v1733, %v1748
        %v1768 = vadd.f32 %v1734, %v1748
        %v1769 = vadd.f32 %v1735, %v1748
        %v1770 = vadd.f32 %v1736, %v1748
        %v1771 = vadd.f32 %v1737, %v1748
        %v1772 = vadd.f32 %v1738, %v1748
        %v1773 = vadd.f32 %v1739, %v1748
        %v1774 = vadd.f32 %v1740, %v1748
        %v1775 = vadd.f32 %v1741, %v1748
        %v1776 = vadd.f32 %v1742, %v1748
        %v1777 = vadd.f32 %v1743, %v1748
        %v1778 = vadd.f32 %v1744, %v1748
        %v1779 = vadd.f32 %v1745, %v1748
        %v1780 = vmax.f32 %v1750, 0.0
        %v1781 = vmax.f32 %v1751, 0.0
        %v1782 = vmax.f32 %v1752, 0.0
        %v1783 = vmax.f32 %v1753, 0.0
        %v1784 = vmax.f32 %v1754, 0.0
        %v1785 = vmax.f32 %v1755, 0.0
        %v1786 = vmax.f32 %v1756, 0.0
        %v1787 = vmax.f32 %v1757, 0.0
        %v1788 = vmax.f32 %v1758, 0.0
        %v1789 = vmax.f32 %v1759, 0.0
        %v1790 = vmax.f32 %v1760, 0.0
        %v1791 = vmax.f32 %v1761, 0.0
        %v1792 = vmax.f32 %v1762, 0.0
        %v1793 = vmax.f32 %v1763, 0.0
        %v1794 = vmax.f32 %v1764, 0.0
        %v1795 = vmax.f32 %v1765, 0.0
        %v1796 = vmax.f32 %v1766, 0.0
        %v1797 = vmax.f32 %v1767, 0.0
        %v1798 = vmax.f32 %v1768, 0.0
        %v1799 = vmax.f32 %v1769, 0.0
        %v1800 = vmax.f32 %v1770, 0.0
        %v1801 = vmax.f32 %v1771, 0.0
        %v1802 = vmax.f32 %v1772, 0.0
        %v1803 = vmax.f32 %v1773, 0.0
        %v1804 = vmax.f32 %v1774, 0.0
        %v1805 = vmax.f32 %v1775, 0.0
        %v1806 = vmax.f32 %v1776, 0.0
        %v1807 = vmax.f32 %v1777, 0.0
        %v1808 = vmax.f32 %v1778, 0.0
        %v1809 = vmax.f32 %v1779, 0.0
        %vm1810 = vcmask 523264
        %1811 = vst.msk [vmem:[%s691] sm:$0xff] %vm1810, %v1780
        %1812 = vst.msk [vmem:[%s691 + $0x8] sm:$0xff] %vm1810, %v1781
        %1813 = vst.msk [vmem:[%s691 + $0x10] sm:$0xff] %vm1810, %v1782
        %1814 = vst.msk [vmem:[%s691 + $0x18] sm:$0xff] %vm1810, %v1783
        %1815 = vst.msk [vmem:[%s691 + $0x20] sm:$0xff] %vm1810, %v1784
        %1816 = vst.msk [vmem:[%s691 + $0x28] sm:$0xff] %vm1810, %v1785
        %1817 = vst.msk [vmem:[%s691 + $0x30] sm:$0xff] %vm1810, %v1786
        %1818 = vst.msk [vmem:[%s691 + $0x38] sm:$0xff] %vm1810, %v1787
        %1819 = vst.msk [vmem:[%s691 + $0x40] sm:$0xff] %vm1810, %v1788
        %1820 = vst.msk [vmem:[%s691 + $0x48] sm:$0xff] %vm1810, %v1789
        %1821 = vst.msk [vmem:[%s691 + $0x50] sm:$0xff] %vm1810, %v1790
        %1822 = vst.msk [vmem:[%s691 + $0x58] sm:$0xff] %vm1810, %v1791
        %1823 = vst.msk [vmem:[%s691 + $0x60] sm:$0xff] %vm1810, %v1792
        %1824 = vst.msk [vmem:[%s691 + $0x68] sm:$0xff] %vm1810, %v1793
        %1825 = vst.msk [vmem:[%s691 + $0x70] sm:$0xff] %vm1810, %v1794
        %1826 = vst.msk [vmem:[%s691 + $0x78] sm:$0xff] %vm1810, %v1795
        %1827 = vst.msk [vmem:[%s691 + $0x80] sm:$0xff] %vm1810, %v1796
        %1828 = vst.msk [vmem:[%s691 + $0x88] sm:$0xff] %vm1810, %v1797
        %1829 = vst.msk [vmem:[%s691 + $0x90] sm:$0xff] %vm1810, %v1798
        %1830 = vst.msk [vmem:[%s691 + $0x98] sm:$0xff] %vm1810, %v1799
        %1831 = vst.msk [vmem:[%s691 + $0xa0] sm:$0xff] %vm1810, %v1800
        %1832 = vst.msk [vmem:[%s691 + $0xa8] sm:$0xff] %vm1810, %v1801
        %1833 = vst.msk [vmem:[%s691 + $0xb0] sm:$0xff] %vm1810, %v1802
        %1834 = vst.msk [vmem:[%s691 + $0xb8] sm:$0xff] %vm1810, %v1803
        %1835 = vst.msk [vmem:[%s691 + $0xc0] sm:$0xff] %vm1810, %v1804
        %1836 = vst.msk [vmem:[%s691 + $0xc8] sm:$0xff] %vm1810, %v1805
        %1837 = vst.msk [vmem:[%s691 + $0xd0] sm:$0xff] %vm1810, %v1806
        %1838 = vst.msk [vmem:[%s691 + $0xd8] sm:$0xff] %vm1810, %v1807
        %1839 = vst.msk [vmem:[%s691 + $0xe0] sm:$0xff] %vm1810, %v1808
        %1840 = vst.msk [vmem:[%s691 + $0xe8] sm:$0xff] %vm1810, %v1809
        %s1841 = smul.u32 30, %s14
        %p1842 = scmp.lt.s32.totalorder %s1841, 59
        %s1843 = scalar_select %p1842, %s1841, 59
        %s1844 = smul.addr %s1843, 8
        %s1845 = scalar_lea.vmem %s3, %s1844
        // Predicated region
        $region74: #{_lambda_.2} parent=68 // pred_check
          %p1846 = pneg %p100
        $region75: #{_lambda_.2} parent=68 // pred_check_branch
          %1848 = sbr.rel (%p1846) target = $region77
        $region76: #{_lambda_.2} parent=68 // pred_region
          %s1849 = smul.u32 30, %s14
        $region77: #{_lambda_.2} parent=68 // pred_fallthru
          _
      $region69: #{_lambda_.2} parent=5 // pred_fallthru
        _
      %p1850 = scmp.le.s32.totalorder 2, %s9
      // Predicated region
      $region78: #{_lambda_.2} parent=5 // pred_check
        %p1851 = pneg %p1850
      $region79: #{_lambda_.2} parent=5 // pred_check_branch
        %1853 = sbr.rel (%p1851) target = $region81
      $region80: #{_lambda_.2} parent=5 // pred_region
        %s1854 = ssub.s32 %s9, 2
        // Predicated region
        $region82: #{_lambda_.2} parent=80 // pred_check
          %p1855 = pneg %p106
        $region83: #{_lambda_.2} parent=80 // pred_check_branch
          %1857 = sbr.rel (%p1855) target = $region85
        $region84: #{_lambda_.2} parent=80 // pred_region
          %s1858 = smul.u32 30, %s15
          %p1859 = scmp.lt.s32.totalorder %s1858, 59
          %s1860 = scalar_select %p1859, %s1858, 59
          %s1861 = smul.addr %s1860, 8
          %s1862 = scalar_lea.vmem %s3, %s1861
        $region85: #{_lambda_.2} parent=80 // pred_fallthru
          _
      $region81: #{_lambda_.2} parent=5 // pred_fallthru
        _
    $region6: #{_lambda_.2} parent=1 // loop_footer
      %s13 = sadd.s32 1, %s9
    $region7: #{_lambda_.2} parent=1 // loop_footer_branch
      %8 = sbr.rel target = $region3
    $region8: #{_lambda_.2} parent=1 // loop_exit
      _

// kernel: _lambda_.3
$region0: #{_lambda_.3}
  #allocation0 [shape = 'u32[]', space=smem, size = 0x4, offset = 0x4, fixed_abs, tag = 'smem constant byte address 0x4 - core index']
  #allocation1 [shape = 'u32[72,128]{1,0:T(1,128)}', space=vmem, size = 0x9000, scoped, tag = 'internal scratch']
  #allocation2 [shape = 'f32[6,6,128]{2,1,0:T(8,128)}', space=vmem, size = 0x6000, scoped, tag = 'scratch operand']
  %s0 = inlined_call_operand.vmem [shape: f32[2,15,15,64], index: 0, kind: input, shape index: {}]
  %s1 = inlined_call_operand.vmem [shape: bf16[576,128], index: 1, kind: input, shape index: {}]
  %s2 = inlined_call_operand.vmem [shape: f32[1,128], index: 2, kind: input, shape index: {}]
  %s3 = inlined_call_operand.vmem [shape: bf16[1152,256], index: 3, kind: input, shape index: {}]
  %s4 = inlined_call_operand.vmem [shape: f32[1,256], index: 4, kind: input, shape index: {}]
  %s5 = inlined_call_operand.vmem [shape: bf16[1024,128], index: 5, kind: input, shape index: {}]
  %s6 = inlined_call_operand.vmem [shape: f32[1,128], index: 6, kind: input, shape index: {}]
  %s7 = inlined_call_operand.vmem [shape: bf16[128,256], index: 7, kind: input, shape index: {}]
  %s8 = inlined_call_operand.vmem [shape: f32[1,256], index: 8, kind: input, shape index: {}]
  %s9 = inlined_call_operand.vmem [shape: bf16[256,128], index: 9, kind: input, shape index: {}]
  %s10 = inlined_call_operand.vmem [shape: f32[1,128], index: 10, kind: input, shape index: {}]
  %s11 = inlined_call_operand.hbm [shape: f32[2,1,128], index: 11, kind: output, shape index: {}]
  %s12 = sld [smem:[#allocation0]]
  $region77: #{_lambda_.3} parent=0
    _
  %s14 = ssub.s32 1, %s12
  %s15 = scalar_select 0, %s14, %s12
  $region1: #{_lambda_.3} parent=0
    #allocation3 [shape = 'u8[1024]{0}', space=vmem, size = 0x400, scoped, tag = 'output window, operand 0']
    #allocation4 [shape = 's32[2]{0}', space=sflag, size = 0x8, scoped, tag = 'scoped memory for _lambda_.3']
    %16 = vsyncpa [#allocation4], 0
    %s17 = scalar_lea.sflag [#allocation4], 1
    %18 = vsyncpa %s17, 0
    loop: start=0, step=1, limit=4
    $region2: #{_lambda_.3} parent=1 // loop_pre_header
      _
    $region3: #{_lambda_.3} parent=1 // loop_header
      %s20 = sphi 0, %s24
      %p21 = scmp.ge.s32.totalorder %s20, 4
      %s30 = sphi 0, %s32
      %s33 = sphi 0, %s30
      %s34 = sphi 0, %s33
      %s50 = sphi 0, %s34
      %s54 = sphi 0, %s54
      %s56 = sphi 0, %s54
      %s57 = sphi 0, %s56
      %s71 = sphi 0, %s57
      %s75 = sphi 0, %s75
      %s77 = sphi 0, %s75
      %s78 = sphi 0, %s77
      %s92 = sphi 0, %s78
      %s96 = sphi 0, %s96
      %s98 = sphi 0, %s96
      %s99 = sphi 0, %s98
      %s113 = sphi 0, %s99
      %s117 = sphi 0, %s117
      %s119 = sphi 0, %s117
      %s120 = sphi 0, %s119
      %s134 = sphi 0, %s120
      %s138 = sphi 0, %s138
      %s140 = sphi 0, %s138
      %s141 = sphi 0, %s140
      %s155 = sphi 0, %s141
      %s159 = sphi 0, %s159
      %s161 = sphi 0, %s159
      %s162 = sphi 0, %s161
      %s176 = sphi 0, %s162
      %s180 = sphi 0, %s180
      %s182 = sphi 0, %s180
      %s183 = sphi 0, %s182
      %s197 = sphi 0, %s183
      %s201 = sphi 0, %s201
      %s203 = sphi 0, %s201
      %s204 = sphi 0, %s203
      %s218 = sphi 0, %s204
      %s222 = sphi 0, %s222
      %s224 = sphi 0, %s222
      %s225 = sphi 0, %s224
      %s239 = sphi 0, %s225
      %s243 = sphi 0, %s243
      %s245 = sphi 0, %s243
      %s246 = sphi 0, %s245
      %s260 = sphi 0, %s246
      %s266 = sphi 0, %s268
      %s269 = sphi 0, %s266
      %s270 = sphi 0, %s269
      %s286 = sphi 0, %s270
    $region4: #{_lambda_.3} parent=1 // loop_header_branch
      %23 = sbr.rel (%p21) target = $region8
    $region5: #{_lambda_.3} parent=1 // loop_body
      %s25 = ssub.s32 %s20, 1
      %s26 = ssub.s32 %s20, 2
      %s27 = sadd.s32 %s20, 1
      %s28 = ssub.s32 %s20, %s27
      %p29 = scmp.eq.s32.totalorder %s28, 0
      %s31 = sadd.s32 %s30, 1
      %s32 = scalar_select %p29, %s30, %s31
      %p35 = pneg %p29
      %p36 = scmp.eq.s32.totalorder %s20, 1
      %p37 = por %p35, %p36
      %p38 = scmp.ne.s32.totalorder %s30, %s33
      %p39 = scmp.eq.s32.totalorder %s20, 0
      %p40 = por %p38, %p39
      %p41 = scmp.ne.s32.totalorder %s30, %s33
      %p42 = scmp.eq.s32.totalorder %s25, 1
      %p43 = por %p41, %p42
      %p44 = scmp.ne.s32.totalorder %s33, %s34
      %p45 = scmp.eq.s32.totalorder %s25, 0
      %p46 = por %p44, %p45
      %p47 = scmp.ne.s32.totalorder %s33, %s34
      %p48 = scmp.eq.s32.totalorder %s26, 1
      %p49 = por %p47, %p48
      %p51 = scmp.ne.s32.totalorder %s34, %s50
      %p52 = scmp.eq.s32.totalorder %s26, 0
      %p53 = por %p51, %p52
      %s55 = sadd.s32 %s54, 1
      %p58 = scmp.eq.s32.totalorder %s20, 1
      %p59 = scmp.ne.s32.totalorder %s54, %s56
      %p60 = scmp.eq.s32.totalorder %s20, 0
      %p61 = por %p59, %p60
      %p62 = scmp.ne.s32.totalorder %s54, %s56
      %p63 = scmp.eq.s32.totalorder %s25, 1
      %p64 = por %p62, %p63
      %p65 = scmp.ne.s32.totalorder %s56, %s57
      %p66 = scmp.eq.s32.totalorder %s25, 0
      %p67 = por %p65, %p66
      %p68 = scmp.ne.s32.totalorder %s56, %s57
      %p69 = scmp.eq.s32.totalorder %s26, 1
      %p70 = por %p68, %p69
      %p72 = scmp.ne.s32.totalorder %s57, %s71
      %p73 = scmp.eq.s32.totalorder %s26, 0
      %p74 = por %p72, %p73
      %s76 = sadd.s32 %s75, 1
      %p79 = scmp.eq.s32.totalorder %s20, 1
      %p80 = scmp.ne.s32.totalorder %s75, %s77
      %p81 = scmp.eq.s32.totalorder %s20, 0
      %p82 = por %p80, %p81
      %p83 = scmp.ne.s32.totalorder %s75, %s77
      %p84 = scmp.eq.s32.totalorder %s25, 1
      %p85 = por %p83, %p84
      %p86 = scmp.ne.s32.totalorder %s77, %s78
      %p87 = scmp.eq.s32.totalorder %s25, 0
      %p88 = por %p86, %p87
      %p89 = scmp.ne.s32.totalorder %s77, %s78
      %p90 = scmp.eq.s32.totalorder %s26, 1
      %p91 = por %p89, %p90
      %p93 = scmp.ne.s32.totalorder %s78, %s92
      %p94 = scmp.eq.s32.totalorder %s26, 0
      %p95 = por %p93, %p94
      %s97 = sadd.s32 %s96, 1
      %p100 = scmp.eq.s32.totalorder %s20, 1
      %p101 = scmp.ne.s32.totalorder %s96, %s98
      %p102 = scmp.eq.s32.totalorder %s20, 0
      %p103 = por %p101, %p102
      %p104 = scmp.ne.s32.totalorder %s96, %s98
      %p105 = scmp.eq.s32.totalorder %s25, 1
      %p106 = por %p104, %p105
      %p107 = scmp.ne.s32.totalorder %s98, %s99
      %p108 = scmp.eq.s32.totalorder %s25, 0
      %p109 = por %p107, %p108
      %p110 = scmp.ne.s32.totalorder %s98, %s99
      %p111 = scmp.eq.s32.totalorder %s26, 1
      %p112 = por %p110, %p111
      %p114 = scmp.ne.s32.totalorder %s99, %s113
      %p115 = scmp.eq.s32.totalorder %s26, 0
      %p116 = por %p114, %p115
      %s118 = sadd.s32 %s117, 1
      %p121 = scmp.eq.s32.totalorder %s20, 1
      %p122 = scmp.ne.s32.totalorder %s117, %s119
      %p123 = scmp.eq.s32.totalorder %s20, 0
      %p124 = por %p122, %p123
      %p125 = scmp.ne.s32.totalorder %s117, %s119
      %p126 = scmp.eq.s32.totalorder %s25, 1
      %p127 = por %p125, %p126
      %p128 = scmp.ne.s32.totalorder %s119, %s120
      %p129 = scmp.eq.s32.totalorder %s25, 0
      %p130 = por %p128, %p129
      %p131 = scmp.ne.s32.totalorder %s119, %s120
      %p132 = scmp.eq.s32.totalorder %s26, 1
      %p133 = por %p131, %p132
      %p135 = scmp.ne.s32.totalorder %s120, %s134
      %p136 = scmp.eq.s32.totalorder %s26, 0
      %p137 = por %p135, %p136
      %s139 = sadd.s32 %s138, 1
      %p142 = scmp.eq.s32.totalorder %s20, 1
      %p143 = scmp.ne.s32.totalorder %s138, %s140
      %p144 = scmp.eq.s32.totalorder %s20, 0
      %p145 = por %p143, %p144
      %p146 = scmp.ne.s32.totalorder %s138, %s140
      %p147 = scmp.eq.s32.totalorder %s25, 1
      %p148 = por %p146, %p147
      %p149 = scmp.ne.s32.totalorder %s140, %s141
      %p150 = scmp.eq.s32.totalorder %s25, 0
      %p151 = por %p149, %p150
      %p152 = scmp.ne.s32.totalorder %s140, %s141
      %p153 = scmp.eq.s32.totalorder %s26, 1
      %p154 = por %p152, %p153
      %p156 = scmp.ne.s32.totalorder %s141, %s155
      %p157 = scmp.eq.s32.totalorder %s26, 0
      %p158 = por %p156, %p157
      %s160 = sadd.s32 %s159, 1
      %p163 = scmp.eq.s32.totalorder %s20, 1
      %p164 = scmp.ne.s32.totalorder %s159, %s161
      %p165 = scmp.eq.s32.totalorder %s20, 0
      %p166 = por %p164, %p165
      %p167 = scmp.ne.s32.totalorder %s159, %s161
      %p168 = scmp.eq.s32.totalorder %s25, 1
      %p169 = por %p167, %p168
      %p170 = scmp.ne.s32.totalorder %s161, %s162
      %p171 = scmp.eq.s32.totalorder %s25, 0
      %p172 = por %p170, %p171
      %p173 = scmp.ne.s32.totalorder %s161, %s162
      %p174 = scmp.eq.s32.totalorder %s26, 1
      %p175 = por %p173, %p174
      %p177 = scmp.ne.s32.totalorder %s162, %s176
      %p178 = scmp.eq.s32.totalorder %s26, 0
      %p179 = por %p177, %p178
      %s181 = sadd.s32 %s180, 1
      %p184 = scmp.eq.s32.totalorder %s20, 1
      %p185 = scmp.ne.s32.totalorder %s180, %s182
      %p186 = scmp.eq.s32.totalorder %s20, 0
      %p187 = por %p185, %p186
      %p188 = scmp.ne.s32.totalorder %s180, %s182
      %p189 = scmp.eq.s32.totalorder %s25, 1
      %p190 = por %p188, %p189
      %p191 = scmp.ne.s32.totalorder %s182, %s183
      %p192 = scmp.eq.s32.totalorder %s25, 0
      %p193 = por %p191, %p192
      %p194 = scmp.ne.s32.totalorder %s182, %s183
      %p195 = scmp.eq.s32.totalorder %s26, 1
      %p196 = por %p194, %p195
      %p198 = scmp.ne.s32.totalorder %s183, %s197
      %p199 = scmp.eq.s32.totalorder %s26, 0
      %p200 = por %p198, %p199
      %s202 = sadd.s32 %s201, 1
      %p205 = scmp.eq.s32.totalorder %s20, 1
      %p206 = scmp.ne.s32.totalorder %s201, %s203
      %p207 = scmp.eq.s32.totalorder %s20, 0
      %p208 = por %p206, %p207
      %p209 = scmp.ne.s32.totalorder %s201, %s203
      %p210 = scmp.eq.s32.totalorder %s25, 1
      %p211 = por %p209, %p210
      %p212 = scmp.ne.s32.totalorder %s203, %s204
      %p213 = scmp.eq.s32.totalorder %s25, 0
      %p214 = por %p212, %p213
      %p215 = scmp.ne.s32.totalorder %s203, %s204
      %p216 = scmp.eq.s32.totalorder %s26, 1
      %p217 = por %p215, %p216
      %p219 = scmp.ne.s32.totalorder %s204, %s218
      %p220 = scmp.eq.s32.totalorder %s26, 0
      %p221 = por %p219, %p220
      %s223 = sadd.s32 %s222, 1
      %p226 = scmp.eq.s32.totalorder %s20, 1
      %p227 = scmp.ne.s32.totalorder %s222, %s224
      %p228 = scmp.eq.s32.totalorder %s20, 0
      %p229 = por %p227, %p228
      %p230 = scmp.ne.s32.totalorder %s222, %s224
      %p231 = scmp.eq.s32.totalorder %s25, 1
      %p232 = por %p230, %p231
      %p233 = scmp.ne.s32.totalorder %s224, %s225
      %p234 = scmp.eq.s32.totalorder %s25, 0
      %p235 = por %p233, %p234
      %p236 = scmp.ne.s32.totalorder %s224, %s225
      %p237 = scmp.eq.s32.totalorder %s26, 1
      %p238 = por %p236, %p237
      %p240 = scmp.ne.s32.totalorder %s225, %s239
      %p241 = scmp.eq.s32.totalorder %s26, 0
      %p242 = por %p240, %p241
      %s244 = sadd.s32 %s243, 1
      %p247 = scmp.eq.s32.totalorder %s20, 1
      %p248 = scmp.ne.s32.totalorder %s243, %s245
      %p249 = scmp.eq.s32.totalorder %s20, 0
      %p250 = por %p248, %p249
      %p251 = scmp.ne.s32.totalorder %s243, %s245
      %p252 = scmp.eq.s32.totalorder %s25, 1
      %p253 = por %p251, %p252
      %p254 = scmp.ne.s32.totalorder %s245, %s246
      %p255 = scmp.eq.s32.totalorder %s25, 0
      %p256 = por %p254, %p255
      %p257 = scmp.ne.s32.totalorder %s245, %s246
      %p258 = scmp.eq.s32.totalorder %s26, 1
      %p259 = por %p257, %p258
      %p261 = scmp.ne.s32.totalorder %s246, %s260
      %p262 = scmp.eq.s32.totalorder %s26, 0
      %p263 = por %p261, %p262
      %s264 = ssub.s32 %s20, %s27
      %p265 = scmp.eq.s32.totalorder %s264, 0
      %s267 = sadd.s32 %s266, 1
      %s268 = scalar_select %p265, %s266, %s267
      %p271 = pneg %p265
      %p272 = scmp.eq.s32.totalorder %s20, 1
      %p273 = por %p271, %p272
      %p274 = scmp.ne.s32.totalorder %s266, %s269
      %p275 = scmp.eq.s32.totalorder %s20, 0
      %p276 = por %p274, %p275
      %p277 = scmp.ne.s32.totalorder %s266, %s269
      %p278 = scmp.eq.s32.totalorder %s25, 1
      %p279 = por %p277, %p278
      %p280 = scmp.ne.s32.totalorder %s269, %s270
      %p281 = scmp.eq.s32.totalorder %s25, 0
      %p282 = por %p280, %p281
      %p283 = scmp.ne.s32.totalorder %s269, %s270
      %p284 = scmp.eq.s32.totalorder %s26, 1
      %p285 = por %p283, %p284
      %p287 = scmp.ne.s32.totalorder %s270, %s286
      %p288 = scmp.eq.s32.totalorder %s26, 0
      %p289 = por %p287, %p288
      %p290 = scmp.le.s32.totalorder 1, %s20
      %p291 = scmp.lt.s32.totalorder %s20, 3
      %p292 = pnand %p290, %p291
      %p293 = pneg %p292
      // Predicated region
      $region9: #{_lambda_.3} parent=5 // pred_check
        _
      $region10: #{_lambda_.3} parent=5 // pred_check_branch
        %295 = sbr.rel (%p292) target = $region12
      $region11: #{_lambda_.3} parent=5 // pred_region
        %s296 = ssub.s32 %s20, 1
        // Predicated region
        $region13: #{_lambda_.3} parent=11 // pred_check
          %p297 = pneg %p67
        $region14: #{_lambda_.3} parent=11 // pred_check_branch
          %299 = sbr.rel (%p297) target = $region16
        $region15: #{_lambda_.3} parent=11 // pred_region
          _
        $region16: #{_lambda_.3} parent=11 // pred_fallthru
          _
        // Predicated region
        $region17: #{_lambda_.3} parent=11 // pred_check
          %p300 = pneg %p88
        $region18: #{_lambda_.3} parent=11 // pred_check_branch
          %302 = sbr.rel (%p300) target = $region20
        $region19: #{_lambda_.3} parent=11 // pred_region
          _
        $region20: #{_lambda_.3} parent=11 // pred_fallthru
          _
        // Predicated region
        $region21: #{_lambda_.3} parent=11 // pred_check
          %p303 = pneg %p109
        $region22: #{_lambda_.3} parent=11 // pred_check_branch
          %305 = sbr.rel (%p303) target = $region24
        $region23: #{_lambda_.3} parent=11 // pred_region
          _
        $region24: #{_lambda_.3} parent=11 // pred_fallthru
          _
        // Predicated region
        $region25: #{_lambda_.3} parent=11 // pred_check
          %p306 = pneg %p130
        $region26: #{_lambda_.3} parent=11 // pred_check_branch
          %308 = sbr.rel (%p306) target = $region28
        $region27: #{_lambda_.3} parent=11 // pred_region
          _
        $region28: #{_lambda_.3} parent=11 // pred_fallthru
          _
        // Predicated region
        $region29: #{_lambda_.3} parent=11 // pred_check
          %p309 = pneg %p151
        $region30: #{_lambda_.3} parent=11 // pred_check_branch
          %311 = sbr.rel (%p309) target = $region32
        $region31: #{_lambda_.3} parent=11 // pred_region
          _
        $region32: #{_lambda_.3} parent=11 // pred_fallthru
          _
        // Predicated region
        $region33: #{_lambda_.3} parent=11 // pred_check
          %p312 = pneg %p172
        $region34: #{_lambda_.3} parent=11 // pred_check_branch
          %314 = sbr.rel (%p312) target = $region36
        $region35: #{_lambda_.3} parent=11 // pred_region
          _
        $region36: #{_lambda_.3} parent=11 // pred_fallthru
          _
        // Predicated region
        $region37: #{_lambda_.3} parent=11 // pred_check
          %p315 = pneg %p193
        $region38: #{_lambda_.3} parent=11 // pred_check_branch
          %317 = sbr.rel (%p315) target = $region40
        $region39: #{_lambda_.3} parent=11 // pred_region
          _
        $region40: #{_lambda_.3} parent=11 // pred_fallthru
          _
        // Predicated region
        $region41: #{_lambda_.3} parent=11 // pred_check
          %p318 = pneg %p214
        $region42: #{_lambda_.3} parent=11 // pred_check_branch
          %320 = sbr.rel (%p318) target = $region44
        $region43: #{_lambda_.3} parent=11 // pred_region
          _
        $region44: #{_lambda_.3} parent=11 // pred_fallthru
          _
        // Predicated region
        $region45: #{_lambda_.3} parent=11 // pred_check
          %p321 = pneg %p235
        $region46: #{_lambda_.3} parent=11 // pred_check_branch
          %323 = sbr.rel (%p321) target = $region48
        $region47: #{_lambda_.3} parent=11 // pred_region
          _
        $region48: #{_lambda_.3} parent=11 // pred_fallthru
          _
        // Predicated region
        $region49: #{_lambda_.3} parent=11 // pred_check
          %p324 = pneg %p256
        $region50: #{_lambda_.3} parent=11 // pred_check_branch
          %326 = sbr.rel (%p324) target = $region52
        $region51: #{_lambda_.3} parent=11 // pred_region
          _
        $region52: #{_lambda_.3} parent=11 // pred_fallthru
          _
      $region12: #{_lambda_.3} parent=5 // pred_fallthru
        _
      %p327 = scmp.lt.s32.totalorder %s20, 2
      // Predicated region
      $region53: #{_lambda_.3} parent=5 // pred_check
        %p328 = pneg %p327
      $region54: #{_lambda_.3} parent=5 // pred_check_branch
        %330 = sbr.rel (%p328) target = $region56
      $region55: #{_lambda_.3} parent=5 // pred_region
        // Predicated region
        $region57: #{_lambda_.3} parent=55 // pred_check
          %p331 = pneg %p40
        $region58: #{_lambda_.3} parent=55 // pred_check_branch
          %333 = sbr.rel (%p331) target = $region60
        $region59: #{_lambda_.3} parent=55 // pred_region
          %p334 = scmp.lt.s32.totalorder %s20, 1
          %s335 = scalar_select %p334, %s20, 1
          %s336 = smul.addr %s335, 30
          %s337 = smul.addr %s336, 8
          %s338 = scalar_lea.vmem %s0, %s337
        $region60: #{_lambda_.3} parent=55 // pred_fallthru
          _
      $region56: #{_lambda_.3} parent=5 // pred_fallthru
        _
      %p339 = scmp.le.s32.totalorder 1, %s20
      %p340 = scmp.lt.s32.totalorder %s20, 3
      %p341 = pnand %p339, %p340
      %p342 = pneg %p341
      // Predicated region
      $region61: #{_lambda_.3} parent=5 // pred_check
        _
      $region62: #{_lambda_.3} parent=5 // pred_check_branch
        %344 = sbr.rel (%p341) target = $region64
      $region63: #{_lambda_.3} parent=5 // pred_region
        %s345 = ssub.s32 %s20, 1
        %p346 = scmp.lt.s32.totalorder %s25, 1
        %s347 = scalar_select %p346, %s25, 1
        %s348 = smul.addr %s347, 30
        %s349 = smul.addr %s348, 8
        %s350 = scalar_lea.vmem %s0, %s349
        %p351 = pneg %p46
        %p352 = pneg %p43
        %p353 = pneg %p67
        %p354 = pneg %p64
        %p355 = pneg %p88
        %p356 = pneg %p85
        %p357 = pneg %p109
        %p358 = pneg %p106
        %p359 = pneg %p130
        %p360 = pneg %p127
        %p361 = pneg %p151
        %p362 = pneg %p148
        %p363 = pneg %p172
        %p364 = pneg %p169
        %p365 = pneg %p193
        %p366 = pneg %p190
        %p367 = pneg %p214
        %p368 = pneg %p211
        %p369 = pneg %p235
        %p370 = pneg %p232
        %p371 = pneg %p256
        %p372 = pneg %p253
        %p373 = pneg %p282
        %p374 = pneg %p279
        %s375 = sand.u32 %s269, 1
        %s376 = scalar_lea.sflag [#allocation4], %s375
        %s377 = sand.u32 %s269, 1
        %s378 = scalar_lea.vmem [#allocation3], %s377
        %p379 = scmp.lt.s32.totalorder %s25, 1
        %s380 = scalar_select %p379, %s25, 1
        %s381 = smul.addr %s380, 30
        %s382 = smul.addr %s381, 8
        %s383 = scalar_lea.vmem %s0, %s382
        %v385 = vld [vmem:[%s1] sm:$0xf]
        %v386 = vld [vmem:[%s1 + $0x4] sm:$0xf]
        %v387 = vld [vmem:[%s1 + $0x8] sm:$0xf]
        %v388 = vld [vmem:[%s1 + $0xc] sm:$0xf]
        %v389 = vld [vmem:[%s1 + $0x10] sm:$0xf]
        %v390 = vld [vmem:[%s1 + $0x14] sm:$0xf]
        %v391 = vld [vmem:[%s1 + $0x18] sm:$0xf]
        %v392 = vld [vmem:[%s1 + $0x1c] sm:$0xf]
        %v393 = vld [vmem:[%s1 + $0x20] sm:$0xf]
        %v394 = vld [vmem:[%s1 + $0x24] sm:$0xf]
        %v395 = vld [vmem:[%s1 + $0x28] sm:$0xf]
        %v396 = vld [vmem:[%s1 + $0x2c] sm:$0xf]
        %v397 = vld [vmem:[%s1 + $0x30] sm:$0xf]
        %v398 = vld [vmem:[%s1 + $0x34] sm:$0xf]
        %v399 = vld [vmem:[%s1 + $0x38] sm:$0xf]
        %v400 = vld [vmem:[%s1 + $0x3c] sm:$0xf]
        %v401 = vld [vmem:[%s1 + $0x40] sm:$0xf]
        %v402 = vld [vmem:[%s1 + $0x44] sm:$0xf]
        %v403 = vld [vmem:[%s1 + $0x48] sm:$0xf]
        %v404 = vld [vmem:[%s1 + $0x4c] sm:$0xf]
        %v405 = vld [vmem:[%s1 + $0x50] sm:$0xf]
        %v406 = vld [vmem:[%s1 + $0x54] sm:$0xf]
        %v407 = vld [vmem:[%s1 + $0x58] sm:$0xf]
        %v408 = vld [vmem:[%s1 + $0x5c] sm:$0xf]
        %v409 = vld [vmem:[%s1 + $0x60] sm:$0xf]
        %v410 = vld [vmem:[%s1 + $0x64] sm:$0xf]
        %v411 = vld [vmem:[%s1 + $0x68] sm:$0xf]
        %v412 = vld [vmem:[%s1 + $0x6c] sm:$0xf]
        %v413 = vld [vmem:[%s1 + $0x70] sm:$0xf]
        %v414 = vld [vmem:[%s1 + $0x74] sm:$0xf]
        %v415 = vld [vmem:[%s1 + $0x78] sm:$0xf]
        %v416 = vld [vmem:[%s1 + $0x7c] sm:$0xf]
        %v417 = vld [vmem:[%s1 + $0x80] sm:$0xf]
        %v418 = vld [vmem:[%s1 + $0x84] sm:$0xf]
        %v419 = vld [vmem:[%s1 + $0x88] sm:$0xf]
        %v420 = vld [vmem:[%s1 + $0x8c] sm:$0xf]
        %v421 = vld [vmem:[%s1 + $0x90] sm:$0xf]
        %v422 = vld [vmem:[%s1 + $0x94] sm:$0xf]
        %v423 = vld [vmem:[%s1 + $0x98] sm:$0xf]
        %v424 = vld [vmem:[%s1 + $0x9c] sm:$0xf]
        %v425 = vld [vmem:[%s1 + $0xa0] sm:$0xf]
        %v426 = vld [vmem:[%s1 + $0xa4] sm:$0xf]
        %v427 = vld [vmem:[%s1 + $0xa8] sm:$0xf]
        %v428 = vld [vmem:[%s1 + $0xac] sm:$0xf]
        %v429 = vld [vmem:[%s1 + $0xb0] sm:$0xf]
        %v430 = vld [vmem:[%s1 + $0xb4] sm:$0xf]
        %v431 = vld [vmem:[%s1 + $0xb8] sm:$0xf]
        %v432 = vld [vmem:[%s1 + $0xbc] sm:$0xf]
        %v433 = vld [vmem:[%s1 + $0xc0] sm:$0xf]
        %v434 = vld [vmem:[%s1 + $0xc4] sm:$0xf]
        %v435 = vld [vmem:[%s1 + $0xc8] sm:$0xf]
        %v436 = vld [vmem:[%s1 + $0xcc] sm:$0xf]
        %v437 = vld [vmem:[%s1 + $0xd0] sm:$0xf]
        %v438 = vld [vmem:[%s1 + $0xd4] sm:$0xf]
        %v439 = vld [vmem:[%s1 + $0xd8] sm:$0xf]
        %v440 = vld [vmem:[%s1 + $0xdc] sm:$0xf]
        %v441 = vld [vmem:[%s1 + $0xe0] sm:$0xf]
        %v442 = vld [vmem:[%s1 + $0xe4] sm:$0xf]
        %v443 = vld [vmem:[%s1 + $0xe8] sm:$0xf]
        %v444 = vld [vmem:[%s1 + $0xec] sm:$0xf]
        %v445 = vld [vmem:[%s1 + $0xf0] sm:$0xf]
        %v446 = vld [vmem:[%s1 + $0xf4] sm:$0xf]
        %v447 = vld [vmem:[%s1 + $0xf8] sm:$0xf]
        %v448 = vld [vmem:[%s1 + $0xfc] sm:$0xf]
        %v449 = vld [vmem:[%s1 + $0x100] sm:$0xf]
        %v450 = vld [vmem:[%s1 + $0x104] sm:$0xf]
        %v451 = vld [vmem:[%s1 + $0x108] sm:$0xf]
        %v452 = vld [vmem:[%s1 + $0x10c] sm:$0xf]
        %v453 = vld [vmem:[%s1 + $0x110] sm:$0xf]
        %v454 = vld [vmem:[%s1 + $0x114] sm:$0xf]
        %v455 = vld [vmem:[%s1 + $0x118] sm:$0xf]
        %v456 = vld [vmem:[%s1 + $0x11c] sm:$0xf]
        %v457 = vld [vmem:[%s2] sm:$0x1]
        %v458 = vld [vmem:[%s3] sm:$0xff]
        %v459 = vld [vmem:[%s3 + $0x8] sm:$0xff]
        %v460 = vld [vmem:[%s3 + $0x10] sm:$0xff]
        %v461 = vld [vmem:[%s3 + $0x18] sm:$0xff]
        %v462 = vld [vmem:[%s3 + $0x20] sm:$0xff]
        %v463 = vld [vmem:[%s3 + $0x28] sm:$0xff]
        %v464 = vld [vmem:[%s3 + $0x30] sm:$0xff]
        %v465 = vld [vmem:[%s3 + $0x38] sm:$0xff]
        %v466 = vld [vmem:[%s3 + $0x40] sm:$0xff]
        %v467 = vld [vmem:[%s3 + $0x48] sm:$0xff]
        %v468 = vld [vmem:[%s3 + $0x50] sm:$0xff]
        %v469 = vld [vmem:[%s3 + $0x58] sm:$0xff]
        %v470 = vld [vmem:[%s3 + $0x60] sm:$0xff]
        %v471 = vld [vmem:[%s3 + $0x68] sm:$0xff]
        %v472 = vld [vmem:[%s3 + $0x70] sm:$0xff]
        %v473 = vld [vmem:[%s3 + $0x78] sm:$0xff]
        %v474 = vld [vmem:[%s3 + $0x80] sm:$0xff]
        %v475 = vld [vmem:[%s3 + $0x88] sm:$0xff]
        %v476 = vld [vmem:[%s3 + $0x90] sm:$0xff]
        %v477 = vld [vmem:[%s3 + $0x98] sm:$0xff]
        %v478 = vld [vmem:[%s3 + $0xa0] sm:$0xff]
        %v479 = vld [vmem:[%s3 + $0xa8] sm:$0xff]
        %v480 = vld [vmem:[%s3 + $0xb0] sm:$0xff]
        %v481 = vld [vmem:[%s3 + $0xb8] sm:$0xff]
        %v482 = vld [vmem:[%s3 + $0xc0] sm:$0xff]
        %v483 = vld [vmem:[%s3 + $0xc8] sm:$0xff]
        %v484 = vld [vmem:[%s3 + $0xd0] sm:$0xff]
        %v485 = vld [vmem:[%s3 + $0xd8] sm:$0xff]
        %v486 = vld [vmem:[%s3 + $0xe0] sm:$0xff]
        %v487 = vld [vmem:[%s3 + $0xe8] sm:$0xff]
        %v488 = vld [vmem:[%s3 + $0xf0] sm:$0xff]
        %v489 = vld [vmem:[%s3 + $0xf8] sm:$0xff]
        %v490 = vld [vmem:[%s3 + $0x100] sm:$0xff]
        %v491 = vld [vmem:[%s3 + $0x108] sm:$0xff]
        %v492 = vld [vmem:[%s3 + $0x110] sm:$0xff]
        %v493 = vld [vmem:[%s3 + $0x118] sm:$0xff]
        %v494 = vld [vmem:[%s3 + $0x120] sm:$0xff]
        %v495 = vld [vmem:[%s3 + $0x128] sm:$0xff]
        %v496 = vld [vmem:[%s3 + $0x130] sm:$0xff]
        %v497 = vld [vmem:[%s3 + $0x138] sm:$0xff]
        %v498 = vld [vmem:[%s3 + $0x140] sm:$0xff]
        %v499 = vld [vmem:[%s3 + $0x148] sm:$0xff]
        %v500 = vld [vmem:[%s3 + $0x150] sm:$0xff]
        %v501 = vld [vmem:[%s3 + $0x158] sm:$0xff]
        %v502 = vld [vmem:[%s3 + $0x160] sm:$0xff]
        %v503 = vld [vmem:[%s3 + $0x168] sm:$0xff]
        %v504 = vld [vmem:[%s3 + $0x170] sm:$0xff]
        %v505 = vld [vmem:[%s3 + $0x178] sm:$0xff]
        %v506 = vld [vmem:[%s3 + $0x180] sm:$0xff]
        %v507 = vld [vmem:[%s3 + $0x188] sm:$0xff]
        %v508 = vld [vmem:[%s3 + $0x190] sm:$0xff]
        %v509 = vld [vmem:[%s3 + $0x198] sm:$0xff]
        %v510 = vld [vmem:[%s3 + $0x1a0] sm:$0xff]
        %v511 = vld [vmem:[%s3 + $0x1a8] sm:$0xff]
        %v512 = vld [vmem:[%s3 + $0x1b0] sm:$0xff]
        %v513 = vld [vmem:[%s3 + $0x1b8] sm:$0xff]
        %v514 = vld [vmem:[%s3 + $0x1c0] sm:$0xff]
        %v515 = vld [vmem:[%s3 + $0x1c8] sm:$0xff]
        %v516 = vld [vmem:[%s3 + $0x1d0] sm:$0xff]
        %v517 = vld [vmem:[%s3 + $0x1d8] sm:$0xff]
        %v518 = vld [vmem:[%s3 + $0x1e0] sm:$0xff]
        %v519 = vld [vmem:[%s3 + $0x1e8] sm:$0xff]
        %v520 = vld [vmem:[%s3 + $0x1f0] sm:$0xff]
        %v521 = vld [vmem:[%s3 + $0x1f8] sm:$0xff]
        %v522 = vld [vmem:[%s3 + $0x200] sm:$0xff]
        %v523 = vld [vmem:[%s3 + $0x208] sm:$0xff]
        %v524 = vld [vmem:[%s3 + $0x210] sm:$0xff]
        %v525 = vld [vmem:[%s3 + $0x218] sm:$0xff]
        %v526 = vld [vmem:[%s3 + $0x220] sm:$0xff]
        %v527 = vld [vmem:[%s3 + $0x228] sm:$0xff]
        %v528 = vld [vmem:[%s3 + $0x230] sm:$0xff]
        %v529 = vld [vmem:[%s3 + $0x238] sm:$0xff]
        %v530 = vld [vmem:[%s3 + $0x240] sm:$0xff]
        %v531 = vld [vmem:[%s3 + $0x248] sm:$0xff]
        %v532 = vld [vmem:[%s3 + $0x250] sm:$0xff]
        %v533 = vld [vmem:[%s3 + $0x258] sm:$0xff]
        %v534 = vld [vmem:[%s3 + $0x260] sm:$0xff]
        %v535 = vld [vmem:[%s3 + $0x268] sm:$0xff]
        %v536 = vld [vmem:[%s3 + $0x270] sm:$0xff]
        %v537 = vld [vmem:[%s3 + $0x278] sm:$0xff]
        %v538 = vld [vmem:[%s3 + $0x280] sm:$0xff]
        %v539 = vld [vmem:[%s3 + $0x288] sm:$0xff]
        %v540 = vld [vmem:[%s3 + $0x290] sm:$0xff]
        %v541 = vld [vmem:[%s3 + $0x298] sm:$0xff]
        %v542 = vld [vmem:[%s3 + $0x2a0] sm:$0xff]
        %v543 = vld [vmem:[%s3 + $0x2a8] sm:$0xff]
        %v544 = vld [vmem:[%s3 + $0x2b0] sm:$0xff]
        %v545 = vld [vmem:[%s3 + $0x2b8] sm:$0xff]
        %v546 = vld [vmem:[%s3 + $0x2c0] sm:$0xff]
        %v547 = vld [vmem:[%s3 + $0x2c8] sm:$0xff]
        %v548 = vld [vmem:[%s3 + $0x2d0] sm:$0xff]
        %v549 = vld [vmem:[%s3 + $0x2d8] sm:$0xff]
        %v550 = vld [vmem:[%s3 + $0x2e0] sm:$0xff]
        %v551 = vld [vmem:[%s3 + $0x2e8] sm:$0xff]
        %v552 = vld [vmem:[%s3 + $0x2f0] sm:$0xff]
        %v553 = vld [vmem:[%s3 + $0x2f8] sm:$0xff]
        %v554 = vld [vmem:[%s3 + $0x300] sm:$0xff]
        %v555 = vld [vmem:[%s3 + $0x308] sm:$0xff]
        %v556 = vld [vmem:[%s3 + $0x310] sm:$0xff]
        %v557 = vld [vmem:[%s3 + $0x318] sm:$0xff]
        %v558 = vld [vmem:[%s3 + $0x320] sm:$0xff]
        %v559 = vld [vmem:[%s3 + $0x328] sm:$0xff]
        %v560 = vld [vmem:[%s3 + $0x330] sm:$0xff]
        %v561 = vld [vmem:[%s3 + $0x338] sm:$0xff]
        %v562 = vld [vmem:[%s3 + $0x340] sm:$0xff]
        %v563 = vld [vmem:[%s3 + $0x348] sm:$0xff]
        %v564 = vld [vmem:[%s3 + $0x350] sm:$0xff]
        %v565 = vld [vmem:[%s3 + $0x358] sm:$0xff]
        %v566 = vld [vmem:[%s3 + $0x360] sm:$0xff]
        %v567 = vld [vmem:[%s3 + $0x368] sm:$0xff]
        %v568 = vld [vmem:[%s3 + $0x370] sm:$0xff]
        %v569 = vld [vmem:[%s3 + $0x378] sm:$0xff]
        %v570 = vld [vmem:[%s3 + $0x380] sm:$0xff]
        %v571 = vld [vmem:[%s3 + $0x388] sm:$0xff]
        %v572 = vld [vmem:[%s3 + $0x390] sm:$0xff]
        %v573 = vld [vmem:[%s3 + $0x398] sm:$0xff]
        %v574 = vld [vmem:[%s3 + $0x3a0] sm:$0xff]
        %v575 = vld [vmem:[%s3 + $0x3a8] sm:$0xff]
        %v576 = vld [vmem:[%s3 + $0x3b0] sm:$0xff]
        %v577 = vld [vmem:[%s3 + $0x3b8] sm:$0xff]
        %v578 = vld [vmem:[%s3 + $0x3c0] sm:$0xff]
        %v579 = vld [vmem:[%s3 + $0x3c8] sm:$0xff]
        %v580 = vld [vmem:[%s3 + $0x3d0] sm:$0xff]
        %v581 = vld [vmem:[%s3 + $0x3d8] sm:$0xff]
        %v582 = vld [vmem:[%s3 + $0x3e0] sm:$0xff]
        %v583 = vld [vmem:[%s3 + $0x3e8] sm:$0xff]
        %v584 = vld [vmem:[%s3 + $0x3f0] sm:$0xff]
        %v585 = vld [vmem:[%s3 + $0x3f8] sm:$0xff]
        %v586 = vld [vmem:[%s3 + $0x400] sm:$0xff]
        %v587 = vld [vmem:[%s3 + $0x408] sm:$0xff]
        %v588 = vld [vmem:[%s3 + $0x410] sm:$0xff]
        %v589 = vld [vmem:[%s3 + $0x418] sm:$0xff]
        %v590 = vld [vmem:[%s3 + $0x420] sm:$0xff]
        %v591 = vld [vmem:[%s3 + $0x428] sm:$0xff]
        %v592 = vld [vmem:[%s3 + $0x430] sm:$0xff]
        %v593 = vld [vmem:[%s3 + $0x438] sm:$0xff]
        %v594 = vld [vmem:[%s3 + $0x440] sm:$0xff]
        %v595 = vld [vmem:[%s3 + $0x448] sm:$0xff]
        %v596 = vld [vmem:[%s3 + $0x450] sm:$0xff]
        %v597 = vld [vmem:[%s3 + $0x458] sm:$0xff]
        %v598 = vld [vmem:[%s3 + $0x460] sm:$0xff]
        %v599 = vld [vmem:[%s3 + $0x468] sm:$0xff]
        %v600 = vld [vmem:[%s3 + $0x470] sm:$0xff]
        %v601 = vld [vmem:[%s3 + $0x478] sm:$0xff]
        %v602 = vld [vmem:[%s4] sm:$0x3]
        %v603 = vld [vmem:[%s5] sm:$0xf]
        %v604 = vld [vmem:[%s5 + $0x4] sm:$0xf]
        %v605 = vld [vmem:[%s5 + $0x8] sm:$0xf]
        %v606 = vld [vmem:[%s5 + $0xc] sm:$0xf]
        %v607 = vld [vmem:[%s5 + $0x10] sm:$0xf]
        %v608 = vld [vmem:[%s5 + $0x14] sm:$0xf]
        %v609 = vld [vmem:[%s5 + $0x18] sm:$0xf]
        %v610 = vld [vmem:[%s5 + $0x1c] sm:$0xf]
        %v611 = vld [vmem:[%s5 + $0x20] sm:$0xf]
        %v612 = vld [vmem:[%s5 + $0x24] sm:$0xf]
        %v613 = vld [vmem:[%s5 + $0x28] sm:$0xf]
        %v614 = vld [vmem:[%s5 + $0x2c] sm:$0xf]
        %v615 = vld [vmem:[%s5 + $0x30] sm:$0xf]
        %v616 = vld [vmem:[%s5 + $0x34] sm:$0xf]
        %v617 = vld [vmem:[%s5 + $0x38] sm:$0xf]
        %v618 = vld [vmem:[%s5 + $0x3c] sm:$0xf]
        %v619 = vld [vmem:[%s5 + $0x40] sm:$0xf]
        %v620 = vld [vmem:[%s5 + $0x44] sm:$0xf]
        %v621 = vld [vmem:[%s5 + $0x48] sm:$0xf]
        %v622 = vld [vmem:[%s5 + $0x4c] sm:$0xf]
        %v623 = vld [vmem:[%s5 + $0x50] sm:$0xf]
        %v624 = vld [vmem:[%s5 + $0x54] sm:$0xf]
        %v625 = vld [vmem:[%s5 + $0x58] sm:$0xf]
        %v626 = vld [vmem:[%s5 + $0x5c] sm:$0xf]
        %v627 = vld [vmem:[%s5 + $0x60] sm:$0xf]
        %v628 = vld [vmem:[%s5 + $0x64] sm:$0xf]
        %v629 = vld [vmem:[%s5 + $0x68] sm:$0xf]
        %v630 = vld [vmem:[%s5 + $0x6c] sm:$0xf]
        %v631 = vld [vmem:[%s5 + $0x70] sm:$0xf]
        %v632 = vld [vmem:[%s5 + $0x74] sm:$0xf]
        %v633 = vld [vmem:[%s5 + $0x78] sm:$0xf]
        %v634 = vld [vmem:[%s5 + $0x7c] sm:$0xf]
        %v635 = vld [vmem:[%s5 + $0x80] sm:$0xf]
        %v636 = vld [vmem:[%s5 + $0x84] sm:$0xf]
        %v637 = vld [vmem:[%s5 + $0x88] sm:$0xf]
        %v638 = vld [vmem:[%s5 + $0x8c] sm:$0xf]
        %v639 = vld [vmem:[%s5 + $0x90] sm:$0xf]
        %v640 = vld [vmem:[%s5 + $0x94] sm:$0xf]
        %v641 = vld [vmem:[%s5 + $0x98] sm:$0xf]
        %v642 = vld [vmem:[%s5 + $0x9c] sm:$0xf]
        %v643 = vld [vmem:[%s5 + $0xa0] sm:$0xf]
        %v644 = vld [vmem:[%s5 + $0xa4] sm:$0xf]
        %v645 = vld [vmem:[%s5 + $0xa8] sm:$0xf]
        %v646 = vld [vmem:[%s5 + $0xac] sm:$0xf]
        %v647 = vld [vmem:[%s5 + $0xb0] sm:$0xf]
        %v648 = vld [vmem:[%s5 + $0xb4] sm:$0xf]
        %v649 = vld [vmem:[%s5 + $0xb8] sm:$0xf]
        %v650 = vld [vmem:[%s5 + $0xbc] sm:$0xf]
        %v651 = vld [vmem:[%s5 + $0xc0] sm:$0xf]
        %v652 = vld [vmem:[%s5 + $0xc4] sm:$0xf]
        %v653 = vld [vmem:[%s5 + $0xc8] sm:$0xf]
        %v654 = vld [vmem:[%s5 + $0xcc] sm:$0xf]
        %v655 = vld [vmem:[%s5 + $0xd0] sm:$0xf]
        %v656 = vld [vmem:[%s5 + $0xd4] sm:$0xf]
        %v657 = vld [vmem:[%s5 + $0xd8] sm:$0xf]
        %v658 = vld [vmem:[%s5 + $0xdc] sm:$0xf]
        %v659 = vld [vmem:[%s5 + $0xe0] sm:$0xf]
        %v660 = vld [vmem:[%s5 + $0xe4] sm:$0xf]
        %v661 = vld [vmem:[%s5 + $0xe8] sm:$0xf]
        %v662 = vld [vmem:[%s5 + $0xec] sm:$0xf]
        %v663 = vld [vmem:[%s5 + $0xf0] sm:$0xf]
        %v664 = vld [vmem:[%s5 + $0xf4] sm:$0xf]
        %v665 = vld [vmem:[%s5 + $0xf8] sm:$0xf]
        %v666 = vld [vmem:[%s5 + $0xfc] sm:$0xf]
        %v667 = vld [vmem:[%s5 + $0x100] sm:$0xf]
        %v668 = vld [vmem:[%s5 + $0x104] sm:$0xf]
        %v669 = vld [vmem:[%s5 + $0x108] sm:$0xf]
        %v670 = vld [vmem:[%s5 + $0x10c] sm:$0xf]
        %v671 = vld [vmem:[%s5 + $0x110] sm:$0xf]
        %v672 = vld [vmem:[%s5 + $0x114] sm:$0xf]
        %v673 = vld [vmem:[%s5 + $0x118] sm:$0xf]
        %v674 = vld [vmem:[%s5 + $0x11c] sm:$0xf]
        %v675 = vld [vmem:[%s5 + $0x120] sm:$0xf]
        %v676 = vld [vmem:[%s5 + $0x124] sm:$0xf]
        %v677 = vld [vmem:[%s5 + $0x128] sm:$0xf]
        %v678 = vld [vmem:[%s5 + $0x12c] sm:$0xf]
        %v679 = vld [vmem:[%s5 + $0x130] sm:$0xf]
        %v680 = vld [vmem:[%s5 + $0x134] sm:$0xf]
        %v681 = vld [vmem:[%s5 + $0x138] sm:$0xf]
        %v682 = vld [vmem:[%s5 + $0x13c] sm:$0xf]
        %v683 = vld [vmem:[%s5 + $0x140] sm:$0xf]
        %v684 = vld [vmem:[%s5 + $0x144] sm:$0xf]
        %v685 = vld [vmem:[%s5 + $0x148] sm:$0xf]
        %v686 = vld [vmem:[%s5 + $0x14c] sm:$0xf]
        %v687 = vld [vmem:[%s5 + $0x150] sm:$0xf]
        %v688 = vld [vmem:[%s5 + $0x154] sm:$0xf]
        %v689 = vld [vmem:[%s5 + $0x158] sm:$0xf]
        %v690 = vld [vmem:[%s5 + $0x15c] sm:$0xf]
        %v691 = vld [vmem:[%s5 + $0x160] sm:$0xf]
        %v692 = vld [vmem:[%s5 + $0x164] sm:$0xf]
        %v693 = vld [vmem:[%s5 + $0x168] sm:$0xf]
        %v694 = vld [vmem:[%s5 + $0x16c] sm:$0xf]
        %v695 = vld [vmem:[%s5 + $0x170] sm:$0xf]
        %v696 = vld [vmem:[%s5 + $0x174] sm:$0xf]
        %v697 = vld [vmem:[%s5 + $0x178] sm:$0xf]
        %v698 = vld [vmem:[%s5 + $0x17c] sm:$0xf]
        %v699 = vld [vmem:[%s5 + $0x180] sm:$0xf]
        %v700 = vld [vmem:[%s5 + $0x184] sm:$0xf]
        %v701 = vld [vmem:[%s5 + $0x188] sm:$0xf]
        %v702 = vld [vmem:[%s5 + $0x18c] sm:$0xf]
        %v703 = vld [vmem:[%s5 + $0x190] sm:$0xf]
        %v704 = vld [vmem:[%s5 + $0x194] sm:$0xf]
        %v705 = vld [vmem:[%s5 + $0x198] sm:$0xf]
        %v706 = vld [vmem:[%s5 + $0x19c] sm:$0xf]
        %v707 = vld [vmem:[%s5 + $0x1a0] sm:$0xf]
        %v708 = vld [vmem:[%s5 + $0x1a4] sm:$0xf]
        %v709 = vld [vmem:[%s5 + $0x1a8] sm:$0xf]
        %v710 = vld [vmem:[%s5 + $0x1ac] sm:$0xf]
        %v711 = vld [vmem:[%s5 + $0x1b0] sm:$0xf]
        %v712 = vld [vmem:[%s5 + $0x1b4] sm:$0xf]
        %v713 = vld [vmem:[%s5 + $0x1b8] sm:$0xf]
        %v714 = vld [vmem:[%s5 + $0x1bc] sm:$0xf]
        %v715 = vld [vmem:[%s5 + $0x1c0] sm:$0xf]
        %v716 = vld [vmem:[%s5 + $0x1c4] sm:$0xf]
        %v717 = vld [vmem:[%s5 + $0x1c8] sm:$0xf]
        %v718 = vld [vmem:[%s5 + $0x1cc] sm:$0xf]
        %v719 = vld [vmem:[%s5 + $0x1d0] sm:$0xf]
        %v720 = vld [vmem:[%s5 + $0x1d4] sm:$0xf]
        %v721 = vld [vmem:[%s5 + $0x1d8] sm:$0xf]
        %v722 = vld [vmem:[%s5 + $0x1dc] sm:$0xf]
        %v723 = vld [vmem:[%s5 + $0x1e0] sm:$0xf]
        %v724 = vld [vmem:[%s5 + $0x1e4] sm:$0xf]
        %v725 = vld [vmem:[%s5 + $0x1e8] sm:$0xf]
        %v726 = vld [vmem:[%s5 + $0x1ec] sm:$0xf]
        %v727 = vld [vmem:[%s5 + $0x1f0] sm:$0xf]
        %v728 = vld [vmem:[%s5 + $0x1f4] sm:$0xf]
        %v729 = vld [vmem:[%s5 + $0x1f8] sm:$0xf]
        %v730 = vld [vmem:[%s5 + $0x1fc] sm:$0xf]
        %v731 = vld [vmem:[%s6] sm:$0x1]
        %v732 = vld [vmem:[%s7] sm:$0xff]
        %v733 = vld [vmem:[%s7 + $0x8] sm:$0xff]
        %v734 = vld [vmem:[%s7 + $0x10] sm:$0xff]
        %v735 = vld [vmem:[%s7 + $0x18] sm:$0xff]
        %v736 = vld [vmem:[%s7 + $0x20] sm:$0xff]
        %v737 = vld [vmem:[%s7 + $0x28] sm:$0xff]
        %v738 = vld [vmem:[%s7 + $0x30] sm:$0xff]
        %v739 = vld [vmem:[%s7 + $0x38] sm:$0xff]
        %v740 = vld [vmem:[%s7 + $0x40] sm:$0xff]
        %v741 = vld [vmem:[%s7 + $0x48] sm:$0xff]
        %v742 = vld [vmem:[%s7 + $0x50] sm:$0xff]
        %v743 = vld [vmem:[%s7 + $0x58] sm:$0xff]
        %v744 = vld [vmem:[%s7 + $0x60] sm:$0xff]
        %v745 = vld [vmem:[%s7 + $0x68] sm:$0xff]
        %v746 = vld [vmem:[%s7 + $0x70] sm:$0xff]
        %v747 = vld [vmem:[%s7 + $0x78] sm:$0xff]
        %v748 = vld [vmem:[%s8] sm:$0x3]
        %v749 = vld [vmem:[%s9] sm:$0xf]
        %v750 = vld [vmem:[%s9 + $0x4] sm:$0xf]
        %v751 = vld [vmem:[%s9 + $0x8] sm:$0xf]
        %v752 = vld [vmem:[%s9 + $0xc] sm:$0xf]
        %v753 = vld [vmem:[%s9 + $0x10] sm:$0xf]
        %v754 = vld [vmem:[%s9 + $0x14] sm:$0xf]
        %v755 = vld [vmem:[%s9 + $0x18] sm:$0xf]
        %v756 = vld [vmem:[%s9 + $0x1c] sm:$0xf]
        %v757 = vld [vmem:[%s9 + $0x20] sm:$0xf]
        %v758 = vld [vmem:[%s9 + $0x24] sm:$0xf]
        %v759 = vld [vmem:[%s9 + $0x28] sm:$0xf]
        %v760 = vld [vmem:[%s9 + $0x2c] sm:$0xf]
        %v761 = vld [vmem:[%s9 + $0x30] sm:$0xf]
        %v762 = vld [vmem:[%s9 + $0x34] sm:$0xf]
        %v763 = vld [vmem:[%s9 + $0x38] sm:$0xf]
        %v764 = vld [vmem:[%s9 + $0x3c] sm:$0xf]
        %v765 = vld [vmem:[%s9 + $0x40] sm:$0xf]
        %v766 = vld [vmem:[%s9 + $0x44] sm:$0xf]
        %v767 = vld [vmem:[%s9 + $0x48] sm:$0xf]
        %v768 = vld [vmem:[%s9 + $0x4c] sm:$0xf]
        %v769 = vld [vmem:[%s9 + $0x50] sm:$0xf]
        %v770 = vld [vmem:[%s9 + $0x54] sm:$0xf]
        %v771 = vld [vmem:[%s9 + $0x58] sm:$0xf]
        %v772 = vld [vmem:[%s9 + $0x5c] sm:$0xf]
        %v773 = vld [vmem:[%s9 + $0x60] sm:$0xf]
        %v774 = vld [vmem:[%s9 + $0x64] sm:$0xf]
        %v775 = vld [vmem:[%s9 + $0x68] sm:$0xf]
        %v776 = vld [vmem:[%s9 + $0x6c] sm:$0xf]
        %v777 = vld [vmem:[%s9 + $0x70] sm:$0xf]
        %v778 = vld [vmem:[%s9 + $0x74] sm:$0xf]
        %v779 = vld [vmem:[%s9 + $0x78] sm:$0xf]
        %v780 = vld [vmem:[%s9 + $0x7c] sm:$0xf]
        %v781 = vld [vmem:[%s10] sm:$0x1]
        %v782 = vld [vmem:[%s383] sm:$0xff]
        %v783 = vld [vmem:[%s383 + $0x8] sm:$0x1f]
        %v784 = vld [vmem:[%s383 + $0x1] sm:$0xff]
        %v785 = vld [vmem:[%s383 + $0x9] sm:$0x1f]
        %v786 = vld [vmem:[%s383 + $0x2] sm:$0xff]
        %v787 = vld [vmem:[%s383 + $0xa] sm:$0x1f]
        %s788 = scalar_lea.vmem %s383, 16
        %v789 = vld [vmem:[%s788] sm:$0xff]
        %v790 = vld [vmem:[%s788 + $0x8] sm:$0x1f]
        %v791 = vld [vmem:[%s788 + $0x1] sm:$0xff]
        %v792 = vld [vmem:[%s788 + $0x9] sm:$0x1f]
        %v793 = vld [vmem:[%s788 + $0x2] sm:$0xff]
        %v794 = vld [vmem:[%s788 + $0xa] sm:$0x1f]
        %s795 = scalar_lea.vmem %s383, 32
        %v796 = vld [vmem:[%s795] sm:$0xff]
        %v797 = vld [vmem:[%s795 + $0x8] sm:$0x1f]
        %v798 = vld [vmem:[%s795 + $0x1] sm:$0xff]
        %v799 = vld [vmem:[%s795 + $0x9] sm:$0x1f]
        %v800 = vld [vmem:[%s795 + $0x2] sm:$0xff]
        %v801 = vld [vmem:[%s795 + $0xa] sm:$0x1f]
        %804 = vrot.lane.b32.xlu0 %v784, 64
        %v805 = vpop.permute.xlu0 %804
        %806 = vrot.lane.b32.xlu0 %v785, 64
        %v807 = vpop.permute.xlu0 %806
        %812 = vrot.lane.b32.xlu0 %v789, 64
        %v813 = vpop.permute.xlu0 %812
        %814 = vrot.lane.b32.xlu0 %v790, 64
        %v815 = vpop.permute.xlu0 %814
        %820 = vrot.lane.b32.xlu0 %v793, 64
        %v821 = vpop.permute.xlu0 %820
        %822 = vrot.lane.b32.xlu0 %v794, 64
        %v823 = vpop.permute.xlu0 %822
        %828 = vrot.lane.b32.xlu0 %v798, 64
        %v829 = vpop.permute.xlu0 %828
        %830 = vrot.lane.b32.xlu0 %v799, 64
        %v831 = vpop.permute.xlu0 %830
        %vm834 = vcmask 523264
        %v835 = vsel %vm834, %v782, %v805
        %v836 = vsel %vm834, %v783, %v807
        %v837 = vsel %vm834, %v786, %v813
        %v838 = vsel %vm834, %v787, %v815
        %v839 = vsel %vm834, %v791, %v821
        %v840 = vsel %vm834, %v792, %v823
        %v841 = vsel %vm834, %v796, %v829
        %v842 = vsel %vm834, %v797, %v831
        %v843 = vpack.c.bf16 %v836, %v835
        %v844 = vpack.c.bf16 %v838, %v837
        %v845 = vpack.c.bf16 %v840, %v839
        %v846 = vpack.c.bf16 %v842, %v841
        %v847 = vpack.c.bf16 %v801, %v800
        %v920 = vunpack.c.l.b16 %v385
        %v921 = vunpack.c.l.b16 %v386
        %v922 = vunpack.c.l.b16 %v387
        %v923 = vunpack.c.l.b16 %v388
        %v924 = vunpack.c.l.b16 %v389
        %v925 = vunpack.c.l.b16 %v390
        %v926 = vunpack.c.l.b16 %v391
        %v927 = vunpack.c.l.b16 %v392
        %v928 = vunpack.c.l.b16 %v393
        %v929 = vunpack.c.l.b16 %v394
        %v930 = vunpack.c.l.b16 %v395
        %v931 = vunpack.c.l.b16 %v396
        %v932 = vunpack.c.l.b16 %v397
        %v933 = vunpack.c.l.b16 %v398
        %v934 = vunpack.c.l.b16 %v399
        %v935 = vunpack.c.l.b16 %v400
        %v936 = vunpack.c.l.b16 %v401
        %v937 = vunpack.c.l.b16 %v402
        %v938 = vunpack.c.l.b16 %v403
        %v939 = vunpack.c.l.b16 %v404
        %v940 = vunpack.c.l.b16 %v405
        %v941 = vunpack.c.l.b16 %v406
        %v942 = vunpack.c.l.b16 %v407
        %v943 = vunpack.c.l.b16 %v408
        %v944 = vunpack.c.l.b16 %v409
        %v945 = vunpack.c.l.b16 %v410
        %v946 = vunpack.c.l.b16 %v411
        %v947 = vunpack.c.l.b16 %v412
        %v948 = vunpack.c.l.b16 %v413
        %v949 = vunpack.c.l.b16 %v414
        %v950 = vunpack.c.l.b16 %v415
        %v951 = vunpack.c.l.b16 %v416
        %v952 = vunpack.c.l.b16 %v417
        %v953 = vunpack.c.l.b16 %v418
        %v954 = vunpack.c.l.b16 %v419
        %v955 = vunpack.c.l.b16 %v420
        %v956 = vunpack.c.l.b16 %v421
        %v957 = vunpack.c.l.b16 %v422
        %v958 = vunpack.c.l.b16 %v423
        %v959 = vunpack.c.l.b16 %v424
        %v960 = vunpack.c.l.b16 %v425
        %v961 = vunpack.c.l.b16 %v426
        %v962 = vunpack.c.l.b16 %v427
        %v963 = vunpack.c.l.b16 %v428
        %v964 = vunpack.c.l.b16 %v429
        %v965 = vunpack.c.l.b16 %v430
        %v966 = vunpack.c.l.b16 %v431
        %v967 = vunpack.c.l.b16 %v432
        %v968 = vunpack.c.l.b16 %v433
        %v969 = vunpack.c.l.b16 %v434
        %v970 = vunpack.c.l.b16 %v435
        %v971 = vunpack.c.l.b16 %v436
        %v972 = vunpack.c.l.b16 %v437
        %v973 = vunpack.c.l.b16 %v438
        %v974 = vunpack.c.l.b16 %v439
        %v975 = vunpack.c.l.b16 %v440
        %v976 = vunpack.c.l.b16 %v441
        %v977 = vunpack.c.l.b16 %v442
        %v978 = vunpack.c.l.b16 %v443
        %v979 = vunpack.c.l.b16 %v444
        %v980 = vunpack.c.l.b16 %v445
        %v981 = vunpack.c.l.b16 %v446
        %v982 = vunpack.c.l.b16 %v447
        %v983 = vunpack.c.l.b16 %v448
        %v984 = vunpack.c.l.b16 %v449
        %v985 = vunpack.c.l.b16 %v450
        %v986 = vunpack.c.l.b16 %v451
        %v987 = vunpack.c.l.b16 %v452
        %v988 = vunpack.c.l.b16 %v453
        %v989 = vunpack.c.l.b16 %v454
        %v990 = vunpack.c.l.b16 %v455
        %v991 = vunpack.c.l.b16 %v456
        %v992 = vpack.c.b16 %v921, %v920
        %v993 = vpack.c.b16 %v923, %v922
        %v994 = vpack.c.b16 %v925, %v924
        %v995 = vpack.c.b16 %v927, %v926
        %v996 = vpack.c.b16 %v929, %v928
        %v997 = vpack.c.b16 %v931, %v930
        %v998 = vpack.c.b16 %v933, %v932
        %v999 = vpack.c.b16 %v935, %v934
        %v1000 = vpack.c.b16 %v937, %v936
        %v1001 = vpack.c.b16 %v939, %v938
        %v1002 = vpack.c.b16 %v941, %v940
        %v1003 = vpack.c.b16 %v943, %v942
        %v1004 = vpack.c.b16 %v945, %v944
        %v1005 = vpack.c.b16 %v947, %v946
        %v1006 = vpack.c.b16 %v949, %v948
        %v1007 = vpack.c.b16 %v951, %v950
        %v1008 = vpack.c.b16 %v953, %v952
        %v1009 = vpack.c.b16 %v955, %v954
        %v1010 = vpack.c.b16 %v957, %v956
        %v1011 = vpack.c.b16 %v959, %v958
        %v1012 = vpack.c.b16 %v961, %v960
        %v1013 = vpack.c.b16 %v963, %v962
        %v1014 = vpack.c.b16 %v965, %v964
        %v1015 = vpack.c.b16 %v967, %v966
        %v1016 = vpack.c.b16 %v969, %v968
        %v1017 = vpack.c.b16 %v971, %v970
        %v1018 = vpack.c.b16 %v973, %v972
        %v1019 = vpack.c.b16 %v975, %v974
        %v1020 = vpack.c.b16 %v977, %v976
        %v1021 = vpack.c.b16 %v979, %v978
        %v1022 = vpack.c.b16 %v981, %v980
        %v1023 = vpack.c.b16 %v983, %v982
        %v1024 = vpack.c.b16 %v985, %v984
        %v1025 = vpack.c.b16 %v987, %v986
        %v1026 = vpack.c.b16 %v989, %v988
        %v1027 = vpack.c.b16 %v991, %v990
        %v1065 = vsel %vm834, %v847, 0
        %1067 = vmatpush.bf16.msra.mxu0 %v999
        %1068 = vmatpush.bf16.msra.mxu0 %v998
        %1069 = vmatpush.bf16.msra.mxu0 %v997
        %1070 = vmatpush.bf16.msra.mxu0 %v996
        %1071 = vmatpush.bf16.msra.mxu0 %v995
        %1072 = vmatpush.bf16.msra.mxu0 %v994
        %1073 = vmatpush.bf16.msra.mxu0 %v993
        %1074 = vmatpush.bf16.msra.mxu0 %v992
        %1075 = vmatmul.bf16.gmra.mxu0 %v843
        %v1076 = vpop.f32.mrf.mxu0
        %v1077 = vadd.f32 0.0, %v1076
        %v1078 = vpop.f32.mrf.mxu0
        %v1079 = vadd.f32 0.0, %v1078
        %1080 = vdwg.mxu0
        %1081 = vmatpush.bf16.msra.mxu0 %v1007
        %1082 = vmatpush.bf16.msra.mxu0 %v1006
        %1083 = vmatpush.bf16.msra.mxu0 %v1005
        %1084 = vmatpush.bf16.msra.mxu0 %v1004
        %1085 = vmatpush.bf16.msra.mxu0 %v1003
        %1086 = vmatpush.bf16.msra.mxu0 %v1002
        %1087 = vmatpush.bf16.msra.mxu0 %v1001
        %1088 = vmatpush.bf16.msra.mxu0 %v1000
        %1089 = vmatmul.bf16.gmra.mxu0 %v844
        %v1090 = vpop.f32.mrf.mxu0
        %v1091 = vadd.f32 %v1077, %v1090
        %v1092 = vpop.f32.mrf.mxu0
        %v1093 = vadd.f32 %v1079, %v1092
        %1094 = vdwg.mxu0
        %1095 = vmatpush.bf16.msra.mxu0 %v1015
        %1096 = vmatpush.bf16.msra.mxu0 %v1014
        %1097 = vmatpush.bf16.msra.mxu0 %v1013
        %1098 = vmatpush.bf16.msra.mxu0 %v1012
        %1099 = vmatpush.bf16.msra.mxu0 %v1011
        %1100 = vmatpush.bf16.msra.mxu0 %v1010
        %1101 = vmatpush.bf16.msra.mxu0 %v1009
        %1102 = vmatpush.bf16.msra.mxu0 %v1008
        %1103 = vmatmul.bf16.gmra.mxu0 %v845
        %v1104 = vpop.f32.mrf.mxu0
        %v1105 = vadd.f32 %v1091, %v1104
        %v1106 = vpop.f32.mrf.mxu0
        %v1107 = vadd.f32 %v1093, %v1106
        %1108 = vdwg.mxu0
        %1109 = vmatpush.bf16.msra.mxu0 %v1023
        %1110 = vmatpush.bf16.msra.mxu0 %v1022
        %1111 = vmatpush.bf16.msra.mxu0 %v1021
        %1112 = vmatpush.bf16.msra.mxu0 %v1020
        %1113 = vmatpush.bf16.msra.mxu0 %v1019
        %1114 = vmatpush.bf16.msra.mxu0 %v1018
        %1115 = vmatpush.bf16.msra.mxu0 %v1017
        %1116 = vmatpush.bf16.msra.mxu0 %v1016
        %1117 = vmatmul.bf16.gmra.mxu0 %v846
        %v1118 = vpop.f32.mrf.mxu0
        %v1119 = vadd.f32 %v1105, %v1118
        %v1120 = vpop.f32.mrf.mxu0
        %v1121 = vadd.f32 %v1107, %v1120
        %1122 = vdwg.mxu0
        %1123 = vmatpush.bf16.msra.mxu0 0
        %1124 = vmatpush.bf16.msra.mxu0 0
        %1125 = vmatpush.bf16.msra.mxu0 0
        %1126 = vmatpush.bf16.msra.mxu0 0
        %1127 = vmatpush.bf16.msra.mxu0 %v1027
        %1128 = vmatpush.bf16.msra.mxu0 %v1026
        %1129 = vmatpush.bf16.msra.mxu0 %v1025
        %1130 = vmatpush.bf16.msra.mxu0 %v1024
        %1131 = vmatmul.bf16.gmra.mxu0 %v1065
        %v1132 = vpop.f32.mrf.mxu0
        %v1133 = vadd.f32 %v1119, %v1132
        %v1134 = vpop.f32.mrf.mxu0
        %v1135 = vadd.f32 %v1121, %v1134
        %1136 = vdwg.mxu0
        %s1137 = scalar_lea.vmem %s383, 48
        %v1138 = vld [vmem:[%s1137] sm:$0xff]
        %v1139 = vld [vmem:[%s1137 + $0x8] sm:$0x1f]
        %v1140 = vld [vmem:[%s1137 + $0x1] sm:$0xff]
        %v1141 = vld [vmem:[%s1137 + $0x9] sm:$0x1f]
        %v1142 = vld [vmem:[%s1137 + $0x2] sm:$0xff]
        %v1143 = vld [vmem:[%s1137 + $0xa] sm:$0x1f]
        %1146 = vrot.lane.b32.xlu0 %v791, 64
        %v1147 = vpop.permute.xlu0 %1146
        %1148 = vrot.lane.b32.xlu0 %v792, 64
        %v1149 = vpop.permute.xlu0 %1148
        %1154 = vrot.lane.b32.xlu0 %v796, 64
        %v1155 = vpop.permute.xlu0 %1154
        %1156 = vrot.lane.b32.xlu0 %v797, 64
        %v1157 = vpop.permute.xlu0 %1156
        %1162 = vrot.lane.b32.xlu0 %v800, 64
        %v1163 = vpop.permute.xlu0 %1162
        %1164 = vrot.lane.b32.xlu0 %v801, 64
        %v1165 = vpop.permute.xlu0 %1164
        %1170 = vrot.lane.b32.xlu0 %v1140, 64
        %v1171 = vpop.permute.xlu0 %1170
        %1172 = vrot.lane.b32.xlu0 %v1141, 64
        %v1173 = vpop.permute.xlu0 %1172
        %v1176 = vsel %vm834, %v789, %v1147
        %v1177 = vsel %vm834, %v790, %v1149
        %v1178 = vsel %vm834, %v793, %v1155
        %v1179 = vsel %vm834, %v794, %v1157
        %v1180 = vsel %vm834, %v798, %v1163
        %v1181 = vsel %vm834, %v799, %v1165
        %v1182 = vsel %vm834, %v1138, %v1171
        %v1183 = vsel %vm834, %v1139, %v1173
        %v1184 = vpack.c.bf16 %v1177, %v1176
        %v1185 = vpack.c.bf16 %v1179, %v1178
        %v1186 = vpack.c.bf16 %v1181, %v1180
        %v1187 = vpack.c.bf16 %v1183, %v1182
        %v1188 = vpack.c.bf16 %v1143, %v1142
        %v1190 = vsel %vm834, %v1188, 0
        %1192 = vmatpush.bf16.msra.mxu0 %v999
        %1193 = vmatpush.bf16.msra.mxu0 %v998
        %1194 = vmatpush.bf16.msra.mxu0 %v997
        %1195 = vmatpush.bf16.msra.mxu0 %v996
        %1196 = vmatpush.bf16.msra.mxu0 %v995
        %1197 = vmatpush.bf16.msra.mxu0 %v994
        %1198 = vmatpush.bf16.msra.mxu0 %v993
        %1199 = vmatpush.bf16.msra.mxu0 %v992
        %1200 = vmatmul.bf16.gmra.mxu0 %v1184
        %v1201 = vpop.f32.mrf.mxu0
        %v1202 = vadd.f32 0.0, %v1201
        %v1203 = vpop.f32.mrf.mxu0
        %v1204 = vadd.f32 0.0, %v1203
        %1205 = vdwg.mxu0
        %1206 = vmatpush.bf16.msra.mxu0 %v1007
        %1207 = vmatpush.bf16.msra.mxu0 %v1006
        %1208 = vmatpush.bf16.msra.mxu0 %v1005
        %1209 = vmatpush.bf16.msra.mxu0 %v1004
        %1210 = vmatpush.bf16.msra.mxu0 %v1003
        %1211 = vmatpush.bf16.msra.mxu0 %v1002
        %1212 = vmatpush.bf16.msra.mxu0 %v1001
        %1213 = vmatpush.bf16.msra.mxu0 %v1000
        %1214 = vmatmul.bf16.gmra.mxu0 %v1185
        %v1215 = vpop.f32.mrf.mxu0
        %v1216 = vadd.f32 %v1202, %v1215
        %v1217 = vpop.f32.mrf.mxu0
        %v1218 = vadd.f32 %v1204, %v1217
        %1219 = vdwg.mxu0
        %1220 = vmatpush.bf16.msra.mxu0 %v1015
        %1221 = vmatpush.bf16.msra.mxu0 %v1014
        %1222 = vmatpush.bf16.msra.mxu0 %v1013
        %1223 = vmatpush.bf16.msra.mxu0 %v1012
        %1224 = vmatpush.bf16.msra.mxu0 %v1011
        %1225 = vmatpush.bf16.msra.mxu0 %v1010
        %1226 = vmatpush.bf16.msra.mxu0 %v1009
        %1227 = vmatpush.bf16.msra.mxu0 %v1008
        %1228 = vmatmul.bf16.gmra.mxu0 %v1186
        %v1229 = vpop.f32.mrf.mxu0
        %v1230 = vadd.f32 %v1216, %v1229
        %v1231 = vpop.f32.mrf.mxu0
        %v1232 = vadd.f32 %v1218, %v1231
        %1233 = vdwg.mxu0
        %1234 = vmatpush.bf16.msra.mxu0 %v1023
        %1235 = vmatpush.bf16.msra.mxu0 %v1022
        %1236 = vmatpush.bf16.msra.mxu0 %v1021
        %1237 = vmatpush.bf16.msra.mxu0 %v1020
        %1238 = vmatpush.bf16.msra.mxu0 %v1019
        %1239 = vmatpush.bf16.msra.mxu0 %v1018
        %1240 = vmatpush.bf16.msra.mxu0 %v1017
        %1241 = vmatpush.bf16.msra.mxu0 %v1016
        %1242 = vmatmul.bf16.gmra.mxu0 %v1187
        %v1243 = vpop.f32.mrf.mxu0
        %v1244 = vadd.f32 %v1230, %v1243
        %v1245 = vpop.f32.mrf.mxu0
        %v1246 = vadd.f32 %v1232, %v1245
        %1247 = vdwg.mxu0
        %1248 = vmatpush.bf16.msra.mxu0 0
        %1249 = vmatpush.bf16.msra.mxu0 0
        %1250 = vmatpush.bf16.msra.mxu0 0
        %1251 = vmatpush.bf16.msra.mxu0 0
        %1252 = vmatpush.bf16.msra.mxu0 %v1027
        %1253 = vmatpush.bf16.msra.mxu0 %v1026
        %1254 = vmatpush.bf16.msra.mxu0 %v1025
        %1255 = vmatpush.bf16.msra.mxu0 %v1024
        %1256 = vmatmul.bf16.gmra.mxu0 %v1190
        %v1257 = vpop.f32.mrf.mxu0
        %v1258 = vadd.f32 %v1244, %v1257
        %v1259 = vpop.f32.mrf.mxu0
        %v1260 = vadd.f32 %v1246, %v1259
        %1261 = vdwg.mxu0
        %v1262 = vmax.f32 %v1133, %v1258
        %v1263 = vmax.f32 %v1135, %v1260
        %v1265 = vperm.slane %v457, 0
        %v1267 = vadd.f32 %v1262, %v1265
        %v1268 = vadd.f32 %v1263, %v1265
        %v1269 = vmax.f32 %v1267, 0.0
        %v1270 = vmax.f32 %v1268, 0.0
        %v1272 = vrot.slane %v1269, 1
        %v1274 = vmax.f32 %v1269, %v1272
        %1275 = vst [vmem:[#allocation2] sm:$0x1] %v1274
        %1276 = vst [vmem:[#allocation2 - $0x1] sm:$0x4] %v1274
        %1277 = vst [vmem:[#allocation2 - $0x2] sm:$0x10] %v1274
        %1278 = vst [vmem:[#allocation2 - $0x3] sm:$0x40] %v1274
        %v1280 = vrot.slane %v1270, 1
        %v1282 = vmax.f32 %v1270, %v1280
        %1283 = vst [vmem:[#allocation2 + $0x4] sm:$0x1] %v1282
        %1284 = vst [vmem:[#allocation2 + $0x3] sm:$0x4] %v1282
        %v1285 = vld [vmem:[%s795] sm:$0xff]
        %v1286 = vld [vmem:[%s795 + $0x8] sm:$0x1f]
        %v1287 = vld [vmem:[%s795 + $0x1] sm:$0xff]
        %v1288 = vld [vmem:[%s795 + $0x9] sm:$0x1f]
        %v1289 = vld [vmem:[%s795 + $0x2] sm:$0xff]
        %v1290 = vld [vmem:[%s795 + $0xa] sm:$0x1f]
        %v1291 = vld [vmem:[%s1137] sm:$0xff]
        %v1292 = vld [vmem:[%s1137 + $0x8] sm:$0x1f]
        %v1293 = vld [vmem:[%s1137 + $0x1] sm:$0xff]
        %v1294 = vld [vmem:[%s1137 + $0x9] sm:$0x1f]
        %v1295 = vld [vmem:[%s1137 + $0x2] sm:$0xff]
        %v1296 = vld [vmem:[%s1137 + $0xa] sm:$0x1f]
        %s1297 = scalar_lea.vmem %s383, 64
        %v1298 = vld [vmem:[%s1297] sm:$0xff]
        %v1299 = vld [vmem:[%s1297 + $0x8] sm:$0x1f]
        %v1300 = vld [vmem:[%s1297 + $0x1] sm:$0xff]
        %v1301 = vld [vmem:[%s1297 + $0x9] sm:$0x1f]
        %v1302 = vld [vmem:[%s1297 + $0x2] sm:$0xff]
        %v1303 = vld [vmem:[%s1297 + $0xa] sm:$0x1f]
        %1306 = vrot.lane.b32.xlu0 %v1287, 64
        %v1307 = vpop.permute.xlu0 %1306
        %1308 = vrot.lane.b32.xlu0 %v1288, 64
        %v1309 = vpop.permute.xlu0 %1308
        %1314 = vrot.lane.b32.xlu0 %v1291, 64
        %v1315 = vpop.permute.xlu0 %1314
        %1316 = vrot.lane.b32.xlu0 %v1292, 64
        %v1317 = vpop.permute.xlu0 %1316
        %1322 = vrot.lane.b32.xlu0 %v1295, 64
        %v1323 = vpop.permute.xlu0 %1322
        %1324 = vrot.lane.b32.xlu0 %v1296, 64
        %v1325 = vpop.permute.xlu0 %1324
        %1330 = vrot.lane.b32.xlu0 %v1300, 64
        %v1331 = vpop.permute.xlu0 %1330
        %1332 = vrot.lane.b32.xlu0 %v1301, 64
        %v1333 = vpop.permute.xlu0 %1332
        %v1336 = vsel %vm834, %v1285, %v1307
        %v1337 = vsel %vm834, %v1286, %v1309
        %v1338 = vsel %vm834, %v1289, %v1315
        %v1339 = vsel %vm834, %v1290, %v1317
        %v1340 = vsel %vm834, %v1293, %v1323
        %v1341 = vsel %vm834, %v1294, %v1325
        %v1342 = vsel %vm834, %v1298, %v1331
        %v1343 = vsel %vm834, %v1299, %v1333
        %v1344 = vpack.c.bf16 %v1337, %v1336
        %v1345 = vpack.c.bf16 %v1339, %v1338
        %v1346 = vpack.c.bf16 %v1341, %v1340
        %v1347 = vpack.c.bf16 %v1343, %v1342
        %v1348 = vpack.c.bf16 %v1303, %v1302
        %v1350 = vsel %vm834, %v1348, 0
        %1352 = vmatpush.bf16.msra.mxu0 %v999
        %1353 = vmatpush.bf16.msra.mxu0 %v998
        %1354 = vmatpush.bf16.msra.mxu0 %v997
        %1355 = vmatpush.bf16.msra.mxu0 %v996
        %1356 = vmatpush.bf16.msra.mxu0 %v995
        %1357 = vmatpush.bf16.msra.mxu0 %v994
        %1358 = vmatpush.bf16.msra.mxu0 %v993
        %1359 = vmatpush.bf16.msra.mxu0 %v992
        %1360 = vmatmul.bf16.gmra.mxu0 %v1344
        %v1361 = vpop.f32.mrf.mxu0
        %v1362 = vadd.f32 0.0, %v1361
        %v1363 = vpop.f32.mrf.mxu0
        %v1364 = vadd.f32 0.0, %v1363
        %1365 = vdwg.mxu0
        %1366 = vmatpush.bf16.msra.mxu0 %v1007
        %1367 = vmatpush.bf16.msra.mxu0 %v1006
        %1368 = vmatpush.bf16.msra.mxu0 %v1005
        %1369 = vmatpush.bf16.msra.mxu0 %v1004
        %1370 = vmatpush.bf16.msra.mxu0 %v1003
        %1371 = vmatpush.bf16.msra.mxu0 %v1002
        %1372 = vmatpush.bf16.msra.mxu0 %v1001
        %1373 = vmatpush.bf16.msra.mxu0 %v1000
        %1374 = vmatmul.bf16.gmra.mxu0 %v1345
        %v1375 = vpop.f32.mrf.mxu0
        %v1376 = vadd.f32 %v1362, %v1375
        %v1377 = vpop.f32.mrf.mxu0
        %v1378 = vadd.f32 %v1364, %v1377
        %1379 = vdwg.mxu0
        %1380 = vmatpush.bf16.msra.mxu0 %v1015
        %1381 = vmatpush.bf16.msra.mxu0 %v1014
        %1382 = vmatpush.bf16.msra.mxu0 %v1013
        %1383 = vmatpush.bf16.msra.mxu0 %v1012
        %1384 = vmatpush.bf16.msra.mxu0 %v1011
        %1385 = vmatpush.bf16.msra.mxu0 %v1010
        %1386 = vmatpush.bf16.msra.mxu0 %v1009
        %1387 = vmatpush.bf16.msra.mxu0 %v1008
        %1388 = vmatmul.bf16.gmra.mxu0 %v1346
        %v1389 = vpop.f32.mrf.mxu0
        %v1390 = vadd.f32 %v1376, %v1389
        %v1391 = vpop.f32.mrf.mxu0
        %v1392 = vadd.f32 %v1378, %v1391
        %1393 = vdwg.mxu0
        %1394 = vmatpush.bf16.msra.mxu0 %v1023
        %1395 = vmatpush.bf16.msra.mxu0 %v1022
        %1396 = vmatpush.bf16.msra.mxu0 %v1021
        %1397 = vmatpush.bf16.msra.mxu0 %v1020
        %1398 = vmatpush.bf16.msra.mxu0 %v1019
        %1399 = vmatpush.bf16.msra.mxu0 %v1018
        %1400 = vmatpush.bf16.msra.mxu0 %v1017
        %1401 = vmatpush.bf16.msra.mxu0 %v1016
        %1402 = vmatmul.bf16.gmra.mxu0 %v1347
        %v1403 = vpop.f32.mrf.mxu0
        %v1404 = vadd.f32 %v1390, %v1403
        %v1405 = vpop.f32.mrf.mxu0
        %v1406 = vadd.f32 %v1392, %v1405
        %1407 = vdwg.mxu0
        %1408 = vmatpush.bf16.msra.mxu0 0
        %1409 = vmatpush.bf16.msra.mxu0 0
        %1410 = vmatpush.bf16.msra.mxu0 0
        %1411 = vmatpush.bf16.msra.mxu0 0
        %1412 = vmatpush.bf16.msra.mxu0 %v1027
        %1413 = vmatpush.bf16.msra.mxu0 %v1026
        %1414 = vmatpush.bf16.msra.mxu0 %v1025
        %1415 = vmatpush.bf16.msra.mxu0 %v1024
        %1416 = vmatmul.bf16.gmra.mxu0 %v1350
        %v1417 = vpop.f32.mrf.mxu0
        %v1418 = vadd.f32 %v1404, %v1417
        %v1419 = vpop.f32.mrf.mxu0
        %v1420 = vadd.f32 %v1406, %v1419
        %1421 = vdwg.mxu0
        %s1422 = scalar_lea.vmem %s383, 80
        %v1423 = vld [vmem:[%s1422] sm:$0xff]
        %v1424 = vld [vmem:[%s1422 + $0x8] sm:$0x1f]
        %v1425 = vld [vmem:[%s1422 + $0x1] sm:$0xff]
        %v1426 = vld [vmem:[%s1422 + $0x9] sm:$0x1f]
        %v1427 = vld [vmem:[%s1422 + $0x2] sm:$0xff]
        %v1428 = vld [vmem:[%s1422 + $0xa] sm:$0x1f]
        %1431 = vrot.lane.b32.xlu0 %v1293, 64
        %v1432 = vpop.permute.xlu0 %1431
        %1433 = vrot.lane.b32.xlu0 %v1294, 64
        %v1434 = vpop.permute.xlu0 %1433
        %1439 = vrot.lane.b32.xlu0 %v1298, 64
        %v1440 = vpop.permute.xlu0 %1439
        %1441 = vrot.lane.b32.xlu0 %v1299, 64
        %v1442 = vpop.permute.xlu0 %1441
        %1447 = vrot.lane.b32.xlu0 %v1302, 64
        %v1448 = vpop.permute.xlu0 %1447
        %1449 = vrot.lane.b32.xlu0 %v1303, 64
        %v1450 = vpop.permute.xlu0 %1449
        %1455 = vrot.lane.b32.xlu0 %v1425, 64
        %v1456 = vpop.permute.xlu0 %1455
        %1457 = vrot.lane.b32.xlu0 %v1426, 64
        %v1458 = vpop.permute.xlu0 %1457
        %v1461 = vsel %vm834, %v1291, %v1432
        %v1462 = vsel %vm834, %v1292, %v1434
        %v1463 = vsel %vm834, %v1295, %v1440
        %v1464 = vsel %vm834, %v1296, %v1442
        %v1465 = vsel %vm834, %v1300, %v1448
        %v1466 = vsel %vm834, %v1301, %v1450
        %v1467 = vsel %vm834, %v1423, %v1456
        %v1468 = vsel %vm834, %v1424, %v1458
        %v1469 = vpack.c.bf16 %v1462, %v1461
        %v1470 = vpack.c.bf16 %v1464, %v1463
        %v1471 = vpack.c.bf16 %v1466, %v1465
        %v1472 = vpack.c.bf16 %v1468, %v1467
        %v1473 = vpack.c.bf16 %v1428, %v1427
        %v1475 = vsel %vm834, %v1473, 0
        %1477 = vmatpush.bf16.msra.mxu0 %v999
        %1478 = vmatpush.bf16.msra.mxu0 %v998
        %1479 = vmatpush.bf16.msra.mxu0 %v997
        %1480 = vmatpush.bf16.msra.mxu0 %v996
        %1481 = vmatpush.bf16.msra.mxu0 %v995
        %1482 = vmatpush.bf16.msra.mxu0 %v994
        %1483 = vmatpush.bf16.msra.mxu0 %v993
        %1484 = vmatpush.bf16.msra.mxu0 %v992
        %1485 = vmatmul.bf16.gmra.mxu0 %v1469
        %v1486 = vpop.f32.mrf.mxu0
        %v1487 = vadd.f32 0.0, %v1486
        %v1488 = vpop.f32.mrf.mxu0
        %v1489 = vadd.f32 0.0, %v1488
        %1490 = vdwg.mxu0
        %1491 = vmatpush.bf16.msra.mxu0 %v1007
        %1492 = vmatpush.bf16.msra.mxu0 %v1006
        %1493 = vmatpush.bf16.msra.mxu0 %v1005
        %1494 = vmatpush.bf16.msra.mxu0 %v1004
        %1495 = vmatpush.bf16.msra.mxu0 %v1003
        %1496 = vmatpush.bf16.msra.mxu0 %v1002
        %1497 = vmatpush.bf16.msra.mxu0 %v1001
        %1498 = vmatpush.bf16.msra.mxu0 %v1000
        %1499 = vmatmul.bf16.gmra.mxu0 %v1470
        %v1500 = vpop.f32.mrf.mxu0
        %v1501 = vadd.f32 %v1487, %v1500
        %v1502 = vpop.f32.mrf.mxu0
        %v1503 = vadd.f32 %v1489, %v1502
        %1504 = vdwg.mxu0
        %1505 = vmatpush.bf16.msra.mxu0 %v1015
        %1506 = vmatpush.bf16.msra.mxu0 %v1014
        %1507 = vmatpush.bf16.msra.mxu0 %v1013
        %1508 = vmatpush.bf16.msra.mxu0 %v1012
        %1509 = vmatpush.bf16.msra.mxu0 %v1011
        %1510 = vmatpush.bf16.msra.mxu0 %v1010
        %1511 = vmatpush.bf16.msra.mxu0 %v1009
        %1512 = vmatpush.bf16.msra.mxu0 %v1008
        %1513 = vmatmul.bf16.gmra.mxu0 %v1471
        %v1514 = vpop.f32.mrf.mxu0
        %v1515 = vadd.f32 %v1501, %v1514
        %v1516 = vpop.f32.mrf.mxu0
        %v1517 = vadd.f32 %v1503, %v1516
        %1518 = vdwg.mxu0
        %1519 = vmatpush.bf16.msra.mxu0 %v1023
        %1520 = vmatpush.bf16.msra.mxu0 %v1022
        %1521 = vmatpush.bf16.msra.mxu0 %v1021
        %1522 = vmatpush.bf16.msra.mxu0 %v1020
        %1523 = vmatpush.bf16.msra.mxu0 %v1019
        %1524 = vmatpush.bf16.msra.mxu0 %v1018
        %1525 = vmatpush.bf16.msra.mxu0 %v1017
        %1526 = vmatpush.bf16.msra.mxu0 %v1016
        %1527 = vmatmul.bf16.gmra.mxu0 %v1472
        %v1528 = vpop.f32.mrf.mxu0
        %v1529 = vadd.f32 %v1515, %v1528
        %v1530 = vpop.f32.mrf.mxu0
        %v1531 = vadd.f32 %v1517, %v1530
        %1532 = vdwg.mxu0
        %1533 = vmatpush.bf16.msra.mxu0 0
        %1534 = vmatpush.bf16.msra.mxu0 0
        %1535 = vmatpush.bf16.msra.mxu0 0
        %1536 = vmatpush.bf16.msra.mxu0 0
        %1537 = vmatpush.bf16.msra.mxu0 %v1027
        %1538 = vmatpush.bf16.msra.mxu0 %v1026
        %1539 = vmatpush.bf16.msra.mxu0 %v1025
        %1540 = vmatpush.bf16.msra.mxu0 %v1024
        %1541 = vmatmul.bf16.gmra.mxu0 %v1475
        %v1542 = vpop.f32.mrf.mxu0
        %v1543 = vadd.f32 %v1529, %v1542
        %v1544 = vpop.f32.mrf.mxu0
        %v1545 = vadd.f32 %v1531, %v1544
        %1546 = vdwg.mxu0
        %v1547 = vmax.f32 %v1418, %v1543
        %v1548 = vmax.f32 %v1420, %v1545
        %v1549 = vadd.f32 %v1547, %v1265
        %v1550 = vadd.f32 %v1548, %v1265
        %v1551 = vmax.f32 %v1549, 0.0
        %v1552 = vmax.f32 %v1550, 0.0
        %v1554 = vrot.slane %v1551, 1
        %v1556 = vmax.f32 %v1551, %v1554
        %s1557 = scalar_lea.vmem [#allocation2], 8
        %1558 = vst [vmem:[%s1557] sm:$0x1] %v1556
        %1559 = vst [vmem:[%s1557 - $0x1] sm:$0x4] %v1556
        %1560 = vst [vmem:[%s1557 - $0x2] sm:$0x10] %v1556
        %1561 = vst [vmem:[%s1557 - $0x3] sm:$0x40] %v1556
        %v1563 = vrot.slane %v1552, 1
        %v1565 = vmax.f32 %v1552, %v1563
        %1566 = vst [vmem:[%s1557 + $0x4] sm:$0x1] %v1565
        %1567 = vst [vmem:[%s1557 + $0x3] sm:$0x4] %v1565
        %v1568 = vld [vmem:[%s1297] sm:$0xff]
        %v1569 = vld [vmem:[%s1297 + $0x8] sm:$0x1f]
        %v1570 = vld [vmem:[%s1297 + $0x1] sm:$0xff]
        %v1571 = vld [vmem:[%s1297 + $0x9] sm:$0x1f]
        %v1572 = vld [vmem:[%s1297 + $0x2] sm:$0xff]
        %v1573 = vld [vmem:[%s1297 + $0xa] sm:$0x1f]
        %v1574 = vld [vmem:[%s1422] sm:$0xff]
        %v1575 = vld [vmem:[%s1422 + $0x8] sm:$0x1f]
        %v1576 = vld [vmem:[%s1422 + $0x1] sm:$0xff]
        %v1577 = vld [vmem:[%s1422 + $0x9] sm:$0x1f]
        %v1578 = vld [vmem:[%s1422 + $0x2] sm:$0xff]
        %v1579 = vld [vmem:[%s1422 + $0xa] sm:$0x1f]
        %s1580 = scalar_lea.vmem %s383, 96
        %v1581 = vld [vmem:[%s1580] sm:$0xff]
        %v1582 = vld [vmem:[%s1580 + $0x8] sm:$0x1f]
        %v1583 = vld [vmem:[%s1580 + $0x1] sm:$0xff]
        %v1584 = vld [vmem:[%s1580 + $0x9] sm:$0x1f]
        %v1585 = vld [vmem:[%s1580 + $0x2] sm:$0xff]
        %v1586 = vld [vmem:[%s1580 + $0xa] sm:$0x1f]
        %1589 = vrot.lane.b32.xlu0 %v1570, 64
        %v1590 = vpop.permute.xlu0 %1589
        %1591 = vrot.lane.b32.xlu0 %v1571, 64
        %v1592 = vpop.permute.xlu0 %1591
        %1597 = vrot.lane.b32.xlu0 %v1574, 64
        %v1598 = vpop.permute.xlu0 %1597
        %1599 = vrot.lane.b32.xlu0 %v1575, 64
        %v1600 = vpop.permute.xlu0 %1599
        %1605 = vrot.lane.b32.xlu0 %v1578, 64
        %v1606 = vpop.permute.xlu0 %1605
        %1607 = vrot.lane.b32.xlu0 %v1579, 64
        %v1608 = vpop.permute.xlu0 %1607
        %1613 = vrot.lane.b32.xlu0 %v1583, 64
        %v1614 = vpop.permute.xlu0 %1613
        %1615 = vrot.lane.b32.xlu0 %v1584, 64
        %v1616 = vpop.permute.xlu0 %1615
        %v1619 = vsel %vm834, %v1568, %v1590
        %v1620 = vsel %vm834, %v1569, %v1592
        %v1621 = vsel %vm834, %v1572, %v1598
        %v1622 = vsel %vm834, %v1573, %v1600
        %v1623 = vsel %vm834, %v1576, %v1606
        %v1624 = vsel %vm834, %v1577, %v1608
        %v1625 = vsel %vm834, %v1581, %v1614
        %v1626 = vsel %vm834, %v1582, %v1616
        %v1627 = vpack.c.bf16 %v1620, %v1619
        %v1628 = vpack.c.bf16 %v1622, %v1621
        %v1629 = vpack.c.bf16 %v1624, %v1623
        %v1630 = vpack.c.bf16 %v1626, %v1625
        %v1631 = vpack.c.bf16 %v1586, %v1585
        %v1633 = vsel %vm834, %v1631, 0
        %1635 = vmatpush.bf16.msra.mxu0 %v999
        %1636 = vmatpush.bf16.msra.mxu0 %v998
        %1637 = vmatpush.bf16.msra.mxu0 %v997
        %1638 = vmatpush.bf16.msra.mxu0 %v996
        %1639 = vmatpush.bf16.msra.mxu0 %v995
        %1640 = vmatpush.bf16.msra.mxu0 %v994
        %1641 = vmatpush.bf16.msra.mxu0 %v993
        %1642 = vmatpush.bf16.msra.mxu0 %v992
        %1643 = vmatmul.bf16.gmra.mxu0 %v1627
        %v1644 = vpop.f32.mrf.mxu0
        %v1645 = vadd.f32 0.0, %v1644
        %v1646 = vpop.f32.mrf.mxu0
        %v1647 = vadd.f32 0.0, %v1646
        %1648 = vdwg.mxu0
        %1649 = vmatpush.bf16.msra.mxu0 %v1007
        %1650 = vmatpush.bf16.msra.mxu0 %v1006
        %1651 = vmatpush.bf16.msra.mxu0 %v1005
        %1652 = vmatpush.bf16.msra.mxu0 %v1004
        %1653 = vmatpush.bf16.msra.mxu0 %v1003
        %1654 = vmatpush.bf16.msra.mxu0 %v1002
        %1655 = vmatpush.bf16.msra.mxu0 %v1001
        %1656 = vmatpush.bf16.msra.mxu0 %v1000
        %1657 = vmatmul.bf16.gmra.mxu0 %v1628
        %v1658 = vpop.f32.mrf.mxu0
        %v1659 = vadd.f32 %v1645, %v1658
        %v1660 = vpop.f32.mrf.mxu0
        %v1661 = vadd.f32 %v1647, %v1660
        %1662 = vdwg.mxu0
        %1663 = vmatpush.bf16.msra.mxu0 %v1015
        %1664 = vmatpush.bf16.msra.mxu0 %v1014
        %1665 = vmatpush.bf16.msra.mxu0 %v1013
        %1666 = vmatpush.bf16.msra.mxu0 %v1012
        %1667 = vmatpush.bf16.msra.mxu0 %v1011
        %1668 = vmatpush.bf16.msra.mxu0 %v1010
        %1669 = vmatpush.bf16.msra.mxu0 %v1009
        %1670 = vmatpush.bf16.msra.mxu0 %v1008
        %1671 = vmatmul.bf16.gmra.mxu0 %v1629
        %v1672 = vpop.f32.mrf.mxu0
        %v1673 = vadd.f32 %v1659, %v1672
        %v1674 = vpop.f32.mrf.mxu0
        %v1675 = vadd.f32 %v1661, %v1674
        %1676 = vdwg.mxu0
        %1677 = vmatpush.bf16.msra.mxu0 %v1023
        %1678 = vmatpush.bf16.msra.mxu0 %v1022
        %1679 = vmatpush.bf16.msra.mxu0 %v1021
        %1680 = vmatpush.bf16.msra.mxu0 %v1020
        %1681 = vmatpush.bf16.msra.mxu0 %v1019
        %1682 = vmatpush.bf16.msra.mxu0 %v1018
        %1683 = vmatpush.bf16.msra.mxu0 %v1017
        %1684 = vmatpush.bf16.msra.mxu0 %v1016
        %1685 = vmatmul.bf16.gmra.mxu0 %v1630
        %v1686 = vpop.f32.mrf.mxu0
        %v1687 = vadd.f32 %v1673, %v1686
        %v1688 = vpop.f32.mrf.mxu0
        %v1689 = vadd.f32 %v1675, %v1688
        %1690 = vdwg.mxu0
        %1691 = vmatpush.bf16.msra.mxu0 0
        %1692 = vmatpush.bf16.msra.mxu0 0
        %1693 = vmatpush.bf16.msra.mxu0 0
        %1694 = vmatpush.bf16.msra.mxu0 0
        %1695 = vmatpush.bf16.msra.mxu0 %v1027
        %1696 = vmatpush.bf16.msra.mxu0 %v1026
        %1697 = vmatpush.bf16.msra.mxu0 %v1025
        %1698 = vmatpush.bf16.msra.mxu0 %v1024
        %1699 = vmatmul.bf16.gmra.mxu0 %v1633
        %v1700 = vpop.f32.mrf.mxu0
        %v1701 = vadd.f32 %v1687, %v1700
        %v1702 = vpop.f32.mrf.mxu0
        %v1703 = vadd.f32 %v1689, %v1702
        %1704 = vdwg.mxu0
        %s1705 = scalar_lea.vmem %s383, 112
        %v1706 = vld [vmem:[%s1705] sm:$0xff]
        %v1707 = vld [vmem:[%s1705 + $0x8] sm:$0x1f]
        %v1708 = vld [vmem:[%s1705 + $0x1] sm:$0xff]
        %v1709 = vld [vmem:[%s1705 + $0x9] sm:$0x1f]
        %v1710 = vld [vmem:[%s1705 + $0x2] sm:$0xff]
        %v1711 = vld [vmem:[%s1705 + $0xa] sm:$0x1f]
        %1714 = vrot.lane.b32.xlu0 %v1576, 64
        %v1715 = vpop.permute.xlu0 %1714
        %1716 = vrot.lane.b32.xlu0 %v1577, 64
        %v1717 = vpop.permute.xlu0 %1716
        %1722 = vrot.lane.b32.xlu0 %v1581, 64
        %v1723 = vpop.permute.xlu0 %1722
        %1724 = vrot.lane.b32.xlu0 %v1582, 64
        %v1725 = vpop.permute.xlu0 %1724
        %1730 = vrot.lane.b32.xlu0 %v1585, 64
        %v1731 = vpop.permute.xlu0 %1730
        %1732 = vrot.lane.b32.xlu0 %v1586, 64
        %v1733 = vpop.permute.xlu0 %1732
        %1738 = vrot.lane.b32.xlu0 %v1708, 64
        %v1739 = vpop.permute.xlu0 %1738
        %1740 = vrot.lane.b32.xlu0 %v1709, 64
        %v1741 = vpop.permute.xlu0 %1740
        %v1744 = vsel %vm834, %v1574, %v1715
        %v1745 = vsel %vm834, %v1575, %v1717
        %v1746 = vsel %vm834, %v1578, %v1723
        %v1747 = vsel %vm834, %v1579, %v1725
        %v1748 = vsel %vm834, %v1583, %v1731
        %v1749 = vsel %vm834, %v1584, %v1733
        %v1750 = vsel %vm834, %v1706, %v1739
        %v1751 = vsel %vm834, %v1707, %v1741
        %v1752 = vpack.c.bf16 %v1745, %v1744
        %v1753 = vpack.c.bf16 %v1747, %v1746
        %v1754 = vpack.c.bf16 %v1749, %v1748
        %v1755 = vpack.c.bf16 %v1751, %v1750
        %v1756 = vpack.c.bf16 %v1711, %v1710
        %v1758 = vsel %vm834, %v1756, 0
        %1760 = vmatpush.bf16.msra.mxu0 %v999
        %1761 = vmatpush.bf16.msra.mxu0 %v998
        %1762 = vmatpush.bf16.msra.mxu0 %v997
        %1763 = vmatpush.bf16.msra.mxu0 %v996
        %1764 = vmatpush.bf16.msra.mxu0 %v995
        %1765 = vmatpush.bf16.msra.mxu0 %v994
        %1766 = vmatpush.bf16.msra.mxu0 %v993
        %1767 = vmatpush.bf16.msra.mxu0 %v992
        %1768 = vmatmul.bf16.gmra.mxu0 %v1752
        %v1769 = vpop.f32.mrf.mxu0
        %v1770 = vadd.f32 0.0, %v1769
        %v1771 = vpop.f32.mrf.mxu0
        %v1772 = vadd.f32 0.0, %v1771
        %1773 = vdwg.mxu0
        %1774 = vmatpush.bf16.msra.mxu0 %v1007
        %1775 = vmatpush.bf16.msra.mxu0 %v1006
        %1776 = vmatpush.bf16.msra.mxu0 %v1005
        %1777 = vmatpush.bf16.msra.mxu0 %v1004
        %1778 = vmatpush.bf16.msra.mxu0 %v1003
        %1779 = vmatpush.bf16.msra.mxu0 %v1002
        %1780 = vmatpush.bf16.msra.mxu0 %v1001
        %1781 = vmatpush.bf16.msra.mxu0 %v1000
        %1782 = vmatmul.bf16.gmra.mxu0 %v1753
        %v1783 = vpop.f32.mrf.mxu0
        %v1784 = vadd.f32 %v1770, %v1783
        %v1785 = vpop.f32.mrf.mxu0
        %v1786 = vadd.f32 %v1772, %v1785
        %1787 = vdwg.mxu0
        %1788 = vmatpush.bf16.msra.mxu0 %v1015
        %1789 = vmatpush.bf16.msra.mxu0 %v1014
        %1790 = vmatpush.bf16.msra.mxu0 %v1013
        %1791 = vmatpush.bf16.msra.mxu0 %v1012
        %1792 = vmatpush.bf16.msra.mxu0 %v1011
        %1793 = vmatpush.bf16.msra.mxu0 %v1010
        %1794 = vmatpush.bf16.msra.mxu0 %v1009
        %1795 = vmatpush.bf16.msra.mxu0 %v1008
        %1796 = vmatmul.bf16.gmra.mxu0 %v1754
        %v1797 = vpop.f32.mrf.mxu0
        %v1798 = vadd.f32 %v1784, %v1797
        %v1799 = vpop.f32.mrf.mxu0
        %v1800 = vadd.f32 %v1786, %v1799
        %1801 = vdwg.mxu0
        %1802 = vmatpush.bf16.msra.mxu0 %v1023
        %1803 = vmatpush.bf16.msra.mxu0 %v1022
        %1804 = vmatpush.bf16.msra.mxu0 %v1021
        %1805 = vmatpush.bf16.msra.mxu0 %v1020
        %1806 = vmatpush.bf16.msra.mxu0 %v1019
        %1807 = vmatpush.bf16.msra.mxu0 %v1018
        %1808 = vmatpush.bf16.msra.mxu0 %v1017
        %1809 = vmatpush.bf16.msra.mxu0 %v1016
        %1810 = vmatmul.bf16.gmra.mxu0 %v1755
        %v1811 = vpop.f32.mrf.mxu0
        %v1812 = vadd.f32 %v1798, %v1811
        %v1813 = vpop.f32.mrf.mxu0
        %v1814 = vadd.f32 %v1800, %v1813
        %1815 = vdwg.mxu0
        %1816 = vmatpush.bf16.msra.mxu0 0
        %1817 = vmatpush.bf16.msra.mxu0 0
        %1818 = vmatpush.bf16.msra.mxu0 0
        %1819 = vmatpush.bf16.msra.mxu0 0
        %1820 = vmatpush.bf16.msra.mxu0 %v1027
        %1821 = vmatpush.bf16.msra.mxu0 %v1026
        %1822 = vmatpush.bf16.msra.mxu0 %v1025
        %1823 = vmatpush.bf16.msra.mxu0 %v1024
        %1824 = vmatmul.bf16.gmra.mxu0 %v1758
        %v1825 = vpop.f32.mrf.mxu0
        %v1826 = vadd.f32 %v1812, %v1825
        %v1827 = vpop.f32.mrf.mxu0
        %v1828 = vadd.f32 %v1814, %v1827
        %1829 = vdwg.mxu0
        %v1830 = vmax.f32 %v1701, %v1826
        %v1831 = vmax.f32 %v1703, %v1828
        %v1832 = vadd.f32 %v1830, %v1265
        %v1833 = vadd.f32 %v1831, %v1265
        %v1834 = vmax.f32 %v1832, 0.0
        %v1835 = vmax.f32 %v1833, 0.0
        %v1837 = vrot.slane %v1834, 1
        %v1839 = vmax.f32 %v1834, %v1837
        %s1840 = scalar_lea.vmem [#allocation2], 16
        %1841 = vst [vmem:[%s1840] sm:$0x1] %v1839
        %1842 = vst [vmem:[%s1840 - $0x1] sm:$0x4] %v1839
        %1843 = vst [vmem:[%s1840 - $0x2] sm:$0x10] %v1839
        %1844 = vst [vmem:[%s1840 - $0x3] sm:$0x40] %v1839
        %v1846 = vrot.slane %v1835, 1
        %v1848 = vmax.f32 %v1835, %v1846
        %1849 = vst [vmem:[%s1840 + $0x4] sm:$0x1] %v1848
        %1850 = vst [vmem:[%s1840 + $0x3] sm:$0x4] %v1848
        %v1851 = vld [vmem:[%s1580] sm:$0xff]
        %v1852 = vld [vmem:[%s1580 + $0x8] sm:$0x1f]
        %v1853 = vld [vmem:[%s1580 + $0x1] sm:$0xff]
        %v1854 = vld [vmem:[%s1580 + $0x9] sm:$0x1f]
        %v1855 = vld [vmem:[%s1580 + $0x2] sm:$0xff]
        %v1856 = vld [vmem:[%s1580 + $0xa] sm:$0x1f]
        %v1857 = vld [vmem:[%s1705] sm:$0xff]
        %v1858 = vld [vmem:[%s1705 + $0x8] sm:$0x1f]
        %v1859 = vld [vmem:[%s1705 + $0x1] sm:$0xff]
        %v1860 = vld [vmem:[%s1705 + $0x9] sm:$0x1f]
        %v1861 = vld [vmem:[%s1705 + $0x2] sm:$0xff]
        %v1862 = vld [vmem:[%s1705 + $0xa] sm:$0x1f]
        %s1863 = scalar_lea.vmem %s383, 128
        %v1864 = vld [vmem:[%s1863] sm:$0xff]
        %v1865 = vld [vmem:[%s1863 + $0x8] sm:$0x1f]
        %v1866 = vld [vmem:[%s1863 + $0x1] sm:$0xff]
        %v1867 = vld [vmem:[%s1863 + $0x9] sm:$0x1f]
        %v1868 = vld [vmem:[%s1863 + $0x2] sm:$0xff]
        %v1869 = vld [vmem:[%s1863 + $0xa] sm:$0x1f]
        %1872 = vrot.lane.b32.xlu0 %v1853, 64
        %v1873 = vpop.permute.xlu0 %1872
        %1874 = vrot.lane.b32.xlu0 %v1854, 64
        %v1875 = vpop.permute.xlu0 %1874
        %1880 = vrot.lane.b32.xlu0 %v1857, 64
        %v1881 = vpop.permute.xlu0 %1880
        %1882 = vrot.lane.b32.xlu0 %v1858, 64
        %v1883 = vpop.permute.xlu0 %1882
        %1888 = vrot.lane.b32.xlu0 %v1861, 64
        %v1889 = vpop.permute.xlu0 %1888
        %1890 = vrot.lane.b32.xlu0 %v1862, 64
        %v1891 = vpop.permute.xlu0 %1890
        %1896 = vrot.lane.b32.xlu0 %v1866, 64
        %v1897 = vpop.permute.xlu0 %1896
        %1898 = vrot.lane.b32.xlu0 %v1867, 64
        %v1899 = vpop.permute.xlu0 %1898
        %v1902 = vsel %vm834, %v1851, %v1873
        %v1903 = vsel %vm834, %v1852, %v1875
        %v1904 = vsel %vm834, %v1855, %v1881
        %v1905 = vsel %vm834, %v1856, %v1883
        %v1906 = vsel %vm834, %v1859, %v1889
        %v1907 = vsel %vm834, %v1860, %v1891
        %v1908 = vsel %vm834, %v1864, %v1897
        %v1909 = vsel %vm834, %v1865, %v1899
        %v1910 = vpack.c.bf16 %v1903, %v1902
        %v1911 = vpack.c.bf16 %v1905, %v1904
        %v1912 = vpack.c.bf16 %v1907, %v1906
        %v1913 = vpack.c.bf16 %v1909, %v1908
        %v1914 = vpack.c.bf16 %v1869, %v1868
        %v1916 = vsel %vm834, %v1914, 0
        %1918 = vmatpush.bf16.msra.mxu0 %v999
        %1919 = vmatpush.bf16.msra.mxu0 %v998
        %1920 = vmatpush.bf16.msra.mxu0 %v997
        %1921 = vmatpush.bf16.msra.mxu0 %v996
        %1922 = vmatpush.bf16.msra.mxu0 %v995
        %1923 = vmatpush.bf16.msra.mxu0 %v994
        %1924 = vmatpush.bf16.msra.mxu0 %v993
        %1925 = vmatpush.bf16.msra.mxu0 %v992
        %1926 = vmatmul.bf16.gmra.mxu0 %v1910
        %v1927 = vpop.f32.mrf.mxu0
        %v1928 = vadd.f32 0.0, %v1927
        %v1929 = vpop.f32.mrf.mxu0
        %v1930 = vadd.f32 0.0, %v1929
        %1931 = vdwg.mxu0
        %1932 = vmatpush.bf16.msra.mxu0 %v1007
        %1933 = vmatpush.bf16.msra.mxu0 %v1006
        %1934 = vmatpush.bf16.msra.mxu0 %v1005
        %1935 = vmatpush.bf16.msra.mxu0 %v1004
        %1936 = vmatpush.bf16.msra.mxu0 %v1003
        %1937 = vmatpush.bf16.msra.mxu0 %v1002
        %1938 = vmatpush.bf16.msra.mxu0 %v1001
        %1939 = vmatpush.bf16.msra.mxu0 %v1000
        %1940 = vmatmul.bf16.gmra.mxu0 %v1911
        %v1941 = vpop.f32.mrf.mxu0
        %v1942 = vadd.f32 %v1928, %v1941
        %v1943 = vpop.f32.mrf.mxu0
        %v1944 = vadd.f32 %v1930, %v1943
        %1945 = vdwg.mxu0
        %1946 = vmatpush.bf16.msra.mxu0 %v1015
        %1947 = vmatpush.bf16.msra.mxu0 %v1014
        %1948 = vmatpush.bf16.msra.mxu0 %v1013
        %1949 = vmatpush.bf16.msra.mxu0 %v1012
        %1950 = vmatpush.bf16.msra.mxu0 %v1011
        %1951 = vmatpush.bf16.msra.mxu0 %v1010
        %1952 = vmatpush.bf16.msra.mxu0 %v1009
        %1953 = vmatpush.bf16.msra.mxu0 %v1008
        %1954 = vmatmul.bf16.gmra.mxu0 %v1912
        %v1955 = vpop.f32.mrf.mxu0
        %v1956 = vadd.f32 %v1942, %v1955
        %v1957 = vpop.f32.mrf.mxu0
        %v1958 = vadd.f32 %v1944, %v1957
        %1959 = vdwg.mxu0
        %1960 = vmatpush.bf16.msra.mxu0 %v1023
        %1961 = vmatpush.bf16.msra.mxu0 %v1022
        %1962 = vmatpush.bf16.msra.mxu0 %v1021
        %1963 = vmatpush.bf16.msra.mxu0 %v1020
        %1964 = vmatpush.bf16.msra.mxu0 %v1019
        %1965 = vmatpush.bf16.msra.mxu0 %v1018
        %1966 = vmatpush.bf16.msra.mxu0 %v1017
        %1967 = vmatpush.bf16.msra.mxu0 %v1016
        %1968 = vmatmul.bf16.gmra.mxu0 %v1913
        %v1969 = vpop.f32.mrf.mxu0
        %v1970 = vadd.f32 %v1956, %v1969
        %v1971 = vpop.f32.mrf.mxu0
        %v1972 = vadd.f32 %v1958, %v1971
        %1973 = vdwg.mxu0
        %1974 = vmatpush.bf16.msra.mxu0 0
        %1975 = vmatpush.bf16.msra.mxu0 0
        %1976 = vmatpush.bf16.msra.mxu0 0
        %1977 = vmatpush.bf16.msra.mxu0 0
        %1978 = vmatpush.bf16.msra.mxu0 %v1027
        %1979 = vmatpush.bf16.msra.mxu0 %v1026
        %1980 = vmatpush.bf16.msra.mxu0 %v1025
        %1981 = vmatpush.bf16.msra.mxu0 %v1024
        %1982 = vmatmul.bf16.gmra.mxu0 %v1916
        %v1983 = vpop.f32.mrf.mxu0
        %v1984 = vadd.f32 %v1970, %v1983
        %v1985 = vpop.f32.mrf.mxu0
        %v1986 = vadd.f32 %v1972, %v1985
        %1987 = vdwg.mxu0
        %s1988 = scalar_lea.vmem %s383, 144
        %v1989 = vld [vmem:[%s1988] sm:$0xff]
        %v1990 = vld [vmem:[%s1988 + $0x8] sm:$0x1f]
        %v1991 = vld [vmem:[%s1988 + $0x1] sm:$0xff]
        %v1992 = vld [vmem:[%s1988 + $0x9] sm:$0x1f]
        %v1993 = vld [vmem:[%s1988 + $0x2] sm:$0xff]
        %v1994 = vld [vmem:[%s1988 + $0xa] sm:$0x1f]
        %1997 = vrot.lane.b32.xlu0 %v1859, 64
        %v1998 = vpop.permute.xlu0 %1997
        %1999 = vrot.lane.b32.xlu0 %v1860, 64
        %v2000 = vpop.permute.xlu0 %1999
        %2005 = vrot.lane.b32.xlu0 %v1864, 64
        %v2006 = vpop.permute.xlu0 %2005
        %2007 = vrot.lane.b32.xlu0 %v1865, 64
        %v2008 = vpop.permute.xlu0 %2007
        %2013 = vrot.lane.b32.xlu0 %v1868, 64
        %v2014 = vpop.permute.xlu0 %2013
        %2015 = vrot.lane.b32.xlu0 %v1869, 64
        %v2016 = vpop.permute.xlu0 %2015
        %2021 = vrot.lane.b32.xlu0 %v1991, 64
        %v2022 = vpop.permute.xlu0 %2021
        %2023 = vrot.lane.b32.xlu0 %v1992, 64
        %v2024 = vpop.permute.xlu0 %2023
        %v2027 = vsel %vm834, %v1857, %v1998
        %v2028 = vsel %vm834, %v1858, %v2000
        %v2029 = vsel %vm834, %v1861, %v2006
        %v2030 = vsel %vm834, %v1862, %v2008
        %v2031 = vsel %vm834, %v1866, %v2014
        %v2032 = vsel %vm834, %v1867, %v2016
        %v2033 = vsel %vm834, %v1989, %v2022
        %v2034 = vsel %vm834, %v1990, %v2024
        %v2035 = vpack.c.bf16 %v2028, %v2027
        %v2036 = vpack.c.bf16 %v2030, %v2029
        %v2037 = vpack.c.bf16 %v2032, %v2031
        %v2038 = vpack.c.bf16 %v2034, %v2033
        %v2039 = vpack.c.bf16 %v1994, %v1993
        %v2041 = vsel %vm834, %v2039, 0
        %2043 = vmatpush.bf16.msra.mxu0 %v999
        %2044 = vmatpush.bf16.msra.mxu0 %v998
        %2045 = vmatpush.bf16.msra.mxu0 %v997
        %2046 = vmatpush.bf16.msra.mxu0 %v996
        %2047 = vmatpush.bf16.msra.mxu0 %v995
        %2048 = vmatpush.bf16.msra.mxu0 %v994
        %2049 = vmatpush.bf16.msra.mxu0 %v993
        %2050 = vmatpush.bf16.msra.mxu0 %v992
        %2051 = vmatmul.bf16.gmra.mxu0 %v2035
        %v2052 = vpop.f32.mrf.mxu0
        %v2053 = vadd.f32 0.0, %v2052
        %v2054 = vpop.f32.mrf.mxu0
        %v2055 = vadd.f32 0.0, %v2054
        %2056 = vdwg.mxu0
        %2057 = vmatpush.bf16.msra.mxu0 %v1007
        %2058 = vmatpush.bf16.msra.mxu0 %v1006
        %2059 = vmatpush.bf16.msra.mxu0 %v1005
        %2060 = vmatpush.bf16.msra.mxu0 %v1004
        %2061 = vmatpush.bf16.msra.mxu0 %v1003
        %2062 = vmatpush.bf16.msra.mxu0 %v1002
        %2063 = vmatpush.bf16.msra.mxu0 %v1001
        %2064 = vmatpush.bf16.msra.mxu0 %v1000
        %2065 = vmatmul.bf16.gmra.mxu0 %v2036
        %v2066 = vpop.f32.mrf.mxu0
        %v2067 = vadd.f32 %v2053, %v2066
        %v2068 = vpop.f32.mrf.mxu0
        %v2069 = vadd.f32 %v2055, %v2068
        %2070 = vdwg.mxu0
        %2071 = vmatpush.bf16.msra.mxu0 %v1015
        %2072 = vmatpush.bf16.msra.mxu0 %v1014
        %2073 = vmatpush.bf16.msra.mxu0 %v1013
        %2074 = vmatpush.bf16.msra.mxu0 %v1012
        %2075 = vmatpush.bf16.msra.mxu0 %v1011
        %2076 = vmatpush.bf16.msra.mxu0 %v1010
        %2077 = vmatpush.bf16.msra.mxu0 %v1009
        %2078 = vmatpush.bf16.msra.mxu0 %v1008
        %2079 = vmatmul.bf16.gmra.mxu0 %v2037
        %v2080 = vpop.f32.mrf.mxu0
        %v2081 = vadd.f32 %v2067, %v2080
        %v2082 = vpop.f32.mrf.mxu0
        %v2083 = vadd.f32 %v2069, %v2082
        %2084 = vdwg.mxu0
        %2085 = vmatpush.bf16.msra.mxu0 %v1023
        %2086 = vmatpush.bf16.msra.mxu0 %v1022
        %2087 = vmatpush.bf16.msra.mxu0 %v1021
        %2088 = vmatpush.bf16.msra.mxu0 %v1020
        %2089 = vmatpush.bf16.msra.mxu0 %v1019
        %2090 = vmatpush.bf16.msra.mxu0 %v1018
        %2091 = vmatpush.bf16.msra.mxu0 %v1017
        %2092 = vmatpush.bf16.msra.mxu0 %v1016
        %2093 = vmatmul.bf16.gmra.mxu0 %v2038
        %v2094 = vpop.f32.mrf.mxu0
        %v2095 = vadd.f32 %v2081, %v2094
        %v2096 = vpop.f32.mrf.mxu0
        %v2097 = vadd.f32 %v2083, %v2096
        %2098 = vdwg.mxu0
        %2099 = vmatpush.bf16.msra.mxu0 0
        %2100 = vmatpush.bf16.msra.mxu0 0
        %2101 = vmatpush.bf16.msra.mxu0 0
        %2102 = vmatpush.bf16.msra.mxu0 0
        %2103 = vmatpush.bf16.msra.mxu0 %v1027
        %2104 = vmatpush.bf16.msra.mxu0 %v1026
        %2105 = vmatpush.bf16.msra.mxu0 %v1025
        %2106 = vmatpush.bf16.msra.mxu0 %v1024
        %2107 = vmatmul.bf16.gmra.mxu0 %v2041
        %v2108 = vpop.f32.mrf.mxu0
        %v2109 = vadd.f32 %v2095, %v2108
        %v2110 = vpop.f32.mrf.mxu0
        %v2111 = vadd.f32 %v2097, %v2110
        %2112 = vdwg.mxu0
        %v2113 = vmax.f32 %v1984, %v2109
        %v2114 = vmax.f32 %v1986, %v2111
        %v2115 = vadd.f32 %v2113, %v1265
        %v2116 = vadd.f32 %v2114, %v1265
        %v2117 = vmax.f32 %v2115, 0.0
        %v2118 = vmax.f32 %v2116, 0.0
        %v2120 = vrot.slane %v2117, 1
        %v2122 = vmax.f32 %v2117, %v2120
        %s2123 = scalar_lea.vmem [#allocation2], 24
        %2124 = vst [vmem:[%s2123] sm:$0x1] %v2122
        %2125 = vst [vmem:[%s2123 - $0x1] sm:$0x4] %v2122
        %2126 = vst [vmem:[%s2123 - $0x2] sm:$0x10] %v2122
        %2127 = vst [vmem:[%s2123 - $0x3] sm:$0x40] %v2122
        %v2129 = vrot.slane %v2118, 1
        %v2131 = vmax.f32 %v2118, %v2129
        %2132 = vst [vmem:[%s2123 + $0x4] sm:$0x1] %v2131
        %2133 = vst [vmem:[%s2123 + $0x3] sm:$0x4] %v2131
        %v2134 = vld [vmem:[%s1863] sm:$0xff]
        %v2135 = vld [vmem:[%s1863 + $0x8] sm:$0x1f]
        %v2136 = vld [vmem:[%s1863 + $0x1] sm:$0xff]
        %v2137 = vld [vmem:[%s1863 + $0x9] sm:$0x1f]
        %v2138 = vld [vmem:[%s1863 + $0x2] sm:$0xff]
        %v2139 = vld [vmem:[%s1863 + $0xa] sm:$0x1f]
        %v2140 = vld [vmem:[%s1988] sm:$0xff]
        %v2141 = vld [vmem:[%s1988 + $0x8] sm:$0x1f]
        %v2142 = vld [vmem:[%s1988 + $0x1] sm:$0xff]
        %v2143 = vld [vmem:[%s1988 + $0x9] sm:$0x1f]
        %v2144 = vld [vmem:[%s1988 + $0x2] sm:$0xff]
        %v2145 = vld [vmem:[%s1988 + $0xa] sm:$0x1f]
        %s2146 = scalar_lea.vmem %s383, 160
        %v2147 = vld [vmem:[%s2146] sm:$0xff]
        %v2148 = vld [vmem:[%s2146 + $0x8] sm:$0x1f]
        %v2149 = vld [vmem:[%s2146 + $0x1] sm:$0xff]
        %v2150 = vld [vmem:[%s2146 + $0x9] sm:$0x1f]
        %v2151 = vld [vmem:[%s2146 + $0x2] sm:$0xff]
        %v2152 = vld [vmem:[%s2146 + $0xa] sm:$0x1f]
        %2155 = vrot.lane.b32.xlu0 %v2136, 64
        %v2156 = vpop.permute.xlu0 %2155
        %2157 = vrot.lane.b32.xlu0 %v2137, 64
        %v2158 = vpop.permute.xlu0 %2157
        %2163 = vrot.lane.b32.xlu0 %v2140, 64
        %v2164 = vpop.permute.xlu0 %2163
        %2165 = vrot.lane.b32.xlu0 %v2141, 64
        %v2166 = vpop.permute.xlu0 %2165
        %2171 = vrot.lane.b32.xlu0 %v2144, 64
        %v2172 = vpop.permute.xlu0 %2171
        %2173 = vrot.lane.b32.xlu0 %v2145, 64
        %v2174 = vpop.permute.xlu0 %2173
        %2179 = vrot.lane.b32.xlu0 %v2149, 64
        %v2180 = vpop.permute.xlu0 %2179
        %2181 = vrot.lane.b32.xlu0 %v2150, 64
        %v2182 = vpop.permute.xlu0 %2181
        %v2185 = vsel %vm834, %v2134, %v2156
        %v2186 = vsel %vm834, %v2135, %v2158
        %v2187 = vsel %vm834, %v2138, %v2164
        %v2188 = vsel %vm834, %v2139, %v2166
        %v2189 = vsel %vm834, %v2142, %v2172
        %v2190 = vsel %vm834, %v2143, %v2174
        %v2191 = vsel %vm834, %v2147, %v2180
        %v2192 = vsel %vm834, %v2148, %v2182
        %v2193 = vpack.c.bf16 %v2186, %v2185
        %v2194 = vpack.c.bf16 %v2188, %v2187
        %v2195 = vpack.c.bf16 %v2190, %v2189
        %v2196 = vpack.c.bf16 %v2192, %v2191
        %v2197 = vpack.c.bf16 %v2152, %v2151
        %v2199 = vsel %vm834, %v2197, 0
        %2201 = vmatpush.bf16.msra.mxu0 %v999
        %2202 = vmatpush.bf16.msra.mxu0 %v998
        %2203 = vmatpush.bf16.msra.mxu0 %v997
        %2204 = vmatpush.bf16.msra.mxu0 %v996
        %2205 = vmatpush.bf16.msra.mxu0 %v995
        %2206 = vmatpush.bf16.msra.mxu0 %v994
        %2207 = vmatpush.bf16.msra.mxu0 %v993
        %2208 = vmatpush.bf16.msra.mxu0 %v992
        %2209 = vmatmul.bf16.gmra.mxu0 %v2193
        %v2210 = vpop.f32.mrf.mxu0
        %v2211 = vadd.f32 0.0, %v2210
        %v2212 = vpop.f32.mrf.mxu0
        %v2213 = vadd.f32 0.0, %v2212
        %2214 = vdwg.mxu0
        %2215 = vmatpush.bf16.msra.mxu0 %v1007
        %2216 = vmatpush.bf16.msra.mxu0 %v1006
        %2217 = vmatpush.bf16.msra.mxu0 %v1005
        %2218 = vmatpush.bf16.msra.mxu0 %v1004
        %2219 = vmatpush.bf16.msra.mxu0 %v1003
        %2220 = vmatpush.bf16.msra.mxu0 %v1002
        %2221 = vmatpush.bf16.msra.mxu0 %v1001
        %2222 = vmatpush.bf16.msra.mxu0 %v1000
        %2223 = vmatmul.bf16.gmra.mxu0 %v2194
        %v2224 = vpop.f32.mrf.mxu0
        %v2225 = vadd.f32 %v2211, %v2224
        %v2226 = vpop.f32.mrf.mxu0
        %v2227 = vadd.f32 %v2213, %v2226
        %2228 = vdwg.mxu0
        %2229 = vmatpush.bf16.msra.mxu0 %v1015
        %2230 = vmatpush.bf16.msra.mxu0 %v1014
        %2231 = vmatpush.bf16.msra.mxu0 %v1013
        %2232 = vmatpush.bf16.msra.mxu0 %v1012
        %2233 = vmatpush.bf16.msra.mxu0 %v1011
        %2234 = vmatpush.bf16.msra.mxu0 %v1010
        %2235 = vmatpush.bf16.msra.mxu0 %v1009
        %2236 = vmatpush.bf16.msra.mxu0 %v1008
        %2237 = vmatmul.bf16.gmra.mxu0 %v2195
        %v2238 = vpop.f32.mrf.mxu0
        %v2239 = vadd.f32 %v2225, %v2238
        %v2240 = vpop.f32.mrf.mxu0
        %v2241 = vadd.f32 %v2227, %v2240
        %2242 = vdwg.mxu0
        %2243 = vmatpush.bf16.msra.mxu0 %v1023
        %2244 = vmatpush.bf16.msra.mxu0 %v1022
        %2245 = vmatpush.bf16.msra.mxu0 %v1021
        %2246 = vmatpush.bf16.msra.mxu0 %v1020
        %2247 = vmatpush.bf16.msra.mxu0 %v1019
        %2248 = vmatpush.bf16.msra.mxu0 %v1018
        %2249 = vmatpush.bf16.msra.mxu0 %v1017
        %2250 = vmatpush.bf16.msra.mxu0 %v1016
        %2251 = vmatmul.bf16.gmra.mxu0 %v2196
        %v2252 = vpop.f32.mrf.mxu0
        %v2253 = vadd.f32 %v2239, %v2252
        %v2254 = vpop.f32.mrf.mxu0
        %v2255 = vadd.f32 %v2241, %v2254
        %2256 = vdwg.mxu0
        %2257 = vmatpush.bf16.msra.mxu0 0
        %2258 = vmatpush.bf16.msra.mxu0 0
        %2259 = vmatpush.bf16.msra.mxu0 0
        %2260 = vmatpush.bf16.msra.mxu0 0
        %2261 = vmatpush.bf16.msra.mxu0 %v1027
        %2262 = vmatpush.bf16.msra.mxu0 %v1026
        %2263 = vmatpush.bf16.msra.mxu0 %v1025
        %2264 = vmatpush.bf16.msra.mxu0 %v1024
        %2265 = vmatmul.bf16.gmra.mxu0 %v2199
        %v2266 = vpop.f32.mrf.mxu0
        %v2267 = vadd.f32 %v2253, %v2266
        %v2268 = vpop.f32.mrf.mxu0
        %v2269 = vadd.f32 %v2255, %v2268
        %2270 = vdwg.mxu0
        %s2271 = scalar_lea.vmem %s383, 176
        %v2272 = vld [vmem:[%s2271] sm:$0xff]
        %v2273 = vld [vmem:[%s2271 + $0x8] sm:$0x1f]
        %v2274 = vld [vmem:[%s2271 + $0x1] sm:$0xff]
        %v2275 = vld [vmem:[%s2271 + $0x9] sm:$0x1f]
        %v2276 = vld [vmem:[%s2271 + $0x2] sm:$0xff]
        %v2277 = vld [vmem:[%s2271 + $0xa] sm:$0x1f]
        %2280 = vrot.lane.b32.xlu0 %v2142, 64
        %v2281 = vpop.permute.xlu0 %2280
        %2282 = vrot.lane.b32.xlu0 %v2143, 64
        %v2283 = vpop.permute.xlu0 %2282
        %2288 = vrot.lane.b32.xlu0 %v2147, 64
        %v2289 = vpop.permute.xlu0 %2288
        %2290 = vrot.lane.b32.xlu0 %v2148, 64
        %v2291 = vpop.permute.xlu0 %2290
        %2296 = vrot.lane.b32.xlu0 %v2151, 64
        %v2297 = vpop.permute.xlu0 %2296
        %2298 = vrot.lane.b32.xlu0 %v2152, 64
        %v2299 = vpop.permute.xlu0 %2298
        %2304 = vrot.lane.b32.xlu0 %v2274, 64
        %v2305 = vpop.permute.xlu0 %2304
        %2306 = vrot.lane.b32.xlu0 %v2275, 64
        %v2307 = vpop.permute.xlu0 %2306
        %v2310 = vsel %vm834, %v2140, %v2281
        %v2311 = vsel %vm834, %v2141, %v2283
        %v2312 = vsel %vm834, %v2144, %v2289
        %v2313 = vsel %vm834, %v2145, %v2291
        %v2314 = vsel %vm834, %v2149, %v2297
        %v2315 = vsel %vm834, %v2150, %v2299
        %v2316 = vsel %vm834, %v2272, %v2305
        %v2317 = vsel %vm834, %v2273, %v2307
        %v2318 = vpack.c.bf16 %v2311, %v2310
        %v2319 = vpack.c.bf16 %v2313, %v2312
        %v2320 = vpack.c.bf16 %v2315, %v2314
        %v2321 = vpack.c.bf16 %v2317, %v2316
        %v2322 = vpack.c.bf16 %v2277, %v2276
        %v2324 = vsel %vm834, %v2322, 0
        %2326 = vmatpush.bf16.msra.mxu0 %v999
        %2327 = vmatpush.bf16.msra.mxu0 %v998
        %2328 = vmatpush.bf16.msra.mxu0 %v997
        %2329 = vmatpush.bf16.msra.mxu0 %v996
        %2330 = vmatpush.bf16.msra.mxu0 %v995
        %2331 = vmatpush.bf16.msra.mxu0 %v994
        %2332 = vmatpush.bf16.msra.mxu0 %v993
        %2333 = vmatpush.bf16.msra.mxu0 %v992
        %2334 = vmatmul.bf16.gmra.mxu0 %v2318
        %v2335 = vpop.f32.mrf.mxu0
        %v2336 = vadd.f32 0.0, %v2335
        %v2337 = vpop.f32.mrf.mxu0
        %v2338 = vadd.f32 0.0, %v2337
        %2339 = vdwg.mxu0
        %2340 = vmatpush.bf16.msra.mxu0 %v1007
        %2341 = vmatpush.bf16.msra.mxu0 %v1006
        %2342 = vmatpush.bf16.msra.mxu0 %v1005
        %2343 = vmatpush.bf16.msra.mxu0 %v1004
        %2344 = vmatpush.bf16.msra.mxu0 %v1003
        %2345 = vmatpush.bf16.msra.mxu0 %v1002
        %2346 = vmatpush.bf16.msra.mxu0 %v1001
        %2347 = vmatpush.bf16.msra.mxu0 %v1000
        %2348 = vmatmul.bf16.gmra.mxu0 %v2319
        %v2349 = vpop.f32.mrf.mxu0
        %v2350 = vadd.f32 %v2336, %v2349
        %v2351 = vpop.f32.mrf.mxu0
        %v2352 = vadd.f32 %v2338, %v2351
        %2353 = vdwg.mxu0
        %2354 = vmatpush.bf16.msra.mxu0 %v1015
        %2355 = vmatpush.bf16.msra.mxu0 %v1014
        %2356 = vmatpush.bf16.msra.mxu0 %v1013
        %2357 = vmatpush.bf16.msra.mxu0 %v1012
        %2358 = vmatpush.bf16.msra.mxu0 %v1011
        %2359 = vmatpush.bf16.msra.mxu0 %v1010
        %2360 = vmatpush.bf16.msra.mxu0 %v1009
        %2361 = vmatpush.bf16.msra.mxu0 %v1008
        %2362 = vmatmul.bf16.gmra.mxu0 %v2320
        %v2363 = vpop.f32.mrf.mxu0
        %v2364 = vadd.f32 %v2350, %v2363
        %v2365 = vpop.f32.mrf.mxu0
        %v2366 = vadd.f32 %v2352, %v2365
        %2367 = vdwg.mxu0
        %2368 = vmatpush.bf16.msra.mxu0 %v1023
        %2369 = vmatpush.bf16.msra.mxu0 %v1022
        %2370 = vmatpush.bf16.msra.mxu0 %v1021
        %2371 = vmatpush.bf16.msra.mxu0 %v1020
        %2372 = vmatpush.bf16.msra.mxu0 %v1019
        %2373 = vmatpush.bf16.msra.mxu0 %v1018
        %2374 = vmatpush.bf16.msra.mxu0 %v1017
        %2375 = vmatpush.bf16.msra.mxu0 %v1016
        %2376 = vmatmul.bf16.gmra.mxu0 %v2321
        %v2377 = vpop.f32.mrf.mxu0
        %v2378 = vadd.f32 %v2364, %v2377
        %v2379 = vpop.f32.mrf.mxu0
        %v2380 = vadd.f32 %v2366, %v2379
        %2381 = vdwg.mxu0
        %2382 = vmatpush.bf16.msra.mxu0 0
        %2383 = vmatpush.bf16.msra.mxu0 0
        %2384 = vmatpush.bf16.msra.mxu0 0
        %2385 = vmatpush.bf16.msra.mxu0 0
        %2386 = vmatpush.bf16.msra.mxu0 %v1027
        %2387 = vmatpush.bf16.msra.mxu0 %v1026
        %2388 = vmatpush.bf16.msra.mxu0 %v1025
        %2389 = vmatpush.bf16.msra.mxu0 %v1024
        %2390 = vmatmul.bf16.gmra.mxu0 %v2324
        %v2391 = vpop.f32.mrf.mxu0
        %v2392 = vadd.f32 %v2378, %v2391
        %v2393 = vpop.f32.mrf.mxu0
        %v2394 = vadd.f32 %v2380, %v2393
        %2395 = vdwg.mxu0
        %v2396 = vmax.f32 %v2267, %v2392
        %v2397 = vmax.f32 %v2269, %v2394
        %v2398 = vadd.f32 %v2396, %v1265
        %v2399 = vadd.f32 %v2397, %v1265
        %v2400 = vmax.f32 %v2398, 0.0
        %v2401 = vmax.f32 %v2399, 0.0
        %v2403 = vrot.slane %v2400, 1
        %v2405 = vmax.f32 %v2400, %v2403
        %s2406 = scalar_lea.vmem [#allocation2], 32
        %2407 = vst [vmem:[%s2406] sm:$0x1] %v2405
        %2408 = vst [vmem:[%s2406 - $0x1] sm:$0x4] %v2405
        %2409 = vst [vmem:[%s2406 - $0x2] sm:$0x10] %v2405
        %2410 = vst [vmem:[%s2406 - $0x3] sm:$0x40] %v2405
        %v2412 = vrot.slane %v2401, 1
        %v2414 = vmax.f32 %v2401, %v2412
        %2415 = vst [vmem:[%s2406 + $0x4] sm:$0x1] %v2414
        %2416 = vst [vmem:[%s2406 + $0x3] sm:$0x4] %v2414
        %v2417 = vld [vmem:[%s2146] sm:$0xff]
        %v2418 = vld [vmem:[%s2146 + $0x8] sm:$0x1f]
        %v2419 = vld [vmem:[%s2146 + $0x1] sm:$0xff]
        %v2420 = vld [vmem:[%s2146 + $0x9] sm:$0x1f]
        %v2421 = vld [vmem:[%s2146 + $0x2] sm:$0xff]
        %v2422 = vld [vmem:[%s2146 + $0xa] sm:$0x1f]
        %v2423 = vld [vmem:[%s2271] sm:$0xff]
        %v2424 = vld [vmem:[%s2271 + $0x8] sm:$0x1f]
        %v2425 = vld [vmem:[%s2271 + $0x1] sm:$0xff]
        %v2426 = vld [vmem:[%s2271 + $0x9] sm:$0x1f]
        %v2427 = vld [vmem:[%s2271 + $0x2] sm:$0xff]
        %v2428 = vld [vmem:[%s2271 + $0xa] sm:$0x1f]
        %s2429 = scalar_lea.vmem %s383, 192
        %v2430 = vld [vmem:[%s2429] sm:$0xff]
        %v2431 = vld [vmem:[%s2429 + $0x8] sm:$0x1f]
        %v2432 = vld [vmem:[%s2429 + $0x1] sm:$0xff]
        %v2433 = vld [vmem:[%s2429 + $0x9] sm:$0x1f]
        %v2434 = vld [vmem:[%s2429 + $0x2] sm:$0xff]
        %v2435 = vld [vmem:[%s2429 + $0xa] sm:$0x1f]
        %2438 = vrot.lane.b32.xlu0 %v2419, 64
        %v2439 = vpop.permute.xlu0 %2438
        %2440 = vrot.lane.b32.xlu0 %v2420, 64
        %v2441 = vpop.permute.xlu0 %2440
        %2446 = vrot.lane.b32.xlu0 %v2423, 64
        %v2447 = vpop.permute.xlu0 %2446
        %2448 = vrot.lane.b32.xlu0 %v2424, 64
        %v2449 = vpop.permute.xlu0 %2448
        %2454 = vrot.lane.b32.xlu0 %v2427, 64
        %v2455 = vpop.permute.xlu0 %2454
        %2456 = vrot.lane.b32.xlu0 %v2428, 64
        %v2457 = vpop.permute.xlu0 %2456
        %2462 = vrot.lane.b32.xlu0 %v2432, 64
        %v2463 = vpop.permute.xlu0 %2462
        %2464 = vrot.lane.b32.xlu0 %v2433, 64
        %v2465 = vpop.permute.xlu0 %2464
        %v2468 = vsel %vm834, %v2417, %v2439
        %v2469 = vsel %vm834, %v2418, %v2441
        %v2470 = vsel %vm834, %v2421, %v2447
        %v2471 = vsel %vm834, %v2422, %v2449
        %v2472 = vsel %vm834, %v2425, %v2455
        %v2473 = vsel %vm834, %v2426, %v2457
        %v2474 = vsel %vm834, %v2430, %v2463
        %v2475 = vsel %vm834, %v2431, %v2465
        %v2476 = vpack.c.bf16 %v2469, %v2468
        %v2477 = vpack.c.bf16 %v2471, %v2470
        %v2478 = vpack.c.bf16 %v2473, %v2472
        %v2479 = vpack.c.bf16 %v2475, %v2474
        %v2480 = vpack.c.bf16 %v2435, %v2434
        %v2482 = vsel %vm834, %v2480, 0
        %2484 = vmatpush.bf16.msra.mxu0 %v999
        %2485 = vmatpush.bf16.msra.mxu0 %v998
        %2486 = vmatpush.bf16.msra.mxu0 %v997
        %2487 = vmatpush.bf16.msra.mxu0 %v996
        %2488 = vmatpush.bf16.msra.mxu0 %v995
        %2489 = vmatpush.bf16.msra.mxu0 %v994
        %2490 = vmatpush.bf16.msra.mxu0 %v993
        %2491 = vmatpush.bf16.msra.mxu0 %v992
        %2492 = vmatmul.bf16.gmra.mxu0 %v2476
        %v2493 = vpop.f32.mrf.mxu0
        %v2494 = vadd.f32 0.0, %v2493
        %v2495 = vpop.f32.mrf.mxu0
        %v2496 = vadd.f32 0.0, %v2495
        %2497 = vdwg.mxu0
        %2498 = vmatpush.bf16.msra.mxu0 %v1007
        %2499 = vmatpush.bf16.msra.mxu0 %v1006
        %2500 = vmatpush.bf16.msra.mxu0 %v1005
        %2501 = vmatpush.bf16.msra.mxu0 %v1004
        %2502 = vmatpush.bf16.msra.mxu0 %v1003
        %2503 = vmatpush.bf16.msra.mxu0 %v1002
        %2504 = vmatpush.bf16.msra.mxu0 %v1001
        %2505 = vmatpush.bf16.msra.mxu0 %v1000
        %2506 = vmatmul.bf16.gmra.mxu0 %v2477
        %v2507 = vpop.f32.mrf.mxu0
        %v2508 = vadd.f32 %v2494, %v2507
        %v2509 = vpop.f32.mrf.mxu0
        %v2510 = vadd.f32 %v2496, %v2509
        %2511 = vdwg.mxu0
        %2512 = vmatpush.bf16.msra.mxu0 %v1015
        %2513 = vmatpush.bf16.msra.mxu0 %v1014
        %2514 = vmatpush.bf16.msra.mxu0 %v1013
        %2515 = vmatpush.bf16.msra.mxu0 %v1012
        %2516 = vmatpush.bf16.msra.mxu0 %v1011
        %2517 = vmatpush.bf16.msra.mxu0 %v1010
        %2518 = vmatpush.bf16.msra.mxu0 %v1009
        %2519 = vmatpush.bf16.msra.mxu0 %v1008
        %2520 = vmatmul.bf16.gmra.mxu0 %v2478
        %v2521 = vpop.f32.mrf.mxu0
        %v2522 = vadd.f32 %v2508, %v2521
        %v2523 = vpop.f32.mrf.mxu0
        %v2524 = vadd.f32 %v2510, %v2523
        %2525 = vdwg.mxu0
        %2526 = vmatpush.bf16.msra.mxu0 %v1023
        %2527 = vmatpush.bf16.msra.mxu0 %v1022
        %2528 = vmatpush.bf16.msra.mxu0 %v1021
        %2529 = vmatpush.bf16.msra.mxu0 %v1020
        %2530 = vmatpush.bf16.msra.mxu0 %v1019
        %2531 = vmatpush.bf16.msra.mxu0 %v1018
        %2532 = vmatpush.bf16.msra.mxu0 %v1017
        %2533 = vmatpush.bf16.msra.mxu0 %v1016
        %2534 = vmatmul.bf16.gmra.mxu0 %v2479
        %v2535 = vpop.f32.mrf.mxu0
        %v2536 = vadd.f32 %v2522, %v2535
        %v2537 = vpop.f32.mrf.mxu0
        %v2538 = vadd.f32 %v2524, %v2537
        %2539 = vdwg.mxu0
        %2540 = vmatpush.bf16.msra.mxu0 0
        %2541 = vmatpush.bf16.msra.mxu0 0
        %2542 = vmatpush.bf16.msra.mxu0 0
        %2543 = vmatpush.bf16.msra.mxu0 0
        %2544 = vmatpush.bf16.msra.mxu0 %v1027
        %2545 = vmatpush.bf16.msra.mxu0 %v1026
        %2546 = vmatpush.bf16.msra.mxu0 %v1025
        %2547 = vmatpush.bf16.msra.mxu0 %v1024
        %2548 = vmatmul.bf16.gmra.mxu0 %v2482
        %v2549 = vpop.f32.mrf.mxu0
        %v2550 = vadd.f32 %v2536, %v2549
        %v2551 = vpop.f32.mrf.mxu0
        %v2552 = vadd.f32 %v2538, %v2551
        %2553 = vdwg.mxu0
        %s2554 = scalar_lea.vmem %s383, 208
        %v2555 = vld [vmem:[%s2554] sm:$0xff]
        %v2556 = vld [vmem:[%s2554 + $0x8] sm:$0x1f]
        %v2557 = vld [vmem:[%s2554 + $0x1] sm:$0xff]
        %v2558 = vld [vmem:[%s2554 + $0x9] sm:$0x1f]
        %v2559 = vld [vmem:[%s2554 + $0x2] sm:$0xff]
        %v2560 = vld [vmem:[%s2554 + $0xa] sm:$0x1f]
        %2563 = vrot.lane.b32.xlu0 %v2425, 64
        %v2564 = vpop.permute.xlu0 %2563
        %2565 = vrot.lane.b32.xlu0 %v2426, 64
        %v2566 = vpop.permute.xlu0 %2565
        %2571 = vrot.lane.b32.xlu0 %v2430, 64
        %v2572 = vpop.permute.xlu0 %2571
        %2573 = vrot.lane.b32.xlu0 %v2431, 64
        %v2574 = vpop.permute.xlu0 %2573
        %2579 = vrot.lane.b32.xlu0 %v2434, 64
        %v2580 = vpop.permute.xlu0 %2579
        %2581 = vrot.lane.b32.xlu0 %v2435, 64
        %v2582 = vpop.permute.xlu0 %2581
        %2587 = vrot.lane.b32.xlu0 %v2557, 64
        %v2588 = vpop.permute.xlu0 %2587
        %2589 = vrot.lane.b32.xlu0 %v2558, 64
        %v2590 = vpop.permute.xlu0 %2589
        %v2593 = vsel %vm834, %v2423, %v2564
        %v2594 = vsel %vm834, %v2424, %v2566
        %v2595 = vsel %vm834, %v2427, %v2572
        %v2596 = vsel %vm834, %v2428, %v2574
        %v2597 = vsel %vm834, %v2432, %v2580
        %v2598 = vsel %vm834, %v2433, %v2582
        %v2599 = vsel %vm834, %v2555, %v2588
        %v2600 = vsel %vm834, %v2556, %v2590
        %v2601 = vpack.c.bf16 %v2594, %v2593
        %v2602 = vpack.c.bf16 %v2596, %v2595
        %v2603 = vpack.c.bf16 %v2598, %v2597
        %v2604 = vpack.c.bf16 %v2600, %v2599
        %v2605 = vpack.c.bf16 %v2560, %v2559
        %v2607 = vsel %vm834, %v2605, 0
        %2609 = vmatpush.bf16.msra.mxu0 %v999
        %2610 = vmatpush.bf16.msra.mxu0 %v998
        %2611 = vmatpush.bf16.msra.mxu0 %v997
        %2612 = vmatpush.bf16.msra.mxu0 %v996
        %2613 = vmatpush.bf16.msra.mxu0 %v995
        %2614 = vmatpush.bf16.msra.mxu0 %v994
        %2615 = vmatpush.bf16.msra.mxu0 %v993
        %2616 = vmatpush.bf16.msra.mxu0 %v992
        %2617 = vmatmul.bf16.gmra.mxu0 %v2601
        %v2618 = vpop.f32.mrf.mxu0
        %v2619 = vadd.f32 0.0, %v2618
        %v2620 = vpop.f32.mrf.mxu0
        %v2621 = vadd.f32 0.0, %v2620
        %2622 = vdwg.mxu0
        %2623 = vmatpush.bf16.msra.mxu0 %v1007
        %2624 = vmatpush.bf16.msra.mxu0 %v1006
        %2625 = vmatpush.bf16.msra.mxu0 %v1005
        %2626 = vmatpush.bf16.msra.mxu0 %v1004
        %2627 = vmatpush.bf16.msra.mxu0 %v1003
        %2628 = vmatpush.bf16.msra.mxu0 %v1002
        %2629 = vmatpush.bf16.msra.mxu0 %v1001
        %2630 = vmatpush.bf16.msra.mxu0 %v1000
        %2631 = vmatmul.bf16.gmra.mxu0 %v2602
        %v2632 = vpop.f32.mrf.mxu0
        %v2633 = vadd.f32 %v2619, %v2632
        %v2634 = vpop.f32.mrf.mxu0
        %v2635 = vadd.f32 %v2621, %v2634
        %2636 = vdwg.mxu0
        %2637 = vmatpush.bf16.msra.mxu0 %v1015
        %2638 = vmatpush.bf16.msra.mxu0 %v1014
        %2639 = vmatpush.bf16.msra.mxu0 %v1013
        %2640 = vmatpush.bf16.msra.mxu0 %v1012
        %2641 = vmatpush.bf16.msra.mxu0 %v1011
        %2642 = vmatpush.bf16.msra.mxu0 %v1010
        %2643 = vmatpush.bf16.msra.mxu0 %v1009
        %2644 = vmatpush.bf16.msra.mxu0 %v1008
        %2645 = vmatmul.bf16.gmra.mxu0 %v2603
        %v2646 = vpop.f32.mrf.mxu0
        %v2647 = vadd.f32 %v2633, %v2646
        %v2648 = vpop.f32.mrf.mxu0
        %v2649 = vadd.f32 %v2635, %v2648
        %2650 = vdwg.mxu0
        %2651 = vmatpush.bf16.msra.mxu0 %v1023
        %2652 = vmatpush.bf16.msra.mxu0 %v1022
        %2653 = vmatpush.bf16.msra.mxu0 %v1021
        %2654 = vmatpush.bf16.msra.mxu0 %v1020
        %2655 = vmatpush.bf16.msra.mxu0 %v1019
        %2656 = vmatpush.bf16.msra.mxu0 %v1018
        %2657 = vmatpush.bf16.msra.mxu0 %v1017
        %2658 = vmatpush.bf16.msra.mxu0 %v1016
        %2659 = vmatmul.bf16.gmra.mxu0 %v2604
        %v2660 = vpop.f32.mrf.mxu0
        %v2661 = vadd.f32 %v2647, %v2660
        %v2662 = vpop.f32.mrf.mxu0
        %v2663 = vadd.f32 %v2649, %v2662
        %2664 = vdwg.mxu0
        %2665 = vmatpush.bf16.msra.mxu0 0
        %2666 = vmatpush.bf16.msra.mxu0 0
        %2667 = vmatpush.bf16.msra.mxu0 0
        %2668 = vmatpush.bf16.msra.mxu0 0
        %2669 = vmatpush.bf16.msra.mxu0 %v1027
        %2670 = vmatpush.bf16.msra.mxu0 %v1026
        %2671 = vmatpush.bf16.msra.mxu0 %v1025
        %2672 = vmatpush.bf16.msra.mxu0 %v1024
        %2673 = vmatmul.bf16.gmra.mxu0 %v2607
        %v2674 = vpop.f32.mrf.mxu0
        %v2675 = vadd.f32 %v2661, %v2674
        %v2676 = vpop.f32.mrf.mxu0
        %v2677 = vadd.f32 %v2663, %v2676
        %2678 = vdwg.mxu0
        %v2679 = vmax.f32 %v2550, %v2675
        %v2680 = vmax.f32 %v2552, %v2677
        %v2681 = vadd.f32 %v2679, %v1265
        %v2682 = vadd.f32 %v2680, %v1265
        %v2683 = vmax.f32 %v2681, 0.0
        %v2684 = vmax.f32 %v2682, 0.0
        %v2686 = vrot.slane %v2683, 1
        %v2688 = vmax.f32 %v2683, %v2686
        %s2689 = scalar_lea.vmem [#allocation2], 40
        %2690 = vst [vmem:[%s2689] sm:$0x1] %v2688
        %2691 = vst [vmem:[%s2689 - $0x1] sm:$0x4] %v2688
        %2692 = vst [vmem:[%s2689 - $0x2] sm:$0x10] %v2688
        %2693 = vst [vmem:[%s2689 - $0x3] sm:$0x40] %v2688
        %v2695 = vrot.slane %v2684, 1
        %v2697 = vmax.f32 %v2684, %v2695
        %2698 = vst [vmem:[%s2689 + $0x4] sm:$0x1] %v2697
        %2699 = vst [vmem:[%s2689 + $0x3] sm:$0x4] %v2697
        %v2700 = vld [vmem:[#allocation2] sm:$0xf]
        %v2701 = vld [vmem:[#allocation2 + $0x1] sm:$0xf]
        %v2702 = vld [vmem:[#allocation2 + $0x2] sm:$0xf]
        %v2703 = vld [vmem:[%s1557] sm:$0xf]
        %v2704 = vld [vmem:[%s1557 + $0x1] sm:$0xf]
        %v2705 = vld [vmem:[%s1557 + $0x2] sm:$0xf]
        %v2706 = vld [vmem:[%s1840] sm:$0xf]
        %v2707 = vld [vmem:[%s1840 + $0x1] sm:$0xf]
        %v2708 = vld [vmem:[%s1840 + $0x2] sm:$0xf]
        %v2709 = vpack.c.bf16 %v2700, %v2700
        %v2710 = vpack.c.bf16 %v2701, %v2701
        %v2711 = vpack.c.bf16 %v2702, %v2702
        %v2712 = vpack.c.bf16 %v2703, %v2703
        %v2713 = vpack.c.bf16 %v2704, %v2704
        %v2714 = vpack.c.bf16 %v2705, %v2705
        %v2715 = vpack.c.bf16 %v2706, %v2706
        %v2716 = vpack.c.bf16 %v2707, %v2707
        %v2717 = vpack.c.bf16 %v2708, %v2708
        %v2862 = vunpack.c.l.b16 %v458
        %v2863 = vunpack.c.h.b16 %v458
        %v2864 = vunpack.c.l.b16 %v459
        %v2865 = vunpack.c.h.b16 %v459
        %v2866 = vunpack.c.l.b16 %v460
        %v2867 = vunpack.c.h.b16 %v460
        %v2868 = vunpack.c.l.b16 %v461
        %v2869 = vunpack.c.h.b16 %v461
        %v2870 = vunpack.c.l.b16 %v462
        %v2871 = vunpack.c.h.b16 %v462
        %v2872 = vunpack.c.l.b16 %v463
        %v2873 = vunpack.c.h.b16 %v463
        %v2874 = vunpack.c.l.b16 %v464
        %v2875 = vunpack.c.h.b16 %v464
        %v2876 = vunpack.c.l.b16 %v465
        %v2877 = vunpack.c.h.b16 %v465
        %v2878 = vunpack.c.l.b16 %v466
        %v2879 = vunpack.c.h.b16 %v466
        %v2880 = vunpack.c.l.b16 %v467
        %v2881 = vunpack.c.h.b16 %v467
        %v2882 = vunpack.c.l.b16 %v468
        %v2883 = vunpack.c.h.b16 %v468
        %v2884 = vunpack.c.l.b16 %v469
        %v2885 = vunpack.c.h.b16 %v469
        %v2886 = vunpack.c.l.b16 %v470
        %v2887 = vunpack.c.h.b16 %v470
        %v2888 = vunpack.c.l.b16 %v471
        %v2889 = vunpack.c.h.b16 %v471
        %v2890 = vunpack.c.l.b16 %v472
        %v2891 = vunpack.c.h.b16 %v472
        %v2892 = vunpack.c.l.b16 %v473
        %v2893 = vunpack.c.h.b16 %v473
        %v2894 = vunpack.c.l.b16 %v474
        %v2895 = vunpack.c.h.b16 %v474
        %v2896 = vunpack.c.l.b16 %v475
        %v2897 = vunpack.c.h.b16 %v475
        %v2898 = vunpack.c.l.b16 %v476
        %v2899 = vunpack.c.h.b16 %v476
        %v2900 = vunpack.c.l.b16 %v477
        %v2901 = vunpack.c.h.b16 %v477
        %v2902 = vunpack.c.l.b16 %v478
        %v2903 = vunpack.c.h.b16 %v478
        %v2904 = vunpack.c.l.b16 %v479
        %v2905 = vunpack.c.h.b16 %v479
        %v2906 = vunpack.c.l.b16 %v480
        %v2907 = vunpack.c.h.b16 %v480
        %v2908 = vunpack.c.l.b16 %v481
        %v2909 = vunpack.c.h.b16 %v481
        %v2910 = vunpack.c.l.b16 %v482
        %v2911 = vunpack.c.h.b16 %v482
        %v2912 = vunpack.c.l.b16 %v483
        %v2913 = vunpack.c.h.b16 %v483
        %v2914 = vunpack.c.l.b16 %v484
        %v2915 = vunpack.c.h.b16 %v484
        %v2916 = vunpack.c.l.b16 %v485
        %v2917 = vunpack.c.h.b16 %v485
        %v2918 = vunpack.c.l.b16 %v486
        %v2919 = vunpack.c.h.b16 %v486
        %v2920 = vunpack.c.l.b16 %v487
        %v2921 = vunpack.c.h.b16 %v487
        %v2922 = vunpack.c.l.b16 %v488
        %v2923 = vunpack.c.h.b16 %v488
        %v2924 = vunpack.c.l.b16 %v489
        %v2925 = vunpack.c.h.b16 %v489
        %v2926 = vunpack.c.l.b16 %v490
        %v2927 = vunpack.c.h.b16 %v490
        %v2928 = vunpack.c.l.b16 %v491
        %v2929 = vunpack.c.h.b16 %v491
        %v2930 = vunpack.c.l.b16 %v492
        %v2931 = vunpack.c.h.b16 %v492
        %v2932 = vunpack.c.l.b16 %v493
        %v2933 = vunpack.c.h.b16 %v493
        %v2934 = vunpack.c.l.b16 %v494
        %v2935 = vunpack.c.h.b16 %v494
        %v2936 = vunpack.c.l.b16 %v495
        %v2937 = vunpack.c.h.b16 %v495
        %v2938 = vunpack.c.l.b16 %v496
        %v2939 = vunpack.c.h.b16 %v496
        %v2940 = vunpack.c.l.b16 %v497
        %v2941 = vunpack.c.h.b16 %v497
        %v2942 = vunpack.c.l.b16 %v498
        %v2943 = vunpack.c.h.b16 %v498
        %v2944 = vunpack.c.l.b16 %v499
        %v2945 = vunpack.c.h.b16 %v499
        %v2946 = vunpack.c.l.b16 %v500
        %v2947 = vunpack.c.h.b16 %v500
        %v2948 = vunpack.c.l.b16 %v501
        %v2949 = vunpack.c.h.b16 %v501
        %v2950 = vunpack.c.l.b16 %v502
        %v2951 = vunpack.c.h.b16 %v502
        %v2952 = vunpack.c.l.b16 %v503
        %v2953 = vunpack.c.h.b16 %v503
        %v2954 = vunpack.c.l.b16 %v504
        %v2955 = vunpack.c.h.b16 %v504
        %v2956 = vunpack.c.l.b16 %v505
        %v2957 = vunpack.c.h.b16 %v505
        %v2958 = vunpack.c.l.b16 %v506
        %v2959 = vunpack.c.h.b16 %v506
        %v2960 = vunpack.c.l.b16 %v507
        %v2961 = vunpack.c.h.b16 %v507
        %v2962 = vunpack.c.l.b16 %v508
        %v2963 = vunpack.c.h.b16 %v508
        %v2964 = vunpack.c.l.b16 %v509
        %v2965 = vunpack.c.h.b16 %v509
        %v2966 = vunpack.c.l.b16 %v510
        %v2967 = vunpack.c.h.b16 %v510
        %v2968 = vunpack.c.l.b16 %v511
        %v2969 = vunpack.c.h.b16 %v511
        %v2970 = vunpack.c.l.b16 %v512
        %v2971 = vunpack.c.h.b16 %v512
        %v2972 = vunpack.c.l.b16 %v513
        %v2973 = vunpack.c.h.b16 %v513
        %v2974 = vunpack.c.l.b16 %v514
        %v2975 = vunpack.c.h.b16 %v514
        %v2976 = vunpack.c.l.b16 %v515
        %v2977 = vunpack.c.h.b16 %v515
        %v2978 = vunpack.c.l.b16 %v516
        %v2979 = vunpack.c.h.b16 %v516
        %v2980 = vunpack.c.l.b16 %v517
        %v2981 = vunpack.c.h.b16 %v517
        %v2982 = vunpack.c.l.b16 %v518
        %v2983 = vunpack.c.h.b16 %v518
        %v2984 = vunpack.c.l.b16 %v519
        %v2985 = vunpack.c.h.b16 %v519
        %v2986 = vunpack.c.l.b16 %v520
        %v2987 = vunpack.c.h.b16 %v520
        %v2988 = vunpack.c.l.b16 %v521
        %v2989 = vunpack.c.h.b16 %v521
        %v2990 = vunpack.c.l.b16 %v522
        %v2991 = vunpack.c.h.b16 %v522
        %v2992 = vunpack.c.l.b16 %v523
        %v2993 = vunpack.c.h.b16 %v523
        %v2994 = vunpack.c.l.b16 %v524
        %v2995 = vunpack.c.h.b16 %v524
        %v2996 = vunpack.c.l.b16 %v525
        %v2997 = vunpack.c.h.b16 %v525
        %v2998 = vunpack.c.l.b16 %v526
        %v2999 = vunpack.c.h.b16 %v526
        %v3000 = vunpack.c.l.b16 %v527
        %v3001 = vunpack.c.h.b16 %v527
        %v3002 = vunpack.c.l.b16 %v528
        %v3003 = vunpack.c.h.b16 %v528
        %v3004 = vunpack.c.l.b16 %v529
        %v3005 = vunpack.c.h.b16 %v529
        %v3006 = vunpack.c.l.b16 %v530
        %v3007 = vunpack.c.h.b16 %v530
        %v3008 = vunpack.c.l.b16 %v531
        %v3009 = vunpack.c.h.b16 %v531
        %v3010 = vunpack.c.l.b16 %v532
        %v3011 = vunpack.c.h.b16 %v532
        %v3012 = vunpack.c.l.b16 %v533
        %v3013 = vunpack.c.h.b16 %v533
        %v3014 = vunpack.c.l.b16 %v534
        %v3015 = vunpack.c.h.b16 %v534
        %v3016 = vunpack.c.l.b16 %v535
        %v3017 = vunpack.c.h.b16 %v535
        %v3018 = vunpack.c.l.b16 %v536
        %v3019 = vunpack.c.h.b16 %v536
        %v3020 = vunpack.c.l.b16 %v537
        %v3021 = vunpack.c.h.b16 %v537
        %v3022 = vunpack.c.l.b16 %v538
        %v3023 = vunpack.c.h.b16 %v538
        %v3024 = vunpack.c.l.b16 %v539
        %v3025 = vunpack.c.h.b16 %v539
        %v3026 = vunpack.c.l.b16 %v540
        %v3027 = vunpack.c.h.b16 %v540
        %v3028 = vunpack.c.l.b16 %v541
        %v3029 = vunpack.c.h.b16 %v541
        %v3030 = vunpack.c.l.b16 %v542
        %v3031 = vunpack.c.h.b16 %v542
        %v3032 = vunpack.c.l.b16 %v543
        %v3033 = vunpack.c.h.b16 %v543
        %v3034 = vunpack.c.l.b16 %v544
        %v3035 = vunpack.c.h.b16 %v544
        %v3036 = vunpack.c.l.b16 %v545
        %v3037 = vunpack.c.h.b16 %v545
        %v3038 = vunpack.c.l.b16 %v546
        %v3039 = vunpack.c.h.b16 %v546
        %v3040 = vunpack.c.l.b16 %v547
        %v3041 = vunpack.c.h.b16 %v547
        %v3042 = vunpack.c.l.b16 %v548
        %v3043 = vunpack.c.h.b16 %v548
        %v3044 = vunpack.c.l.b16 %v549
        %v3045 = vunpack.c.h.b16 %v549
        %v3046 = vunpack.c.l.b16 %v550
        %v3047 = vunpack.c.h.b16 %v550
        %v3048 = vunpack.c.l.b16 %v551
        %v3049 = vunpack.c.h.b16 %v551
        %v3050 = vunpack.c.l.b16 %v552
        %v3051 = vunpack.c.h.b16 %v552
        %v3052 = vunpack.c.l.b16 %v553
        %v3053 = vunpack.c.h.b16 %v553
        %v3054 = vunpack.c.l.b16 %v554
        %v3055 = vunpack.c.h.b16 %v554
        %v3056 = vunpack.c.l.b16 %v555
        %v3057 = vunpack.c.h.b16 %v555
        %v3058 = vunpack.c.l.b16 %v556
        %v3059 = vunpack.c.h.b16 %v556
        %v3060 = vunpack.c.l.b16 %v557
        %v3061 = vunpack.c.h.b16 %v557
        %v3062 = vunpack.c.l.b16 %v558
        %v3063 = vunpack.c.h.b16 %v558
        %v3064 = vunpack.c.l.b16 %v559
        %v3065 = vunpack.c.h.b16 %v559
        %v3066 = vunpack.c.l.b16 %v560
        %v3067 = vunpack.c.h.b16 %v560
        %v3068 = vunpack.c.l.b16 %v561
        %v3069 = vunpack.c.h.b16 %v561
        %v3070 = vunpack.c.l.b16 %v562
        %v3071 = vunpack.c.h.b16 %v562
        %v3072 = vunpack.c.l.b16 %v563
        %v3073 = vunpack.c.h.b16 %v563
        %v3074 = vunpack.c.l.b16 %v564
        %v3075 = vunpack.c.h.b16 %v564
        %v3076 = vunpack.c.l.b16 %v565
        %v3077 = vunpack.c.h.b16 %v565
        %v3078 = vunpack.c.l.b16 %v566
        %v3079 = vunpack.c.h.b16 %v566
        %v3080 = vunpack.c.l.b16 %v567
        %v3081 = vunpack.c.h.b16 %v567
        %v3082 = vunpack.c.l.b16 %v568
        %v3083 = vunpack.c.h.b16 %v568
        %v3084 = vunpack.c.l.b16 %v569
        %v3085 = vunpack.c.h.b16 %v569
        %v3086 = vunpack.c.l.b16 %v570
        %v3087 = vunpack.c.h.b16 %v570
        %v3088 = vunpack.c.l.b16 %v571
        %v3089 = vunpack.c.h.b16 %v571
        %v3090 = vunpack.c.l.b16 %v572
        %v3091 = vunpack.c.h.b16 %v572
        %v3092 = vunpack.c.l.b16 %v573
        %v3093 = vunpack.c.h.b16 %v573
        %v3094 = vunpack.c.l.b16 %v574
        %v3095 = vunpack.c.h.b16 %v574
        %v3096 = vunpack.c.l.b16 %v575
        %v3097 = vunpack.c.h.b16 %v575
        %v3098 = vunpack.c.l.b16 %v576
        %v3099 = vunpack.c.h.b16 %v576
        %v3100 = vunpack.c.l.b16 %v577
        %v3101 = vunpack.c.h.b16 %v577
        %v3102 = vunpack.c.l.b16 %v578
        %v3103 = vunpack.c.h.b16 %v578
        %v3104 = vunpack.c.l.b16 %v579
        %v3105 = vunpack.c.h.b16 %v579
        %v3106 = vunpack.c.l.b16 %v580
        %v3107 = vunpack.c.h.b16 %v580
        %v3108 = vunpack.c.l.b16 %v581
        %v3109 = vunpack.c.h.b16 %v581
        %v3110 = vunpack.c.l.b16 %v582
        %v3111 = vunpack.c.h.b16 %v582
        %v3112 = vunpack.c.l.b16 %v583
        %v3113 = vunpack.c.h.b16 %v583
        %v3114 = vunpack.c.l.b16 %v584
        %v3115 = vunpack.c.h.b16 %v584
        %v3116 = vunpack.c.l.b16 %v585
        %v3117 = vunpack.c.h.b16 %v585
        %v3118 = vunpack.c.l.b16 %v586
        %v3119 = vunpack.c.h.b16 %v586
        %v3120 = vunpack.c.l.b16 %v587
        %v3121 = vunpack.c.h.b16 %v587
        %v3122 = vunpack.c.l.b16 %v588
        %v3123 = vunpack.c.h.b16 %v588
        %v3124 = vunpack.c.l.b16 %v589
        %v3125 = vunpack.c.h.b16 %v589
        %v3126 = vunpack.c.l.b16 %v590
        %v3127 = vunpack.c.h.b16 %v590
        %v3128 = vunpack.c.l.b16 %v591
        %v3129 = vunpack.c.h.b16 %v591
        %v3130 = vunpack.c.l.b16 %v592
        %v3131 = vunpack.c.h.b16 %v592
        %v3132 = vunpack.c.l.b16 %v593
        %v3133 = vunpack.c.h.b16 %v593
        %v3134 = vunpack.c.l.b16 %v594
        %v3135 = vunpack.c.h.b16 %v594
        %v3136 = vunpack.c.l.b16 %v595
        %v3137 = vunpack.c.h.b16 %v595
        %v3138 = vunpack.c.l.b16 %v596
        %v3139 = vunpack.c.h.b16 %v596
        %v3140 = vunpack.c.l.b16 %v597
        %v3141 = vunpack.c.h.b16 %v597
        %v3142 = vunpack.c.l.b16 %v598
        %v3143 = vunpack.c.h.b16 %v598
        %v3144 = vunpack.c.l.b16 %v599
        %v3145 = vunpack.c.h.b16 %v599
        %v3146 = vunpack.c.l.b16 %v600
        %v3147 = vunpack.c.h.b16 %v600
        %v3148 = vunpack.c.l.b16 %v601
        %v3149 = vunpack.c.h.b16 %v601
        %v3150 = vpack.c.b16 %v2864, %v2862
        %v3151 = vpack.c.b16 %v2865, %v2863
        %v3152 = vpack.c.b16 %v2868, %v2866
        %v3153 = vpack.c.b16 %v2869, %v2867
        %v3154 = vpack.c.b16 %v2872, %v2870
        %v3155 = vpack.c.b16 %v2873, %v2871
        %v3156 = vpack.c.b16 %v2876, %v2874
        %v3157 = vpack.c.b16 %v2877, %v2875
        %v3158 = vpack.c.b16 %v2880, %v2878
        %v3159 = vpack.c.b16 %v2881, %v2879
        %v3160 = vpack.c.b16 %v2884, %v2882
        %v3161 = vpack.c.b16 %v2885, %v2883
        %v3162 = vpack.c.b16 %v2888, %v2886
        %v3163 = vpack.c.b16 %v2889, %v2887
        %v3164 = vpack.c.b16 %v2892, %v2890
        %v3165 = vpack.c.b16 %v2893, %v2891
        %v3166 = vpack.c.b16 %v2896, %v2894
        %v3167 = vpack.c.b16 %v2897, %v2895
        %v3168 = vpack.c.b16 %v2900, %v2898
        %v3169 = vpack.c.b16 %v2901, %v2899
        %v3170 = vpack.c.b16 %v2904, %v2902
        %v3171 = vpack.c.b16 %v2905, %v2903
        %v3172 = vpack.c.b16 %v2908, %v2906
        %v3173 = vpack.c.b16 %v2909, %v2907
        %v3174 = vpack.c.b16 %v2912, %v2910
        %v3175 = vpack.c.b16 %v2913, %v2911
        %v3176 = vpack.c.b16 %v2916, %v2914
        %v3177 = vpack.c.b16 %v2917, %v2915
        %v3178 = vpack.c.b16 %v2920, %v2918
        %v3179 = vpack.c.b16 %v2921, %v2919
        %v3180 = vpack.c.b16 %v2924, %v2922
        %v3181 = vpack.c.b16 %v2925, %v2923
        %v3182 = vpack.c.b16 %v2928, %v2926
        %v3183 = vpack.c.b16 %v2929, %v2927
        %v3184 = vpack.c.b16 %v2932, %v2930
        %v3185 = vpack.c.b16 %v2933, %v2931
        %v3186 = vpack.c.b16 %v2936, %v2934
        %v3187 = vpack.c.b16 %v2937, %v2935
        %v3188 = vpack.c.b16 %v2940, %v2938
        %v3189 = vpack.c.b16 %v2941, %v2939
        %v3190 = vpack.c.b16 %v2944, %v2942
        %v3191 = vpack.c.b16 %v2945, %v2943
        %v3192 = vpack.c.b16 %v2948, %v2946
        %v3193 = vpack.c.b16 %v2949, %v2947
        %v3194 = vpack.c.b16 %v2952, %v2950
        %v3195 = vpack.c.b16 %v2953, %v2951
        %v3196 = vpack.c.b16 %v2956, %v2954
        %v3197 = vpack.c.b16 %v2957, %v2955
        %v3198 = vpack.c.b16 %v2960, %v2958
        %v3199 = vpack.c.b16 %v2961, %v2959
        %v3200 = vpack.c.b16 %v2964, %v2962
        %v3201 = vpack.c.b16 %v2965, %v2963
        %v3202 = vpack.c.b16 %v2968, %v2966
        %v3203 = vpack.c.b16 %v2969, %v2967
        %v3204 = vpack.c.b16 %v2972, %v2970
        %v3205 = vpack.c.b16 %v2973, %v2971
        %v3206 = vpack.c.b16 %v2976, %v2974
        %v3207 = vpack.c.b16 %v2977, %v2975
        %v3208 = vpack.c.b16 %v2980, %v2978
        %v3209 = vpack.c.b16 %v2981, %v2979
        %v3210 = vpack.c.b16 %v2984, %v2982
        %v3211 = vpack.c.b16 %v2985, %v2983
        %v3212 = vpack.c.b16 %v2988, %v2986
        %v3213 = vpack.c.b16 %v2989, %v2987
        %v3214 = vpack.c.b16 %v2992, %v2990
        %v3215 = vpack.c.b16 %v2993, %v2991
        %v3216 = vpack.c.b16 %v2996, %v2994
        %v3217 = vpack.c.b16 %v2997, %v2995
        %v3218 = vpack.c.b16 %v3000, %v2998
        %v3219 = vpack.c.b16 %v3001, %v2999
        %v3220 = vpack.c.b16 %v3004, %v3002
        %v3221 = vpack.c.b16 %v3005, %v3003
        %v3222 = vpack.c.b16 %v3008, %v3006
        %v3223 = vpack.c.b16 %v3009, %v3007
        %v3224 = vpack.c.b16 %v3012, %v3010
        %v3225 = vpack.c.b16 %v3013, %v3011
        %v3226 = vpack.c.b16 %v3016, %v3014
        %v3227 = vpack.c.b16 %v3017, %v3015
        %v3228 = vpack.c.b16 %v3020, %v3018
        %v3229 = vpack.c.b16 %v3021, %v3019
        %v3230 = vpack.c.b16 %v3024, %v3022
        %v3231 = vpack.c.b16 %v3025, %v3023
        %v3232 = vpack.c.b16 %v3028, %v3026
        %v3233 = vpack.c.b16 %v3029, %v3027
        %v3234 = vpack.c.b16 %v3032, %v3030
        %v3235 = vpack.c.b16 %v3033, %v3031
        %v3236 = vpack.c.b16 %v3036, %v3034
        %v3237 = vpack.c.b16 %v3037, %v3035
        %v3238 = vpack.c.b16 %v3040, %v3038
        %v3239 = vpack.c.b16 %v3041, %v3039
        %v3240 = vpack.c.b16 %v3044, %v3042
        %v3241 = vpack.c.b16 %v3045, %v3043
        %v3242 = vpack.c.b16 %v3048, %v3046
        %v3243 = vpack.c.b16 %v3049, %v3047
        %v3244 = vpack.c.b16 %v3052, %v3050
        %v3245 = vpack.c.b16 %v3053, %v3051
        %v3246 = vpack.c.b16 %v3056, %v3054
        %v3247 = vpack.c.b16 %v3057, %v3055
        %v3248 = vpack.c.b16 %v3060, %v3058
        %v3249 = vpack.c.b16 %v3061, %v3059
        %v3250 = vpack.c.b16 %v3064, %v3062
        %v3251 = vpack.c.b16 %v3065, %v3063
        %v3252 = vpack.c.b16 %v3068, %v3066
        %v3253 = vpack.c.b16 %v3069, %v3067
        %v3254 = vpack.c.b16 %v3072, %v3070
        %v3255 = vpack.c.b16 %v3073, %v3071
        %v3256 = vpack.c.b16 %v3076, %v3074
        %v3257 = vpack.c.b16 %v3077, %v3075
        %v3258 = vpack.c.b16 %v3080, %v3078
        %v3259 = vpack.c.b16 %v3081, %v3079
        %v3260 = vpack.c.b16 %v3084, %v3082
        %v3261 = vpack.c.b16 %v3085, %v3083
        %v3262 = vpack.c.b16 %v3088, %v3086
        %v3263 = vpack.c.b16 %v3089, %v3087
        %v3264 = vpack.c.b16 %v3092, %v3090
        %v3265 = vpack.c.b16 %v3093, %v3091
        %v3266 = vpack.c.b16 %v3096, %v3094
        %v3267 = vpack.c.b16 %v3097, %v3095
        %v3268 = vpack.c.b16 %v3100, %v3098
        %v3269 = vpack.c.b16 %v3101, %v3099
        %v3270 = vpack.c.b16 %v3104, %v3102
        %v3271 = vpack.c.b16 %v3105, %v3103
        %v3272 = vpack.c.b16 %v3108, %v3106
        %v3273 = vpack.c.b16 %v3109, %v3107
        %v3274 = vpack.c.b16 %v3112, %v3110
        %v3275 = vpack.c.b16 %v3113, %v3111
        %v3276 = vpack.c.b16 %v3116, %v3114
        %v3277 = vpack.c.b16 %v3117, %v3115
        %v3278 = vpack.c.b16 %v3120, %v3118
        %v3279 = vpack.c.b16 %v3121, %v3119
        %v3280 = vpack.c.b16 %v3124, %v3122
        %v3281 = vpack.c.b16 %v3125, %v3123
        %v3282 = vpack.c.b16 %v3128, %v3126
        %v3283 = vpack.c.b16 %v3129, %v3127
        %v3284 = vpack.c.b16 %v3132, %v3130
        %v3285 = vpack.c.b16 %v3133, %v3131
        %v3286 = vpack.c.b16 %v3136, %v3134
        %v3287 = vpack.c.b16 %v3137, %v3135
        %v3288 = vpack.c.b16 %v3140, %v3138
        %v3289 = vpack.c.b16 %v3141, %v3139
        %v3290 = vpack.c.b16 %v3144, %v3142
        %v3291 = vpack.c.b16 %v3145, %v3143
        %v3292 = vpack.c.b16 %v3148, %v3146
        %v3293 = vpack.c.b16 %v3149, %v3147
        %3438 = vmatpush.bf16.msra.mxu0 %v3164
        %3439 = vmatpush.bf16.msra.mxu0 %v3162
        %3440 = vmatpush.bf16.msra.mxu0 %v3160
        %3441 = vmatpush.bf16.msra.mxu0 %v3158
        %3442 = vmatpush.bf16.msra.mxu0 %v3156
        %3443 = vmatpush.bf16.msra.mxu0 %v3154
        %3444 = vmatpush.bf16.msra.mxu0 %v3152
        %3445 = vmatpush.bf16.msra.mxu0 %v3150
        %3446 = vmatmul.bf16.gmra.mxu0 %v2709
        %v3447 = vpop.f32.mrf.mxu0
        %v3448 = vadd.f32 0.0, %v3447
        %v3449 = vpop.f32.mrf.mxu0
        %3450 = vdwg.mxu0
        %3451 = vmatpush.bf16.msra.mxu0 %v3180
        %3452 = vmatpush.bf16.msra.mxu0 %v3178
        %3453 = vmatpush.bf16.msra.mxu0 %v3176
        %3454 = vmatpush.bf16.msra.mxu0 %v3174
        %3455 = vmatpush.bf16.msra.mxu0 %v3172
        %3456 = vmatpush.bf16.msra.mxu0 %v3170
        %3457 = vmatpush.bf16.msra.mxu0 %v3168
        %3458 = vmatpush.bf16.msra.mxu0 %v3166
        %3459 = vmatmul.bf16.gmra.mxu0 %v2710
        %v3460 = vpop.f32.mrf.mxu0
        %v3461 = vadd.f32 %v3448, %v3460
        %v3462 = vpop.f32.mrf.mxu0
        %3463 = vdwg.mxu0
        %3464 = vmatpush.bf16.msra.mxu0 %v3196
        %3465 = vmatpush.bf16.msra.mxu0 %v3194
        %3466 = vmatpush.bf16.msra.mxu0 %v3192
        %3467 = vmatpush.bf16.msra.mxu0 %v3190
        %3468 = vmatpush.bf16.msra.mxu0 %v3188
        %3469 = vmatpush.bf16.msra.mxu0 %v3186
        %3470 = vmatpush.bf16.msra.mxu0 %v3184
        %3471 = vmatpush.bf16.msra.mxu0 %v3182
        %3472 = vmatmul.bf16.gmra.mxu0 %v2711
        %v3473 = vpop.f32.mrf.mxu0
        %v3474 = vadd.f32 %v3461, %v3473
        %v3475 = vpop.f32.mrf.mxu0
        %3476 = vdwg.mxu0
        %3477 = vmatpush.bf16.msra.mxu0 %v3212
        %3478 = vmatpush.bf16.msra.mxu0 %v3210
        %3479 = vmatpush.bf16.msra.mxu0 %v3208
        %3480 = vmatpush.bf16.msra.mxu0 %v3206
        %3481 = vmatpush.bf16.msra.mxu0 %v3204
        %3482 = vmatpush.bf16.msra.mxu0 %v3202
        %3483 = vmatpush.bf16.msra.mxu0 %v3200
        %3484 = vmatpush.bf16.msra.mxu0 %v3198
        %3485 = vmatmul.bf16.gmra.mxu0 %v2712
        %v3486 = vpop.f32.mrf.mxu0
        %v3487 = vadd.f32 %v3474, %v3486
        %v3488 = vpop.f32.mrf.mxu0
        %3489 = vdwg.mxu0
        %3490 = vmatpush.bf16.msra.mxu0 %v3228
        %3491 = vmatpush.bf16.msra.mxu0 %v3226
        %3492 = vmatpush.bf16.msra.mxu0 %v3224
        %3493 = vmatpush.bf16.msra.mxu0 %v3222
        %3494 = vmatpush.bf16.msra.mxu0 %v3220
        %3495 = vmatpush.bf16.msra.mxu0 %v3218
        %3496 = vmatpush.bf16.msra.mxu0 %v3216
        %3497 = vmatpush.bf16.msra.mxu0 %v3214
        %3498 = vmatmul.bf16.gmra.mxu0 %v2713
        %v3499 = vpop.f32.mrf.mxu0
        %v3500 = vadd.f32 %v3487, %v3499
        %v3501 = vpop.f32.mrf.mxu0
        %3502 = vdwg.mxu0
        %3503 = vmatpush.bf16.msra.mxu0 %v3244
        %3504 = vmatpush.bf16.msra.mxu0 %v3242
        %3505 = vmatpush.bf16.msra.mxu0 %v3240
        %3506 = vmatpush.bf16.msra.mxu0 %v3238
        %3507 = vmatpush.bf16.msra.mxu0 %v3236
        %3508 = vmatpush.bf16.msra.mxu0 %v3234
        %3509 = vmatpush.bf16.msra.mxu0 %v3232
        %3510 = vmatpush.bf16.msra.mxu0 %v3230
        %3511 = vmatmul.bf16.gmra.mxu0 %v2714
        %v3512 = vpop.f32.mrf.mxu0
        %v3513 = vadd.f32 %v3500, %v3512
        %v3514 = vpop.f32.mrf.mxu0
        %3515 = vdwg.mxu0
        %3516 = vmatpush.bf16.msra.mxu0 %v3260
        %3517 = vmatpush.bf16.msra.mxu0 %v3258
        %3518 = vmatpush.bf16.msra.mxu0 %v3256
        %3519 = vmatpush.bf16.msra.mxu0 %v3254
        %3520 = vmatpush.bf16.msra.mxu0 %v3252
        %3521 = vmatpush.bf16.msra.mxu0 %v3250
        %3522 = vmatpush.bf16.msra.mxu0 %v3248
        %3523 = vmatpush.bf16.msra.mxu0 %v3246
        %3524 = vmatmul.bf16.gmra.mxu0 %v2715
        %v3525 = vpop.f32.mrf.mxu0
        %v3526 = vadd.f32 %v3513, %v3525
        %v3527 = vpop.f32.mrf.mxu0
        %3528 = vdwg.mxu0
        %3529 = vmatpush.bf16.msra.mxu0 %v3276
        %3530 = vmatpush.bf16.msra.mxu0 %v3274
        %3531 = vmatpush.bf16.msra.mxu0 %v3272
        %3532 = vmatpush.bf16.msra.mxu0 %v3270
        %3533 = vmatpush.bf16.msra.mxu0 %v3268
        %3534 = vmatpush.bf16.msra.mxu0 %v3266
        %3535 = vmatpush.bf16.msra.mxu0 %v3264
        %3536 = vmatpush.bf16.msra.mxu0 %v3262
        %3537 = vmatmul.bf16.gmra.mxu0 %v2716
        %v3538 = vpop.f32.mrf.mxu0
        %v3539 = vadd.f32 %v3526, %v3538
        %v3540 = vpop.f32.mrf.mxu0
        %3541 = vdwg.mxu0
        %3542 = vmatpush.bf16.msra.mxu0 %v3292
        %3543 = vmatpush.bf16.msra.mxu0 %v3290
        %3544 = vmatpush.bf16.msra.mxu0 %v3288
        %3545 = vmatpush.bf16.msra.mxu0 %v3286
        %3546 = vmatpush.bf16.msra.mxu0 %v3284
        %3547 = vmatpush.bf16.msra.mxu0 %v3282
        %3548 = vmatpush.bf16.msra.mxu0 %v3280
        %3549 = vmatpush.bf16.msra.mxu0 %v3278
        %3550 = vmatmul.bf16.gmra.mxu0 %v2717
        %v3551 = vpop.f32.mrf.mxu0
        %v3552 = vadd.f32 %v3539, %v3551
        %v3553 = vpop.f32.mrf.mxu0
        %3554 = vdwg.mxu0
        %3555 = vmatpush.bf16.msra.mxu0 %v3165
        %3556 = vmatpush.bf16.msra.mxu0 %v3163
        %3557 = vmatpush.bf16.msra.mxu0 %v3161
        %3558 = vmatpush.bf16.msra.mxu0 %v3159
        %3559 = vmatpush.bf16.msra.mxu0 %v3157
        %3560 = vmatpush.bf16.msra.mxu0 %v3155
        %3561 = vmatpush.bf16.msra.mxu0 %v3153
        %3562 = vmatpush.bf16.msra.mxu0 %v3151
        %3563 = vmatmul.bf16.gmra.mxu0 %v2709
        %v3564 = vpop.f32.mrf.mxu0
        %v3565 = vadd.f32 0.0, %v3564
        %v3566 = vpop.f32.mrf.mxu0
        %3567 = vdwg.mxu0
        %3568 = vmatpush.bf16.msra.mxu0 %v3181
        %3569 = vmatpush.bf16.msra.mxu0 %v3179
        %3570 = vmatpush.bf16.msra.mxu0 %v3177
        %3571 = vmatpush.bf16.msra.mxu0 %v3175
        %3572 = vmatpush.bf16.msra.mxu0 %v3173
        %3573 = vmatpush.bf16.msra.mxu0 %v3171
        %3574 = vmatpush.bf16.msra.mxu0 %v3169
        %3575 = vmatpush.bf16.msra.mxu0 %v3167
        %3576 = vmatmul.bf16.gmra.mxu0 %v2710
        %v3577 = vpop.f32.mrf.mxu0
        %v3578 = vadd.f32 %v3565, %v3577
        %v3579 = vpop.f32.mrf.mxu0
        %3580 = vdwg.mxu0
        %3581 = vmatpush.bf16.msra.mxu0 %v3197
        %3582 = vmatpush.bf16.msra.mxu0 %v3195
        %3583 = vmatpush.bf16.msra.mxu0 %v3193
        %3584 = vmatpush.bf16.msra.mxu0 %v3191
        %3585 = vmatpush.bf16.msra.mxu0 %v3189
        %3586 = vmatpush.bf16.msra.mxu0 %v3187
        %3587 = vmatpush.bf16.msra.mxu0 %v3185
        %3588 = vmatpush.bf16.msra.mxu0 %v3183
        %3589 = vmatmul.bf16.gmra.mxu0 %v2711
        %v3590 = vpop.f32.mrf.mxu0
        %v3591 = vadd.f32 %v3578, %v3590
        %v3592 = vpop.f32.mrf.mxu0
        %3593 = vdwg.mxu0
        %3594 = vmatpush.bf16.msra.mxu0 %v3213
        %3595 = vmatpush.bf16.msra.mxu0 %v3211
        %3596 = vmatpush.bf16.msra.mxu0 %v3209
        %3597 = vmatpush.bf16.msra.mxu0 %v3207
        %3598 = vmatpush.bf16.msra.mxu0 %v3205
        %3599 = vmatpush.bf16.msra.mxu0 %v3203
        %3600 = vmatpush.bf16.msra.mxu0 %v3201
        %3601 = vmatpush.bf16.msra.mxu0 %v3199
        %3602 = vmatmul.bf16.gmra.mxu0 %v2712
        %v3603 = vpop.f32.mrf.mxu0
        %v3604 = vadd.f32 %v3591, %v3603
        %v3605 = vpop.f32.mrf.mxu0
        %3606 = vdwg.mxu0
        %3607 = vmatpush.bf16.msra.mxu0 %v3229
        %3608 = vmatpush.bf16.msra.mxu0 %v3227
        %3609 = vmatpush.bf16.msra.mxu0 %v3225
        %3610 = vmatpush.bf16.msra.mxu0 %v3223
        %3611 = vmatpush.bf16.msra.mxu0 %v3221
        %3612 = vmatpush.bf16.msra.mxu0 %v3219
        %3613 = vmatpush.bf16.msra.mxu0 %v3217
        %3614 = vmatpush.bf16.msra.mxu0 %v3215
        %3615 = vmatmul.bf16.gmra.mxu0 %v2713
        %v3616 = vpop.f32.mrf.mxu0
        %v3617 = vadd.f32 %v3604, %v3616
        %v3618 = vpop.f32.mrf.mxu0
        %3619 = vdwg.mxu0
        %3620 = vmatpush.bf16.msra.mxu0 %v3245
        %3621 = vmatpush.bf16.msra.mxu0 %v3243
        %3622 = vmatpush.bf16.msra.mxu0 %v3241
        %3623 = vmatpush.bf16.msra.mxu0 %v3239
        %3624 = vmatpush.bf16.msra.mxu0 %v3237
        %3625 = vmatpush.bf16.msra.mxu0 %v3235
        %3626 = vmatpush.bf16.msra.mxu0 %v3233
        %3627 = vmatpush.bf16.msra.mxu0 %v3231
        %3628 = vmatmul.bf16.gmra.mxu0 %v2714
        %v3629 = vpop.f32.mrf.mxu0
        %v3630 = vadd.f32 %v3617, %v3629
        %v3631 = vpop.f32.mrf.mxu0
        %3632 = vdwg.mxu0
        %3633 = vmatpush.bf16.msra.mxu0 %v3261
        %3634 = vmatpush.bf16.msra.mxu0 %v3259
        %3635 = vmatpush.bf16.msra.mxu0 %v3257
        %3636 = vmatpush.bf16.msra.mxu0 %v3255
        %3637 = vmatpush.bf16.msra.mxu0 %v3253
        %3638 = vmatpush.bf16.msra.mxu0 %v3251
        %3639 = vmatpush.bf16.msra.mxu0 %v3249
        %3640 = vmatpush.bf16.msra.mxu0 %v3247
        %3641 = vmatmul.bf16.gmra.mxu0 %v2715
        %v3642 = vpop.f32.mrf.mxu0
        %v3643 = vadd.f32 %v3630, %v3642
        %v3644 = vpop.f32.mrf.mxu0
        %3645 = vdwg.mxu0
        %3646 = vmatpush.bf16.msra.mxu0 %v3277
        %3647 = vmatpush.bf16.msra.mxu0 %v3275
        %3648 = vmatpush.bf16.msra.mxu0 %v3273
        %3649 = vmatpush.bf16.msra.mxu0 %v3271
        %3650 = vmatpush.bf16.msra.mxu0 %v3269
        %3651 = vmatpush.bf16.msra.mxu0 %v3267
        %3652 = vmatpush.bf16.msra.mxu0 %v3265
        %3653 = vmatpush.bf16.msra.mxu0 %v3263
        %3654 = vmatmul.bf16.gmra.mxu0 %v2716
        %v3655 = vpop.f32.mrf.mxu0
        %v3656 = vadd.f32 %v3643, %v3655
        %v3657 = vpop.f32.mrf.mxu0
        %3658 = vdwg.mxu0
        %3659 = vmatpush.bf16.msra.mxu0 %v3293
        %3660 = vmatpush.bf16.msra.mxu0 %v3291
        %3661 = vmatpush.bf16.msra.mxu0 %v3289
        %3662 = vmatpush.bf16.msra.mxu0 %v3287
        %3663 = vmatpush.bf16.msra.mxu0 %v3285
        %3664 = vmatpush.bf16.msra.mxu0 %v3283
        %3665 = vmatpush.bf16.msra.mxu0 %v3281
        %3666 = vmatpush.bf16.msra.mxu0 %v3279
        %3667 = vmatmul.bf16.gmra.mxu0 %v2717
        %v3668 = vpop.f32.mrf.mxu0
        %v3669 = vadd.f32 %v3656, %v3668
        %v3670 = vpop.f32.mrf.mxu0
        %3671 = vdwg.mxu0
        %v3672 = vld [vmem:[%s2123] sm:$0xf]
        %v3673 = vld [vmem:[%s2123 + $0x1] sm:$0xf]
        %v3674 = vld [vmem:[%s2123 + $0x2] sm:$0xf]
        %v3675 = vpack.c.bf16 %v3672, %v3672
        %v3676 = vpack.c.bf16 %v3673, %v3673
        %v3677 = vpack.c.bf16 %v3674, %v3674
        %3678 = vmatpush.bf16.msra.mxu0 %v3164
        %3679 = vmatpush.bf16.msra.mxu0 %v3162
        %3680 = vmatpush.bf16.msra.mxu0 %v3160
        %3681 = vmatpush.bf16.msra.mxu0 %v3158
        %3682 = vmatpush.bf16.msra.mxu0 %v3156
        %3683 = vmatpush.bf16.msra.mxu0 %v3154
        %3684 = vmatpush.bf16.msra.mxu0 %v3152
        %3685 = vmatpush.bf16.msra.mxu0 %v3150
        %3686 = vmatmul.bf16.gmra.mxu0 %v2712
        %v3687 = vpop.f32.mrf.mxu0
        %v3688 = vadd.f32 0.0, %v3687
        %v3689 = vpop.f32.mrf.mxu0
        %3690 = vdwg.mxu0
        %3691 = vmatpush.bf16.msra.mxu0 %v3180
        %3692 = vmatpush.bf16.msra.mxu0 %v3178
        %3693 = vmatpush.bf16.msra.mxu0 %v3176
        %3694 = vmatpush.bf16.msra.mxu0 %v3174
        %3695 = vmatpush.bf16.msra.mxu0 %v3172
        %3696 = vmatpush.bf16.msra.mxu0 %v3170
        %3697 = vmatpush.bf16.msra.mxu0 %v3168
        %3698 = vmatpush.bf16.msra.mxu0 %v3166
        %3699 = vmatmul.bf16.gmra.mxu0 %v2713
        %v3700 = vpop.f32.mrf.mxu0
        %v3701 = vadd.f32 %v3688, %v3700
        %v3702 = vpop.f32.mrf.mxu0
        %3703 = vdwg.mxu0
        %3704 = vmatpush.bf16.msra.mxu0 %v3196
        %3705 = vmatpush.bf16.msra.mxu0 %v3194
        %3706 = vmatpush.bf16.msra.mxu0 %v3192
        %3707 = vmatpush.bf16.msra.mxu0 %v3190
        %3708 = vmatpush.bf16.msra.mxu0 %v3188
        %3709 = vmatpush.bf16.msra.mxu0 %v3186
        %3710 = vmatpush.bf16.msra.mxu0 %v3184
        %3711 = vmatpush.bf16.msra.mxu0 %v3182
        %3712 = vmatmul.bf16.gmra.mxu0 %v2714
        %v3713 = vpop.f32.mrf.mxu0
        %v3714 = vadd.f32 %v3701, %v3713
        %v3715 = vpop.f32.mrf.mxu0
        %3716 = vdwg.mxu0
        %3717 = vmatpush.bf16.msra.mxu0 %v3212
        %3718 = vmatpush.bf16.msra.mxu0 %v3210
        %3719 = vmatpush.bf16.msra.mxu0 %v3208
        %3720 = vmatpush.bf16.msra.mxu0 %v3206
        %3721 = vmatpush.bf16.msra.mxu0 %v3204
        %3722 = vmatpush.bf16.msra.mxu0 %v3202
        %3723 = vmatpush.bf16.msra.mxu0 %v3200
        %3724 = vmatpush.bf16.msra.mxu0 %v3198
        %3725 = vmatmul.bf16.gmra.mxu0 %v2715
        %v3726 = vpop.f32.mrf.mxu0
        %v3727 = vadd.f32 %v3714, %v3726
        %v3728 = vpop.f32.mrf.mxu0
        %3729 = vdwg.mxu0
        %3730 = vmatpush.bf16.msra.mxu0 %v3228
        %3731 = vmatpush.bf16.msra.mxu0 %v3226
        %3732 = vmatpush.bf16.msra.mxu0 %v3224
        %3733 = vmatpush.bf16.msra.mxu0 %v3222
        %3734 = vmatpush.bf16.msra.mxu0 %v3220
        %3735 = vmatpush.bf16.msra.mxu0 %v3218
        %3736 = vmatpush.bf16.msra.mxu0 %v3216
        %3737 = vmatpush.bf16.msra.mxu0 %v3214
        %3738 = vmatmul.bf16.gmra.mxu0 %v2716
        %v3739 = vpop.f32.mrf.mxu0
        %v3740 = vadd.f32 %v3727, %v3739
        %v3741 = vpop.f32.mrf.mxu0
        %3742 = vdwg.mxu0
        %3743 = vmatpush.bf16.msra.mxu0 %v3244
        %3744 = vmatpush.bf16.msra.mxu0 %v3242
        %3745 = vmatpush.bf16.msra.mxu0 %v3240
        %3746 = vmatpush.bf16.msra.mxu0 %v3238
        %3747 = vmatpush.bf16.msra.mxu0 %v3236
        %3748 = vmatpush.bf16.msra.mxu0 %v3234
        %3749 = vmatpush.bf16.msra.mxu0 %v3232
        %3750 = vmatpush.bf16.msra.mxu0 %v3230
        %3751 = vmatmul.bf16.gmra.mxu0 %v2717
        %v3752 = vpop.f32.mrf.mxu0
        %v3753 = vadd.f32 %v3740, %v3752
        %v3754 = vpop.f32.mrf.mxu0
        %3755 = vdwg.mxu0
        %3756 = vmatpush.bf16.msra.mxu0 %v3260
        %3757 = vmatpush.bf16.msra.mxu0 %v3258
        %3758 = vmatpush.bf16.msra.mxu0 %v3256
        %3759 = vmatpush.bf16.msra.mxu0 %v3254
        %3760 = vmatpush.bf16.msra.mxu0 %v3252
        %3761 = vmatpush.bf16.msra.mxu0 %v3250
        %3762 = vmatpush.bf16.msra.mxu0 %v3248
        %3763 = vmatpush.bf16.msra.mxu0 %v3246
        %3764 = vmatmul.bf16.gmra.mxu0 %v3675
        %v3765 = vpop.f32.mrf.mxu0
        %v3766 = vadd.f32 %v3753, %v3765
        %v3767 = vpop.f32.mrf.mxu0
        %3768 = vdwg.mxu0
        %3769 = vmatpush.bf16.msra.mxu0 %v3276
        %3770 = vmatpush.bf16.msra.mxu0 %v3274
        %3771 = vmatpush.bf16.msra.mxu0 %v3272
        %3772 = vmatpush.bf16.msra.mxu0 %v3270
        %3773 = vmatpush.bf16.msra.mxu0 %v3268
        %3774 = vmatpush.bf16.msra.mxu0 %v3266
        %3775 = vmatpush.bf16.msra.mxu0 %v3264
        %3776 = vmatpush.bf16.msra.mxu0 %v3262
        %3777 = vmatmul.bf16.gmra.mxu0 %v3676
        %v3778 = vpop.f32.mrf.mxu0
        %v3779 = vadd.f32 %v3766, %v3778
        %v3780 = vpop.f32.mrf.mxu0
        %3781 = vdwg.mxu0
        %3782 = vmatpush.bf16.msra.mxu0 %v3292
        %3783 = vmatpush.bf16.msra.mxu0 %v3290
        %3784 = vmatpush.bf16.msra.mxu0 %v3288
        %3785 = vmatpush.bf16.msra.mxu0 %v3286
        %3786 = vmatpush.bf16.msra.mxu0 %v3284
        %3787 = vmatpush.bf16.msra.mxu0 %v3282
        %3788 = vmatpush.bf16.msra.mxu0 %v3280
        %3789 = vmatpush.bf16.msra.mxu0 %v3278
        %3790 = vmatmul.bf16.gmra.mxu0 %v3677
        %v3791 = vpop.f32.mrf.mxu0
        %v3792 = vadd.f32 %v3779, %v3791
        %v3793 = vpop.f32.mrf.mxu0
        %3794 = vdwg.mxu0
        %3795 = vmatpush.bf16.msra.mxu0 %v3165
        %3796 = vmatpush.bf16.msra.mxu0 %v3163
        %3797 = vmatpush.bf16.msra.mxu0 %v3161
        %3798 = vmatpush.bf16.msra.mxu0 %v3159
        %3799 = vmatpush.bf16.msra.mxu0 %v3157
        %3800 = vmatpush.bf16.msra.mxu0 %v3155
        %3801 = vmatpush.bf16.msra.mxu0 %v3153
        %3802 = vmatpush.bf16.msra.mxu0 %v3151
        %3803 = vmatmul.bf16.gmra.mxu0 %v2712
        %v3804 = vpop.f32.mrf.mxu0
        %v3805 = vadd.f32 0.0, %v3804
        %v3806 = vpop.f32.mrf.mxu0
        %3807 = vdwg.mxu0
        %3808 = vmatpush.bf16.msra.mxu0 %v3181
        %3809 = vmatpush.bf16.msra.mxu0 %v3179
        %3810 = vmatpush.bf16.msra.mxu0 %v3177
        %3811 = vmatpush.bf16.msra.mxu0 %v3175
        %3812 = vmatpush.bf16.msra.mxu0 %v3173
        %3813 = vmatpush.bf16.msra.mxu0 %v3171
        %3814 = vmatpush.bf16.msra.mxu0 %v3169
        %3815 = vmatpush.bf16.msra.mxu0 %v3167
        %3816 = vmatmul.bf16.gmra.mxu0 %v2713
        %v3817 = vpop.f32.mrf.mxu0
        %v3818 = vadd.f32 %v3805, %v3817
        %v3819 = vpop.f32.mrf.mxu0
        %3820 = vdwg.mxu0
        %3821 = vmatpush.bf16.msra.mxu0 %v3197
        %3822 = vmatpush.bf16.msra.mxu0 %v3195
        %3823 = vmatpush.bf16.msra.mxu0 %v3193
        %3824 = vmatpush.bf16.msra.mxu0 %v3191
        %3825 = vmatpush.bf16.msra.mxu0 %v3189
        %3826 = vmatpush.bf16.msra.mxu0 %v3187
        %3827 = vmatpush.bf16.msra.mxu0 %v3185
        %3828 = vmatpush.bf16.msra.mxu0 %v3183
        %3829 = vmatmul.bf16.gmra.mxu0 %v2714
        %v3830 = vpop.f32.mrf.mxu0
        %v3831 = vadd.f32 %v3818, %v3830
        %v3832 = vpop.f32.mrf.mxu0
        %3833 = vdwg.mxu0
        %3834 = vmatpush.bf16.msra.mxu0 %v3213
        %3835 = vmatpush.bf16.msra.mxu0 %v3211
        %3836 = vmatpush.bf16.msra.mxu0 %v3209
        %3837 = vmatpush.bf16.msra.mxu0 %v3207
        %3838 = vmatpush.bf16.msra.mxu0 %v3205
        %3839 = vmatpush.bf16.msra.mxu0 %v3203
        %3840 = vmatpush.bf16.msra.mxu0 %v3201
        %3841 = vmatpush.bf16.msra.mxu0 %v3199
        %3842 = vmatmul.bf16.gmra.mxu0 %v2715
        %v3843 = vpop.f32.mrf.mxu0
        %v3844 = vadd.f32 %v3831, %v3843
        %v3845 = vpop.f32.mrf.mxu0
        %3846 = vdwg.mxu0
        %3847 = vmatpush.bf16.msra.mxu0 %v3229
        %3848 = vmatpush.bf16.msra.mxu0 %v3227
        %3849 = vmatpush.bf16.msra.mxu0 %v3225
        %3850 = vmatpush.bf16.msra.mxu0 %v3223
        %3851 = vmatpush.bf16.msra.mxu0 %v3221
        %3852 = vmatpush.bf16.msra.mxu0 %v3219
        %3853 = vmatpush.bf16.msra.mxu0 %v3217
        %3854 = vmatpush.bf16.msra.mxu0 %v3215
        %3855 = vmatmul.bf16.gmra.mxu0 %v2716
        %v3856 = vpop.f32.mrf.mxu0
        %v3857 = vadd.f32 %v3844, %v3856
        %v3858 = vpop.f32.mrf.mxu0
        %3859 = vdwg.mxu0
        %3860 = vmatpush.bf16.msra.mxu0 %v3245
        %3861 = vmatpush.bf16.msra.mxu0 %v3243
        %3862 = vmatpush.bf16.msra.mxu0 %v3241
        %3863 = vmatpush.bf16.msra.mxu0 %v3239
        %3864 = vmatpush.bf16.msra.mxu0 %v3237
        %3865 = vmatpush.bf16.msra.mxu0 %v3235
        %3866 = vmatpush.bf16.msra.mxu0 %v3233
        %3867 = vmatpush.bf16.msra.mxu0 %v3231
        %3868 = vmatmul.bf16.gmra.mxu0 %v2717
        %v3869 = vpop.f32.mrf.mxu0
        %v3870 = vadd.f32 %v3857, %v3869
        %v3871 = vpop.f32.mrf.mxu0
        %3872 = vdwg.mxu0
        %3873 = vmatpush.bf16.msra.mxu0 %v3261
        %3874 = vmatpush.bf16.msra.mxu0 %v3259
        %3875 = vmatpush.bf16.msra.mxu0 %v3257
        %3876 = vmatpush.bf16.msra.mxu0 %v3255
        %3877 = vmatpush.bf16.msra.mxu0 %v3253
        %3878 = vmatpush.bf16.msra.mxu0 %v3251
        %3879 = vmatpush.bf16.msra.mxu0 %v3249
        %3880 = vmatpush.bf16.msra.mxu0 %v3247
        %3881 = vmatmul.bf16.gmra.mxu0 %v3675
        %v3882 = vpop.f32.mrf.mxu0
        %v3883 = vadd.f32 %v3870, %v3882
        %v3884 = vpop.f32.mrf.mxu0
        %3885 = vdwg.mxu0
        %3886 = vmatpush.bf16.msra.mxu0 %v3277
        %3887 = vmatpush.bf16.msra.mxu0 %v3275
        %3888 = vmatpush.bf16.msra.mxu0 %v3273
        %3889 = vmatpush.bf16.msra.mxu0 %v3271
        %3890 = vmatpush.bf16.msra.mxu0 %v3269
        %3891 = vmatpush.bf16.msra.mxu0 %v3267
        %3892 = vmatpush.bf16.msra.mxu0 %v3265
        %3893 = vmatpush.bf16.msra.mxu0 %v3263
        %3894 = vmatmul.bf16.gmra.mxu0 %v3676
        %v3895 = vpop.f32.mrf.mxu0
        %v3896 = vadd.f32 %v3883, %v3895
        %v3897 = vpop.f32.mrf.mxu0
        %3898 = vdwg.mxu0
        %3899 = vmatpush.bf16.msra.mxu0 %v3293
        %3900 = vmatpush.bf16.msra.mxu0 %v3291
        %3901 = vmatpush.bf16.msra.mxu0 %v3289
        %3902 = vmatpush.bf16.msra.mxu0 %v3287
        %3903 = vmatpush.bf16.msra.mxu0 %v3285
        %3904 = vmatpush.bf16.msra.mxu0 %v3283
        %3905 = vmatpush.bf16.msra.mxu0 %v3281
        %3906 = vmatpush.bf16.msra.mxu0 %v3279
        %3907 = vmatmul.bf16.gmra.mxu0 %v3677
        %v3908 = vpop.f32.mrf.mxu0
        %v3909 = vadd.f32 %v3896, %v3908
        %v3910 = vpop.f32.mrf.mxu0
        %3911 = vdwg.mxu0
        %v3912 = vmax.f32 %v3552, %v3792
        %v3913 = vmax.f32 %v3669, %v3909
        %v3915 = vperm.slane %v602, 0
        %v3916 = vperm.slane %v602, 1
        %v3919 = vadd.f32 %v3912, %v3915
        %v3920 = vadd.f32 %v3913, %v3916
        %v3921 = vmax.f32 %v3919, 0.0
        %v3922 = vmax.f32 %v3920, 0.0
        %v3925 = vrot.slane %v3921, 1
        %v3926 = vrot.slane %v3922, 1
        %v3929 = vmax.f32 %v3921, %v3925
        %v3930 = vmax.f32 %v3922, %v3926
        %v3931 = vld [vmem:[%s2406] sm:$0xf]
        %v3932 = vld [vmem:[%s2406 + $0x1] sm:$0xf]
        %v3933 = vld [vmem:[%s2406 + $0x2] sm:$0xf]
        %v3934 = vpack.c.bf16 %v3931, %v3931
        %v3935 = vpack.c.bf16 %v3932, %v3932
        %v3936 = vpack.c.bf16 %v3933, %v3933
        %3937 = vmatpush.bf16.msra.mxu0 %v3164
        %3938 = vmatpush.bf16.msra.mxu0 %v3162
        %3939 = vmatpush.bf16.msra.mxu0 %v3160
        %3940 = vmatpush.bf16.msra.mxu0 %v3158
        %3941 = vmatpush.bf16.msra.mxu0 %v3156
        %3942 = vmatpush.bf16.msra.mxu0 %v3154
        %3943 = vmatpush.bf16.msra.mxu0 %v3152
        %3944 = vmatpush.bf16.msra.mxu0 %v3150
        %3945 = vmatmul.bf16.gmra.mxu0 %v2715
        %v3946 = vpop.f32.mrf.mxu0
        %v3947 = vadd.f32 0.0, %v3946
        %v3948 = vpop.f32.mrf.mxu0
        %3949 = vdwg.mxu0
        %3950 = vmatpush.bf16.msra.mxu0 %v3180
        %3951 = vmatpush.bf16.msra.mxu0 %v3178
        %3952 = vmatpush.bf16.msra.mxu0 %v3176
        %3953 = vmatpush.bf16.msra.mxu0 %v3174
        %3954 = vmatpush.bf16.msra.mxu0 %v3172
        %3955 = vmatpush.bf16.msra.mxu0 %v3170
        %3956 = vmatpush.bf16.msra.mxu0 %v3168
        %3957 = vmatpush.bf16.msra.mxu0 %v3166
        %3958 = vmatmul.bf16.gmra.mxu0 %v2716
        %v3959 = vpop.f32.mrf.mxu0
        %v3960 = vadd.f32 %v3947, %v3959
        %v3961 = vpop.f32.mrf.mxu0
        %3962 = vdwg.mxu0
        %3963 = vmatpush.bf16.msra.mxu0 %v3196
        %3964 = vmatpush.bf16.msra.mxu0 %v3194
        %3965 = vmatpush.bf16.msra.mxu0 %v3192
        %3966 = vmatpush.bf16.msra.mxu0 %v3190
        %3967 = vmatpush.bf16.msra.mxu0 %v3188
        %3968 = vmatpush.bf16.msra.mxu0 %v3186
        %3969 = vmatpush.bf16.msra.mxu0 %v3184
        %3970 = vmatpush.bf16.msra.mxu0 %v3182
        %3971 = vmatmul.bf16.gmra.mxu0 %v2717
        %v3972 = vpop.f32.mrf.mxu0
        %v3973 = vadd.f32 %v3960, %v3972
        %v3974 = vpop.f32.mrf.mxu0
        %3975 = vdwg.mxu0
        %3976 = vmatpush.bf16.msra.mxu0 %v3212
        %3977 = vmatpush.bf16.msra.mxu0 %v3210
        %3978 = vmatpush.bf16.msra.mxu0 %v3208
        %3979 = vmatpush.bf16.msra.mxu0 %v3206
        %3980 = vmatpush.bf16.msra.mxu0 %v3204
        %3981 = vmatpush.bf16.msra.mxu0 %v3202
        %3982 = vmatpush.bf16.msra.mxu0 %v3200
        %3983 = vmatpush.bf16.msra.mxu0 %v3198
        %3984 = vmatmul.bf16.gmra.mxu0 %v3675
        %v3985 = vpop.f32.mrf.mxu0
        %v3986 = vadd.f32 %v3973, %v3985
        %v3987 = vpop.f32.mrf.mxu0
        %3988 = vdwg.mxu0
        %3989 = vmatpush.bf16.msra.mxu0 %v3228
        %3990 = vmatpush.bf16.msra.mxu0 %v3226
        %3991 = vmatpush.bf16.msra.mxu0 %v3224
        %3992 = vmatpush.bf16.msra.mxu0 %v3222
        %3993 = vmatpush.bf16.msra.mxu0 %v3220
        %3994 = vmatpush.bf16.msra.mxu0 %v3218
        %3995 = vmatpush.bf16.msra.mxu0 %v3216
        %3996 = vmatpush.bf16.msra.mxu0 %v3214
        %3997 = vmatmul.bf16.gmra.mxu0 %v3676
        %v3998 = vpop.f32.mrf.mxu0
        %v3999 = vadd.f32 %v3986, %v3998
        %v4000 = vpop.f32.mrf.mxu0
        %4001 = vdwg.mxu0
        %4002 = vmatpush.bf16.msra.mxu0 %v3244
        %4003 = vmatpush.bf16.msra.mxu0 %v3242
        %4004 = vmatpush.bf16.msra.mxu0 %v3240
        %4005 = vmatpush.bf16.msra.mxu0 %v3238
        %4006 = vmatpush.bf16.msra.mxu0 %v3236
        %4007 = vmatpush.bf16.msra.mxu0 %v3234
        %4008 = vmatpush.bf16.msra.mxu0 %v3232
        %4009 = vmatpush.bf16.msra.mxu0 %v3230
        %4010 = vmatmul.bf16.gmra.mxu0 %v3677
        %v4011 = vpop.f32.mrf.mxu0
        %v4012 = vadd.f32 %v3999, %v4011
        %v4013 = vpop.f32.mrf.mxu0
        %4014 = vdwg.mxu0
        %4015 = vmatpush.bf16.msra.mxu0 %v3260
        %4016 = vmatpush.bf16.msra.mxu0 %v3258
        %4017 = vmatpush.bf16.msra.mxu0 %v3256
        %4018 = vmatpush.bf16.msra.mxu0 %v3254
        %4019 = vmatpush.bf16.msra.mxu0 %v3252
        %4020 = vmatpush.bf16.msra.mxu0 %v3250
        %4021 = vmatpush.bf16.msra.mxu0 %v3248
        %4022 = vmatpush.bf16.msra.mxu0 %v3246
        %4023 = vmatmul.bf16.gmra.mxu0 %v3934
        %v4024 = vpop.f32.mrf.mxu0
        %v4025 = vadd.f32 %v4012, %v4024
        %v4026 = vpop.f32.mrf.mxu0
        %4027 = vdwg.mxu0
        %4028 = vmatpush.bf16.msra.mxu0 %v3276
        %4029 = vmatpush.bf16.msra.mxu0 %v3274
        %4030 = vmatpush.bf16.msra.mxu0 %v3272
        %4031 = vmatpush.bf16.msra.mxu0 %v3270
        %4032 = vmatpush.bf16.msra.mxu0 %v3268
        %4033 = vmatpush.bf16.msra.mxu0 %v3266
        %4034 = vmatpush.bf16.msra.mxu0 %v3264
        %4035 = vmatpush.bf16.msra.mxu0 %v3262
        %4036 = vmatmul.bf16.gmra.mxu0 %v3935
        %v4037 = vpop.f32.mrf.mxu0
        %v4038 = vadd.f32 %v4025, %v4037
        %v4039 = vpop.f32.mrf.mxu0
        %4040 = vdwg.mxu0
        %4041 = vmatpush.bf16.msra.mxu0 %v3292
        %4042 = vmatpush.bf16.msra.mxu0 %v3290
        %4043 = vmatpush.bf16.msra.mxu0 %v3288
        %4044 = vmatpush.bf16.msra.mxu0 %v3286
        %4045 = vmatpush.bf16.msra.mxu0 %v3284
        %4046 = vmatpush.bf16.msra.mxu0 %v3282
        %4047 = vmatpush.bf16.msra.mxu0 %v3280
        %4048 = vmatpush.bf16.msra.mxu0 %v3278
        %4049 = vmatmul.bf16.gmra.mxu0 %v3936
        %v4050 = vpop.f32.mrf.mxu0
        %v4051 = vadd.f32 %v4038, %v4050
        %v4052 = vpop.f32.mrf.mxu0
        %4053 = vdwg.mxu0
        %4054 = vmatpush.bf16.msra.mxu0 %v3165
        %4055 = vmatpush.bf16.msra.mxu0 %v3163
        %4056 = vmatpush.bf16.msra.mxu0 %v3161
        %4057 = vmatpush.bf16.msra.mxu0 %v3159
        %4058 = vmatpush.bf16.msra.mxu0 %v3157
        %4059 = vmatpush.bf16.msra.mxu0 %v3155
        %4060 = vmatpush.bf16.msra.mxu0 %v3153
        %4061 = vmatpush.bf16.msra.mxu0 %v3151
        %4062 = vmatmul.bf16.gmra.mxu0 %v2715
        %v4063 = vpop.f32.mrf.mxu0
        %v4064 = vadd.f32 0.0, %v4063
        %v4065 = vpop.f32.mrf.mxu0
        %4066 = vdwg.mxu0
        %4067 = vmatpush.bf16.msra.mxu0 %v3181
        %4068 = vmatpush.bf16.msra.mxu0 %v3179
        %4069 = vmatpush.bf16.msra.mxu0 %v3177
        %4070 = vmatpush.bf16.msra.mxu0 %v3175
        %4071 = vmatpush.bf16.msra.mxu0 %v3173
        %4072 = vmatpush.bf16.msra.mxu0 %v3171
        %4073 = vmatpush.bf16.msra.mxu0 %v3169
        %4074 = vmatpush.bf16.msra.mxu0 %v3167
        %4075 = vmatmul.bf16.gmra.mxu0 %v2716
        %v4076 = vpop.f32.mrf.mxu0
        %v4077 = vadd.f32 %v4064, %v4076
        %v4078 = vpop.f32.mrf.mxu0
        %4079 = vdwg.mxu0
        %4080 = vmatpush.bf16.msra.mxu0 %v3197
        %4081 = vmatpush.bf16.msra.mxu0 %v3195
        %4082 = vmatpush.bf16.msra.mxu0 %v3193
        %4083 = vmatpush.bf16.msra.mxu0 %v3191
        %4084 = vmatpush.bf16.msra.mxu0 %v3189
        %4085 = vmatpush.bf16.msra.mxu0 %v3187
        %4086 = vmatpush.bf16.msra.mxu0 %v3185
        %4087 = vmatpush.bf16.msra.mxu0 %v3183
        %4088 = vmatmul.bf16.gmra.mxu0 %v2717
        %v4089 = vpop.f32.mrf.mxu0
        %v4090 = vadd.f32 %v4077, %v4089
        %v4091 = vpop.f32.mrf.mxu0
        %4092 = vdwg.mxu0
        %4093 = vmatpush.bf16.msra.mxu0 %v3213
        %4094 = vmatpush.bf16.msra.mxu0 %v3211
        %4095 = vmatpush.bf16.msra.mxu0 %v3209
        %4096 = vmatpush.bf16.msra.mxu0 %v3207
        %4097 = vmatpush.bf16.msra.mxu0 %v3205
        %4098 = vmatpush.bf16.msra.mxu0 %v3203
        %4099 = vmatpush.bf16.msra.mxu0 %v3201
        %4100 = vmatpush.bf16.msra.mxu0 %v3199
        %4101 = vmatmul.bf16.gmra.mxu0 %v3675
        %v4102 = vpop.f32.mrf.mxu0
        %v4103 = vadd.f32 %v4090, %v4102
        %v4104 = vpop.f32.mrf.mxu0
        %4105 = vdwg.mxu0
        %4106 = vmatpush.bf16.msra.mxu0 %v3229
        %4107 = vmatpush.bf16.msra.mxu0 %v3227
        %4108 = vmatpush.bf16.msra.mxu0 %v3225
        %4109 = vmatpush.bf16.msra.mxu0 %v3223
        %4110 = vmatpush.bf16.msra.mxu0 %v3221
        %4111 = vmatpush.bf16.msra.mxu0 %v3219
        %4112 = vmatpush.bf16.msra.mxu0 %v3217
        %4113 = vmatpush.bf16.msra.mxu0 %v3215
        %4114 = vmatmul.bf16.gmra.mxu0 %v3676
        %v4115 = vpop.f32.mrf.mxu0
        %v4116 = vadd.f32 %v4103, %v4115
        %v4117 = vpop.f32.mrf.mxu0
        %4118 = vdwg.mxu0
        %4119 = vmatpush.bf16.msra.mxu0 %v3245
        %4120 = vmatpush.bf16.msra.mxu0 %v3243
        %4121 = vmatpush.bf16.msra.mxu0 %v3241
        %4122 = vmatpush.bf16.msra.mxu0 %v3239
        %4123 = vmatpush.bf16.msra.mxu0 %v3237
        %4124 = vmatpush.bf16.msra.mxu0 %v3235
        %4125 = vmatpush.bf16.msra.mxu0 %v3233
        %4126 = vmatpush.bf16.msra.mxu0 %v3231
        %4127 = vmatmul.bf16.gmra.mxu0 %v3677
        %v4128 = vpop.f32.mrf.mxu0
        %v4129 = vadd.f32 %v4116, %v4128
        %v4130 = vpop.f32.mrf.mxu0
        %4131 = vdwg.mxu0
        %4132 = vmatpush.bf16.msra.mxu0 %v3261
        %4133 = vmatpush.bf16.msra.mxu0 %v3259
        %4134 = vmatpush.bf16.msra.mxu0 %v3257
        %4135 = vmatpush.bf16.msra.mxu0 %v3255
        %4136 = vmatpush.bf16.msra.mxu0 %v3253
        %4137 = vmatpush.bf16.msra.mxu0 %v3251
        %4138 = vmatpush.bf16.msra.mxu0 %v3249
        %4139 = vmatpush.bf16.msra.mxu0 %v3247
        %4140 = vmatmul.bf16.gmra.mxu0 %v3934
        %v4141 = vpop.f32.mrf.mxu0
        %v4142 = vadd.f32 %v4129, %v4141
        %v4143 = vpop.f32.mrf.mxu0
        %4144 = vdwg.mxu0
        %4145 = vmatpush.bf16.msra.mxu0 %v3277
        %4146 = vmatpush.bf16.msra.mxu0 %v3275
        %4147 = vmatpush.bf16.msra.mxu0 %v3273
        %4148 = vmatpush.bf16.msra.mxu0 %v3271
        %4149 = vmatpush.bf16.msra.mxu0 %v3269
        %4150 = vmatpush.bf16.msra.mxu0 %v3267
        %4151 = vmatpush.bf16.msra.mxu0 %v3265
        %4152 = vmatpush.bf16.msra.mxu0 %v3263
        %4153 = vmatmul.bf16.gmra.mxu0 %v3935
        %v4154 = vpop.f32.mrf.mxu0
        %v4155 = vadd.f32 %v4142, %v4154
        %v4156 = vpop.f32.mrf.mxu0
        %4157 = vdwg.mxu0
        %4158 = vmatpush.bf16.msra.mxu0 %v3293
        %4159 = vmatpush.bf16.msra.mxu0 %v3291
        %4160 = vmatpush.bf16.msra.mxu0 %v3289
        %4161 = vmatpush.bf16.msra.mxu0 %v3287
        %4162 = vmatpush.bf16.msra.mxu0 %v3285
        %4163 = vmatpush.bf16.msra.mxu0 %v3283
        %4164 = vmatpush.bf16.msra.mxu0 %v3281
        %4165 = vmatpush.bf16.msra.mxu0 %v3279
        %4166 = vmatmul.bf16.gmra.mxu0 %v3936
        %v4167 = vpop.f32.mrf.mxu0
        %v4168 = vadd.f32 %v4155, %v4167
        %v4169 = vpop.f32.mrf.mxu0
        %4170 = vdwg.mxu0
        %v4171 = vld [vmem:[%s2689] sm:$0xf]
        %v4172 = vld [vmem:[%s2689 + $0x1] sm:$0xf]
        %v4173 = vld [vmem:[%s2689 + $0x2] sm:$0xf]
        %v4174 = vpack.c.bf16 %v4171, %v4171
        %v4175 = vpack.c.bf16 %v4172, %v4172
        %v4176 = vpack.c.bf16 %v4173, %v4173
        %4177 = vmatpush.bf16.msra.mxu0 %v3164
        %4178 = vmatpush.bf16.msra.mxu0 %v3162
        %4179 = vmatpush.bf16.msra.mxu0 %v3160
        %4180 = vmatpush.bf16.msra.mxu0 %v3158
        %4181 = vmatpush.bf16.msra.mxu0 %v3156
        %4182 = vmatpush.bf16.msra.mxu0 %v3154
        %4183 = vmatpush.bf16.msra.mxu0 %v3152
        %4184 = vmatpush.bf16.msra.mxu0 %v3150
        %4185 = vmatmul.bf16.gmra.mxu0 %v3675
        %v4186 = vpop.f32.mrf.mxu0
        %v4187 = vadd.f32 0.0, %v4186
        %v4188 = vpop.f32.mrf.mxu0
        %4189 = vdwg.mxu0
        %4190 = vmatpush.bf16.msra.mxu0 %v3180
        %4191 = vmatpush.bf16.msra.mxu0 %v3178
        %4192 = vmatpush.bf16.msra.mxu0 %v3176
        %4193 = vmatpush.bf16.msra.mxu0 %v3174
        %4194 = vmatpush.bf16.msra.mxu0 %v3172
        %4195 = vmatpush.bf16.msra.mxu0 %v3170
        %4196 = vmatpush.bf16.msra.mxu0 %v3168
        %4197 = vmatpush.bf16.msra.mxu0 %v3166
        %4198 = vmatmul.bf16.gmra.mxu0 %v3676
        %v4199 = vpop.f32.mrf.mxu0
        %v4200 = vadd.f32 %v4187, %v4199
        %v4201 = vpop.f32.mrf.mxu0
        %4202 = vdwg.mxu0
        %4203 = vmatpush.bf16.msra.mxu0 %v3196
        %4204 = vmatpush.bf16.msra.mxu0 %v3194
        %4205 = vmatpush.bf16.msra.mxu0 %v3192
        %4206 = vmatpush.bf16.msra.mxu0 %v3190
        %4207 = vmatpush.bf16.msra.mxu0 %v3188
        %4208 = vmatpush.bf16.msra.mxu0 %v3186
        %4209 = vmatpush.bf16.msra.mxu0 %v3184
        %4210 = vmatpush.bf16.msra.mxu0 %v3182
        %4211 = vmatmul.bf16.gmra.mxu0 %v3677
        %v4212 = vpop.f32.mrf.mxu0
        %v4213 = vadd.f32 %v4200, %v4212
        %v4214 = vpop.f32.mrf.mxu0
        %4215 = vdwg.mxu0
        %4216 = vmatpush.bf16.msra.mxu0 %v3212
        %4217 = vmatpush.bf16.msra.mxu0 %v3210
        %4218 = vmatpush.bf16.msra.mxu0 %v3208
        %4219 = vmatpush.bf16.msra.mxu0 %v3206
        %4220 = vmatpush.bf16.msra.mxu0 %v3204
        %4221 = vmatpush.bf16.msra.mxu0 %v3202
        %4222 = vmatpush.bf16.msra.mxu0 %v3200
        %4223 = vmatpush.bf16.msra.mxu0 %v3198
        %4224 = vmatmul.bf16.gmra.mxu0 %v3934
        %v4225 = vpop.f32.mrf.mxu0
        %v4226 = vadd.f32 %v4213, %v4225
        %v4227 = vpop.f32.mrf.mxu0
        %4228 = vdwg.mxu0
        %4229 = vmatpush.bf16.msra.mxu0 %v3228
        %4230 = vmatpush.bf16.msra.mxu0 %v3226
        %4231 = vmatpush.bf16.msra.mxu0 %v3224
        %4232 = vmatpush.bf16.msra.mxu0 %v3222
        %4233 = vmatpush.bf16.msra.mxu0 %v3220
        %4234 = vmatpush.bf16.msra.mxu0 %v3218
        %4235 = vmatpush.bf16.msra.mxu0 %v3216
        %4236 = vmatpush.bf16.msra.mxu0 %v3214
        %4237 = vmatmul.bf16.gmra.mxu0 %v3935
        %v4238 = vpop.f32.mrf.mxu0
        %v4239 = vadd.f32 %v4226, %v4238
        %v4240 = vpop.f32.mrf.mxu0
        %4241 = vdwg.mxu0
        %4242 = vmatpush.bf16.msra.mxu0 %v3244
        %4243 = vmatpush.bf16.msra.mxu0 %v3242
        %4244 = vmatpush.bf16.msra.mxu0 %v3240
        %4245 = vmatpush.bf16.msra.mxu0 %v3238
        %4246 = vmatpush.bf16.msra.mxu0 %v3236
        %4247 = vmatpush.bf16.msra.mxu0 %v3234
        %4248 = vmatpush.bf16.msra.mxu0 %v3232
        %4249 = vmatpush.bf16.msra.mxu0 %v3230
        %4250 = vmatmul.bf16.gmra.mxu0 %v3936
        %v4251 = vpop.f32.mrf.mxu0
        %v4252 = vadd.f32 %v4239, %v4251
        %v4253 = vpop.f32.mrf.mxu0
        %4254 = vdwg.mxu0
        %4255 = vmatpush.bf16.msra.mxu0 %v3260
        %4256 = vmatpush.bf16.msra.mxu0 %v3258
        %4257 = vmatpush.bf16.msra.mxu0 %v3256
        %4258 = vmatpush.bf16.msra.mxu0 %v3254
        %4259 = vmatpush.bf16.msra.mxu0 %v3252
        %4260 = vmatpush.bf16.msra.mxu0 %v3250
        %4261 = vmatpush.bf16.msra.mxu0 %v3248
        %4262 = vmatpush.bf16.msra.mxu0 %v3246
        %4263 = vmatmul.bf16.gmra.mxu0 %v4174
        %v4264 = vpop.f32.mrf.mxu0
        %v4265 = vadd.f32 %v4252, %v4264
        %v4266 = vpop.f32.mrf.mxu0
        %4267 = vdwg.mxu0
        %4268 = vmatpush.bf16.msra.mxu0 %v3276
        %4269 = vmatpush.bf16.msra.mxu0 %v3274
        %4270 = vmatpush.bf16.msra.mxu0 %v3272
        %4271 = vmatpush.bf16.msra.mxu0 %v3270
        %4272 = vmatpush.bf16.msra.mxu0 %v3268
        %4273 = vmatpush.bf16.msra.mxu0 %v3266
        %4274 = vmatpush.bf16.msra.mxu0 %v3264
        %4275 = vmatpush.bf16.msra.mxu0 %v3262
        %4276 = vmatmul.bf16.gmra.mxu0 %v4175
        %v4277 = vpop.f32.mrf.mxu0
        %v4278 = vadd.f32 %v4265, %v4277
        %v4279 = vpop.f32.mrf.mxu0
        %4280 = vdwg.mxu0
        %4281 = vmatpush.bf16.msra.mxu0 %v3292
        %4282 = vmatpush.bf16.msra.mxu0 %v3290
        %4283 = vmatpush.bf16.msra.mxu0 %v3288
        %4284 = vmatpush.bf16.msra.mxu0 %v3286
        %4285 = vmatpush.bf16.msra.mxu0 %v3284
        %4286 = vmatpush.bf16.msra.mxu0 %v3282
        %4287 = vmatpush.bf16.msra.mxu0 %v3280
        %4288 = vmatpush.bf16.msra.mxu0 %v3278
        %4289 = vmatmul.bf16.gmra.mxu0 %v4176
        %v4290 = vpop.f32.mrf.mxu0
        %v4291 = vadd.f32 %v4278, %v4290
        %v4292 = vpop.f32.mrf.mxu0
        %4293 = vdwg.mxu0
        %4294 = vmatpush.bf16.msra.mxu0 %v3165
        %4295 = vmatpush.bf16.msra.mxu0 %v3163
        %4296 = vmatpush.bf16.msra.mxu0 %v3161
        %4297 = vmatpush.bf16.msra.mxu0 %v3159
        %4298 = vmatpush.bf16.msra.mxu0 %v3157
        %4299 = vmatpush.bf16.msra.mxu0 %v3155
        %4300 = vmatpush.bf16.msra.mxu0 %v3153
        %4301 = vmatpush.bf16.msra.mxu0 %v3151
        %4302 = vmatmul.bf16.gmra.mxu0 %v3675
        %v4303 = vpop.f32.mrf.mxu0
        %v4304 = vadd.f32 0.0, %v4303
        %v4305 = vpop.f32.mrf.mxu0
        %4306 = vdwg.mxu0
        %4307 = vmatpush.bf16.msra.mxu0 %v3181
        %4308 = vmatpush.bf16.msra.mxu0 %v3179
        %4309 = vmatpush.bf16.msra.mxu0 %v3177
        %4310 = vmatpush.bf16.msra.mxu0 %v3175
        %4311 = vmatpush.bf16.msra.mxu0 %v3173
        %4312 = vmatpush.bf16.msra.mxu0 %v3171
        %4313 = vmatpush.bf16.msra.mxu0 %v3169
        %4314 = vmatpush.bf16.msra.mxu0 %v3167
        %4315 = vmatmul.bf16.gmra.mxu0 %v3676
        %v4316 = vpop.f32.mrf.mxu0
        %v4317 = vadd.f32 %v4304, %v4316
        %v4318 = vpop.f32.mrf.mxu0
        %4319 = vdwg.mxu0
        %4320 = vmatpush.bf16.msra.mxu0 %v3197
        %4321 = vmatpush.bf16.msra.mxu0 %v3195
        %4322 = vmatpush.bf16.msra.mxu0 %v3193
        %4323 = vmatpush.bf16.msra.mxu0 %v3191
        %4324 = vmatpush.bf16.msra.mxu0 %v3189
        %4325 = vmatpush.bf16.msra.mxu0 %v3187
        %4326 = vmatpush.bf16.msra.mxu0 %v3185
        %4327 = vmatpush.bf16.msra.mxu0 %v3183
        %4328 = vmatmul.bf16.gmra.mxu0 %v3677
        %v4329 = vpop.f32.mrf.mxu0
        %v4330 = vadd.f32 %v4317, %v4329
        %v4331 = vpop.f32.mrf.mxu0
        %4332 = vdwg.mxu0
        %4333 = vmatpush.bf16.msra.mxu0 %v3213
        %4334 = vmatpush.bf16.msra.mxu0 %v3211
        %4335 = vmatpush.bf16.msra.mxu0 %v3209
        %4336 = vmatpush.bf16.msra.mxu0 %v3207
        %4337 = vmatpush.bf16.msra.mxu0 %v3205
        %4338 = vmatpush.bf16.msra.mxu0 %v3203
        %4339 = vmatpush.bf16.msra.mxu0 %v3201
        %4340 = vmatpush.bf16.msra.mxu0 %v3199
        %4341 = vmatmul.bf16.gmra.mxu0 %v3934
        %v4342 = vpop.f32.mrf.mxu0
        %v4343 = vadd.f32 %v4330, %v4342
        %v4344 = vpop.f32.mrf.mxu0
        %4345 = vdwg.mxu0
        %4346 = vmatpush.bf16.msra.mxu0 %v3229
        %4347 = vmatpush.bf16.msra.mxu0 %v3227
        %4348 = vmatpush.bf16.msra.mxu0 %v3225
        %4349 = vmatpush.bf16.msra.mxu0 %v3223
        %4350 = vmatpush.bf16.msra.mxu0 %v3221
        %4351 = vmatpush.bf16.msra.mxu0 %v3219
        %4352 = vmatpush.bf16.msra.mxu0 %v3217
        %4353 = vmatpush.bf16.msra.mxu0 %v3215
        %4354 = vmatmul.bf16.gmra.mxu0 %v3935
        %v4355 = vpop.f32.mrf.mxu0
        %v4356 = vadd.f32 %v4343, %v4355
        %v4357 = vpop.f32.mrf.mxu0
        %4358 = vdwg.mxu0
        %4359 = vmatpush.bf16.msra.mxu0 %v3245
        %4360 = vmatpush.bf16.msra.mxu0 %v3243
        %4361 = vmatpush.bf16.msra.mxu0 %v3241
        %4362 = vmatpush.bf16.msra.mxu0 %v3239
        %4363 = vmatpush.bf16.msra.mxu0 %v3237
        %4364 = vmatpush.bf16.msra.mxu0 %v3235
        %4365 = vmatpush.bf16.msra.mxu0 %v3233
        %4366 = vmatpush.bf16.msra.mxu0 %v3231
        %4367 = vmatmul.bf16.gmra.mxu0 %v3936
        %v4368 = vpop.f32.mrf.mxu0
        %v4369 = vadd.f32 %v4356, %v4368
        %v4370 = vpop.f32.mrf.mxu0
        %4371 = vdwg.mxu0
        %4372 = vmatpush.bf16.msra.mxu0 %v3261
        %4373 = vmatpush.bf16.msra.mxu0 %v3259
        %4374 = vmatpush.bf16.msra.mxu0 %v3257
        %4375 = vmatpush.bf16.msra.mxu0 %v3255
        %4376 = vmatpush.bf16.msra.mxu0 %v3253
        %4377 = vmatpush.bf16.msra.mxu0 %v3251
        %4378 = vmatpush.bf16.msra.mxu0 %v3249
        %4379 = vmatpush.bf16.msra.mxu0 %v3247
        %4380 = vmatmul.bf16.gmra.mxu0 %v4174
        %v4381 = vpop.f32.mrf.mxu0
        %v4382 = vadd.f32 %v4369, %v4381
        %v4383 = vpop.f32.mrf.mxu0
        %4384 = vdwg.mxu0
        %4385 = vmatpush.bf16.msra.mxu0 %v3277
        %4386 = vmatpush.bf16.msra.mxu0 %v3275
        %4387 = vmatpush.bf16.msra.mxu0 %v3273
        %4388 = vmatpush.bf16.msra.mxu0 %v3271
        %4389 = vmatpush.bf16.msra.mxu0 %v3269
        %4390 = vmatpush.bf16.msra.mxu0 %v3267
        %4391 = vmatpush.bf16.msra.mxu0 %v3265
        %4392 = vmatpush.bf16.msra.mxu0 %v3263
        %4393 = vmatmul.bf16.gmra.mxu0 %v4175
        %v4394 = vpop.f32.mrf.mxu0
        %v4395 = vadd.f32 %v4382, %v4394
        %v4396 = vpop.f32.mrf.mxu0
        %4397 = vdwg.mxu0
        %4398 = vmatpush.bf16.msra.mxu0 %v3293
        %4399 = vmatpush.bf16.msra.mxu0 %v3291
        %4400 = vmatpush.bf16.msra.mxu0 %v3289
        %4401 = vmatpush.bf16.msra.mxu0 %v3287
        %4402 = vmatpush.bf16.msra.mxu0 %v3285
        %4403 = vmatpush.bf16.msra.mxu0 %v3283
        %4404 = vmatpush.bf16.msra.mxu0 %v3281
        %4405 = vmatpush.bf16.msra.mxu0 %v3279
        %4406 = vmatmul.bf16.gmra.mxu0 %v4176
        %v4407 = vpop.f32.mrf.mxu0
        %v4408 = vadd.f32 %v4395, %v4407
        %v4409 = vpop.f32.mrf.mxu0
        %4410 = vdwg.mxu0
        %v4411 = vmax.f32 %v4051, %v4291
        %v4412 = vmax.f32 %v4168, %v4408
        %v4413 = vadd.f32 %v4411, %v3915
        %v4414 = vadd.f32 %v4412, %v3916
        %v4415 = vmax.f32 %v4413, 0.0
        %v4416 = vmax.f32 %v4414, 0.0
        %v4419 = vrot.slane %v4415, 1
        %v4420 = vrot.slane %v4416, 1
        %v4423 = vmax.f32 %v4415, %v4419
        %v4424 = vmax.f32 %v4416, %v4420
        %v4427 = vrot.slane %v3929, 2
        %v4428 = vrot.slane %v3930, 2
        %v4433 = vrot.slane %v4423, 2
        %v4434 = vrot.slane %v4424, 2
        %v4437 = vpack.c.bf16 %v3929, %v3929
        %v4438 = vpack.c.bf16 %v3930, %v3930
        %v4439 = vpack.c.bf16 %v4427, %v4427
        %v4440 = vpack.c.bf16 %v4428, %v4428
        %v4441 = vpack.c.bf16 %v4423, %v4423
        %v4442 = vpack.c.bf16 %v4424, %v4424
        %v4443 = vpack.c.bf16 %v4433, %v4433
        %v4444 = vpack.c.bf16 %v4434, %v4434
        %v4573 = vunpack.c.l.b16 %v603
        %v4574 = vunpack.c.l.b16 %v604
        %v4575 = vunpack.c.l.b16 %v605
        %v4576 = vunpack.c.l.b16 %v606
        %v4577 = vunpack.c.l.b16 %v607
        %v4578 = vunpack.c.l.b16 %v608
        %v4579 = vunpack.c.l.b16 %v609
        %v4580 = vunpack.c.l.b16 %v610
        %v4581 = vunpack.c.l.b16 %v611
        %v4582 = vunpack.c.l.b16 %v612
        %v4583 = vunpack.c.l.b16 %v613
        %v4584 = vunpack.c.l.b16 %v614
        %v4585 = vunpack.c.l.b16 %v615
        %v4586 = vunpack.c.l.b16 %v616
        %v4587 = vunpack.c.l.b16 %v617
        %v4588 = vunpack.c.l.b16 %v618
        %v4589 = vunpack.c.l.b16 %v619
        %v4590 = vunpack.c.l.b16 %v620
        %v4591 = vunpack.c.l.b16 %v621
        %v4592 = vunpack.c.l.b16 %v622
        %v4593 = vunpack.c.l.b16 %v623
        %v4594 = vunpack.c.l.b16 %v624
        %v4595 = vunpack.c.l.b16 %v625
        %v4596 = vunpack.c.l.b16 %v626
        %v4597 = vunpack.c.l.b16 %v627
        %v4598 = vunpack.c.l.b16 %v628
        %v4599 = vunpack.c.l.b16 %v629
        %v4600 = vunpack.c.l.b16 %v630
        %v4601 = vunpack.c.l.b16 %v631
        %v4602 = vunpack.c.l.b16 %v632
        %v4603 = vunpack.c.l.b16 %v633
        %v4604 = vunpack.c.l.b16 %v634
        %v4605 = vunpack.c.l.b16 %v635
        %v4606 = vunpack.c.l.b16 %v636
        %v4607 = vunpack.c.l.b16 %v637
        %v4608 = vunpack.c.l.b16 %v638
        %v4609 = vunpack.c.l.b16 %v639
        %v4610 = vunpack.c.l.b16 %v640
        %v4611 = vunpack.c.l.b16 %v641
        %v4612 = vunpack.c.l.b16 %v642
        %v4613 = vunpack.c.l.b16 %v643
        %v4614 = vunpack.c.l.b16 %v644
        %v4615 = vunpack.c.l.b16 %v645
        %v4616 = vunpack.c.l.b16 %v646
        %v4617 = vunpack.c.l.b16 %v647
        %v4618 = vunpack.c.l.b16 %v648
        %v4619 = vunpack.c.l.b16 %v649
        %v4620 = vunpack.c.l.b16 %v650
        %v4621 = vunpack.c.l.b16 %v651
        %v4622 = vunpack.c.l.b16 %v652
        %v4623 = vunpack.c.l.b16 %v653
        %v4624 = vunpack.c.l.b16 %v654
        %v4625 = vunpack.c.l.b16 %v655
        %v4626 = vunpack.c.l.b16 %v656
        %v4627 = vunpack.c.l.b16 %v657
        %v4628 = vunpack.c.l.b16 %v658
        %v4629 = vunpack.c.l.b16 %v659
        %v4630 = vunpack.c.l.b16 %v660
        %v4631 = vunpack.c.l.b16 %v661
        %v4632 = vunpack.c.l.b16 %v662
        %v4633 = vunpack.c.l.b16 %v663
        %v4634 = vunpack.c.l.b16 %v664
        %v4635 = vunpack.c.l.b16 %v665
        %v4636 = vunpack.c.l.b16 %v666
        %v4637 = vunpack.c.l.b16 %v667
        %v4638 = vunpack.c.l.b16 %v668
        %v4639 = vunpack.c.l.b16 %v669
        %v4640 = vunpack.c.l.b16 %v670
        %v4641 = vunpack.c.l.b16 %v671
        %v4642 = vunpack.c.l.b16 %v672
        %v4643 = vunpack.c.l.b16 %v673
        %v4644 = vunpack.c.l.b16 %v674
        %v4645 = vunpack.c.l.b16 %v675
        %v4646 = vunpack.c.l.b16 %v676
        %v4647 = vunpack.c.l.b16 %v677
        %v4648 = vunpack.c.l.b16 %v678
        %v4649 = vunpack.c.l.b16 %v679
        %v4650 = vunpack.c.l.b16 %v680
        %v4651 = vunpack.c.l.b16 %v681
        %v4652 = vunpack.c.l.b16 %v682
        %v4653 = vunpack.c.l.b16 %v683
        %v4654 = vunpack.c.l.b16 %v684
        %v4655 = vunpack.c.l.b16 %v685
        %v4656 = vunpack.c.l.b16 %v686
        %v4657 = vunpack.c.l.b16 %v687
        %v4658 = vunpack.c.l.b16 %v688
        %v4659 = vunpack.c.l.b16 %v689
        %v4660 = vunpack.c.l.b16 %v690
        %v4661 = vunpack.c.l.b16 %v691
        %v4662 = vunpack.c.l.b16 %v692
        %v4663 = vunpack.c.l.b16 %v693
        %v4664 = vunpack.c.l.b16 %v694
        %v4665 = vunpack.c.l.b16 %v695
        %v4666 = vunpack.c.l.b16 %v696
        %v4667 = vunpack.c.l.b16 %v697
        %v4668 = vunpack.c.l.b16 %v698
        %v4669 = vunpack.c.l.b16 %v699
        %v4670 = vunpack.c.l.b16 %v700
        %v4671 = vunpack.c.l.b16 %v701
        %v4672 = vunpack.c.l.b16 %v702
        %v4673 = vunpack.c.l.b16 %v703
        %v4674 = vunpack.c.l.b16 %v704
        %v4675 = vunpack.c.l.b16 %v705
        %v4676 = vunpack.c.l.b16 %v706
        %v4677 = vunpack.c.l.b16 %v707
        %v4678 = vunpack.c.l.b16 %v708
        %v4679 = vunpack.c.l.b16 %v709
        %v4680 = vunpack.c.l.b16 %v710
        %v4681 = vunpack.c.l.b16 %v711
        %v4682 = vunpack.c.l.b16 %v712
        %v4683 = vunpack.c.l.b16 %v713
        %v4684 = vunpack.c.l.b16 %v714
        %v4685 = vunpack.c.l.b16 %v715
        %v4686 = vunpack.c.l.b16 %v716
        %v4687 = vunpack.c.l.b16 %v717
        %v4688 = vunpack.c.l.b16 %v718
        %v4689 = vunpack.c.l.b16 %v719
        %v4690 = vunpack.c.l.b16 %v720
        %v4691 = vunpack.c.l.b16 %v721
        %v4692 = vunpack.c.l.b16 %v722
        %v4693 = vunpack.c.l.b16 %v723
        %v4694 = vunpack.c.l.b16 %v724
        %v4695 = vunpack.c.l.b16 %v725
        %v4696 = vunpack.c.l.b16 %v726
        %v4697 = vunpack.c.l.b16 %v727
        %v4698 = vunpack.c.l.b16 %v728
        %v4699 = vunpack.c.l.b16 %v729
        %v4700 = vunpack.c.l.b16 %v730
        %v4701 = vpack.c.b16 %v4574, %v4573
        %v4702 = vpack.c.b16 %v4576, %v4575
        %v4703 = vpack.c.b16 %v4578, %v4577
        %v4704 = vpack.c.b16 %v4580, %v4579
        %v4705 = vpack.c.b16 %v4582, %v4581
        %v4706 = vpack.c.b16 %v4584, %v4583
        %v4707 = vpack.c.b16 %v4586, %v4585
        %v4708 = vpack.c.b16 %v4588, %v4587
        %v4709 = vpack.c.b16 %v4590, %v4589
        %v4710 = vpack.c.b16 %v4592, %v4591
        %v4711 = vpack.c.b16 %v4594, %v4593
        %v4712 = vpack.c.b16 %v4596, %v4595
        %v4713 = vpack.c.b16 %v4598, %v4597
        %v4714 = vpack.c.b16 %v4600, %v4599
        %v4715 = vpack.c.b16 %v4602, %v4601
        %v4716 = vpack.c.b16 %v4604, %v4603
        %v4717 = vpack.c.b16 %v4606, %v4605
        %v4718 = vpack.c.b16 %v4608, %v4607
        %v4719 = vpack.c.b16 %v4610, %v4609
        %v4720 = vpack.c.b16 %v4612, %v4611
        %v4721 = vpack.c.b16 %v4614, %v4613
        %v4722 = vpack.c.b16 %v4616, %v4615
        %v4723 = vpack.c.b16 %v4618, %v4617
        %v4724 = vpack.c.b16 %v4620, %v4619
        %v4725 = vpack.c.b16 %v4622, %v4621
        %v4726 = vpack.c.b16 %v4624, %v4623
        %v4727 = vpack.c.b16 %v4626, %v4625
        %v4728 = vpack.c.b16 %v4628, %v4627
        %v4729 = vpack.c.b16 %v4630, %v4629
        %v4730 = vpack.c.b16 %v4632, %v4631
        %v4731 = vpack.c.b16 %v4634, %v4633
        %v4732 = vpack.c.b16 %v4636, %v4635
        %v4733 = vpack.c.b16 %v4638, %v4637
        %v4734 = vpack.c.b16 %v4640, %v4639
        %v4735 = vpack.c.b16 %v4642, %v4641
        %v4736 = vpack.c.b16 %v4644, %v4643
        %v4737 = vpack.c.b16 %v4646, %v4645
        %v4738 = vpack.c.b16 %v4648, %v4647
        %v4739 = vpack.c.b16 %v4650, %v4649
        %v4740 = vpack.c.b16 %v4652, %v4651
        %v4741 = vpack.c.b16 %v4654, %v4653
        %v4742 = vpack.c.b16 %v4656, %v4655
        %v4743 = vpack.c.b16 %v4658, %v4657
        %v4744 = vpack.c.b16 %v4660, %v4659
        %v4745 = vpack.c.b16 %v4662, %v4661
        %v4746 = vpack.c.b16 %v4664, %v4663
        %v4747 = vpack.c.b16 %v4666, %v4665
        %v4748 = vpack.c.b16 %v4668, %v4667
        %v4749 = vpack.c.b16 %v4670, %v4669
        %v4750 = vpack.c.b16 %v4672, %v4671
        %v4751 = vpack.c.b16 %v4674, %v4673
        %v4752 = vpack.c.b16 %v4676, %v4675
        %v4753 = vpack.c.b16 %v4678, %v4677
        %v4754 = vpack.c.b16 %v4680, %v4679
        %v4755 = vpack.c.b16 %v4682, %v4681
        %v4756 = vpack.c.b16 %v4684, %v4683
        %v4757 = vpack.c.b16 %v4686, %v4685
        %v4758 = vpack.c.b16 %v4688, %v4687
        %v4759 = vpack.c.b16 %v4690, %v4689
        %v4760 = vpack.c.b16 %v4692, %v4691
        %v4761 = vpack.c.b16 %v4694, %v4693
        %v4762 = vpack.c.b16 %v4696, %v4695
        %v4763 = vpack.c.b16 %v4698, %v4697
        %v4764 = vpack.c.b16 %v4700, %v4699
        %4829 = vmatpush.bf16.msra.mxu0 %v4708
        %4830 = vmatpush.bf16.msra.mxu0 %v4707
        %4831 = vmatpush.bf16.msra.mxu0 %v4706
        %4832 = vmatpush.bf16.msra.mxu0 %v4705
        %4833 = vmatpush.bf16.msra.mxu0 %v4704
        %4834 = vmatpush.bf16.msra.mxu0 %v4703
        %4835 = vmatpush.bf16.msra.mxu0 %v4702
        %4836 = vmatpush.bf16.msra.mxu0 %v4701
        %4837 = vmatmul.bf16.gmra.mxu0 %v4437
        %v4838 = vpop.f32.mrf.mxu0
        %v4839 = vadd.f32 %v731, %v4838
        %v4840 = vpop.f32.mrf.mxu0
        %4841 = vdwg.mxu0
        %4842 = vmatpush.bf16.msra.mxu0 %v4716
        %4843 = vmatpush.bf16.msra.mxu0 %v4715
        %4844 = vmatpush.bf16.msra.mxu0 %v4714
        %4845 = vmatpush.bf16.msra.mxu0 %v4713
        %4846 = vmatpush.bf16.msra.mxu0 %v4712
        %4847 = vmatpush.bf16.msra.mxu0 %v4711
        %4848 = vmatpush.bf16.msra.mxu0 %v4710
        %4849 = vmatpush.bf16.msra.mxu0 %v4709
        %4850 = vmatmul.bf16.gmra.mxu0 %v4438
        %v4851 = vpop.f32.mrf.mxu0
        %v4852 = vadd.f32 %v4839, %v4851
        %v4853 = vpop.f32.mrf.mxu0
        %4854 = vdwg.mxu0
        %4855 = vmatpush.bf16.msra.mxu0 %v4724
        %4856 = vmatpush.bf16.msra.mxu0 %v4723
        %4857 = vmatpush.bf16.msra.mxu0 %v4722
        %4858 = vmatpush.bf16.msra.mxu0 %v4721
        %4859 = vmatpush.bf16.msra.mxu0 %v4720
        %4860 = vmatpush.bf16.msra.mxu0 %v4719
        %4861 = vmatpush.bf16.msra.mxu0 %v4718
        %4862 = vmatpush.bf16.msra.mxu0 %v4717
        %4863 = vmatmul.bf16.gmra.mxu0 %v4439
        %v4864 = vpop.f32.mrf.mxu0
        %v4865 = vadd.f32 %v4852, %v4864
        %v4866 = vpop.f32.mrf.mxu0
        %4867 = vdwg.mxu0
        %4868 = vmatpush.bf16.msra.mxu0 %v4732
        %4869 = vmatpush.bf16.msra.mxu0 %v4731
        %4870 = vmatpush.bf16.msra.mxu0 %v4730
        %4871 = vmatpush.bf16.msra.mxu0 %v4729
        %4872 = vmatpush.bf16.msra.mxu0 %v4728
        %4873 = vmatpush.bf16.msra.mxu0 %v4727
        %4874 = vmatpush.bf16.msra.mxu0 %v4726
        %4875 = vmatpush.bf16.msra.mxu0 %v4725
        %4876 = vmatmul.bf16.gmra.mxu0 %v4440
        %v4877 = vpop.f32.mrf.mxu0
        %v4878 = vadd.f32 %v4865, %v4877
        %v4879 = vpop.f32.mrf.mxu0
        %4880 = vdwg.mxu0
        %4881 = vmatpush.bf16.msra.mxu0 %v4740
        %4882 = vmatpush.bf16.msra.mxu0 %v4739
        %4883 = vmatpush.bf16.msra.mxu0 %v4738
        %4884 = vmatpush.bf16.msra.mxu0 %v4737
        %4885 = vmatpush.bf16.msra.mxu0 %v4736
        %4886 = vmatpush.bf16.msra.mxu0 %v4735
        %4887 = vmatpush.bf16.msra.mxu0 %v4734
        %4888 = vmatpush.bf16.msra.mxu0 %v4733
        %4889 = vmatmul.bf16.gmra.mxu0 %v4441
        %v4890 = vpop.f32.mrf.mxu0
        %v4891 = vadd.f32 %v4878, %v4890
        %v4892 = vpop.f32.mrf.mxu0
        %4893 = vdwg.mxu0
        %4894 = vmatpush.bf16.msra.mxu0 %v4748
        %4895 = vmatpush.bf16.msra.mxu0 %v4747
        %4896 = vmatpush.bf16.msra.mxu0 %v4746
        %4897 = vmatpush.bf16.msra.mxu0 %v4745
        %4898 = vmatpush.bf16.msra.mxu0 %v4744
        %4899 = vmatpush.bf16.msra.mxu0 %v4743
        %4900 = vmatpush.bf16.msra.mxu0 %v4742
        %4901 = vmatpush.bf16.msra.mxu0 %v4741
        %4902 = vmatmul.bf16.gmra.mxu0 %v4442
        %v4903 = vpop.f32.mrf.mxu0
        %v4904 = vadd.f32 %v4891, %v4903
        %v4905 = vpop.f32.mrf.mxu0
        %4906 = vdwg.mxu0
        %4907 = vmatpush.bf16.msra.mxu0 %v4756
        %4908 = vmatpush.bf16.msra.mxu0 %v4755
        %4909 = vmatpush.bf16.msra.mxu0 %v4754
        %4910 = vmatpush.bf16.msra.mxu0 %v4753
        %4911 = vmatpush.bf16.msra.mxu0 %v4752
        %4912 = vmatpush.bf16.msra.mxu0 %v4751
        %4913 = vmatpush.bf16.msra.mxu0 %v4750
        %4914 = vmatpush.bf16.msra.mxu0 %v4749
        %4915 = vmatmul.bf16.gmra.mxu0 %v4443
        %v4916 = vpop.f32.mrf.mxu0
        %v4917 = vadd.f32 %v4904, %v4916
        %v4918 = vpop.f32.mrf.mxu0
        %4919 = vdwg.mxu0
        %4920 = vmatpush.bf16.msra.mxu0 %v4764
        %4921 = vmatpush.bf16.msra.mxu0 %v4763
        %4922 = vmatpush.bf16.msra.mxu0 %v4762
        %4923 = vmatpush.bf16.msra.mxu0 %v4761
        %4924 = vmatpush.bf16.msra.mxu0 %v4760
        %4925 = vmatpush.bf16.msra.mxu0 %v4759
        %4926 = vmatpush.bf16.msra.mxu0 %v4758
        %4927 = vmatpush.bf16.msra.mxu0 %v4757
        %4928 = vmatmul.bf16.gmra.mxu0 %v4444
        %v4929 = vpop.f32.mrf.mxu0
        %v4930 = vadd.f32 %v4917, %v4929
        %v4931 = vpop.f32.mrf.mxu0
        %4932 = vdwg.mxu0
        %v4933 = vmax.f32 %v4930, 0.0
        %v4934 = vpack.c.bf16 %v4933, %v4933
        %v4951 = vunpack.c.l.b16 %v732
        %v4952 = vunpack.c.h.b16 %v732
        %v4953 = vunpack.c.l.b16 %v733
        %v4954 = vunpack.c.h.b16 %v733
        %v4955 = vunpack.c.l.b16 %v734
        %v4956 = vunpack.c.h.b16 %v734
        %v4957 = vunpack.c.l.b16 %v735
        %v4958 = vunpack.c.h.b16 %v735
        %v4959 = vunpack.c.l.b16 %v736
        %v4960 = vunpack.c.h.b16 %v736
        %v4961 = vunpack.c.l.b16 %v737
        %v4962 = vunpack.c.h.b16 %v737
        %v4963 = vunpack.c.l.b16 %v738
        %v4964 = vunpack.c.h.b16 %v738
        %v4965 = vunpack.c.l.b16 %v739
        %v4966 = vunpack.c.h.b16 %v739
        %v4967 = vunpack.c.l.b16 %v740
        %v4968 = vunpack.c.h.b16 %v740
        %v4969 = vunpack.c.l.b16 %v741
        %v4970 = vunpack.c.h.b16 %v741
        %v4971 = vunpack.c.l.b16 %v742
        %v4972 = vunpack.c.h.b16 %v742
        %v4973 = vunpack.c.l.b16 %v743
        %v4974 = vunpack.c.h.b16 %v743
        %v4975 = vunpack.c.l.b16 %v744
        %v4976 = vunpack.c.h.b16 %v744
        %v4977 = vunpack.c.l.b16 %v745
        %v4978 = vunpack.c.h.b16 %v745
        %v4979 = vunpack.c.l.b16 %v746
        %v4980 = vunpack.c.h.b16 %v746
        %v4981 = vunpack.c.l.b16 %v747
        %v4982 = vunpack.c.h.b16 %v747
        %v4983 = vpack.c.b16 %v4953, %v4951
        %v4984 = vpack.c.b16 %v4954, %v4952
        %v4985 = vpack.c.b16 %v4957, %v4955
        %v4986 = vpack.c.b16 %v4958, %v4956
        %v4987 = vpack.c.b16 %v4961, %v4959
        %v4988 = vpack.c.b16 %v4962, %v4960
        %v4989 = vpack.c.b16 %v4965, %v4963
        %v4990 = vpack.c.b16 %v4966, %v4964
        %v4991 = vpack.c.b16 %v4969, %v4967
        %v4992 = vpack.c.b16 %v4970, %v4968
        %v4993 = vpack.c.b16 %v4973, %v4971
        %v4994 = vpack.c.b16 %v4974, %v4972
        %v4995 = vpack.c.b16 %v4977, %v4975
        %v4996 = vpack.c.b16 %v4978, %v4976
        %v4997 = vpack.c.b16 %v4981, %v4979
        %v4998 = vpack.c.b16 %v4982, %v4980
        %v5016 = vperm.slane %v748, 0
        %v5017 = vperm.slane %v748, 1
        %5020 = vmatpush.bf16.msra.mxu0 %v4997
        %5021 = vmatpush.bf16.msra.mxu0 %v4995
        %5022 = vmatpush.bf16.msra.mxu0 %v4993
        %5023 = vmatpush.bf16.msra.mxu0 %v4991
        %5024 = vmatpush.bf16.msra.mxu0 %v4989
        %5025 = vmatpush.bf16.msra.mxu0 %v4987
        %5026 = vmatpush.bf16.msra.mxu0 %v4985
        %5027 = vmatpush.bf16.msra.mxu0 %v4983
        %5028 = vmatmul.bf16.gmra.mxu0 %v4934
        %v5029 = vpop.f32.mrf.mxu0
        %v5030 = vadd.f32 %v5016, %v5029
        %v5031 = vpop.f32.mrf.mxu0
        %5032 = vdwg.mxu0
        %5033 = vmatpush.bf16.msra.mxu0 %v4998
        %5034 = vmatpush.bf16.msra.mxu0 %v4996
        %5035 = vmatpush.bf16.msra.mxu0 %v4994
        %5036 = vmatpush.bf16.msra.mxu0 %v4992
        %5037 = vmatpush.bf16.msra.mxu0 %v4990
        %5038 = vmatpush.bf16.msra.mxu0 %v4988
        %5039 = vmatpush.bf16.msra.mxu0 %v4986
        %5040 = vmatpush.bf16.msra.mxu0 %v4984
        %5041 = vmatmul.bf16.gmra.mxu0 %v4934
        %v5042 = vpop.f32.mrf.mxu0
        %v5043 = vadd.f32 %v5017, %v5042
        %v5044 = vpop.f32.mrf.mxu0
        %5045 = vdwg.mxu0
        %v5046 = vmax.f32 %v5030, 0.0
        %v5047 = vmax.f32 %v5043, 0.0
        %v5048 = vpack.c.bf16 %v5046, %v5046
        %v5049 = vpack.c.bf16 %v5047, %v5047
        %v5082 = vunpack.c.l.b16 %v749
        %v5083 = vunpack.c.l.b16 %v750
        %v5084 = vunpack.c.l.b16 %v751
        %v5085 = vunpack.c.l.b16 %v752
        %v5086 = vunpack.c.l.b16 %v753
        %v5087 = vunpack.c.l.b16 %v754
        %v5088 = vunpack.c.l.b16 %v755
        %v5089 = vunpack.c.l.b16 %v756
        %v5090 = vunpack.c.l.b16 %v757
        %v5091 = vunpack.c.l.b16 %v758
        %v5092 = vunpack.c.l.b16 %v759
        %v5093 = vunpack.c.l.b16 %v760
        %v5094 = vunpack.c.l.b16 %v761
        %v5095 = vunpack.c.l.b16 %v762
        %v5096 = vunpack.c.l.b16 %v763
        %v5097 = vunpack.c.l.b16 %v764
        %v5098 = vunpack.c.l.b16 %v765
        %v5099 = vunpack.c.l.b16 %v766
        %v5100 = vunpack.c.l.b16 %v767
        %v5101 = vunpack.c.l.b16 %v768
        %v5102 = vunpack.c.l.b16 %v769
        %v5103 = vunpack.c.l.b16 %v770
        %v5104 = vunpack.c.l.b16 %v771
        %v5105 = vunpack.c.l.b16 %v772
        %v5106 = vunpack.c.l.b16 %v773
        %v5107 = vunpack.c.l.b16 %v774
        %v5108 = vunpack.c.l.b16 %v775
        %v5109 = vunpack.c.l.b16 %v776
        %v5110 = vunpack.c.l.b16 %v777
        %v5111 = vunpack.c.l.b16 %v778
        %v5112 = vunpack.c.l.b16 %v779
        %v5113 = vunpack.c.l.b16 %v780
        %v5114 = vpack.c.b16 %v5083, %v5082
        %v5115 = vpack.c.b16 %v5085, %v5084
        %v5116 = vpack.c.b16 %v5087, %v5086
        %v5117 = vpack.c.b16 %v5089, %v5088
        %v5118 = vpack.c.b16 %v5091, %v5090
        %v5119 = vpack.c.b16 %v5093, %v5092
        %v5120 = vpack.c.b16 %v5095, %v5094
        %v5121 = vpack.c.b16 %v5097, %v5096
        %v5122 = vpack.c.b16 %v5099, %v5098
        %v5123 = vpack.c.b16 %v5101, %v5100
        %v5124 = vpack.c.b16 %v5103, %v5102
        %v5125 = vpack.c.b16 %v5105, %v5104
        %v5126 = vpack.c.b16 %v5107, %v5106
        %v5127 = vpack.c.b16 %v5109, %v5108
        %v5128 = vpack.c.b16 %v5111, %v5110
        %v5129 = vpack.c.b16 %v5113, %v5112
        %5146 = vmatpush.bf16.msra.mxu0 %v5121
        %5147 = vmatpush.bf16.msra.mxu0 %v5120
        %5148 = vmatpush.bf16.msra.mxu0 %v5119
        %5149 = vmatpush.bf16.msra.mxu0 %v5118
        %5150 = vmatpush.bf16.msra.mxu0 %v5117
        %5151 = vmatpush.bf16.msra.mxu0 %v5116
        %5152 = vmatpush.bf16.msra.mxu0 %v5115
        %5153 = vmatpush.bf16.msra.mxu0 %v5114
        %5154 = vmatmul.bf16.gmra.mxu0 %v5048
        %v5155 = vpop.f32.mrf.mxu0
        %v5156 = vadd.f32 %v781, %v5155
        %v5157 = vpop.f32.mrf.mxu0
        %5158 = vdwg.mxu0
        %5159 = vmatpush.bf16.msra.mxu0 %v5129
        %5160 = vmatpush.bf16.msra.mxu0 %v5128
        %5161 = vmatpush.bf16.msra.mxu0 %v5127
        %5162 = vmatpush.bf16.msra.mxu0 %v5126
        %5163 = vmatpush.bf16.msra.mxu0 %v5125
        %5164 = vmatpush.bf16.msra.mxu0 %v5124
        %5165 = vmatpush.bf16.msra.mxu0 %v5123
        %5166 = vmatpush.bf16.msra.mxu0 %v5122
        %5167 = vmatmul.bf16.gmra.mxu0 %v5049
        %v5168 = vpop.f32.mrf.mxu0
        %v5169 = vadd.f32 %v5156, %v5168
        %v5170 = vpop.f32.mrf.mxu0
        %5171 = vdwg.mxu0
        %5172 = vst [vmem:[%s378] sm:$0x1] %v5169
        %s5173 = sand.u32 %s269, 1
        %s5174 = scalar_lea.sflag [#allocation4], %s5173
        %s5175 = sand.u32 %s269, 1
        %s5176 = scalar_lea.vmem [#allocation3], %s5175
        // Predicated region
        $region65: #{_lambda_.3} parent=63 // pred_check
          %p5177 = pneg %p279
        $region66: #{_lambda_.3} parent=63 // pred_check_branch
          %5179 = sbr.rel (%p5177) target = $region68
        $region67: #{_lambda_.3} parent=63 // pred_region
          %5181 = vsyncadd %s5174, 0
          %s5182 = scalar_lea.hbm %s11, %s25
          %s5184 = sshll.u32 %s5176, 4
          %s5185 = int_to_ptr.vmem [resolvable:$true] %s5184
          %s5186 = sshll.u32 %s5182, 4
          %s5187 = int_to_ptr.hbm [resolvable:$true] %s5186
          %5189 = dma.vmem_to_hbm [thread:$0]  %s5185, 16, %s5187, %s5174
        $region68: #{_lambda_.3} parent=63 // pred_fallthru
          _
      $region64: #{_lambda_.3} parent=5 // pred_fallthru
        _
      %p5190 = scmp.le.s32.totalorder 2, %s20
      // Predicated region
      $region69: #{_lambda_.3} parent=5 // pred_check
        %p5191 = pneg %p5190
      $region70: #{_lambda_.3} parent=5 // pred_check_branch
        %5193 = sbr.rel (%p5191) target = $region72
      $region71: #{_lambda_.3} parent=5 // pred_region
        %s5194 = ssub.s32 %s20, 2
        // Predicated region
        $region73: #{_lambda_.3} parent=71 // pred_check
          %p5195 = pneg %p285
        $region74: #{_lambda_.3} parent=71 // pred_check_branch
          %5197 = sbr.rel (%p5195) target = $region76
        $region75: #{_lambda_.3} parent=71 // pred_region
          %s5198 = sand.u32 %s270, 1
          %s5199 = scalar_lea.sflag [#allocation4], %s5198
          %s5200 = sand.u32 %s270, 1
          %s5201 = scalar_lea.vmem [#allocation3], %s5200
          %5203 = dma.done %s5199, 16
        $region76: #{_lambda_.3} parent=71 // pred_fallthru
          _
      $region72: #{_lambda_.3} parent=5 // pred_fallthru
        _
    $region6: #{_lambda_.3} parent=1 // loop_footer
      %s24 = sadd.s32 1, %s20
    $region7: #{_lambda_.3} parent=1 // loop_footer_branch
      %19 = sbr.rel target = $region3
    $region8: #{_lambda_.3} parent=1 // loop_exit
      _
    %5204 = vsyncpa [#allocation4], 1
    %s5205 = scalar_lea.sflag [#allocation4], 1
    %5206 = vsyncpa %s5205, 1

</llo_original>
